<compile_context>
chip_gen: v7x
topology: tpu7x:2x2x1
jax: 0.10.0
libtpu: 0.0.40
codegen_flags: <defaults>
</compile_context>

<pallas_src>
import functools

import jax
import jax.numpy as jnp
from jax.experimental import pallas as pl
from jax.experimental.pallas import tpu as pltpu


# ----------------------------------------------------------------------------
# Bilinear x2 upsample (align_corners=True) — separable interpolation matrices
# ----------------------------------------------------------------------------
def _interp_matrix(n_in, n_out):
    """(n_out, n_in) linear-interpolation matrix, align_corners=True."""
    if n_in == 1 or n_out == 1:
        return jnp.ones((n_out, n_in), jnp.float32) / n_in
    pos = jnp.arange(n_out, dtype=jnp.float32) * (n_in - 1) / (n_out - 1)
    lo = jnp.clip(jnp.floor(pos), 0, n_in - 1).astype(jnp.int32)
    hi = jnp.clip(lo + 1, 0, n_in - 1)
    frac = pos - lo.astype(jnp.float32)
    return (jax.nn.one_hot(lo, n_in, dtype=jnp.float32) * (1.0 - frac)[:, None]
            + jax.nn.one_hot(hi, n_in, dtype=jnp.float32) * frac[:, None])


def _upsample_kernel(ah_ref, awt_ref, x_ref, o_ref, *, cin):
    # One batch sample per grid step, ALL channels batched in the block.
    for c in range(cin):
        t = jnp.dot(ah_ref[...], x_ref[0, c], preferred_element_type=jnp.float32)
        o_ref[0, c] = jnp.dot(t, awt_ref[...],
                              preferred_element_type=jnp.float32).astype(o_ref.dtype)


def bilinear_upsample_x2(x):
    n, c, h, w = x.shape
    ho, wo = 2 * h, 2 * w
    ah = _interp_matrix(h, ho)           # (Hout, Hin)
    awt = _interp_matrix(w, wo).T        # (Win, Wout)
    return pl.pallas_call(
        functools.partial(_upsample_kernel, cin=c),
        out_shape=jax.ShapeDtypeStruct((n, c, ho, wo), x.dtype),
        grid_spec=pltpu.PrefetchScalarGridSpec(
            num_scalar_prefetch=0,
            grid=(n,),
            in_specs=[
                pl.BlockSpec((ho, h), lambda i: (0, 0)),
                pl.BlockSpec((w, wo), lambda i: (0, 0)),
                pl.BlockSpec((1, c, h, w), lambda i: (i, 0, 0, 0)),
            ],
            out_specs=pl.BlockSpec((1, c, ho, wo), lambda i: (i, 0, 0, 0)),
        ),
        compiler_params=pltpu.CompilerParams(
            dimension_semantics=("parallel",)),
    )(ah, awt, x)


# ----------------------------------------------------------------------------
# Fully fused:  conv_up(+ReLU) -> conv1(*s1+sh1, ReLU) -> conv2(*s2+sh2)
#               + residual + ReLU, all in VMEM, flat (C, H*W) layout
# ----------------------------------------------------------------------------
def _fused_block_kernel(wu_ref, w1_ref, w2_ref, sh1_ref, sh2_ref,
                        ml_ref, mr_ref, up_ref, o_ref,
                        apad_ref, ypad_ref, hpad_ref, *, wid, m, padl):
    """Refs:
       wu_ref:(9,C2,Cin)  w1_ref/w2_ref:(9,C2,C2)  sh*_ref:(C2,1)
       ml_ref/mr_ref:(1,M) f32 {0,1} width-edge masks
       up_ref:(1,Cin,M)   o_ref:(1,C2,M)
       apad/ypad/hpad: VMEM scratch (C, M + 2*padl), zero border >= W+1 wide.
    """
    mask_l = ml_ref[...]
    mask_r = mr_ref[...]

    def conv3x3(pad_ref, w9_ref):
        src = pad_ref[...]                       # (C, Mp) f32, lives in VMEM
        acc = None
        for dy in range(3):
            for dx in range(3):
                s = (dy - 1) * wid + (dx - 1)
                tap = src[:, padl + s: padl + s + m]       # (C, M) static slice
                if dx == 0:
                    tap = tap * mask_l           # zero columns where w-1 < 0
                elif dx == 2:
                    tap = tap * mask_r           # zero columns where w+1 >= W
                part = jnp.dot(w9_ref[dy * 3 + dx], tap,
                               preferred_element_type=jnp.float32)
                acc = part if acc is None else acc + part
        return acc                               # (Cout, M) f32

    # ---- Up's conv:  y = ReLU(conv3x3(up, w_up)) ----------------------------
    apad_ref[...] = jnp.zeros_like(apad_ref)
    apad_ref[:, padl:padl + m] = up_ref[0].astype(jnp.float32)
    y = jnp.maximum(conv3x3(apad_ref, wu_ref), 0.0)

    # ---- Residual_Block conv1 (BN scale folded into weights) ----------------
    ypad_ref[...] = jnp.zeros_like(ypad_ref)
    ypad_ref[:, padl:padl + m] = y
    h1 = jnp.maximum(conv3x3(ypad_ref, w1_ref) + sh1_ref[...], 0.0)

    # ---- conv2 + shift + residual (f32) + ReLU -------------------------------
    hpad_ref[...] = jnp.zeros_like(hpad_ref)
    hpad_ref[:, padl:padl + m] = h1
    out = jnp.maximum(conv3x3(hpad_ref, w2_ref) + sh2_ref[...] + y, 0.0)
    o_ref[0] = out.astype(o_ref.dtype)


def _fused_up_conv_resblock(up, w_up, w1s, sh1, w2s, sh2):
    """up: (N, Cin, Hout, Wout);  w*: OIHW (scale already folded);  sh*: (C2,)."""
    n, cin, ho, wo = up.shape
    c2 = w_up.shape[0]
    m = ho * wo
    padl = ((wo + 1 + 127) // 128) * 128        # aligned zero border >= W+1
    mp = m + 2 * padl

    up_flat = up.reshape(n, cin, m)             # free reshape (row-major)

    def tap_major(w):  # OIHW -> (9, O, I), tap index t = dy*3 + dx
        o, i = w.shape[0], w.shape[1]
        return jnp.transpose(w, (2, 3, 0, 1)).reshape(9, o, i).astype(jnp.float32)

    wu9 = tap_major(w_up)
    w19 = tap_major(w1s)
    w29 = tap_major(w2s)
    sh1c = sh1.reshape(c2, 1).astype(jnp.float32)
    sh2c = sh2.reshape(c2, 1).astype(jnp.float32)

    col = jnp.arange(m, dtype=jnp.int32) % wo
    mask_l = (col >= 1).astype(jnp.float32).reshape(1, m)
    mask_r = (col < wo - 1).astype(jnp.float32).reshape(1, m)

    flops = 2 * n * m * 9 * (c2 * cin + 2 * c2 * c2)
    bytes_accessed = 4 * (n * cin * m + n * c2 * m
                          + 9 * (c2 * cin + 2 * c2 * c2) + 2 * m)

    out = pl.pallas_call(
        functools.partial(_fused_block_kernel, wid=wo, m=m, padl=padl),
        out_shape=jax.ShapeDtypeStruct((n, c2, m), up.dtype),
        grid_spec=pltpu.PrefetchScalarGridSpec(
            num_scalar_prefetch=0,
            grid=(n,),
            in_specs=[
                pl.BlockSpec((9, c2, cin), lambda i: (0, 0, 0)),
                pl.BlockSpec((9, c2, c2), lambda i: (0, 0, 0)),
                pl.BlockSpec((9, c2, c2), lambda i: (0, 0, 0)),
                pl.BlockSpec((c2, 1), lambda i: (0, 0)),
                pl.BlockSpec((c2, 1), lambda i: (0, 0)),
                pl.BlockSpec((1, m), lambda i: (0, 0)),
                pl.BlockSpec((1, m), lambda i: (0, 0)),
                pl.BlockSpec((1, cin, m), lambda i: (i, 0, 0)),
            ],
            out_specs=pl.BlockSpec((1, c2, m), lambda i: (i, 0, 0)),
            scratch_shapes=[
                pltpu.VMEM((cin, mp), jnp.float32),
                pltpu.VMEM((c2, mp), jnp.float32),
                pltpu.VMEM((c2, mp), jnp.float32),
            ],
        ),
        compiler_params=pltpu.CompilerParams(
            dimension_semantics=("parallel",)),
        cost_estimate=pl.CostEstimate(
            flops=flops, transcendentals=0, bytes_accessed=bytes_accessed),
    )(wu9, w19, w29, sh1c, sh2c, mask_l, mask_r, up_flat)
    return out.reshape(n, c2, ho, wo)           # free reshape


# ----------------------------------------------------------------------------
# resnet_up forward
# ----------------------------------------------------------------------------
def resnet_up_forward(x, params, eps=1e-5):
    # Up: bilinear x2 upsample, then fused conv chain.
    up = bilinear_upsample_x2(x)

    # Fold eval-mode BatchNorm (and conv bias) into weight scale + shift.
    s1 = params["bn1_gamma"] / jnp.sqrt(params["bn1_var"] + eps)
    sh1 = (params["b1"] - params["bn1_mean"]) * s1 + params["bn1_beta"]
    w1s = params["w1"] * s1[:, None, None, None]

    s2 = params["bn2_gamma"] / jnp.sqrt(params["bn2_var"] + eps)
    sh2 = (params["b2"] - params["bn2_mean"]) * s2 + params["bn2_beta"]
    w2s = params["w2"] * s2[:, None, None, None]

    return _fused_up_conv_resblock(up, params["w_up"], w1s, sh1, w2s, sh2)


# ----------------------------------------------------------------------------
# Pure-JAX reference (same eval-mode BN semantics) for the in-script check
# ----------------------------------------------------------------------------
def _ref_forward(x, params, eps=1e-5):
    n, c, h, w = x.shape
    ah = _interp_matrix(h, 2 * h)
    aw = _interp_matrix(w, 2 * w)
    up = jnp.einsum("oh,nchw->ncow", ah, x)
    up = jnp.einsum("ncow,jw->ncoj", up, aw)

    def conv(z, wgt):
        return jax.lax.conv_general_dilated(
            z, wgt, (1, 1), ((1, 1), (1, 1)),
            dimension_numbers=("NCHW", "OIHW", "NCHW"))

    def bn(z, g, b, mu, var):
        inv = g / jnp.sqrt(var + eps)
        return (z - mu[None, :, None, None]) * inv[None, :, None, None] \
            + b[None, :, None, None]

    y = jnp.maximum(conv(up, params["w_up"]), 0.0)
    res = y
    h1 = jnp.maximum(
        bn(conv(y, params["w1"]) + params["b1"][None, :, None, None],
           params["bn1_gamma"], params["bn1_beta"],
           params["bn1_mean"], params["bn1_var"]), 0.0)
    o = bn(conv(h1, params["w2"]) + params["b2"][None, :, None, None],
           params["bn2_gamma"], params["bn2_beta"],
           params["bn2_mean"], params["bn2_var"])
    return jnp.maximum(o + res, 0.0)


if __name__ == "__main__":
    key = jax.random.PRNGKey(0)
    ks = jax.random.split(key, 14)

    N, CIN, H, W = 2, 4, 16, 16
    UP = 2
    CMID = CIN // UP  # 2

    x = jax.random.normal(ks[0], (N, CIN, H, W), dtype=jnp.float32)

    def conv_w(k, cout, cin):
        fan_in = cin * 9
        bound = 1.0 / (fan_in ** 0.5)
        return jax.random.uniform(k, (cout, cin, 3, 3),
                                  minval=-bound, maxval=bound,
                                  dtype=jnp.float32)

    params = dict(
        w_up=conv_w(ks[1], CMID, CIN),
        w1=conv_w(ks[2], CMID, CMID),
        b1=jax.random.uniform(ks[3], (CMID,), minval=-0.1, maxval=0.1,
                              dtype=jnp.float32),
        bn1_gamma=jax.random.uniform(ks[4], (CMID,), minval=0.5, maxval=1.5,
                                     dtype=jnp.float32),
        bn1_beta=jax.random.uniform(ks[5], (CMID,), minval=-0.1, maxval=0.1,
                                    dtype=jnp.float32),
        bn1_mean=jax.random.uniform(ks[6], (CMID,), minval=-0.1, maxval=0.1,
                                    dtype=jnp.float32),
        bn1_var=jax.random.uniform(ks[7], (CMID,), minval=0.5, maxval=1.5,
                                   dtype=jnp.float32),
        w2=conv_w(ks[8], CMID, CMID),
        b2=jax.random.uniform(ks[9], (CMID,), minval=-0.1, maxval=0.1,
                              dtype=jnp.float32),
        bn2_gamma=jax.random.uniform(ks[10], (CMID,), minval=0.5, maxval=1.5,
                                     dtype=jnp.float32),
        bn2_beta=jax.random.uniform(ks[11], (CMID,), minval=-0.1, maxval=0.1,
                                    dtype=jnp.float32),
        bn2_mean=jax.random.uniform(ks[12], (CMID,), minval=-0.1, maxval=0.1,
                                    dtype=jnp.float32),
        bn2_var=jax.random.uniform(ks[13], (CMID,), minval=0.5, maxval=1.5,
                                   dtype=jnp.float32),
    )

    y = jax.jit(resnet_up_forward)(x, params)
    y = jax.block_until_ready(y)

    y_ref = _ref_forward(x, params)
    assert y.shape == (N, CMID, H * UP, W * UP)
    err = float(jnp.max(jnp.abs(y - y_ref)))
    assert jnp.allclose(y, y_ref, atol=1e-4, rtol=1e-4), err

    print("KERNEL_OK")
</pallas_src>

<mosaic_0001>
module attributes {stable_mosaic.version = 11 : i64} {
  func.func @_upsample_kernel(%arg0: i32, %arg1: memref<32x16xf32, #tpu.memory_space<vmem>>, %arg2: memref<16x32xf32, #tpu.memory_space<vmem>>, %arg3: memref<1x4x16x16xf32, #tpu.memory_space<vmem>>, %arg4: memref<1x4x32x32xf32, #tpu.memory_space<vmem>>) attributes {dimension_semantics = [#tpu.dimension_semantics<parallel>], iteration_bounds = array<i64: 2>, scalar_prefetch = 0 : i64, scratch_operands = 0 : i64, tpu.core_type = #tpu.core_type<tc>, window_params = [{pipeline_mode = #tpu.pipeline_mode<synchronous>, transform_indices = @transform_0, window_bounds = array<i64: 32, 16>}, {pipeline_mode = #tpu.pipeline_mode<synchronous>, transform_indices = @transform_1, window_bounds = array<i64: 16, 32>}, {transform_indices = @transform_2, window_bounds = array<i64: 1, 4, 16, 16>}, {transform_indices = @transform_3, window_bounds = array<i64: 1, 4, 32, 32>}]} {
    %c0 = arith.constant 0 : index
    %c0_0 = arith.constant 0 : index
    %0 = vector.load %arg1[%c0, %c0_0] : memref<32x16xf32, #tpu.memory_space<vmem>>, vector<32x16xf32>
    %c0_1 = arith.constant 0 : index
    %c0_2 = arith.constant 0 : index
    %c0_3 = arith.constant 0 : index
    %c0_4 = arith.constant 0 : index
    %1 = vector.load %arg3[%c0_1, %c0_2, %c0_3, %c0_4] : memref<1x4x16x16xf32, #tpu.memory_space<vmem>>, vector<1x1x16x16xf32>
    %2 = vector.shape_cast %1 : vector<1x1x16x16xf32> to vector<16x16xf32>
    %cst = arith.constant dense<0.000000e+00> : vector<32x16xf32>
    %3 = tpu.matmul %0, %2, %cst {dimension_numbers = #tpu.dot_dimension_numbers<[1], [0], [0], [1], [0, 0, 1, 1], [], []>} : vector<32x16xf32>, vector<16x16xf32>, vector<32x16xf32> -> vector<32x16xf32>
    %c0_5 = arith.constant 0 : index
    %c0_6 = arith.constant 0 : index
    %4 = vector.load %arg2[%c0_5, %c0_6] : memref<16x32xf32, #tpu.memory_space<vmem>>, vector<16x32xf32>
    %cst_7 = arith.constant dense<0.000000e+00> : vector<32x32xf32>
    %5 = tpu.matmul %3, %4, %cst_7 {dimension_numbers = #tpu.dot_dimension_numbers<[1], [0], [0], [1], [0, 0, 1, 1], [], []>} : vector<32x16xf32>, vector<16x32xf32>, vector<32x32xf32> -> vector<32x32xf32>
    %c0_8 = arith.constant 0 : index
    %c0_9 = arith.constant 0 : index
    %c0_10 = arith.constant 0 : index
    %c0_11 = arith.constant 0 : index
    %6 = vector.load %arg4[%c0_8, %c0_9, %c0_10, %c0_11] : memref<1x4x32x32xf32, #tpu.memory_space<vmem>>, vector<1x1x32x32xf32>
    %7 = vector.shape_cast %6 : vector<1x1x32x32xf32> to vector<32x32xf32>
    %8 = vector.shape_cast %5 : vector<32x32xf32> to vector<1x1x32x32xf32>
    tpu.vector_store %arg4[%c0_8, %c0_9, %c0_10, %c0_11], %8 {strides = array<i32>} : memref<1x4x32x32xf32, #tpu.memory_space<vmem>>, vector<1x1x32x32xf32>,
    %c0_12 = arith.constant 0 : index
    %c0_13 = arith.constant 0 : index
    %9 = vector.load %arg1[%c0_12, %c0_13] : memref<32x16xf32, #tpu.memory_space<vmem>>, vector<32x16xf32>
    %c0_14 = arith.constant 0 : index
    %c1 = arith.constant 1 : index
    %c0_15 = arith.constant 0 : index
    %c0_16 = arith.constant 0 : index
    %10 = vector.load %arg3[%c0_14, %c1, %c0_15, %c0_16] : memref<1x4x16x16xf32, #tpu.memory_space<vmem>>, vector<1x1x16x16xf32>
    %11 = vector.shape_cast %10 : vector<1x1x16x16xf32> to vector<16x16xf32>
    %cst_17 = arith.constant dense<0.000000e+00> : vector<32x16xf32>
    %12 = tpu.matmul %9, %11, %cst_17 {dimension_numbers = #tpu.dot_dimension_numbers<[1], [0], [0], [1], [0, 0, 1, 1], [], []>} : vector<32x16xf32>, vector<16x16xf32>, vector<32x16xf32> -> vector<32x16xf32>
    %c0_18 = arith.constant 0 : index
    %c0_19 = arith.constant 0 : index
    %13 = vector.load %arg2[%c0_18, %c0_19] : memref<16x32xf32, #tpu.memory_space<vmem>>, vector<16x32xf32>
    %cst_20 = arith.constant dense<0.000000e+00> : vector<32x32xf32>
    %14 = tpu.matmul %12, %13, %cst_20 {dimension_numbers = #tpu.dot_dimension_numbers<[1], [0], [0], [1], [0, 0, 1, 1], [], []>} : vector<32x16xf32>, vector<16x32xf32>, vector<32x32xf32> -> vector<32x32xf32>
    %c0_21 = arith.constant 0 : index
    %c1_22 = arith.constant 1 : index
    %c0_23 = arith.constant 0 : index
    %c0_24 = arith.constant 0 : index
    %15 = vector.load %arg4[%c0_21, %c1_22, %c0_23, %c0_24] : memref<1x4x32x32xf32, #tpu.memory_space<vmem>>, vector<1x1x32x32xf32>
    %16 = vector.shape_cast %15 : vector<1x1x32x32xf32> to vector<32x32xf32>
    %17 = vector.shape_cast %14 : vector<32x32xf32> to vector<1x1x32x32xf32>
    tpu.vector_store %arg4[%c0_21, %c1_22, %c0_23, %c0_24], %17 {strides = array<i32>} : memref<1x4x32x32xf32, #tpu.memory_space<vmem>>, vector<1x1x32x32xf32>,
    %c0_25 = arith.constant 0 : index
    %c0_26 = arith.constant 0 : index
    %18 = vector.load %arg1[%c0_25, %c0_26] : memref<32x16xf32, #tpu.memory_space<vmem>>, vector<32x16xf32>
    %c0_27 = arith.constant 0 : index
    %c2 = arith.constant 2 : index
    %c0_28 = arith.constant 0 : index
    %c0_29 = arith.constant 0 : index
    %19 = vector.load %arg3[%c0_27, %c2, %c0_28, %c0_29] : memref<1x4x16x16xf32, #tpu.memory_space<vmem>>, vector<1x1x16x16xf32>
    %20 = vector.shape_cast %19 : vector<1x1x16x16xf32> to vector<16x16xf32>
    %cst_30 = arith.constant dense<0.000000e+00> : vector<32x16xf32>
    %21 = tpu.matmul %18, %20, %cst_30 {dimension_numbers = #tpu.dot_dimension_numbers<[1], [0], [0], [1], [0, 0, 1, 1], [], []>} : vector<32x16xf32>, vector<16x16xf32>, vector<32x16xf32> -> vector<32x16xf32>
    %c0_31 = arith.constant 0 : index
    %c0_32 = arith.constant 0 : index
    %22 = vector.load %arg2[%c0_31, %c0_32] : memref<16x32xf32, #tpu.memory_space<vmem>>, vector<16x32xf32>
    %cst_33 = arith.constant dense<0.000000e+00> : vector<32x32xf32>
    %23 = tpu.matmul %21, %22, %cst_33 {dimension_numbers = #tpu.dot_dimension_numbers<[1], [0], [0], [1], [0, 0, 1, 1], [], []>} : vector<32x16xf32>, vector<16x32xf32>, vector<32x32xf32> -> vector<32x32xf32>
    %c0_34 = arith.constant 0 : index
    %c2_35 = arith.constant 2 : index
    %c0_36 = arith.constant 0 : index
    %c0_37 = arith.constant 0 : index
    %24 = vector.load %arg4[%c0_34, %c2_35, %c0_36, %c0_37] : memref<1x4x32x32xf32, #tpu.memory_space<vmem>>, vector<1x1x32x32xf32>
    %25 = vector.shape_cast %24 : vector<1x1x32x32xf32> to vector<32x32xf32>
    %26 = vector.shape_cast %23 : vector<32x32xf32> to vector<1x1x32x32xf32>
    tpu.vector_store %arg4[%c0_34, %c2_35, %c0_36, %c0_37], %26 {strides = array<i32>} : memref<1x4x32x32xf32, #tpu.memory_space<vmem>>, vector<1x1x32x32xf32>,
    %c0_38 = arith.constant 0 : index
    %c0_39 = arith.constant 0 : index
    %27 = vector.load %arg1[%c0_38, %c0_39] : memref<32x16xf32, #tpu.memory_space<vmem>>, vector<32x16xf32>
    %c0_40 = arith.constant 0 : index
    %c3 = arith.constant 3 : index
    %c0_41 = arith.constant 0 : index
    %c0_42 = arith.constant 0 : index
    %28 = vector.load %arg3[%c0_40, %c3, %c0_41, %c0_42] : memref<1x4x16x16xf32, #tpu.memory_space<vmem>>, vector<1x1x16x16xf32>
    %29 = vector.shape_cast %28 : vector<1x1x16x16xf32> to vector<16x16xf32>
    %cst_43 = arith.constant dense<0.000000e+00> : vector<32x16xf32>
    %30 = tpu.matmul %27, %29, %cst_43 {dimension_numbers = #tpu.dot_dimension_numbers<[1], [0], [0], [1], [0, 0, 1, 1], [], []>} : vector<32x16xf32>, vector<16x16xf32>, vector<32x16xf32> -> vector<32x16xf32>
    %c0_44 = arith.constant 0 : index
    %c0_45 = arith.constant 0 : index
    %31 = vector.load %arg2[%c0_44, %c0_45] : memref<16x32xf32, #tpu.memory_space<vmem>>, vector<16x32xf32>
    %cst_46 = arith.constant dense<0.000000e+00> : vector<32x32xf32>
    %32 = tpu.matmul %30, %31, %cst_46 {dimension_numbers = #tpu.dot_dimension_numbers<[1], [0], [0], [1], [0, 0, 1, 1], [], []>} : vector<32x16xf32>, vector<16x32xf32>, vector<32x32xf32> -> vector<32x32xf32>
    %c0_47 = arith.constant 0 : index
    %c3_48 = arith.constant 3 : index
    %c0_49 = arith.constant 0 : index
    %c0_50 = arith.constant 0 : index
    %33 = vector.load %arg4[%c0_47, %c3_48, %c0_49, %c0_50] : memref<1x4x32x32xf32, #tpu.memory_space<vmem>>, vector<1x1x32x32xf32>
    %34 = vector.shape_cast %33 : vector<1x1x32x32xf32> to vector<32x32xf32>
    %35 = vector.shape_cast %32 : vector<32x32xf32> to vector<1x1x32x32xf32>
    tpu.vector_store %arg4[%c0_47, %c3_48, %c0_49, %c0_50], %35 {strides = array<i32>} : memref<1x4x32x32xf32, #tpu.memory_space<vmem>>, vector<1x1x32x32xf32>,
    return
  }
  func.func @transform_0(%arg0: i32) -> (i32, i32) {
    %c0_i32 = arith.constant 0 : i32
    %c0_i32_0 = arith.constant 0 : i32
    %c0_i32_1 = arith.constant 0 : i32
    return %c0_i32, %c0_i32_0 : i32, i32
  }
  func.func @transform_1(%arg0: i32) -> (i32, i32) {
    %c0_i32 = arith.constant 0 : i32
    %c0_i32_0 = arith.constant 0 : i32
    %c0_i32_1 = arith.constant 0 : i32
    return %c0_i32, %c0_i32_0 : i32, i32
  }
  func.func @transform_2(%arg0: i32) -> (i32, i32, i32, i32) {
    %c0_i32 = arith.constant 0 : i32
    %c0_i32_0 = arith.constant 0 : i32
    %c0_i32_1 = arith.constant 0 : i32
    %c0_i32_2 = arith.constant 0 : i32
    return %arg0, %c0_i32, %c0_i32_0, %c0_i32_1 : i32, i32, i32, i32
  }
  func.func @transform_3(%arg0: i32) -> (i32, i32, i32, i32) {
    %c0_i32 = arith.constant 0 : i32
    %c0_i32_0 = arith.constant 0 : i32
    %c0_i32_1 = arith.constant 0 : i32
    %c0_i32_2 = arith.constant 0 : i32
    return %arg0, %c0_i32, %c0_i32_0, %c0_i32_1 : i32, i32, i32, i32
  }
}

module attributes {stable_mosaic.version = 11 : i64} {
  func.func @_fused_block_kernel(%arg0: i32, %arg1: memref<9x2x4xf32, #tpu.memory_space<vmem>>, %arg2: memref<9x2x2xf32, #tpu.memory_space<vmem>>, %arg3: memref<9x2x2xf32, #tpu.memory_space<vmem>>, %arg4: memref<2x1xf32, #tpu.memory_space<vmem>>, %arg5: memref<2x1xf32, #tpu.memory_space<vmem>>, %arg6: memref<1x1024xf32, #tpu.memory_space<vmem>>, %arg7: memref<1x1024xf32, #tpu.memory_space<vmem>>, %arg8: memref<1x4x1024xf32, #tpu.memory_space<vmem>>, %arg9: memref<1x2x1024xf32, #tpu.memory_space<vmem>>, %arg10: memref<4x1280xf32, #tpu.memory_space<vmem>>, %arg11: memref<2x1280xf32, #tpu.memory_space<vmem>>, %arg12: memref<2x1280xf32, #tpu.memory_space<vmem>>) attributes {dimension_semantics = [#tpu.dimension_semantics<parallel>], iteration_bounds = array<i64: 2>, scalar_prefetch = 0 : i64, scratch_operands = 3 : i64, tpu.core_type = #tpu.core_type<tc>, window_params = [{pipeline_mode = #tpu.pipeline_mode<synchronous>, transform_indices = @transform_0, window_bounds = array<i64: 9, 2, 4>}, {pipeline_mode = #tpu.pipeline_mode<synchronous>, transform_indices = @transform_1, window_bounds = array<i64: 9, 2, 2>}, {pipeline_mode = #tpu.pipeline_mode<synchronous>, transform_indices = @transform_2, window_bounds = array<i64: 9, 2, 2>}, {pipeline_mode = #tpu.pipeline_mode<synchronous>, transform_indices = @transform_3, window_bounds = array<i64: 2, 1>}, {pipeline_mode = #tpu.pipeline_mode<synchronous>, transform_indices = @transform_4, window_bounds = array<i64: 2, 1>}, {pipeline_mode = #tpu.pipeline_mode<synchronous>, transform_indices = @transform_5, window_bounds = array<i64: 1, 1024>}, {pipeline_mode = #tpu.pipeline_mode<synchronous>, transform_indices = @transform_6, window_bounds = array<i64: 1, 1024>}, {transform_indices = @transform_7, window_bounds = array<i64: 1, 4, 1024>}, {transform_indices = @transform_8, window_bounds = array<i64: 1, 2, 1024>}]} {
    %c0 = arith.constant 0 : index
    %c0_0 = arith.constant 0 : index
    %0 = vector.load %arg6[%c0, %c0_0] : memref<1x1024xf32, #tpu.memory_space<vmem>>, vector<1x1024xf32>
    %c0_1 = arith.constant 0 : index
    %c0_2 = arith.constant 0 : index
    %1 = vector.load %arg7[%c0_1, %c0_2] : memref<1x1024xf32, #tpu.memory_space<vmem>>, vector<1x1024xf32>
    %cst = arith.constant 0.000000e+00 : f32
    %2 = vector.broadcast %cst : f32 to vector<4x1280xf32>
    %c0_3 = arith.constant 0 : index
    %c0_4 = arith.constant 0 : index
    %3 = vector.load %arg10[%c0_3, %c0_4] : memref<4x1280xf32, #tpu.memory_space<vmem>>, vector<4x1280xf32>
    tpu.vector_store %arg10[%c0_3, %c0_4], %2 {strides = array<i32>} : memref<4x1280xf32, #tpu.memory_space<vmem>>, vector<4x1280xf32>,
    %c0_5 = arith.constant 0 : index
    %c0_6 = arith.constant 0 : index
    %c0_7 = arith.constant 0 : index
    %4 = vector.load %arg8[%c0_5, %c0_6, %c0_7] : memref<1x4x1024xf32, #tpu.memory_space<vmem>>, vector<1x4x1024xf32>
    %5 = vector.shape_cast %4 : vector<1x4x1024xf32> to vector<4x1024xf32>
    %c0_8 = arith.constant 0 : index
    %c128 = arith.constant 128 : index
    %6 = vector.load %arg10[%c0_8, %c128] : memref<4x1280xf32, #tpu.memory_space<vmem>>, vector<4x1024xf32>
    tpu.vector_store %arg10[%c0_8, %c128], %5 {strides = array<i32>} : memref<4x1280xf32, #tpu.memory_space<vmem>>, vector<4x1024xf32>,
    %c0_9 = arith.constant 0 : index
    %c0_10 = arith.constant 0 : index
    %7 = vector.load %arg10[%c0_9, %c0_10] : memref<4x1280xf32, #tpu.memory_space<vmem>>, vector<4x1280xf32>
    %8 = vector.extract_strided_slice %7 {offsets = [0, 95], sizes = [4, 1024], strides = [1, 1]} : vector<4x1280xf32> to vector<4x1024xf32>
    %9 = vector.broadcast %0 : vector<1x1024xf32> to vector<4x1024xf32>
    %10 = arith.mulf %8, %9 : vector<4x1024xf32>
    %c0_11 = arith.constant 0 : index
    %c0_12 = arith.constant 0 : index
    %c0_13 = arith.constant 0 : index
    %11 = vector.load %arg1[%c0_11, %c0_12, %c0_13] : memref<9x2x4xf32, #tpu.memory_space<vmem>>, vector<1x2x4xf32>
    %12 = vector.shape_cast %11 : vector<1x2x4xf32> to vector<2x4xf32>
    %cst_14 = arith.constant dense<0.000000e+00> : vector<2x1024xf32>
    %13 = tpu.matmul %12, %10, %cst_14 {dimension_numbers = #tpu.dot_dimension_numbers<[1], [0], [0], [1], [0, 0, 1, 1], [], []>} : vector<2x4xf32>, vector<4x1024xf32>, vector<2x1024xf32> -> vector<2x1024xf32>
    %14 = vector.extract_strided_slice %7 {offsets = [0, 96], sizes = [4, 1024], strides = [1, 1]} : vector<4x1280xf32> to vector<4x1024xf32>
    %c1 = arith.constant 1 : index
    %c0_15 = arith.constant 0 : index
    %c0_16 = arith.constant 0 : index
    %15 = vector.load %arg1[%c1, %c0_15, %c0_16] : memref<9x2x4xf32, #tpu.memory_space<vmem>>, vector<1x2x4xf32>
    %16 = vector.shape_cast %15 : vector<1x2x4xf32> to vector<2x4xf32>
    %cst_17 = arith.constant dense<0.000000e+00> : vector<2x1024xf32>
    %17 = tpu.matmul %16, %14, %cst_17 {dimension_numbers = #tpu.dot_dimension_numbers<[1], [0], [0], [1], [0, 0, 1, 1], [], []>} : vector<2x4xf32>, vector<4x1024xf32>, vector<2x1024xf32> -> vector<2x1024xf32>
    %18 = arith.addf %13, %17 : vector<2x1024xf32>
    %19 = vector.extract_strided_slice %7 {offsets = [0, 97], sizes = [4, 1024], strides = [1, 1]} : vector<4x1280xf32> to vector<4x1024xf32>
    %20 = vector.broadcast %1 : vector<1x1024xf32> to vector<4x1024xf32>
    %21 = arith.mulf %19, %20 : vector<4x1024xf32>
    %c2 = arith.constant 2 : index
    %c0_18 = arith.constant 0 : index
    %c0_19 = arith.constant 0 : index
    %22 = vector.load %arg1[%c2, %c0_18, %c0_19] : memref<9x2x4xf32, #tpu.memory_space<vmem>>, vector<1x2x4xf32>
    %23 = vector.shape_cast %22 : vector<1x2x4xf32> to vector<2x4xf32>
    %cst_20 = arith.constant dense<0.000000e+00> : vector<2x1024xf32>
    %24 = tpu.matmul %23, %21, %cst_20 {dimension_numbers = #tpu.dot_dimension_numbers<[1], [0], [0], [1], [0, 0, 1, 1], [], []>} : vector<2x4xf32>, vector<4x1024xf32>, vector<2x1024xf32> -> vector<2x1024xf32>
    %25 = arith.addf %18, %24 : vector<2x1024xf32>
    %26 = vector.extract_strided_slice %7 {offsets = [0, 127], sizes = [4, 1024], strides = [1, 1]} : vector<4x1280xf32> to vector<4x1024xf32>
    %27 = vector.broadcast %0 : vector<1x1024xf32> to vector<4x1024xf32>
    %28 = arith.mulf %26, %27 : vector<4x1024xf32>
    %c3 = arith.constant 3 : index
    %c0_21 = arith.constant 0 : index
    %c0_22 = arith.constant 0 : index
    %29 = vector.load %arg1[%c3, %c0_21, %c0_22] : memref<9x2x4xf32, #tpu.memory_space<vmem>>, vector<1x2x4xf32>
    %30 = vector.shape_cast %29 : vector<1x2x4xf32> to vector<2x4xf32>
    %cst_23 = arith.constant dense<0.000000e+00> : vector<2x1024xf32>
    %31 = tpu.matmul %30, %28, %cst_23 {dimension_numbers = #tpu.dot_dimension_numbers<[1], [0], [0], [1], [0, 0, 1, 1], [], []>} : vector<2x4xf32>, vector<4x1024xf32>, vector<2x1024xf32> -> vector<2x1024xf32>
    %32 = arith.addf %25, %31 : vector<2x1024xf32>
    %33 = vector.extract_strided_slice %7 {offsets = [0, 128], sizes = [4, 1024], strides = [1, 1]} : vector<4x1280xf32> to vector<4x1024xf32>
    %c4 = arith.constant 4 : index
    %c0_24 = arith.constant 0 : index
    %c0_25 = arith.constant 0 : index
    %34 = vector.load %arg1[%c4, %c0_24, %c0_25] : memref<9x2x4xf32, #tpu.memory_space<vmem>>, vector<1x2x4xf32>
    %35 = vector.shape_cast %34 : vector<1x2x4xf32> to vector<2x4xf32>
    %cst_26 = arith.constant dense<0.000000e+00> : vector<2x1024xf32>
    %36 = tpu.matmul %35, %33, %cst_26 {dimension_numbers = #tpu.dot_dimension_numbers<[1], [0], [0], [1], [0, 0, 1, 1], [], []>} : vector<2x4xf32>, vector<4x1024xf32>, vector<2x1024xf32> -> vector<2x1024xf32>
    %37 = arith.addf %32, %36 : vector<2x1024xf32>
    %38 = vector.extract_strided_slice %7 {offsets = [0, 129], sizes = [4, 1024], strides = [1, 1]} : vector<4x1280xf32> to vector<4x1024xf32>
    %39 = vector.broadcast %1 : vector<1x1024xf32> to vector<4x1024xf32>
    %40 = arith.mulf %38, %39 : vector<4x1024xf32>
    %c5 = arith.constant 5 : index
    %c0_27 = arith.constant 0 : index
    %c0_28 = arith.constant 0 : index
    %41 = vector.load %arg1[%c5, %c0_27, %c0_28] : memref<9x2x4xf32, #tpu.memory_space<vmem>>, vector<1x2x4xf32>
    %42 = vector.shape_cast %41 : vector<1x2x4xf32> to vector<2x4xf32>
    %cst_29 = arith.constant dense<0.000000e+00> : vector<2x1024xf32>
    %43 = tpu.matmul %42, %40, %cst_29 {dimension_numbers = #tpu.dot_dimension_numbers<[1], [0], [0], [1], [0, 0, 1, 1], [], []>} : vector<2x4xf32>, vector<4x1024xf32>, vector<2x1024xf32> -> vector<2x1024xf32>
    %44 = arith.addf %37, %43 : vector<2x1024xf32>
    %45 = vector.extract_strided_slice %7 {offsets = [0, 159], sizes = [4, 1024], strides = [1, 1]} : vector<4x1280xf32> to vector<4x1024xf32>
    %46 = vector.broadcast %0 : vector<1x1024xf32> to vector<4x1024xf32>
    %47 = arith.mulf %45, %46 : vector<4x1024xf32>
    %c6 = arith.constant 6 : index
    %c0_30 = arith.constant 0 : index
    %c0_31 = arith.constant 0 : index
    %48 = vector.load %arg1[%c6, %c0_30, %c0_31] : memref<9x2x4xf32, #tpu.memory_space<vmem>>, vector<1x2x4xf32>
    %49 = vector.shape_cast %48 : vector<1x2x4xf32> to vector<2x4xf32>
    %cst_32 = arith.constant dense<0.000000e+00> : vector<2x1024xf32>
    %50 = tpu.matmul %49, %47, %cst_32 {dimension_numbers = #tpu.dot_dimension_numbers<[1], [0], [0], [1], [0, 0, 1, 1], [], []>} : vector<2x4xf32>, vector<4x1024xf32>, vector<2x1024xf32> -> vector<2x1024xf32>
    %51 = arith.addf %44, %50 : vector<2x1024xf32>
    %52 = vector.extract_strided_slice %7 {offsets = [0, 160], sizes = [4, 1024], strides = [1, 1]} : vector<4x1280xf32> to vector<4x1024xf32>
    %c7 = arith.constant 7 : index
    %c0_33 = arith.constant 0 : index
    %c0_34 = arith.constant 0 : index
    %53 = vector.load %arg1[%c7, %c0_33, %c0_34] : memref<9x2x4xf32, #tpu.memory_space<vmem>>, vector<1x2x4xf32>
    %54 = vector.shape_cast %53 : vector<1x2x4xf32> to vector<2x4xf32>
    %cst_35 = arith.constant dense<0.000000e+00> : vector<2x1024xf32>
    %55 = tpu.matmul %54, %52, %cst_35 {dimension_numbers = #tpu.dot_dimension_numbers<[1], [0], [0], [1], [0, 0, 1, 1], [], []>} : vector<2x4xf32>, vector<4x1024xf32>, vector<2x1024xf32> -> vector<2x1024xf32>
    %56 = arith.addf %51, %55 : vector<2x1024xf32>
    %57 = vector.extract_strided_slice %7 {offsets = [0, 161], sizes = [4, 1024], strides = [1, 1]} : vector<4x1280xf32> to vector<4x1024xf32>
    %58 = vector.broadcast %1 : vector<1x1024xf32> to vector<4x1024xf32>
    %59 = arith.mulf %57, %58 : vector<4x1024xf32>
    %c8 = arith.constant 8 : index
    %c0_36 = arith.constant 0 : index
    %c0_37 = arith.constant 0 : index
    %60 = vector.load %arg1[%c8, %c0_36, %c0_37] : memref<9x2x4xf32, #tpu.memory_space<vmem>>, vector<1x2x4xf32>
    %61 = vector.shape_cast %60 : vector<1x2x4xf32> to vector<2x4xf32>
    %cst_38 = arith.constant dense<0.000000e+00> : vector<2x1024xf32>
    %62 = tpu.matmul %61, %59, %cst_38 {dimension_numbers = #tpu.dot_dimension_numbers<[1], [0], [0], [1], [0, 0, 1, 1], [], []>} : vector<2x4xf32>, vector<4x1024xf32>, vector<2x1024xf32> -> vector<2x1024xf32>
    %63 = arith.addf %56, %62 : vector<2x1024xf32>
    %cst_39 = arith.constant 0.000000e+00 : f32
    %64 = vector.broadcast %cst_39 : f32 to vector<2x1024xf32>
    %65 = arith.maximumf %63, %64 : vector<2x1024xf32>
    %cst_40 = arith.constant 0.000000e+00 : f32
    %66 = vector.broadcast %cst_40 : f32 to vector<2x1280xf32>
    %c0_41 = arith.constant 0 : index
    %c0_42 = arith.constant 0 : index
    %67 = vector.load %arg11[%c0_41, %c0_42] : memref<2x1280xf32, #tpu.memory_space<vmem>>, vector<2x1280xf32>
    tpu.vector_store %arg11[%c0_41, %c0_42], %66 {strides = array<i32>} : memref<2x1280xf32, #tpu.memory_space<vmem>>, vector<2x1280xf32>,
    %c0_43 = arith.constant 0 : index
    %c128_44 = arith.constant 128 : index
    %68 = vector.load %arg11[%c0_43, %c128_44] : memref<2x1280xf32, #tpu.memory_space<vmem>>, vector<2x1024xf32>
    tpu.vector_store %arg11[%c0_43, %c128_44], %65 {strides = array<i32>} : memref<2x1280xf32, #tpu.memory_space<vmem>>, vector<2x1024xf32>,
    %c0_45 = arith.constant 0 : index
    %c0_46 = arith.constant 0 : index
    %69 = vector.load %arg11[%c0_45, %c0_46] : memref<2x1280xf32, #tpu.memory_space<vmem>>, vector<2x1280xf32>
    %70 = vector.extract_strided_slice %69 {offsets = [0, 95], sizes = [2, 1024], strides = [1, 1]} : vector<2x1280xf32> to vector<2x1024xf32>
    %71 = vector.broadcast %0 : vector<1x1024xf32> to vector<2x1024xf32>
    %72 = arith.mulf %70, %71 : vector<2x1024xf32>
    %c0_47 = arith.constant 0 : index
    %c0_48 = arith.constant 0 : index
    %c0_49 = arith.constant 0 : index
    %73 = vector.load %arg2[%c0_47, %c0_48, %c0_49] : memref<9x2x2xf32, #tpu.memory_space<vmem>>, vector<1x2x2xf32>
    %74 = vector.shape_cast %73 : vector<1x2x2xf32> to vector<2x2xf32>
    %cst_50 = arith.constant dense<0.000000e+00> : vector<2x1024xf32>
    %75 = tpu.matmul %74, %72, %cst_50 {dimension_numbers = #tpu.dot_dimension_numbers<[1], [0], [0], [1], [0, 0, 1, 1], [], []>} : vector<2x2xf32>, vector<2x1024xf32>, vector<2x1024xf32> -> vector<2x1024xf32>
    %76 = vector.extract_strided_slice %69 {offsets = [0, 96], sizes = [2, 1024], strides = [1, 1]} : vector<2x1280xf32> to vector<2x1024xf32>
    %c1_51 = arith.constant 1 : index
    %c0_52 = arith.constant 0 : index
    %c0_53 = arith.constant 0 : index
    %77 = vector.load %arg2[%c1_51, %c0_52, %c0_53] : memref<9x2x2xf32, #tpu.memory_space<vmem>>, vector<1x2x2xf32>
    %78 = vector.shape_cast %77 : vector<1x2x2xf32> to vector<2x2xf32>
    %cst_54 = arith.constant dense<0.000000e+00> : vector<2x1024xf32>
    %79 = tpu.matmul %78, %76, %cst_54 {dimension_numbers = #tpu.dot_dimension_numbers<[1], [0], [0], [1], [0, 0, 1, 1], [], []>} : vector<2x2xf32>, vector<2x1024xf32>, vector<2x1024xf32> -> vector<2x1024xf32>
    %80 = arith.addf %75, %79 : vector<2x1024xf32>
    %81 = vector.extract_strided_slice %69 {offsets = [0, 97], sizes = [2, 1024], strides = [1, 1]} : vector<2x1280xf32> to vector<2x1024xf32>
    %82 = vector.broadcast %1 : vector<1x1024xf32> to vector<2x1024xf32>
    %83 = arith.mulf %81, %82 : vector<2x1024xf32>
    %c2_55 = arith.constant 2 : index
    %c0_56 = arith.constant 0 : index
    %c0_57 = arith.constant 0 : index
    %84 = vector.load %arg2[%c2_55, %c0_56, %c0_57] : memref<9x2x2xf32, #tpu.memory_space<vmem>>, vector<1x2x2xf32>
    %85 = vector.shape_cast %84 : vector<1x2x2xf32> to vector<2x2xf32>
    %cst_58 = arith.constant dense<0.000000e+00> : vector<2x1024xf32>
    %86 = tpu.matmul %85, %83, %cst_58 {dimension_numbers = #tpu.dot_dimension_numbers<[1], [0], [0], [1], [0, 0, 1, 1], [], []>} : vector<2x2xf32>, vector<2x1024xf32>, vector<2x1024xf32> -> vector<2x1024xf32>
    %87 = arith.addf %80, %86 : vector<2x1024xf32>
    %88 = vector.extract_strided_slice %69 {offsets = [0, 127], sizes = [2, 1024], strides = [1, 1]} : vector<2x1280xf32> to vector<2x1024xf32>
    %89 = vector.broadcast %0 : vector<1x1024xf32> to vector<2x1024xf32>
    %90 = arith.mulf %88, %89 : vector<2x1024xf32>
    %c3_59 = arith.constant 3 : index
    %c0_60 = arith.constant 0 : index
    %c0_61 = arith.constant 0 : index
    %91 = vector.load %arg2[%c3_59, %c0_60, %c0_61] : memref<9x2x2xf32, #tpu.memory_space<vmem>>, vector<1x2x2xf32>
    %92 = vector.shape_cast %91 : vector<1x2x2xf32> to vector<2x2xf32>
    %cst_62 = arith.constant dense<0.000000e+00> : vector<2x1024xf32>
    %93 = tpu.matmul %92, %90, %cst_62 {dimension_numbers = #tpu.dot_dimension_numbers<[1], [0], [0], [1], [0, 0, 1, 1], [], []>} : vector<2x2xf32>, vector<2x1024xf32>, vector<2x1024xf32> -> vector<2x1024xf32>
    %94 = arith.addf %87, %93 : vector<2x1024xf32>
    %95 = vector.extract_strided_slice %69 {offsets = [0, 128], sizes = [2, 1024], strides = [1, 1]} : vector<2x1280xf32> to vector<2x1024xf32>
    %c4_63 = arith.constant 4 : index
    %c0_64 = arith.constant 0 : index
    %c0_65 = arith.constant 0 : index
    %96 = vector.load %arg2[%c4_63, %c0_64, %c0_65] : memref<9x2x2xf32, #tpu.memory_space<vmem>>, vector<1x2x2xf32>
    %97 = vector.shape_cast %96 : vector<1x2x2xf32> to vector<2x2xf32>
    %cst_66 = arith.constant dense<0.000000e+00> : vector<2x1024xf32>
    %98 = tpu.matmul %97, %95, %cst_66 {dimension_numbers = #tpu.dot_dimension_numbers<[1], [0], [0], [1], [0, 0, 1, 1], [], []>} : vector<2x2xf32>, vector<2x1024xf32>, vector<2x1024xf32> -> vector<2x1024xf32>
    %99 = arith.addf %94, %98 : vector<2x1024xf32>
    %100 = vector.extract_strided_slice %69 {offsets = [0, 129], sizes = [2, 1024], strides = [1, 1]} : vector<2x1280xf32> to vector<2x1024xf32>
    %101 = vector.broadcast %1 : vector<1x1024xf32> to vector<2x1024xf32>
    %102 = arith.mulf %100, %101 : vector<2x1024xf32>
    %c5_67 = arith.constant 5 : index
    %c0_68 = arith.constant 0 : index
    %c0_69 = arith.constant 0 : index
    %103 = vector.load %arg2[%c5_67, %c0_68, %c0_69] : memref<9x2x2xf32, #tpu.memory_space<vmem>>, vector<1x2x2xf32>
    %104 = vector.shape_cast %103 : vector<1x2x2xf32> to vector<2x2xf32>
    %cst_70 = arith.constant dense<0.000000e+00> : vector<2x1024xf32>
    %105 = tpu.matmul %104, %102, %cst_70 {dimension_numbers = #tpu.dot_dimension_numbers<[1], [0], [0], [1], [0, 0, 1, 1], [], []>} : vector<2x2xf32>, vector<2x1024xf32>, vector<2x1024xf32> -> vector<2x1024xf32>
    %106 = arith.addf %99, %105 : vector<2x1024xf32>
    %107 = vector.extract_strided_slice %69 {offsets = [0, 159], sizes = [2, 1024], strides = [1, 1]} : vector<2x1280xf32> to vector<2x1024xf32>
    %108 = vector.broadcast %0 : vector<1x1024xf32> to vector<2x1024xf32>
    %109 = arith.mulf %107, %108 : vector<2x1024xf32>
    %c6_71 = arith.constant 6 : index
    %c0_72 = arith.constant 0 : index
    %c0_73 = arith.constant 0 : index
    %110 = vector.load %arg2[%c6_71, %c0_72, %c0_73] : memref<9x2x2xf32, #tpu.memory_space<vmem>>, vector<1x2x2xf32>
    %111 = vector.shape_cast %110 : vector<1x2x2xf32> to vector<2x2xf32>
    %cst_74 = arith.constant dense<0.000000e+00> : vector<2x1024xf32>
    %112 = tpu.matmul %111, %109, %cst_74 {dimension_numbers = #tpu.dot_dimension_numbers<[1], [0], [0], [1], [0, 0, 1, 1], [], []>} : vector<2x2xf32>, vector<2x1024xf32>, vector<2x1024xf32> -> vector<2x1024xf32>
    %113 = arith.addf %106, %112 : vector<2x1024xf32>
    %114 = vector.extract_strided_slice %69 {offsets = [0, 160], sizes = [2, 1024], strides = [1, 1]} : vector<2x1280xf32> to vector<2x1024xf32>
    %c7_75 = arith.constant 7 : index
    %c0_76 = arith.constant 0 : index
    %c0_77 = arith.constant 0 : index
    %115 = vector.load %arg2[%c7_75, %c0_76, %c0_77] : memref<9x2x2xf32, #tpu.memory_space<vmem>>, vector<1x2x2xf32>
    %116 = vector.shape_cast %115 : vector<1x2x2xf32> to vector<2x2xf32>
    %cst_78 = arith.constant dense<0.000000e+00> : vector<2x1024xf32>
    %117 = tpu.matmul %116, %114, %cst_78 {dimension_numbers = #tpu.dot_dimension_numbers<[1], [0], [0], [1], [0, 0, 1, 1], [], []>} : vector<2x2xf32>, vector<2x1024xf32>, vector<2x1024xf32> -> vector<2x1024xf32>
    %118 = arith.addf %113, %117 : vector<2x1024xf32>
    %119 = vector.extract_strided_slice %69 {offsets = [0, 161], sizes = [2, 1024], strides = [1, 1]} : vector<2x1280xf32> to vector<2x1024xf32>
    %120 = vector.broadcast %1 : vector<1x1024xf32> to vector<2x1024xf32>
    %121 = arith.mulf %119, %120 : vector<2x1024xf32>
    %c8_79 = arith.constant 8 : index
    %c0_80 = arith.constant 0 : index
    %c0_81 = arith.constant 0 : index
    %122 = vector.load %arg2[%c8_79, %c0_80, %c0_81] : memref<9x2x2xf32, #tpu.memory_space<vmem>>, vector<1x2x2xf32>
    %123 = vector.shape_cast %122 : vector<1x2x2xf32> to vector<2x2xf32>
    %cst_82 = arith.constant dense<0.000000e+00> : vector<2x1024xf32>
    %124 = tpu.matmul %123, %121, %cst_82 {dimension_numbers = #tpu.dot_dimension_numbers<[1], [0], [0], [1], [0, 0, 1, 1], [], []>} : vector<2x2xf32>, vector<2x1024xf32>, vector<2x1024xf32> -> vector<2x1024xf32>
    %125 = arith.addf %118, %124 : vector<2x1024xf32>
    %c0_83 = arith.constant 0 : index
    %c0_84 = arith.constant 0 : index
    %126 = vector.load %arg4[%c0_83, %c0_84] : memref<2x1xf32, #tpu.memory_space<vmem>>, vector<2x1xf32>
    %127 = vector.broadcast %126 : vector<2x1xf32> to vector<2x1024xf32>
    %128 = arith.addf %125, %127 : vector<2x1024xf32>
    %cst_85 = arith.constant 0.000000e+00 : f32
    %129 = vector.broadcast %cst_85 : f32 to vector<2x1024xf32>
    %130 = arith.maximumf %128, %129 : vector<2x1024xf32>
    %cst_86 = arith.constant 0.000000e+00 : f32
    %131 = vector.broadcast %cst_86 : f32 to vector<2x1280xf32>
    %c0_87 = arith.constant 0 : index
    %c0_88 = arith.constant 0 : index
    %132 = vector.load %arg12[%c0_87, %c0_88] : memref<2x1280xf32, #tpu.memory_space<vmem>>, vector<2x1280xf32>
    tpu.vector_store %arg12[%c0_87, %c0_88], %131 {strides = array<i32>} : memref<2x1280xf32, #tpu.memory_space<vmem>>, vector<2x1280xf32>,
    %c0_89 = arith.constant 0 : index
    %c128_90 = arith.constant 128 : index
    %133 = vector.load %arg12[%c0_89, %c128_90] : memref<2x1280xf32, #tpu.memory_space<vmem>>, vector<2x1024xf32>
    tpu.vector_store %arg12[%c0_89, %c128_90], %130 {strides = array<i32>} : memref<2x1280xf32, #tpu.memory_space<vmem>>, vector<2x1024xf32>,
    %c0_91 = arith.constant 0 : index
    %c0_92 = arith.constant 0 : index
    %134 = vector.load %arg12[%c0_91, %c0_92] : memref<2x1280xf32, #tpu.memory_space<vmem>>, vector<2x1280xf32>
    %135 = vector.extract_strided_slice %134 {offsets = [0, 95], sizes = [2, 1024], strides = [1, 1]} : vector<2x1280xf32> to vector<2x1024xf32>
    %136 = vector.broadcast %0 : vector<1x1024xf32> to vector<2x1024xf32>
    %137 = arith.mulf %135, %136 : vector<2x1024xf32>
    %c0_93 = arith.constant 0 : index
    %c0_94 = arith.constant 0 : index
    %c0_95 = arith.constant 0 : index
    %138 = vector.load %arg3[%c0_93, %c0_94, %c0_95] : memref<9x2x2xf32, #tpu.memory_space<vmem>>, vector<1x2x2xf32>
    %139 = vector.shape_cast %138 : vector<1x2x2xf32> to vector<2x2xf32>
    %cst_96 = arith.constant dense<0.000000e+00> : vector<2x1024xf32>
    %140 = tpu.matmul %139, %137, %cst_96 {dimension_numbers = #tpu.dot_dimension_numbers<[1], [0], [0], [1], [0, 0, 1, 1], [], []>} : vector<2x2xf32>, vector<2x1024xf32>, vector<2x1024xf32> -> vector<2x1024xf32>
    %141 = vector.extract_strided_slice %134 {offsets = [0, 96], sizes = [2, 1024], strides = [1, 1]} : vector<2x1280xf32> to vector<2x1024xf32>
    %c1_97 = arith.constant 1 : index
    %c0_98 = arith.constant 0 : index
    %c0_99 = arith.constant 0 : index
    %142 = vector.load %arg3[%c1_97, %c0_98, %c0_99] : memref<9x2x2xf32, #tpu.memory_space<vmem>>, vector<1x2x2xf32>
    %143 = vector.shape_cast %142 : vector<1x2x2xf32> to vector<2x2xf32>
    %cst_100 = arith.constant dense<0.000000e+00> : vector<2x1024xf32>
    %144 = tpu.matmul %143, %141, %cst_100 {dimension_numbers = #tpu.dot_dimension_numbers<[1], [0], [0], [1], [0, 0, 1, 1], [], []>} : vector<2x2xf32>, vector<2x1024xf32>, vector<2x1024xf32> -> vector<2x1024xf32>
    %145 = arith.addf %140, %144 : vector<2x1024xf32>
    %146 = vector.extract_strided_slice %134 {offsets = [0, 97], sizes = [2, 1024], strides = [1, 1]} : vector<2x1280xf32> to vector<2x1024xf32>
    %147 = vector.broadcast %1 : vector<1x1024xf32> to vector<2x1024xf32>
    %148 = arith.mulf %146, %147 : vector<2x1024xf32>
    %c2_101 = arith.constant 2 : index
    %c0_102 = arith.constant 0 : index
    %c0_103 = arith.constant 0 : index
    %149 = vector.load %arg3[%c2_101, %c0_102, %c0_103] : memref<9x2x2xf32, #tpu.memory_space<vmem>>, vector<1x2x2xf32>
    %150 = vector.shape_cast %149 : vector<1x2x2xf32> to vector<2x2xf32>
    %cst_104 = arith.constant dense<0.000000e+00> : vector<2x1024xf32>
    %151 = tpu.matmul %150, %148, %cst_104 {dimension_numbers = #tpu.dot_dimension_numbers<[1], [0], [0], [1], [0, 0, 1, 1], [], []>} : vector<2x2xf32>, vector<2x1024xf32>, vector<2x1024xf32> -> vector<2x1024xf32>
    %152 = arith.addf %145, %151 : vector<2x1024xf32>
    %153 = vector.extract_strided_slice %134 {offsets = [0, 127], sizes = [2, 1024], strides = [1, 1]} : vector<2x1280xf32> to vector<2x1024xf32>
    %154 = vector.broadcast %0 : vector<1x1024xf32> to vector<2x1024xf32>
    %155 = arith.mulf %153, %154 : vector<2x1024xf32>
    %c3_105 = arith.constant 3 : index
    %c0_106 = arith.constant 0 : index
    %c0_107 = arith.constant 0 : index
    %156 = vector.load %arg3[%c3_105, %c0_106, %c0_107] : memref<9x2x2xf32, #tpu.memory_space<vmem>>, vector<1x2x2xf32>
    %157 = vector.shape_cast %156 : vector<1x2x2xf32> to vector<2x2xf32>
    %cst_108 = arith.constant dense<0.000000e+00> : vector<2x1024xf32>
    %158 = tpu.matmul %157, %155, %cst_108 {dimension_numbers = #tpu.dot_dimension_numbers<[1], [0], [0], [1], [0, 0, 1, 1], [], []>} : vector<2x2xf32>, vector<2x1024xf32>, vector<2x1024xf32> -> vector<2x1024xf32>
    %159 = arith.addf %152, %158 : vector<2x1024xf32>
    %160 = vector.extract_strided_slice %134 {offsets = [0, 128], sizes = [2, 1024], strides = [1, 1]} : vector<2x1280xf32> to vector<2x1024xf32>
    %c4_109 = arith.constant 4 : index
    %c0_110 = arith.constant 0 : index
    %c0_111 = arith.constant 0 : index
    %161 = vector.load %arg3[%c4_109, %c0_110, %c0_111] : memref<9x2x2xf32, #tpu.memory_space<vmem>>, vector<1x2x2xf32>
    %162 = vector.shape_cast %161 : vector<1x2x2xf32> to vector<2x2xf32>
    %cst_112 = arith.constant dense<0.000000e+00> : vector<2x1024xf32>
    %163 = tpu.matmul %162, %160, %cst_112 {dimension_numbers = #tpu.dot_dimension_numbers<[1], [0], [0], [1], [0, 0, 1, 1], [], []>} : vector<2x2xf32>, vector<2x1024xf32>, vector<2x1024xf32> -> vector<2x1024xf32>
    %164 = arith.addf %159, %163 : vector<2x1024xf32>
    %165 = vector.extract_strided_slice %134 {offsets = [0, 129], sizes = [2, 1024], strides = [1, 1]} : vector<2x1280xf32> to vector<2x1024xf32>
    %166 = vector.broadcast %1 : vector<1x1024xf32> to vector<2x1024xf32>
    %167 = arith.mulf %165, %166 : vector<2x1024xf32>
    %c5_113 = arith.constant 5 : index
    %c0_114 = arith.constant 0 : index
    %c0_115 = arith.constant 0 : index
    %168 = vector.load %arg3[%c5_113, %c0_114, %c0_115] : memref<9x2x2xf32, #tpu.memory_space<vmem>>, vector<1x2x2xf32>
    %169 = vector.shape_cast %168 : vector<1x2x2xf32> to vector<2x2xf32>
    %cst_116 = arith.constant dense<0.000000e+00> : vector<2x1024xf32>
    %170 = tpu.matmul %169, %167, %cst_116 {dimension_numbers = #tpu.dot_dimension_numbers<[1], [0], [0], [1], [0, 0, 1, 1], [], []>} : vector<2x2xf32>, vector<2x1024xf32>, vector<2x1024xf32> -> vector<2x1024xf32>
    %171 = arith.addf %164, %170 : vector<2x1024xf32>
    %172 = vector.extract_strided_slice %134 {offsets = [0, 159], sizes = [2, 1024], strides = [1, 1]} : vector<2x1280xf32> to vector<2x1024xf32>
    %173 = vector.broadcast %0 : vector<1x1024xf32> to vector<2x1024xf32>
    %174 = arith.mulf %172, %173 : vector<2x1024xf32>
    %c6_117 = arith.constant 6 : index
    %c0_118 = arith.constant 0 : index
    %c0_119 = arith.constant 0 : index
    %175 = vector.load %arg3[%c6_117, %c0_118, %c0_119] : memref<9x2x2xf32, #tpu.memory_space<vmem>>, vector<1x2x2xf32>
    %176 = vector.shape_cast %175 : vector<1x2x2xf32> to vector<2x2xf32>
    %cst_120 = arith.constant dense<0.000000e+00> : vector<2x1024xf32>
    %177 = tpu.matmul %176, %174, %cst_120 {dimension_numbers = #tpu.dot_dimension_numbers<[1], [0], [0], [1], [0, 0, 1, 1], [], []>} : vector<2x2xf32>, vector<2x1024xf32>, vector<2x1024xf32> -> vector<2x1024xf32>
    %178 = arith.addf %171, %177 : vector<2x1024xf32>
    %179 = vector.extract_strided_slice %134 {offsets = [0, 160], sizes = [2, 1024], strides = [1, 1]} : vector<2x1280xf32> to vector<2x1024xf32>
    %c7_121 = arith.constant 7 : index
    %c0_122 = arith.constant 0 : index
    %c0_123 = arith.constant 0 : index
    %180 = vector.load %arg3[%c7_121, %c0_122, %c0_123] : memref<9x2x2xf32, #tpu.memory_space<vmem>>, vector<1x2x2xf32>
    %181 = vector.shape_cast %180 : vector<1x2x2xf32> to vector<2x2xf32>
    %cst_124 = arith.constant dense<0.000000e+00> : vector<2x1024xf32>
    %182 = tpu.matmul %181, %179, %cst_124 {dimension_numbers = #tpu.dot_dimension_numbers<[1], [0], [0], [1], [0, 0, 1, 1], [], []>} : vector<2x2xf32>, vector<2x1024xf32>, vector<2x1024xf32> -> vector<2x1024xf32>
    %183 = arith.addf %178, %182 : vector<2x1024xf32>
    %184 = vector.extract_strided_slice %134 {offsets = [0, 161], sizes = [2, 1024], strides = [1, 1]} : vector<2x1280xf32> to vector<2x1024xf32>
    %185 = vector.broadcast %1 : vector<1x1024xf32> to vector<2x1024xf32>
    %186 = arith.mulf %184, %185 : vector<2x1024xf32>
    %c8_125 = arith.constant 8 : index
    %c0_126 = arith.constant 0 : index
    %c0_127 = arith.constant 0 : index
    %187 = vector.load %arg3[%c8_125, %c0_126, %c0_127] : memref<9x2x2xf32, #tpu.memory_space<vmem>>, vector<1x2x2xf32>
    %188 = vector.shape_cast %187 : vector<1x2x2xf32> to vector<2x2xf32>
    %cst_128 = arith.constant dense<0.000000e+00> : vector<2x1024xf32>
    %189 = tpu.matmul %188, %186, %cst_128 {dimension_numbers = #tpu.dot_dimension_numbers<[1], [0], [0], [1], [0, 0, 1, 1], [], []>} : vector<2x2xf32>, vector<2x1024xf32>, vector<2x1024xf32> -> vector<2x1024xf32>
    %190 = arith.addf %183, %189 : vector<2x1024xf32>
    %c0_129 = arith.constant 0 : index
    %c0_130 = arith.constant 0 : index
    %191 = vector.load %arg5[%c0_129, %c0_130] : memref<2x1xf32, #tpu.memory_space<vmem>>, vector<2x1xf32>
    %192 = vector.broadcast %191 : vector<2x1xf32> to vector<2x1024xf32>
    %193 = arith.addf %190, %192 : vector<2x1024xf32>
    %194 = arith.addf %193, %65 : vector<2x1024xf32>
    %cst_131 = arith.constant 0.000000e+00 : f32
    %195 = vector.broadcast %cst_131 : f32 to vector<2x1024xf32>
    %196 = arith.maximumf %194, %195 : vector<2x1024xf32>
    %c0_132 = arith.constant 0 : index
    %c0_133 = arith.constant 0 : index
    %c0_134 = arith.constant 0 : index
    %197 = vector.load %arg9[%c0_132, %c0_133, %c0_134] : memref<1x2x1024xf32, #tpu.memory_space<vmem>>, vector<1x2x1024xf32>
    %198 = vector.shape_cast %197 : vector<1x2x1024xf32> to vector<2x1024xf32>
    %199 = vector.shape_cast %196 : vector<2x1024xf32> to vector<1x2x1024xf32>
    tpu.vector_store %arg9[%c0_132, %c0_133, %c0_134], %199 {strides = array<i32>} : memref<1x2x1024xf32, #tpu.memory_space<vmem>>, vector<1x2x1024xf32>,
    return
  }
  func.func @transform_0(%arg0: i32) -> (i32, i32, i32) {
    %c0_i32 = arith.constant 0 : i32
    %c0_i32_0 = arith.constant 0 : i32
    %c0_i32_1 = arith.constant 0 : i32
    %c0_i32_2 = arith.constant 0 : i32
    return %c0_i32, %c0_i32_0, %c0_i32_1 : i32, i32, i32
  }
  func.func @transform_1(%arg0: i32) -> (i32, i32, i32) {
    %c0_i32 = arith.constant 0 : i32
    %c0_i32_0 = arith.constant 0 : i32
    %c0_i32_1 = arith.constant 0 : i32
    %c0_i32_2 = arith.constant 0 : i32
    return %c0_i32, %c0_i32_0, %c0_i32_1 : i32, i32, i32
  }
  func.func @transform_2(%arg0: i32) -> (i32, i32, i32) {
    %c0_i32 = arith.constant 0 : i32
    %c0_i32_0 = arith.constant 0 : i32
    %c0_i32_1 = arith.constant 0 : i32
    %c0_i32_2 = arith.constant 0 : i32
    return %c0_i32, %c0_i32_0, %c0_i32_1 : i32, i32, i32
  }
  func.func @transform_3(%arg0: i32) -> (i32, i32) {
    %c0_i32 = arith.constant 0 : i32
    %c0_i32_0 = arith.constant 0 : i32
    %c0_i32_1 = arith.constant 0 : i32
    return %c0_i32, %c0_i32_0 : i32, i32
  }
  func.func @transform_4(%arg0: i32) -> (i32, i32) {
    %c0_i32 = arith.constant 0 : i32
    %c0_i32_0 = arith.constant 0 : i32
    %c0_i32_1 = arith.constant 0 : i32
    return %c0_i32, %c0_i32_0 : i32, i32
  }
  func.func @transform_5(%arg0: i32) -> (i32, i32) {
    %c0_i32 = arith.constant 0 : i32
    %c0_i32_0 = arith.constant 0 : i32
    %c0_i32_1 = arith.constant 0 : i32
    return %c0_i32, %c0_i32_0 : i32, i32
  }
  func.func @transform_6(%arg0: i32) -> (i32, i32) {
    %c0_i32 = arith.constant 0 : i32
    %c0_i32_0 = arith.constant 0 : i32
    %c0_i32_1 = arith.constant 0 : i32
    return %c0_i32, %c0_i32_0 : i32, i32
  }
  func.func @transform_7(%arg0: i32) -> (i32, i32, i32) {
    %c0_i32 = arith.constant 0 : i32
    %c0_i32_0 = arith.constant 0 : i32
    %c0_i32_1 = arith.constant 0 : i32
    return %arg0, %c0_i32, %c0_i32_0 : i32, i32, i32
  }
  func.func @transform_8(%arg0: i32) -> (i32, i32, i32) {
    %c0_i32 = arith.constant 0 : i32
    %c0_i32_0 = arith.constant 0 : i32
    %c0_i32_1 = arith.constant 0 : i32
    return %arg0, %c0_i32, %c0_i32_0 : i32, i32, i32
  }
}

</mosaic_0001>

<llo_original>
// kernel: resnet_up_forward.2
$region0: #{resnet_up_forward.2}
  #allocation0 [shape = 'u32[]', space=smem, size = 0x4, offset = 0x4, fixed_abs, tag = 'smem constant byte address 0x4 - core index']
  #allocation1 [shape = 'u32[144,128]{1,0:T(1,128)}', space=vmem, size = 0x12000, scoped, tag = 'internal scratch']
  %s0 = inlined_call_operand.vmem [shape: f32[32,16], index: 0, kind: input, shape index: {}]
  %s1 = inlined_call_operand.vmem [shape: f32[16,32], index: 1, kind: input, shape index: {}]
  %s2 = inlined_call_operand.hbm [shape: f32[2,4,16,16], index: 2, kind: input, shape index: {}]
  %s3 = inlined_call_operand.vmem [shape: f32[2,4,32,32], index: 3, kind: output, shape index: {}]
  %s4 = sld [smem:[#allocation0]]
  $region49: #{resnet_up_forward.2} parent=0
    _
  %s6 = ssub.s32 1, %s4
  %s7 = scalar_select 0, %s6, %s4
  $region1: #{resnet_up_forward.2} parent=0
    #allocation2 [shape = 'u8[65536]{0}', space=vmem, size = 0x10000, scoped, tag = 'input window, operand 2']
    #allocation3 [shape = 's32[2]{0}', space=sflag, size = 0x8, scoped, tag = 'scoped memory for resnet_up_forward.2']
    %8 = vsyncpa [#allocation3], 0
    %s9 = scalar_lea.sflag [#allocation3], 1
    %10 = vsyncpa %s9, 0
    loop: start=0, step=1, limit=4
    $region2: #{resnet_up_forward.2} parent=1 // loop_pre_header
      _
    $region3: #{resnet_up_forward.2} parent=1 // loop_header
      %s12 = sphi 0, %s16
      %p13 = scmp.ge.s32.totalorder %s12, 4
      %s20 = sphi 0, %s20
      %s22 = sphi 0, %s20
      %s23 = sphi 0, %s22
      %s37 = sphi 0, %s23
      %s41 = sphi 0, %s41
      %s43 = sphi 0, %s41
      %s44 = sphi 0, %s43
      %s58 = sphi 0, %s44
      %s64 = sphi 0, %s66
      %s67 = sphi 0, %s64
      %s68 = sphi 0, %s67
      %s84 = sphi 0, %s68
      %s90 = sphi 0, %s92
      %s93 = sphi 0, %s90
      %s94 = sphi 0, %s93
      %s110 = sphi 0, %s94
    $region4: #{resnet_up_forward.2} parent=1 // loop_header_branch
      %15 = sbr.rel (%p13) target = $region8
    $region5: #{resnet_up_forward.2} parent=1 // loop_body
      %s17 = ssub.s32 %s12, 1
      %s18 = ssub.s32 %s12, 2
      %s19 = sadd.s32 %s12, 1
      %s21 = sadd.s32 %s20, 1
      %p24 = scmp.eq.s32.totalorder %s12, 1
      %p25 = scmp.ne.s32.totalorder %s20, %s22
      %p26 = scmp.eq.s32.totalorder %s12, 0
      %p27 = por %p25, %p26
      %p28 = scmp.ne.s32.totalorder %s20, %s22
      %p29 = scmp.eq.s32.totalorder %s17, 1
      %p30 = por %p28, %p29
      %p31 = scmp.ne.s32.totalorder %s22, %s23
      %p32 = scmp.eq.s32.totalorder %s17, 0
      %p33 = por %p31, %p32
      %p34 = scmp.ne.s32.totalorder %s22, %s23
      %p35 = scmp.eq.s32.totalorder %s18, 1
      %p36 = por %p34, %p35
      %p38 = scmp.ne.s32.totalorder %s23, %s37
      %p39 = scmp.eq.s32.totalorder %s18, 0
      %p40 = por %p38, %p39
      %s42 = sadd.s32 %s41, 1
      %p45 = scmp.eq.s32.totalorder %s12, 1
      %p46 = scmp.ne.s32.totalorder %s41, %s43
      %p47 = scmp.eq.s32.totalorder %s12, 0
      %p48 = por %p46, %p47
      %p49 = scmp.ne.s32.totalorder %s41, %s43
      %p50 = scmp.eq.s32.totalorder %s17, 1
      %p51 = por %p49, %p50
      %p52 = scmp.ne.s32.totalorder %s43, %s44
      %p53 = scmp.eq.s32.totalorder %s17, 0
      %p54 = por %p52, %p53
      %p55 = scmp.ne.s32.totalorder %s43, %s44
      %p56 = scmp.eq.s32.totalorder %s18, 1
      %p57 = por %p55, %p56
      %p59 = scmp.ne.s32.totalorder %s44, %s58
      %p60 = scmp.eq.s32.totalorder %s18, 0
      %p61 = por %p59, %p60
      %s62 = ssub.s32 %s12, %s19
      %p63 = scmp.eq.s32.totalorder %s62, 0
      %s65 = sadd.s32 %s64, 1
      %s66 = scalar_select %p63, %s64, %s65
      %p69 = pneg %p63
      %p70 = scmp.eq.s32.totalorder %s12, 1
      %p71 = por %p69, %p70
      %p72 = scmp.ne.s32.totalorder %s64, %s67
      %p73 = scmp.eq.s32.totalorder %s12, 0
      %p74 = por %p72, %p73
      %p75 = scmp.ne.s32.totalorder %s64, %s67
      %p76 = scmp.eq.s32.totalorder %s17, 1
      %p77 = por %p75, %p76
      %p78 = scmp.ne.s32.totalorder %s67, %s68
      %p79 = scmp.eq.s32.totalorder %s17, 0
      %p80 = por %p78, %p79
      %p81 = scmp.ne.s32.totalorder %s67, %s68
      %p82 = scmp.eq.s32.totalorder %s18, 1
      %p83 = por %p81, %p82
      %p85 = scmp.ne.s32.totalorder %s68, %s84
      %p86 = scmp.eq.s32.totalorder %s18, 0
      %p87 = por %p85, %p86
      %s88 = ssub.s32 %s12, %s19
      %p89 = scmp.eq.s32.totalorder %s88, 0
      %s91 = sadd.s32 %s90, 1
      %s92 = scalar_select %p89, %s90, %s91
      %p95 = pneg %p89
      %p96 = scmp.eq.s32.totalorder %s12, 1
      %p97 = por %p95, %p96
      %p98 = scmp.ne.s32.totalorder %s90, %s93
      %p99 = scmp.eq.s32.totalorder %s12, 0
      %p100 = por %p98, %p99
      %p101 = scmp.ne.s32.totalorder %s90, %s93
      %p102 = scmp.eq.s32.totalorder %s17, 1
      %p103 = por %p101, %p102
      %p104 = scmp.ne.s32.totalorder %s93, %s94
      %p105 = scmp.eq.s32.totalorder %s17, 0
      %p106 = por %p104, %p105
      %p107 = scmp.ne.s32.totalorder %s93, %s94
      %p108 = scmp.eq.s32.totalorder %s18, 1
      %p109 = por %p107, %p108
      %p111 = scmp.ne.s32.totalorder %s94, %s110
      %p112 = scmp.eq.s32.totalorder %s18, 0
      %p113 = por %p111, %p112
      %p114 = scmp.le.s32.totalorder 1, %s12
      %p115 = scmp.lt.s32.totalorder %s12, 3
      %p116 = pnand %p114, %p115
      %p117 = pneg %p116
      // Predicated region
      $region9: #{resnet_up_forward.2} parent=5 // pred_check
        _
      $region10: #{resnet_up_forward.2} parent=5 // pred_check_branch
        %119 = sbr.rel (%p116) target = $region12
      $region11: #{resnet_up_forward.2} parent=5 // pred_region
        %s120 = ssub.s32 %s12, 1
        // Predicated region
        $region13: #{resnet_up_forward.2} parent=11 // pred_check
          %p121 = pneg %p33
        $region14: #{resnet_up_forward.2} parent=11 // pred_check_branch
          %123 = sbr.rel (%p121) target = $region16
        $region15: #{resnet_up_forward.2} parent=11 // pred_region
          _
        $region16: #{resnet_up_forward.2} parent=11 // pred_fallthru
          _
        // Predicated region
        $region17: #{resnet_up_forward.2} parent=11 // pred_check
          %p124 = pneg %p54
        $region18: #{resnet_up_forward.2} parent=11 // pred_check_branch
          %126 = sbr.rel (%p124) target = $region20
        $region19: #{resnet_up_forward.2} parent=11 // pred_region
          _
        $region20: #{resnet_up_forward.2} parent=11 // pred_fallthru
          _
      $region12: #{resnet_up_forward.2} parent=5 // pred_fallthru
        _
      %p127 = scmp.lt.s32.totalorder %s12, 2
      // Predicated region
      $region21: #{resnet_up_forward.2} parent=5 // pred_check
        %p128 = pneg %p127
      $region22: #{resnet_up_forward.2} parent=5 // pred_check_branch
        %130 = sbr.rel (%p128) target = $region24
      $region23: #{resnet_up_forward.2} parent=5 // pred_region
        // Predicated region
        $region25: #{resnet_up_forward.2} parent=23 // pred_check
          %p131 = pneg %p74
        $region26: #{resnet_up_forward.2} parent=23 // pred_check_branch
          %133 = sbr.rel (%p131) target = $region28
        $region27: #{resnet_up_forward.2} parent=23 // pred_region
          %s134 = sand.u32 %s64, 1
          %s135 = scalar_lea.sflag [#allocation3], %s134
          %s136 = sand.u32 %s64, 1
          %s137 = smul.addr %s136, 64
          %s138 = scalar_lea.vmem [#allocation2], %s137
          %s140 = ssub.s32 1024, 1024
          %141 = vsyncadd %s135, %s140
          %s142 = smul.addr %s12, 8
          %s143 = smul.addr %s142, 128
          %s144 = scalar_lea.hbm %s2, %s143
          %s145 = sshll.u32 %s138, 4
          %s146 = int_to_ptr.vmem [resolvable:$true] %s145
          %151 = dma.hbm_to_vmem [thread:$0]  %s144, 1024, %s146, %s135, 128, 128, 8
        $region28: #{resnet_up_forward.2} parent=23 // pred_fallthru
          _
      $region24: #{resnet_up_forward.2} parent=5 // pred_fallthru
        _
      %p152 = scmp.le.s32.totalorder 1, %s12
      %p153 = scmp.lt.s32.totalorder %s12, 3
      %p154 = pnand %p152, %p153
      %p155 = pneg %p154
      // Predicated region
      $region29: #{resnet_up_forward.2} parent=5 // pred_check
        _
      $region30: #{resnet_up_forward.2} parent=5 // pred_check_branch
        %157 = sbr.rel (%p154) target = $region32
      $region31: #{resnet_up_forward.2} parent=5 // pred_region
        %s158 = ssub.s32 %s12, 1
        %s159 = sand.u32 %s67, 1
        %s160 = scalar_lea.sflag [#allocation3], %s159
        %s161 = sand.u32 %s67, 1
        %s162 = smul.addr %s161, 64
        %s163 = scalar_lea.vmem [#allocation2], %s162
        // Predicated region
        $region33: #{resnet_up_forward.2} parent=31 // pred_check
          %p164 = pneg %p80
        $region34: #{resnet_up_forward.2} parent=31 // pred_check_branch
          %166 = sbr.rel (%p164) target = $region36
        $region35: #{resnet_up_forward.2} parent=31 // pred_region
          %167 = dma.done %s160, 1024
        $region36: #{resnet_up_forward.2} parent=31 // pred_fallthru
          _
        %p168 = pneg %p33
        %p169 = pneg %p30
        %p170 = pneg %p54
        %p171 = pneg %p51
        %s172 = sand.u32 %s67, 1
        %s173 = scalar_lea.sflag [#allocation3], %s172
        %s174 = sand.u32 %s67, 1
        %s175 = smul.addr %s174, 64
        %s176 = scalar_lea.vmem [#allocation2], %s175
        %p177 = pneg %p80
        %p178 = pneg %p77
        %p179 = pneg %p106
        %p180 = pneg %p103
        %p181 = scmp.lt.s32.totalorder %s17, 1
        %s182 = scalar_select %p181, %s17, 1
        %s183 = smul.addr %s182, 16
        %s184 = smul.addr %s183, 8
        %s185 = scalar_lea.vmem %s3, %s184
        %p186 = scmp.lt.s32.totalorder %s17, 1
        %s187 = scalar_select %p186, %s17, 1
        %s188 = smul.addr %s187, 16
        %s189 = smul.addr %s188, 8
        %s190 = scalar_lea.vmem %s3, %s189
        %v191 = vld [vmem:[%s0] sm:$0xff]
        %v192 = vld [vmem:[%s0 + $0x8] sm:$0xff]
        %v193 = vld [vmem:[%s0 + $0x10] sm:$0xff]
        %v194 = vld [vmem:[%s0 + $0x18] sm:$0xff]
        %v195 = vld [vmem:[%s163] sm:$0xff]
        %v196 = vld [vmem:[%s163 + $0x8] sm:$0xff]
        %vm197 = vcmask 130048
        %v199 = vsel %vm197, %v191, 0
        %v202 = vsel %vm197, %v192, 0
        %v205 = vsel %vm197, %v193, 0
        %v208 = vsel %vm197, %v194, 0
        %210 = vmatprep.subr.mxu0 0.0
        %211 = vmatpush1.msra.mxu0 %v195
        %212 = vmatprep.subr.mxu0 0.0
        %213 = vmatpush1.msra.mxu0 %v196
        %214 = vmatprep.subr.mxu0 0.0
        %215 = vmatpush1.msra.mxu0 0.0
        %216 = vmatprep.subr.mxu0 0.0
        %217 = vmatpush1.msra.mxu0 0.0
        %218 = vmatprep.subr.mxu0 0.0
        %219 = vmatpush1.msra.mxu0 0.0
        %220 = vmatprep.subr.mxu0 0.0
        %221 = vmatpush1.msra.mxu0 0.0
        %222 = vmatprep.subr.mxu0 0.0
        %223 = vmatpush1.msra.mxu0 0.0
        %224 = vmatprep.subr.mxu0 0.0
        %225 = vmatpush1.msra.mxu0 0.0
        %226 = vmatprep.subr.mxu0 0.0
        %227 = vmatpush1.msra.mxu0 0.0
        %228 = vmatprep.subr.mxu0 0.0
        %229 = vmatpush1.msra.mxu0 0.0
        %230 = vmatprep.subr.mxu0 0.0
        %231 = vmatpush1.msra.mxu0 0.0
        %232 = vmatprep.subr.mxu0 0.0
        %233 = vmatpush1.msra.mxu0 0.0
        %234 = vmatprep.subr.mxu0 0.0
        %235 = vmatpush1.msra.mxu0 0.0
        %236 = vmatprep.subr.mxu0 0.0
        %237 = vmatpush1.msra.mxu0 0.0
        %238 = vmatprep.subr.mxu0 0.0
        %239 = vmatpush1.msra.mxu0 0.0
        %240 = vmatprep.subr.mxu0 0.0
        %241 = vmatpush1.msra.mxu0 0.0
        %242 = vmatprep.subr.mxu0 0.0
        %243 = vmatpush1.msra.mxu0 0.0
        %244 = vmatprep.subr.mxu0 0.0
        %245 = vmatpush1.msra.mxu0 0.0
        %246 = vmatprep.subr.mxu0 0.0
        %247 = vmatpush1.msra.mxu0 0.0
        %248 = vmatprep.subr.mxu0 0.0
        %249 = vmatpush1.msra.mxu0 0.0
        %250 = vmatprep.subr.mxu0 0.0
        %251 = vmatpush1.msra.mxu0 0.0
        %252 = vmatprep.subr.mxu0 0.0
        %253 = vmatpush1.msra.mxu0 0.0
        %254 = vmatprep.subr.mxu0 0.0
        %255 = vmatpush1.msra.mxu0 0.0
        %256 = vmatprep.subr.mxu0 0.0
        %257 = vmatpush1.msra.mxu0 0.0
        %258 = vmatprep.subr.mxu0 0.0
        %259 = vmatpush1.msra.mxu0 0.0
        %260 = vmatprep.subr.mxu0 0.0
        %261 = vmatpush1.msra.mxu0 0.0
        %262 = vmatprep.subr.mxu0 0.0
        %263 = vmatpush1.msra.mxu0 0.0
        %264 = vmatprep.subr.mxu0 0.0
        %265 = vmatpush1.msra.mxu0 0.0
        %266 = vmatprep.subr.mxu0 0.0
        %267 = vmatpush1.msra.mxu0 0.0
        %268 = vmatprep.subr.mxu0 0.0
        %269 = vmatpush1.msra.mxu0 0.0
        %270 = vmatprep.subr.mxu0 0.0
        %271 = vmatpush1.msra.mxu0 0.0
        %272 = vmatprep.subr.mxu0 0.0
        %273 = vmatpush1.msra.mxu0 0.0
        %274 = vmatprep.mubr.f32.mxu0 0.0
        %275 = vmatmul.mubr.f32.gmra.mrb[0].mxu0 %v199
        %v276 = vpop.f32.mrb[0].mxu0
        %v277 = vadd.f32 0.0, %v276
        %v278 = vpop.f32.mrb[0].mxu0
        %279 = vmatprep.mubr.f32.mxu0 0.0
        %280 = vmatmul.mubr.f32.gmra.mrb[0].mxu0 %v202
        %v281 = vpop.f32.mrb[0].mxu0
        %v282 = vadd.f32 0.0, %v281
        %v283 = vpop.f32.mrb[0].mxu0
        %284 = vmatprep.mubr.f32.mxu0 0.0
        %285 = vmatmul.mubr.f32.gmra.mrb[0].mxu0 %v205
        %v286 = vpop.f32.mrb[0].mxu0
        %v287 = vadd.f32 0.0, %v286
        %v288 = vpop.f32.mrb[0].mxu0
        %289 = vmatprep.mubr.f32.mxu0 0.0
        %290 = vmatmul.mubr.f32.gmra.mrb[0].mxu0 %v208
        %v291 = vpop.f32.mrb[0].mxu0
        %v292 = vadd.f32 0.0, %v291
        %v293 = vpop.f32.mrb[0].mxu0
        %294 = vdwg.mxu0
        %v295 = vld [vmem:[%s1] sm:$0xff]
        %v296 = vld [vmem:[%s1 + $0x8] sm:$0xff]
        %v298 = vsel %vm197, %v277, 0
        %v301 = vsel %vm197, %v282, 0
        %v304 = vsel %vm197, %v287, 0
        %v307 = vsel %vm197, %v292, 0
        %309 = vmatprep.subr.mxu0 0.0
        %310 = vmatpush1.msra.mxu0 %v295
        %311 = vmatprep.subr.mxu0 0.0
        %312 = vmatpush1.msra.mxu0 %v296
        %313 = vmatprep.subr.mxu0 0.0
        %314 = vmatpush1.msra.mxu0 0.0
        %315 = vmatprep.subr.mxu0 0.0
        %316 = vmatpush1.msra.mxu0 0.0
        %317 = vmatprep.subr.mxu0 0.0
        %318 = vmatpush1.msra.mxu0 0.0
        %319 = vmatprep.subr.mxu0 0.0
        %320 = vmatpush1.msra.mxu0 0.0
        %321 = vmatprep.subr.mxu0 0.0
        %322 = vmatpush1.msra.mxu0 0.0
        %323 = vmatprep.subr.mxu0 0.0
        %324 = vmatpush1.msra.mxu0 0.0
        %325 = vmatprep.subr.mxu0 0.0
        %326 = vmatpush1.msra.mxu0 0.0
        %327 = vmatprep.subr.mxu0 0.0
        %328 = vmatpush1.msra.mxu0 0.0
        %329 = vmatprep.subr.mxu0 0.0
        %330 = vmatpush1.msra.mxu0 0.0
        %331 = vmatprep.subr.mxu0 0.0
        %332 = vmatpush1.msra.mxu0 0.0
        %333 = vmatprep.subr.mxu0 0.0
        %334 = vmatpush1.msra.mxu0 0.0
        %335 = vmatprep.subr.mxu0 0.0
        %336 = vmatpush1.msra.mxu0 0.0
        %337 = vmatprep.subr.mxu0 0.0
        %338 = vmatpush1.msra.mxu0 0.0
        %339 = vmatprep.subr.mxu0 0.0
        %340 = vmatpush1.msra.mxu0 0.0
        %341 = vmatprep.subr.mxu0 0.0
        %342 = vmatpush1.msra.mxu0 0.0
        %343 = vmatprep.subr.mxu0 0.0
        %344 = vmatpush1.msra.mxu0 0.0
        %345 = vmatprep.subr.mxu0 0.0
        %346 = vmatpush1.msra.mxu0 0.0
        %347 = vmatprep.subr.mxu0 0.0
        %348 = vmatpush1.msra.mxu0 0.0
        %349 = vmatprep.subr.mxu0 0.0
        %350 = vmatpush1.msra.mxu0 0.0
        %351 = vmatprep.subr.mxu0 0.0
        %352 = vmatpush1.msra.mxu0 0.0
        %353 = vmatprep.subr.mxu0 0.0
        %354 = vmatpush1.msra.mxu0 0.0
        %355 = vmatprep.subr.mxu0 0.0
        %356 = vmatpush1.msra.mxu0 0.0
        %357 = vmatprep.subr.mxu0 0.0
        %358 = vmatpush1.msra.mxu0 0.0
        %359 = vmatprep.subr.mxu0 0.0
        %360 = vmatpush1.msra.mxu0 0.0
        %361 = vmatprep.subr.mxu0 0.0
        %362 = vmatpush1.msra.mxu0 0.0
        %363 = vmatprep.subr.mxu0 0.0
        %364 = vmatpush1.msra.mxu0 0.0
        %365 = vmatprep.subr.mxu0 0.0
        %366 = vmatpush1.msra.mxu0 0.0
        %367 = vmatprep.subr.mxu0 0.0
        %368 = vmatpush1.msra.mxu0 0.0
        %369 = vmatprep.subr.mxu0 0.0
        %370 = vmatpush1.msra.mxu0 0.0
        %371 = vmatprep.subr.mxu0 0.0
        %372 = vmatpush1.msra.mxu0 0.0
        %373 = vmatprep.mubr.f32.mxu0 0.0
        %374 = vmatmul.mubr.f32.gmra.mrb[0].mxu0 %v298
        %v375 = vpop.f32.mrb[0].mxu0
        %v376 = vadd.f32 0.0, %v375
        %v377 = vpop.f32.mrb[0].mxu0
        %378 = vmatprep.mubr.f32.mxu0 0.0
        %379 = vmatmul.mubr.f32.gmra.mrb[0].mxu0 %v301
        %v380 = vpop.f32.mrb[0].mxu0
        %v381 = vadd.f32 0.0, %v380
        %v382 = vpop.f32.mrb[0].mxu0
        %383 = vmatprep.mubr.f32.mxu0 0.0
        %384 = vmatmul.mubr.f32.gmra.mrb[0].mxu0 %v304
        %v385 = vpop.f32.mrb[0].mxu0
        %v386 = vadd.f32 0.0, %v385
        %v387 = vpop.f32.mrb[0].mxu0
        %388 = vmatprep.mubr.f32.mxu0 0.0
        %389 = vmatmul.mubr.f32.gmra.mrb[0].mxu0 %v307
        %v390 = vpop.f32.mrb[0].mxu0
        %v391 = vadd.f32 0.0, %v390
        %v392 = vpop.f32.mrb[0].mxu0
        %393 = vdwg.mxu0
        %vm394 = vcmask 261120
        %395 = vst.msk [vmem:[%s190] sm:$0xff] %vm394, %v376
        %396 = vst.msk [vmem:[%s190 + $0x8] sm:$0xff] %vm394, %v381
        %397 = vst.msk [vmem:[%s190 + $0x10] sm:$0xff] %vm394, %v386
        %398 = vst.msk [vmem:[%s190 + $0x18] sm:$0xff] %vm394, %v391
        %v399 = vld [vmem:[%s0] sm:$0xff]
        %v400 = vld [vmem:[%s0 + $0x8] sm:$0xff]
        %v401 = vld [vmem:[%s0 + $0x10] sm:$0xff]
        %v402 = vld [vmem:[%s0 + $0x18] sm:$0xff]
        %s403 = scalar_lea.vmem %s163, 16 [#allocation2]
        %v404 = vld [vmem:[%s403] sm:$0xff]
        %v405 = vld [vmem:[%s403 + $0x8] sm:$0xff]
        %v407 = vsel %vm197, %v399, 0
        %v410 = vsel %vm197, %v400, 0
        %v413 = vsel %vm197, %v401, 0
        %v416 = vsel %vm197, %v402, 0
        %418 = vmatprep.subr.mxu0 0.0
        %419 = vmatpush1.msra.mxu0 %v404
        %420 = vmatprep.subr.mxu0 0.0
        %421 = vmatpush1.msra.mxu0 %v405
        %422 = vmatprep.subr.mxu0 0.0
        %423 = vmatpush1.msra.mxu0 0.0
        %424 = vmatprep.subr.mxu0 0.0
        %425 = vmatpush1.msra.mxu0 0.0
        %426 = vmatprep.subr.mxu0 0.0
        %427 = vmatpush1.msra.mxu0 0.0
        %428 = vmatprep.subr.mxu0 0.0
        %429 = vmatpush1.msra.mxu0 0.0
        %430 = vmatprep.subr.mxu0 0.0
        %431 = vmatpush1.msra.mxu0 0.0
        %432 = vmatprep.subr.mxu0 0.0
        %433 = vmatpush1.msra.mxu0 0.0
        %434 = vmatprep.subr.mxu0 0.0
        %435 = vmatpush1.msra.mxu0 0.0
        %436 = vmatprep.subr.mxu0 0.0
        %437 = vmatpush1.msra.mxu0 0.0
        %438 = vmatprep.subr.mxu0 0.0
        %439 = vmatpush1.msra.mxu0 0.0
        %440 = vmatprep.subr.mxu0 0.0
        %441 = vmatpush1.msra.mxu0 0.0
        %442 = vmatprep.subr.mxu0 0.0
        %443 = vmatpush1.msra.mxu0 0.0
        %444 = vmatprep.subr.mxu0 0.0
        %445 = vmatpush1.msra.mxu0 0.0
        %446 = vmatprep.subr.mxu0 0.0
        %447 = vmatpush1.msra.mxu0 0.0
        %448 = vmatprep.subr.mxu0 0.0
        %449 = vmatpush1.msra.mxu0 0.0
        %450 = vmatprep.subr.mxu0 0.0
        %451 = vmatpush1.msra.mxu0 0.0
        %452 = vmatprep.subr.mxu0 0.0
        %453 = vmatpush1.msra.mxu0 0.0
        %454 = vmatprep.subr.mxu0 0.0
        %455 = vmatpush1.msra.mxu0 0.0
        %456 = vmatprep.subr.mxu0 0.0
        %457 = vmatpush1.msra.mxu0 0.0
        %458 = vmatprep.subr.mxu0 0.0
        %459 = vmatpush1.msra.mxu0 0.0
        %460 = vmatprep.subr.mxu0 0.0
        %461 = vmatpush1.msra.mxu0 0.0
        %462 = vmatprep.subr.mxu0 0.0
        %463 = vmatpush1.msra.mxu0 0.0
        %464 = vmatprep.subr.mxu0 0.0
        %465 = vmatpush1.msra.mxu0 0.0
        %466 = vmatprep.subr.mxu0 0.0
        %467 = vmatpush1.msra.mxu0 0.0
        %468 = vmatprep.subr.mxu0 0.0
        %469 = vmatpush1.msra.mxu0 0.0
        %470 = vmatprep.subr.mxu0 0.0
        %471 = vmatpush1.msra.mxu0 0.0
        %472 = vmatprep.subr.mxu0 0.0
        %473 = vmatpush1.msra.mxu0 0.0
        %474 = vmatprep.subr.mxu0 0.0
        %475 = vmatpush1.msra.mxu0 0.0
        %476 = vmatprep.subr.mxu0 0.0
        %477 = vmatpush1.msra.mxu0 0.0
        %478 = vmatprep.subr.mxu0 0.0
        %479 = vmatpush1.msra.mxu0 0.0
        %480 = vmatprep.subr.mxu0 0.0
        %481 = vmatpush1.msra.mxu0 0.0
        %482 = vmatprep.mubr.f32.mxu0 0.0
        %483 = vmatmul.mubr.f32.gmra.mrb[0].mxu0 %v407
        %v484 = vpop.f32.mrb[0].mxu0
        %v485 = vadd.f32 0.0, %v484
        %v486 = vpop.f32.mrb[0].mxu0
        %487 = vmatprep.mubr.f32.mxu0 0.0
        %488 = vmatmul.mubr.f32.gmra.mrb[0].mxu0 %v410
        %v489 = vpop.f32.mrb[0].mxu0
        %v490 = vadd.f32 0.0, %v489
        %v491 = vpop.f32.mrb[0].mxu0
        %492 = vmatprep.mubr.f32.mxu0 0.0
        %493 = vmatmul.mubr.f32.gmra.mrb[0].mxu0 %v413
        %v494 = vpop.f32.mrb[0].mxu0
        %v495 = vadd.f32 0.0, %v494
        %v496 = vpop.f32.mrb[0].mxu0
        %497 = vmatprep.mubr.f32.mxu0 0.0
        %498 = vmatmul.mubr.f32.gmra.mrb[0].mxu0 %v416
        %v499 = vpop.f32.mrb[0].mxu0
        %v500 = vadd.f32 0.0, %v499
        %v501 = vpop.f32.mrb[0].mxu0
        %502 = vdwg.mxu0
        %v503 = vld [vmem:[%s1] sm:$0xff]
        %v504 = vld [vmem:[%s1 + $0x8] sm:$0xff]
        %v506 = vsel %vm197, %v485, 0
        %v509 = vsel %vm197, %v490, 0
        %v512 = vsel %vm197, %v495, 0
        %v515 = vsel %vm197, %v500, 0
        %517 = vmatprep.subr.mxu0 0.0
        %518 = vmatpush1.msra.mxu0 %v503
        %519 = vmatprep.subr.mxu0 0.0
        %520 = vmatpush1.msra.mxu0 %v504
        %521 = vmatprep.subr.mxu0 0.0
        %522 = vmatpush1.msra.mxu0 0.0
        %523 = vmatprep.subr.mxu0 0.0
        %524 = vmatpush1.msra.mxu0 0.0
        %525 = vmatprep.subr.mxu0 0.0
        %526 = vmatpush1.msra.mxu0 0.0
        %527 = vmatprep.subr.mxu0 0.0
        %528 = vmatpush1.msra.mxu0 0.0
        %529 = vmatprep.subr.mxu0 0.0
        %530 = vmatpush1.msra.mxu0 0.0
        %531 = vmatprep.subr.mxu0 0.0
        %532 = vmatpush1.msra.mxu0 0.0
        %533 = vmatprep.subr.mxu0 0.0
        %534 = vmatpush1.msra.mxu0 0.0
        %535 = vmatprep.subr.mxu0 0.0
        %536 = vmatpush1.msra.mxu0 0.0
        %537 = vmatprep.subr.mxu0 0.0
        %538 = vmatpush1.msra.mxu0 0.0
        %539 = vmatprep.subr.mxu0 0.0
        %540 = vmatpush1.msra.mxu0 0.0
        %541 = vmatprep.subr.mxu0 0.0
        %542 = vmatpush1.msra.mxu0 0.0
        %543 = vmatprep.subr.mxu0 0.0
        %544 = vmatpush1.msra.mxu0 0.0
        %545 = vmatprep.subr.mxu0 0.0
        %546 = vmatpush1.msra.mxu0 0.0
        %547 = vmatprep.subr.mxu0 0.0
        %548 = vmatpush1.msra.mxu0 0.0
        %549 = vmatprep.subr.mxu0 0.0
        %550 = vmatpush1.msra.mxu0 0.0
        %551 = vmatprep.subr.mxu0 0.0
        %552 = vmatpush1.msra.mxu0 0.0
        %553 = vmatprep.subr.mxu0 0.0
        %554 = vmatpush1.msra.mxu0 0.0
        %555 = vmatprep.subr.mxu0 0.0
        %556 = vmatpush1.msra.mxu0 0.0
        %557 = vmatprep.subr.mxu0 0.0
        %558 = vmatpush1.msra.mxu0 0.0
        %559 = vmatprep.subr.mxu0 0.0
        %560 = vmatpush1.msra.mxu0 0.0
        %561 = vmatprep.subr.mxu0 0.0
        %562 = vmatpush1.msra.mxu0 0.0
        %563 = vmatprep.subr.mxu0 0.0
        %564 = vmatpush1.msra.mxu0 0.0
        %565 = vmatprep.subr.mxu0 0.0
        %566 = vmatpush1.msra.mxu0 0.0
        %567 = vmatprep.subr.mxu0 0.0
        %568 = vmatpush1.msra.mxu0 0.0
        %569 = vmatprep.subr.mxu0 0.0
        %570 = vmatpush1.msra.mxu0 0.0
        %571 = vmatprep.subr.mxu0 0.0
        %572 = vmatpush1.msra.mxu0 0.0
        %573 = vmatprep.subr.mxu0 0.0
        %574 = vmatpush1.msra.mxu0 0.0
        %575 = vmatprep.subr.mxu0 0.0
        %576 = vmatpush1.msra.mxu0 0.0
        %577 = vmatprep.subr.mxu0 0.0
        %578 = vmatpush1.msra.mxu0 0.0
        %579 = vmatprep.subr.mxu0 0.0
        %580 = vmatpush1.msra.mxu0 0.0
        %581 = vmatprep.mubr.f32.mxu0 0.0
        %582 = vmatmul.mubr.f32.gmra.mrb[0].mxu0 %v506
        %v583 = vpop.f32.mrb[0].mxu0
        %v584 = vadd.f32 0.0, %v583
        %v585 = vpop.f32.mrb[0].mxu0
        %586 = vmatprep.mubr.f32.mxu0 0.0
        %587 = vmatmul.mubr.f32.gmra.mrb[0].mxu0 %v509
        %v588 = vpop.f32.mrb[0].mxu0
        %v589 = vadd.f32 0.0, %v588
        %v590 = vpop.f32.mrb[0].mxu0
        %591 = vmatprep.mubr.f32.mxu0 0.0
        %592 = vmatmul.mubr.f32.gmra.mrb[0].mxu0 %v512
        %v593 = vpop.f32.mrb[0].mxu0
        %v594 = vadd.f32 0.0, %v593
        %v595 = vpop.f32.mrb[0].mxu0
        %596 = vmatprep.mubr.f32.mxu0 0.0
        %597 = vmatmul.mubr.f32.gmra.mrb[0].mxu0 %v515
        %v598 = vpop.f32.mrb[0].mxu0
        %v599 = vadd.f32 0.0, %v598
        %v600 = vpop.f32.mrb[0].mxu0
        %601 = vdwg.mxu0
        %s602 = scalar_lea.vmem %s190, 32
        %603 = vst.msk [vmem:[%s602] sm:$0xff] %vm394, %v584
        %604 = vst.msk [vmem:[%s602 + $0x8] sm:$0xff] %vm394, %v589
        %605 = vst.msk [vmem:[%s602 + $0x10] sm:$0xff] %vm394, %v594
        %606 = vst.msk [vmem:[%s602 + $0x18] sm:$0xff] %vm394, %v599
        %v607 = vld [vmem:[%s0] sm:$0xff]
        %v608 = vld [vmem:[%s0 + $0x8] sm:$0xff]
        %v609 = vld [vmem:[%s0 + $0x10] sm:$0xff]
        %v610 = vld [vmem:[%s0 + $0x18] sm:$0xff]
        %s611 = scalar_lea.vmem %s163, 32 [#allocation2]
        %v612 = vld [vmem:[%s611] sm:$0xff]
        %v613 = vld [vmem:[%s611 + $0x8] sm:$0xff]
        %v615 = vsel %vm197, %v607, 0
        %v618 = vsel %vm197, %v608, 0
        %v621 = vsel %vm197, %v609, 0
        %v624 = vsel %vm197, %v610, 0
        %626 = vmatprep.subr.mxu0 0.0
        %627 = vmatpush1.msra.mxu0 %v612
        %628 = vmatprep.subr.mxu0 0.0
        %629 = vmatpush1.msra.mxu0 %v613
        %630 = vmatprep.subr.mxu0 0.0
        %631 = vmatpush1.msra.mxu0 0.0
        %632 = vmatprep.subr.mxu0 0.0
        %633 = vmatpush1.msra.mxu0 0.0
        %634 = vmatprep.subr.mxu0 0.0
        %635 = vmatpush1.msra.mxu0 0.0
        %636 = vmatprep.subr.mxu0 0.0
        %637 = vmatpush1.msra.mxu0 0.0
        %638 = vmatprep.subr.mxu0 0.0
        %639 = vmatpush1.msra.mxu0 0.0
        %640 = vmatprep.subr.mxu0 0.0
        %641 = vmatpush1.msra.mxu0 0.0
        %642 = vmatprep.subr.mxu0 0.0
        %643 = vmatpush1.msra.mxu0 0.0
        %644 = vmatprep.subr.mxu0 0.0
        %645 = vmatpush1.msra.mxu0 0.0
        %646 = vmatprep.subr.mxu0 0.0
        %647 = vmatpush1.msra.mxu0 0.0
        %648 = vmatprep.subr.mxu0 0.0
        %649 = vmatpush1.msra.mxu0 0.0
        %650 = vmatprep.subr.mxu0 0.0
        %651 = vmatpush1.msra.mxu0 0.0
        %652 = vmatprep.subr.mxu0 0.0
        %653 = vmatpush1.msra.mxu0 0.0
        %654 = vmatprep.subr.mxu0 0.0
        %655 = vmatpush1.msra.mxu0 0.0
        %656 = vmatprep.subr.mxu0 0.0
        %657 = vmatpush1.msra.mxu0 0.0
        %658 = vmatprep.subr.mxu0 0.0
        %659 = vmatpush1.msra.mxu0 0.0
        %660 = vmatprep.subr.mxu0 0.0
        %661 = vmatpush1.msra.mxu0 0.0
        %662 = vmatprep.subr.mxu0 0.0
        %663 = vmatpush1.msra.mxu0 0.0
        %664 = vmatprep.subr.mxu0 0.0
        %665 = vmatpush1.msra.mxu0 0.0
        %666 = vmatprep.subr.mxu0 0.0
        %667 = vmatpush1.msra.mxu0 0.0
        %668 = vmatprep.subr.mxu0 0.0
        %669 = vmatpush1.msra.mxu0 0.0
        %670 = vmatprep.subr.mxu0 0.0
        %671 = vmatpush1.msra.mxu0 0.0
        %672 = vmatprep.subr.mxu0 0.0
        %673 = vmatpush1.msra.mxu0 0.0
        %674 = vmatprep.subr.mxu0 0.0
        %675 = vmatpush1.msra.mxu0 0.0
        %676 = vmatprep.subr.mxu0 0.0
        %677 = vmatpush1.msra.mxu0 0.0
        %678 = vmatprep.subr.mxu0 0.0
        %679 = vmatpush1.msra.mxu0 0.0
        %680 = vmatprep.subr.mxu0 0.0
        %681 = vmatpush1.msra.mxu0 0.0
        %682 = vmatprep.subr.mxu0 0.0
        %683 = vmatpush1.msra.mxu0 0.0
        %684 = vmatprep.subr.mxu0 0.0
        %685 = vmatpush1.msra.mxu0 0.0
        %686 = vmatprep.subr.mxu0 0.0
        %687 = vmatpush1.msra.mxu0 0.0
        %688 = vmatprep.subr.mxu0 0.0
        %689 = vmatpush1.msra.mxu0 0.0
        %690 = vmatprep.mubr.f32.mxu0 0.0
        %691 = vmatmul.mubr.f32.gmra.mrb[0].mxu0 %v615
        %v692 = vpop.f32.mrb[0].mxu0
        %v693 = vadd.f32 0.0, %v692
        %v694 = vpop.f32.mrb[0].mxu0
        %695 = vmatprep.mubr.f32.mxu0 0.0
        %696 = vmatmul.mubr.f32.gmra.mrb[0].mxu0 %v618
        %v697 = vpop.f32.mrb[0].mxu0
        %v698 = vadd.f32 0.0, %v697
        %v699 = vpop.f32.mrb[0].mxu0
        %700 = vmatprep.mubr.f32.mxu0 0.0
        %701 = vmatmul.mubr.f32.gmra.mrb[0].mxu0 %v621
        %v702 = vpop.f32.mrb[0].mxu0
        %v703 = vadd.f32 0.0, %v702
        %v704 = vpop.f32.mrb[0].mxu0
        %705 = vmatprep.mubr.f32.mxu0 0.0
        %706 = vmatmul.mubr.f32.gmra.mrb[0].mxu0 %v624
        %v707 = vpop.f32.mrb[0].mxu0
        %v708 = vadd.f32 0.0, %v707
        %v709 = vpop.f32.mrb[0].mxu0
        %710 = vdwg.mxu0
        %v711 = vld [vmem:[%s1] sm:$0xff]
        %v712 = vld [vmem:[%s1 + $0x8] sm:$0xff]
        %v714 = vsel %vm197, %v693, 0
        %v717 = vsel %vm197, %v698, 0
        %v720 = vsel %vm197, %v703, 0
        %v723 = vsel %vm197, %v708, 0
        %725 = vmatprep.subr.mxu0 0.0
        %726 = vmatpush1.msra.mxu0 %v711
        %727 = vmatprep.subr.mxu0 0.0
        %728 = vmatpush1.msra.mxu0 %v712
        %729 = vmatprep.subr.mxu0 0.0
        %730 = vmatpush1.msra.mxu0 0.0
        %731 = vmatprep.subr.mxu0 0.0
        %732 = vmatpush1.msra.mxu0 0.0
        %733 = vmatprep.subr.mxu0 0.0
        %734 = vmatpush1.msra.mxu0 0.0
        %735 = vmatprep.subr.mxu0 0.0
        %736 = vmatpush1.msra.mxu0 0.0
        %737 = vmatprep.subr.mxu0 0.0
        %738 = vmatpush1.msra.mxu0 0.0
        %739 = vmatprep.subr.mxu0 0.0
        %740 = vmatpush1.msra.mxu0 0.0
        %741 = vmatprep.subr.mxu0 0.0
        %742 = vmatpush1.msra.mxu0 0.0
        %743 = vmatprep.subr.mxu0 0.0
        %744 = vmatpush1.msra.mxu0 0.0
        %745 = vmatprep.subr.mxu0 0.0
        %746 = vmatpush1.msra.mxu0 0.0
        %747 = vmatprep.subr.mxu0 0.0
        %748 = vmatpush1.msra.mxu0 0.0
        %749 = vmatprep.subr.mxu0 0.0
        %750 = vmatpush1.msra.mxu0 0.0
        %751 = vmatprep.subr.mxu0 0.0
        %752 = vmatpush1.msra.mxu0 0.0
        %753 = vmatprep.subr.mxu0 0.0
        %754 = vmatpush1.msra.mxu0 0.0
        %755 = vmatprep.subr.mxu0 0.0
        %756 = vmatpush1.msra.mxu0 0.0
        %757 = vmatprep.subr.mxu0 0.0
        %758 = vmatpush1.msra.mxu0 0.0
        %759 = vmatprep.subr.mxu0 0.0
        %760 = vmatpush1.msra.mxu0 0.0
        %761 = vmatprep.subr.mxu0 0.0
        %762 = vmatpush1.msra.mxu0 0.0
        %763 = vmatprep.subr.mxu0 0.0
        %764 = vmatpush1.msra.mxu0 0.0
        %765 = vmatprep.subr.mxu0 0.0
        %766 = vmatpush1.msra.mxu0 0.0
        %767 = vmatprep.subr.mxu0 0.0
        %768 = vmatpush1.msra.mxu0 0.0
        %769 = vmatprep.subr.mxu0 0.0
        %770 = vmatpush1.msra.mxu0 0.0
        %771 = vmatprep.subr.mxu0 0.0
        %772 = vmatpush1.msra.mxu0 0.0
        %773 = vmatprep.subr.mxu0 0.0
        %774 = vmatpush1.msra.mxu0 0.0
        %775 = vmatprep.subr.mxu0 0.0
        %776 = vmatpush1.msra.mxu0 0.0
        %777 = vmatprep.subr.mxu0 0.0
        %778 = vmatpush1.msra.mxu0 0.0
        %779 = vmatprep.subr.mxu0 0.0
        %780 = vmatpush1.msra.mxu0 0.0
        %781 = vmatprep.subr.mxu0 0.0
        %782 = vmatpush1.msra.mxu0 0.0
        %783 = vmatprep.subr.mxu0 0.0
        %784 = vmatpush1.msra.mxu0 0.0
        %785 = vmatprep.subr.mxu0 0.0
        %786 = vmatpush1.msra.mxu0 0.0
        %787 = vmatprep.subr.mxu0 0.0
        %788 = vmatpush1.msra.mxu0 0.0
        %789 = vmatprep.mubr.f32.mxu0 0.0
        %790 = vmatmul.mubr.f32.gmra.mrb[0].mxu0 %v714
        %v791 = vpop.f32.mrb[0].mxu0
        %v792 = vadd.f32 0.0, %v791
        %v793 = vpop.f32.mrb[0].mxu0
        %794 = vmatprep.mubr.f32.mxu0 0.0
        %795 = vmatmul.mubr.f32.gmra.mrb[0].mxu0 %v717
        %v796 = vpop.f32.mrb[0].mxu0
        %v797 = vadd.f32 0.0, %v796
        %v798 = vpop.f32.mrb[0].mxu0
        %799 = vmatprep.mubr.f32.mxu0 0.0
        %800 = vmatmul.mubr.f32.gmra.mrb[0].mxu0 %v720
        %v801 = vpop.f32.mrb[0].mxu0
        %v802 = vadd.f32 0.0, %v801
        %v803 = vpop.f32.mrb[0].mxu0
        %804 = vmatprep.mubr.f32.mxu0 0.0
        %805 = vmatmul.mubr.f32.gmra.mrb[0].mxu0 %v723
        %v806 = vpop.f32.mrb[0].mxu0
        %v807 = vadd.f32 0.0, %v806
        %v808 = vpop.f32.mrb[0].mxu0
        %809 = vdwg.mxu0
        %s810 = scalar_lea.vmem %s190, 64
        %811 = vst.msk [vmem:[%s810] sm:$0xff] %vm394, %v792
        %812 = vst.msk [vmem:[%s810 + $0x8] sm:$0xff] %vm394, %v797
        %813 = vst.msk [vmem:[%s810 + $0x10] sm:$0xff] %vm394, %v802
        %814 = vst.msk [vmem:[%s810 + $0x18] sm:$0xff] %vm394, %v807
        %v815 = vld [vmem:[%s0] sm:$0xff]
        %v816 = vld [vmem:[%s0 + $0x8] sm:$0xff]
        %v817 = vld [vmem:[%s0 + $0x10] sm:$0xff]
        %v818 = vld [vmem:[%s0 + $0x18] sm:$0xff]
        %s819 = scalar_lea.vmem %s163, 48 [#allocation2]
        %v820 = vld [vmem:[%s819] sm:$0xff]
        %v821 = vld [vmem:[%s819 + $0x8] sm:$0xff]
        %v823 = vsel %vm197, %v815, 0
        %v826 = vsel %vm197, %v816, 0
        %v829 = vsel %vm197, %v817, 0
        %v832 = vsel %vm197, %v818, 0
        %834 = vmatprep.subr.mxu0 0.0
        %835 = vmatpush1.msra.mxu0 %v820
        %836 = vmatprep.subr.mxu0 0.0
        %837 = vmatpush1.msra.mxu0 %v821
        %838 = vmatprep.subr.mxu0 0.0
        %839 = vmatpush1.msra.mxu0 0.0
        %840 = vmatprep.subr.mxu0 0.0
        %841 = vmatpush1.msra.mxu0 0.0
        %842 = vmatprep.subr.mxu0 0.0
        %843 = vmatpush1.msra.mxu0 0.0
        %844 = vmatprep.subr.mxu0 0.0
        %845 = vmatpush1.msra.mxu0 0.0
        %846 = vmatprep.subr.mxu0 0.0
        %847 = vmatpush1.msra.mxu0 0.0
        %848 = vmatprep.subr.mxu0 0.0
        %849 = vmatpush1.msra.mxu0 0.0
        %850 = vmatprep.subr.mxu0 0.0
        %851 = vmatpush1.msra.mxu0 0.0
        %852 = vmatprep.subr.mxu0 0.0
        %853 = vmatpush1.msra.mxu0 0.0
        %854 = vmatprep.subr.mxu0 0.0
        %855 = vmatpush1.msra.mxu0 0.0
        %856 = vmatprep.subr.mxu0 0.0
        %857 = vmatpush1.msra.mxu0 0.0
        %858 = vmatprep.subr.mxu0 0.0
        %859 = vmatpush1.msra.mxu0 0.0
        %860 = vmatprep.subr.mxu0 0.0
        %861 = vmatpush1.msra.mxu0 0.0
        %862 = vmatprep.subr.mxu0 0.0
        %863 = vmatpush1.msra.mxu0 0.0
        %864 = vmatprep.subr.mxu0 0.0
        %865 = vmatpush1.msra.mxu0 0.0
        %866 = vmatprep.subr.mxu0 0.0
        %867 = vmatpush1.msra.mxu0 0.0
        %868 = vmatprep.subr.mxu0 0.0
        %869 = vmatpush1.msra.mxu0 0.0
        %870 = vmatprep.subr.mxu0 0.0
        %871 = vmatpush1.msra.mxu0 0.0
        %872 = vmatprep.subr.mxu0 0.0
        %873 = vmatpush1.msra.mxu0 0.0
        %874 = vmatprep.subr.mxu0 0.0
        %875 = vmatpush1.msra.mxu0 0.0
        %876 = vmatprep.subr.mxu0 0.0
        %877 = vmatpush1.msra.mxu0 0.0
        %878 = vmatprep.subr.mxu0 0.0
        %879 = vmatpush1.msra.mxu0 0.0
        %880 = vmatprep.subr.mxu0 0.0
        %881 = vmatpush1.msra.mxu0 0.0
        %882 = vmatprep.subr.mxu0 0.0
        %883 = vmatpush1.msra.mxu0 0.0
        %884 = vmatprep.subr.mxu0 0.0
        %885 = vmatpush1.msra.mxu0 0.0
        %886 = vmatprep.subr.mxu0 0.0
        %887 = vmatpush1.msra.mxu0 0.0
        %888 = vmatprep.subr.mxu0 0.0
        %889 = vmatpush1.msra.mxu0 0.0
        %890 = vmatprep.subr.mxu0 0.0
        %891 = vmatpush1.msra.mxu0 0.0
        %892 = vmatprep.subr.mxu0 0.0
        %893 = vmatpush1.msra.mxu0 0.0
        %894 = vmatprep.subr.mxu0 0.0
        %895 = vmatpush1.msra.mxu0 0.0
        %896 = vmatprep.subr.mxu0 0.0
        %897 = vmatpush1.msra.mxu0 0.0
        %898 = vmatprep.mubr.f32.mxu0 0.0
        %899 = vmatmul.mubr.f32.gmra.mrb[0].mxu0 %v823
        %v900 = vpop.f32.mrb[0].mxu0
        %v901 = vadd.f32 0.0, %v900
        %v902 = vpop.f32.mrb[0].mxu0
        %903 = vmatprep.mubr.f32.mxu0 0.0
        %904 = vmatmul.mubr.f32.gmra.mrb[0].mxu0 %v826
        %v905 = vpop.f32.mrb[0].mxu0
        %v906 = vadd.f32 0.0, %v905
        %v907 = vpop.f32.mrb[0].mxu0
        %908 = vmatprep.mubr.f32.mxu0 0.0
        %909 = vmatmul.mubr.f32.gmra.mrb[0].mxu0 %v829
        %v910 = vpop.f32.mrb[0].mxu0
        %v911 = vadd.f32 0.0, %v910
        %v912 = vpop.f32.mrb[0].mxu0
        %913 = vmatprep.mubr.f32.mxu0 0.0
        %914 = vmatmul.mubr.f32.gmra.mrb[0].mxu0 %v832
        %v915 = vpop.f32.mrb[0].mxu0
        %v916 = vadd.f32 0.0, %v915
        %v917 = vpop.f32.mrb[0].mxu0
        %918 = vdwg.mxu0
        %v919 = vld [vmem:[%s1] sm:$0xff]
        %v920 = vld [vmem:[%s1 + $0x8] sm:$0xff]
        %v922 = vsel %vm197, %v901, 0
        %v925 = vsel %vm197, %v906, 0
        %v928 = vsel %vm197, %v911, 0
        %v931 = vsel %vm197, %v916, 0
        %933 = vmatprep.subr.mxu0 0.0
        %934 = vmatpush1.msra.mxu0 %v919
        %935 = vmatprep.subr.mxu0 0.0
        %936 = vmatpush1.msra.mxu0 %v920
        %937 = vmatprep.subr.mxu0 0.0
        %938 = vmatpush1.msra.mxu0 0.0
        %939 = vmatprep.subr.mxu0 0.0
        %940 = vmatpush1.msra.mxu0 0.0
        %941 = vmatprep.subr.mxu0 0.0
        %942 = vmatpush1.msra.mxu0 0.0
        %943 = vmatprep.subr.mxu0 0.0
        %944 = vmatpush1.msra.mxu0 0.0
        %945 = vmatprep.subr.mxu0 0.0
        %946 = vmatpush1.msra.mxu0 0.0
        %947 = vmatprep.subr.mxu0 0.0
        %948 = vmatpush1.msra.mxu0 0.0
        %949 = vmatprep.subr.mxu0 0.0
        %950 = vmatpush1.msra.mxu0 0.0
        %951 = vmatprep.subr.mxu0 0.0
        %952 = vmatpush1.msra.mxu0 0.0
        %953 = vmatprep.subr.mxu0 0.0
        %954 = vmatpush1.msra.mxu0 0.0
        %955 = vmatprep.subr.mxu0 0.0
        %956 = vmatpush1.msra.mxu0 0.0
        %957 = vmatprep.subr.mxu0 0.0
        %958 = vmatpush1.msra.mxu0 0.0
        %959 = vmatprep.subr.mxu0 0.0
        %960 = vmatpush1.msra.mxu0 0.0
        %961 = vmatprep.subr.mxu0 0.0
        %962 = vmatpush1.msra.mxu0 0.0
        %963 = vmatprep.subr.mxu0 0.0
        %964 = vmatpush1.msra.mxu0 0.0
        %965 = vmatprep.subr.mxu0 0.0
        %966 = vmatpush1.msra.mxu0 0.0
        %967 = vmatprep.subr.mxu0 0.0
        %968 = vmatpush1.msra.mxu0 0.0
        %969 = vmatprep.subr.mxu0 0.0
        %970 = vmatpush1.msra.mxu0 0.0
        %971 = vmatprep.subr.mxu0 0.0
        %972 = vmatpush1.msra.mxu0 0.0
        %973 = vmatprep.subr.mxu0 0.0
        %974 = vmatpush1.msra.mxu0 0.0
        %975 = vmatprep.subr.mxu0 0.0
        %976 = vmatpush1.msra.mxu0 0.0
        %977 = vmatprep.subr.mxu0 0.0
        %978 = vmatpush1.msra.mxu0 0.0
        %979 = vmatprep.subr.mxu0 0.0
        %980 = vmatpush1.msra.mxu0 0.0
        %981 = vmatprep.subr.mxu0 0.0
        %982 = vmatpush1.msra.mxu0 0.0
        %983 = vmatprep.subr.mxu0 0.0
        %984 = vmatpush1.msra.mxu0 0.0
        %985 = vmatprep.subr.mxu0 0.0
        %986 = vmatpush1.msra.mxu0 0.0
        %987 = vmatprep.subr.mxu0 0.0
        %988 = vmatpush1.msra.mxu0 0.0
        %989 = vmatprep.subr.mxu0 0.0
        %990 = vmatpush1.msra.mxu0 0.0
        %991 = vmatprep.subr.mxu0 0.0
        %992 = vmatpush1.msra.mxu0 0.0
        %993 = vmatprep.subr.mxu0 0.0
        %994 = vmatpush1.msra.mxu0 0.0
        %995 = vmatprep.subr.mxu0 0.0
        %996 = vmatpush1.msra.mxu0 0.0
        %997 = vmatprep.mubr.f32.mxu0 0.0
        %998 = vmatmul.mubr.f32.gmra.mrb[0].mxu0 %v922
        %v999 = vpop.f32.mrb[0].mxu0
        %v1000 = vadd.f32 0.0, %v999
        %v1001 = vpop.f32.mrb[0].mxu0
        %1002 = vmatprep.mubr.f32.mxu0 0.0
        %1003 = vmatmul.mubr.f32.gmra.mrb[0].mxu0 %v925
        %v1004 = vpop.f32.mrb[0].mxu0
        %v1005 = vadd.f32 0.0, %v1004
        %v1006 = vpop.f32.mrb[0].mxu0
        %1007 = vmatprep.mubr.f32.mxu0 0.0
        %1008 = vmatmul.mubr.f32.gmra.mrb[0].mxu0 %v928
        %v1009 = vpop.f32.mrb[0].mxu0
        %v1010 = vadd.f32 0.0, %v1009
        %v1011 = vpop.f32.mrb[0].mxu0
        %1012 = vmatprep.mubr.f32.mxu0 0.0
        %1013 = vmatmul.mubr.f32.gmra.mrb[0].mxu0 %v931
        %v1014 = vpop.f32.mrb[0].mxu0
        %v1015 = vadd.f32 0.0, %v1014
        %v1016 = vpop.f32.mrb[0].mxu0
        %1017 = vdwg.mxu0
        %s1018 = scalar_lea.vmem %s190, 96
        %1019 = vst.msk [vmem:[%s1018] sm:$0xff] %vm394, %v1000
        %1020 = vst.msk [vmem:[%s1018 + $0x8] sm:$0xff] %vm394, %v1005
        %1021 = vst.msk [vmem:[%s1018 + $0x10] sm:$0xff] %vm394, %v1010
        %1022 = vst.msk [vmem:[%s1018 + $0x18] sm:$0xff] %vm394, %v1015
        %p1023 = scmp.lt.s32.totalorder %s17, 1
        %s1024 = scalar_select %p1023, %s17, 1
        %s1025 = smul.addr %s1024, 16
        %s1026 = smul.addr %s1025, 8
        %s1027 = scalar_lea.vmem %s3, %s1026
        // Predicated region
        $region37: #{resnet_up_forward.2} parent=31 // pred_check
          %p1028 = pneg %p103
        $region38: #{resnet_up_forward.2} parent=31 // pred_check_branch
          %1030 = sbr.rel (%p1028) target = $region40
        $region39: #{resnet_up_forward.2} parent=31 // pred_region
          _
        $region40: #{resnet_up_forward.2} parent=31 // pred_fallthru
          _
      $region32: #{resnet_up_forward.2} parent=5 // pred_fallthru
        _
      %p1031 = scmp.le.s32.totalorder 2, %s12
      // Predicated region
      $region41: #{resnet_up_forward.2} parent=5 // pred_check
        %p1032 = pneg %p1031
      $region42: #{resnet_up_forward.2} parent=5 // pred_check_branch
        %1034 = sbr.rel (%p1032) target = $region44
      $region43: #{resnet_up_forward.2} parent=5 // pred_region
        %s1035 = ssub.s32 %s12, 2
        // Predicated region
        $region45: #{resnet_up_forward.2} parent=43 // pred_check
          %p1036 = pneg %p109
        $region46: #{resnet_up_forward.2} parent=43 // pred_check_branch
          %1038 = sbr.rel (%p1036) target = $region48
        $region47: #{resnet_up_forward.2} parent=43 // pred_region
          %p1039 = scmp.lt.s32.totalorder %s18, 1
          %s1040 = scalar_select %p1039, %s18, 1
          %s1041 = smul.addr %s1040, 16
          %s1042 = smul.addr %s1041, 8
          %s1043 = scalar_lea.vmem %s3, %s1042
        $region48: #{resnet_up_forward.2} parent=43 // pred_fallthru
          _
      $region44: #{resnet_up_forward.2} parent=5 // pred_fallthru
        _
    $region6: #{resnet_up_forward.2} parent=1 // loop_footer
      %s16 = sadd.s32 1, %s12
    $region7: #{resnet_up_forward.2} parent=1 // loop_footer_branch
      %11 = sbr.rel target = $region3
    $region8: #{resnet_up_forward.2} parent=1 // loop_exit
      _
    %1044 = vsyncpa [#allocation3], 1
    %s1045 = scalar_lea.sflag [#allocation3], 1
    %1046 = vsyncpa %s1045, 1

// kernel: resnet_up_forward.3
$region0: #{resnet_up_forward.3}
  #allocation0 [shape = 'u32[]', space=smem, size = 0x4, offset = 0x4, fixed_abs, tag = 'smem constant byte address 0x4 - core index']
  #allocation1 [shape = 'u32[144,128]{1,0:T(1,128)}', space=vmem, size = 0x12000, scoped, tag = 'internal scratch']
  #allocation2 [shape = 'f32[4,1280]{1,0:T(4,128)}', space=vmem, size = 0x5000, scoped, tag = 'scratch operand']
  #allocation3 [shape = 'f32[2,1280]{1,0:T(2,128)}', space=vmem, size = 0x2800, scoped, tag = 'scratch operand']
  #allocation4 [shape = 'f32[2,1280]{1,0:T(2,128)}', space=vmem, size = 0x2800, scoped, tag = 'scratch operand']
  %s0 = inlined_call_operand.vmem [shape: f32[9,2,4], index: 0, kind: input, shape index: {}]
  %s1 = inlined_call_operand.vmem [shape: f32[9,2,2], index: 1, kind: input, shape index: {}]
  %s2 = inlined_call_operand.vmem [shape: f32[9,2,2], index: 2, kind: input, shape index: {}]
  %s3 = inlined_call_operand.vmem [shape: f32[2,1], index: 3, kind: input, shape index: {}]
  %s4 = inlined_call_operand.vmem [shape: f32[2,1], index: 4, kind: input, shape index: {}]
  %s5 = inlined_call_operand.vmem [shape: f32[1,1024], index: 5, kind: input, shape index: {}]
  %s6 = inlined_call_operand.vmem [shape: f32[1,1024], index: 6, kind: input, shape index: {}]
  %s7 = inlined_call_operand.vmem [shape: f32[2,4,1024], index: 7, kind: input, shape index: {}]
  %s8 = inlined_call_operand.vmem [shape: f32[2,2,1024], index: 8, kind: output, shape index: {}]
  %s9 = sld [smem:[#allocation0]]
  $region65: #{resnet_up_forward.3} parent=0
    _
  %s11 = ssub.s32 1, %s9
  %s12 = scalar_select 0, %s11, %s9
  loop: start=0, step=1, limit=4
  $region2: #{resnet_up_forward.3} parent=0 // loop_pre_header
    _
  $region3: #{resnet_up_forward.3} parent=0 // loop_header
    %s14 = sphi 0, %s18
    %p15 = scmp.ge.s32.totalorder %s14, 4
    %s22 = sphi 0, %s22
    %s24 = sphi 0, %s22
    %s25 = sphi 0, %s24
    %s39 = sphi 0, %s25
    %s43 = sphi 0, %s43
    %s45 = sphi 0, %s43
    %s46 = sphi 0, %s45
    %s60 = sphi 0, %s46
    %s64 = sphi 0, %s64
    %s66 = sphi 0, %s64
    %s67 = sphi 0, %s66
    %s81 = sphi 0, %s67
    %s85 = sphi 0, %s85
    %s87 = sphi 0, %s85
    %s88 = sphi 0, %s87
    %s102 = sphi 0, %s88
    %s106 = sphi 0, %s106
    %s108 = sphi 0, %s106
    %s109 = sphi 0, %s108
    %s123 = sphi 0, %s109
    %s127 = sphi 0, %s127
    %s129 = sphi 0, %s127
    %s130 = sphi 0, %s129
    %s144 = sphi 0, %s130
    %s148 = sphi 0, %s148
    %s150 = sphi 0, %s148
    %s151 = sphi 0, %s150
    %s165 = sphi 0, %s151
    %s171 = sphi 0, %s173
    %s174 = sphi 0, %s171
    %s175 = sphi 0, %s174
    %s191 = sphi 0, %s175
    %s197 = sphi 0, %s199
    %s200 = sphi 0, %s197
    %s201 = sphi 0, %s200
    %s217 = sphi 0, %s201
  $region4: #{resnet_up_forward.3} parent=0 // loop_header_branch
    %17 = sbr.rel (%p15) target = $region8
  $region5: #{resnet_up_forward.3} parent=0 // loop_body
    %s19 = ssub.s32 %s14, 1
    %s20 = ssub.s32 %s14, 2
    %s21 = sadd.s32 %s14, 1
    %s23 = sadd.s32 %s22, 1
    %p26 = scmp.eq.s32.totalorder %s14, 1
    %p27 = scmp.ne.s32.totalorder %s22, %s24
    %p28 = scmp.eq.s32.totalorder %s14, 0
    %p29 = por %p27, %p28
    %p30 = scmp.ne.s32.totalorder %s22, %s24
    %p31 = scmp.eq.s32.totalorder %s19, 1
    %p32 = por %p30, %p31
    %p33 = scmp.ne.s32.totalorder %s24, %s25
    %p34 = scmp.eq.s32.totalorder %s19, 0
    %p35 = por %p33, %p34
    %p36 = scmp.ne.s32.totalorder %s24, %s25
    %p37 = scmp.eq.s32.totalorder %s20, 1
    %p38 = por %p36, %p37
    %p40 = scmp.ne.s32.totalorder %s25, %s39
    %p41 = scmp.eq.s32.totalorder %s20, 0
    %p42 = por %p40, %p41
    %s44 = sadd.s32 %s43, 1
    %p47 = scmp.eq.s32.totalorder %s14, 1
    %p48 = scmp.ne.s32.totalorder %s43, %s45
    %p49 = scmp.eq.s32.totalorder %s14, 0
    %p50 = por %p48, %p49
    %p51 = scmp.ne.s32.totalorder %s43, %s45
    %p52 = scmp.eq.s32.totalorder %s19, 1
    %p53 = por %p51, %p52
    %p54 = scmp.ne.s32.totalorder %s45, %s46
    %p55 = scmp.eq.s32.totalorder %s19, 0
    %p56 = por %p54, %p55
    %p57 = scmp.ne.s32.totalorder %s45, %s46
    %p58 = scmp.eq.s32.totalorder %s20, 1
    %p59 = por %p57, %p58
    %p61 = scmp.ne.s32.totalorder %s46, %s60
    %p62 = scmp.eq.s32.totalorder %s20, 0
    %p63 = por %p61, %p62
    %s65 = sadd.s32 %s64, 1
    %p68 = scmp.eq.s32.totalorder %s14, 1
    %p69 = scmp.ne.s32.totalorder %s64, %s66
    %p70 = scmp.eq.s32.totalorder %s14, 0
    %p71 = por %p69, %p70
    %p72 = scmp.ne.s32.totalorder %s64, %s66
    %p73 = scmp.eq.s32.totalorder %s19, 1
    %p74 = por %p72, %p73
    %p75 = scmp.ne.s32.totalorder %s66, %s67
    %p76 = scmp.eq.s32.totalorder %s19, 0
    %p77 = por %p75, %p76
    %p78 = scmp.ne.s32.totalorder %s66, %s67
    %p79 = scmp.eq.s32.totalorder %s20, 1
    %p80 = por %p78, %p79
    %p82 = scmp.ne.s32.totalorder %s67, %s81
    %p83 = scmp.eq.s32.totalorder %s20, 0
    %p84 = por %p82, %p83
    %s86 = sadd.s32 %s85, 1
    %p89 = scmp.eq.s32.totalorder %s14, 1
    %p90 = scmp.ne.s32.totalorder %s85, %s87
    %p91 = scmp.eq.s32.totalorder %s14, 0
    %p92 = por %p90, %p91
    %p93 = scmp.ne.s32.totalorder %s85, %s87
    %p94 = scmp.eq.s32.totalorder %s19, 1
    %p95 = por %p93, %p94
    %p96 = scmp.ne.s32.totalorder %s87, %s88
    %p97 = scmp.eq.s32.totalorder %s19, 0
    %p98 = por %p96, %p97
    %p99 = scmp.ne.s32.totalorder %s87, %s88
    %p100 = scmp.eq.s32.totalorder %s20, 1
    %p101 = por %p99, %p100
    %p103 = scmp.ne.s32.totalorder %s88, %s102
    %p104 = scmp.eq.s32.totalorder %s20, 0
    %p105 = por %p103, %p104
    %s107 = sadd.s32 %s106, 1
    %p110 = scmp.eq.s32.totalorder %s14, 1
    %p111 = scmp.ne.s32.totalorder %s106, %s108
    %p112 = scmp.eq.s32.totalorder %s14, 0
    %p113 = por %p111, %p112
    %p114 = scmp.ne.s32.totalorder %s106, %s108
    %p115 = scmp.eq.s32.totalorder %s19, 1
    %p116 = por %p114, %p115
    %p117 = scmp.ne.s32.totalorder %s108, %s109
    %p118 = scmp.eq.s32.totalorder %s19, 0
    %p119 = por %p117, %p118
    %p120 = scmp.ne.s32.totalorder %s108, %s109
    %p121 = scmp.eq.s32.totalorder %s20, 1
    %p122 = por %p120, %p121
    %p124 = scmp.ne.s32.totalorder %s109, %s123
    %p125 = scmp.eq.s32.totalorder %s20, 0
    %p126 = por %p124, %p125
    %s128 = sadd.s32 %s127, 1
    %p131 = scmp.eq.s32.totalorder %s14, 1
    %p132 = scmp.ne.s32.totalorder %s127, %s129
    %p133 = scmp.eq.s32.totalorder %s14, 0
    %p134 = por %p132, %p133
    %p135 = scmp.ne.s32.totalorder %s127, %s129
    %p136 = scmp.eq.s32.totalorder %s19, 1
    %p137 = por %p135, %p136
    %p138 = scmp.ne.s32.totalorder %s129, %s130
    %p139 = scmp.eq.s32.totalorder %s19, 0
    %p140 = por %p138, %p139
    %p141 = scmp.ne.s32.totalorder %s129, %s130
    %p142 = scmp.eq.s32.totalorder %s20, 1
    %p143 = por %p141, %p142
    %p145 = scmp.ne.s32.totalorder %s130, %s144
    %p146 = scmp.eq.s32.totalorder %s20, 0
    %p147 = por %p145, %p146
    %s149 = sadd.s32 %s148, 1
    %p152 = scmp.eq.s32.totalorder %s14, 1
    %p153 = scmp.ne.s32.totalorder %s148, %s150
    %p154 = scmp.eq.s32.totalorder %s14, 0
    %p155 = por %p153, %p154
    %p156 = scmp.ne.s32.totalorder %s148, %s150
    %p157 = scmp.eq.s32.totalorder %s19, 1
    %p158 = por %p156, %p157
    %p159 = scmp.ne.s32.totalorder %s150, %s151
    %p160 = scmp.eq.s32.totalorder %s19, 0
    %p161 = por %p159, %p160
    %p162 = scmp.ne.s32.totalorder %s150, %s151
    %p163 = scmp.eq.s32.totalorder %s20, 1
    %p164 = por %p162, %p163
    %p166 = scmp.ne.s32.totalorder %s151, %s165
    %p167 = scmp.eq.s32.totalorder %s20, 0
    %p168 = por %p166, %p167
    %s169 = ssub.s32 %s14, %s21
    %p170 = scmp.eq.s32.totalorder %s169, 0
    %s172 = sadd.s32 %s171, 1
    %s173 = scalar_select %p170, %s171, %s172
    %p176 = pneg %p170
    %p177 = scmp.eq.s32.totalorder %s14, 1
    %p178 = por %p176, %p177
    %p179 = scmp.ne.s32.totalorder %s171, %s174
    %p180 = scmp.eq.s32.totalorder %s14, 0
    %p181 = por %p179, %p180
    %p182 = scmp.ne.s32.totalorder %s171, %s174
    %p183 = scmp.eq.s32.totalorder %s19, 1
    %p184 = por %p182, %p183
    %p185 = scmp.ne.s32.totalorder %s174, %s175
    %p186 = scmp.eq.s32.totalorder %s19, 0
    %p187 = por %p185, %p186
    %p188 = scmp.ne.s32.totalorder %s174, %s175
    %p189 = scmp.eq.s32.totalorder %s20, 1
    %p190 = por %p188, %p189
    %p192 = scmp.ne.s32.totalorder %s175, %s191
    %p193 = scmp.eq.s32.totalorder %s20, 0
    %p194 = por %p192, %p193
    %s195 = ssub.s32 %s14, %s21
    %p196 = scmp.eq.s32.totalorder %s195, 0
    %s198 = sadd.s32 %s197, 1
    %s199 = scalar_select %p196, %s197, %s198
    %p202 = pneg %p196
    %p203 = scmp.eq.s32.totalorder %s14, 1
    %p204 = por %p202, %p203
    %p205 = scmp.ne.s32.totalorder %s197, %s200
    %p206 = scmp.eq.s32.totalorder %s14, 0
    %p207 = por %p205, %p206
    %p208 = scmp.ne.s32.totalorder %s197, %s200
    %p209 = scmp.eq.s32.totalorder %s19, 1
    %p210 = por %p208, %p209
    %p211 = scmp.ne.s32.totalorder %s200, %s201
    %p212 = scmp.eq.s32.totalorder %s19, 0
    %p213 = por %p211, %p212
    %p214 = scmp.ne.s32.totalorder %s200, %s201
    %p215 = scmp.eq.s32.totalorder %s20, 1
    %p216 = por %p214, %p215
    %p218 = scmp.ne.s32.totalorder %s201, %s217
    %p219 = scmp.eq.s32.totalorder %s20, 0
    %p220 = por %p218, %p219
    %p221 = scmp.le.s32.totalorder 1, %s14
    %p222 = scmp.lt.s32.totalorder %s14, 3
    %p223 = pnand %p221, %p222
    %p224 = pneg %p223
    // Predicated region
    $region9: #{resnet_up_forward.3} parent=5 // pred_check
      _
    $region10: #{resnet_up_forward.3} parent=5 // pred_check_branch
      %226 = sbr.rel (%p223) target = $region12
    $region11: #{resnet_up_forward.3} parent=5 // pred_region
      %s227 = ssub.s32 %s14, 1
      // Predicated region
      $region13: #{resnet_up_forward.3} parent=11 // pred_check
        %p228 = pneg %p35
      $region14: #{resnet_up_forward.3} parent=11 // pred_check_branch
        %230 = sbr.rel (%p228) target = $region16
      $region15: #{resnet_up_forward.3} parent=11 // pred_region
        _
      $region16: #{resnet_up_forward.3} parent=11 // pred_fallthru
        _
      // Predicated region
      $region17: #{resnet_up_forward.3} parent=11 // pred_check
        %p231 = pneg %p56
      $region18: #{resnet_up_forward.3} parent=11 // pred_check_branch
        %233 = sbr.rel (%p231) target = $region20
      $region19: #{resnet_up_forward.3} parent=11 // pred_region
        _
      $region20: #{resnet_up_forward.3} parent=11 // pred_fallthru
        _
      // Predicated region
      $region21: #{resnet_up_forward.3} parent=11 // pred_check
        %p234 = pneg %p77
      $region22: #{resnet_up_forward.3} parent=11 // pred_check_branch
        %236 = sbr.rel (%p234) target = $region24
      $region23: #{resnet_up_forward.3} parent=11 // pred_region
        _
      $region24: #{resnet_up_forward.3} parent=11 // pred_fallthru
        _
      // Predicated region
      $region25: #{resnet_up_forward.3} parent=11 // pred_check
        %p237 = pneg %p98
      $region26: #{resnet_up_forward.3} parent=11 // pred_check_branch
        %239 = sbr.rel (%p237) target = $region28
      $region27: #{resnet_up_forward.3} parent=11 // pred_region
        _
      $region28: #{resnet_up_forward.3} parent=11 // pred_fallthru
        _
      // Predicated region
      $region29: #{resnet_up_forward.3} parent=11 // pred_check
        %p240 = pneg %p119
      $region30: #{resnet_up_forward.3} parent=11 // pred_check_branch
        %242 = sbr.rel (%p240) target = $region32
      $region31: #{resnet_up_forward.3} parent=11 // pred_region
        _
      $region32: #{resnet_up_forward.3} parent=11 // pred_fallthru
        _
      // Predicated region
      $region33: #{resnet_up_forward.3} parent=11 // pred_check
        %p243 = pneg %p140
      $region34: #{resnet_up_forward.3} parent=11 // pred_check_branch
        %245 = sbr.rel (%p243) target = $region36
      $region35: #{resnet_up_forward.3} parent=11 // pred_region
        _
      $region36: #{resnet_up_forward.3} parent=11 // pred_fallthru
        _
      // Predicated region
      $region37: #{resnet_up_forward.3} parent=11 // pred_check
        %p246 = pneg %p161
      $region38: #{resnet_up_forward.3} parent=11 // pred_check_branch
        %248 = sbr.rel (%p246) target = $region40
      $region39: #{resnet_up_forward.3} parent=11 // pred_region
        _
      $region40: #{resnet_up_forward.3} parent=11 // pred_fallthru
        _
    $region12: #{resnet_up_forward.3} parent=5 // pred_fallthru
      _
    %p249 = scmp.lt.s32.totalorder %s14, 2
    // Predicated region
    $region41: #{resnet_up_forward.3} parent=5 // pred_check
      %p250 = pneg %p249
    $region42: #{resnet_up_forward.3} parent=5 // pred_check_branch
      %252 = sbr.rel (%p250) target = $region44
    $region43: #{resnet_up_forward.3} parent=5 // pred_region
      // Predicated region
      $region45: #{resnet_up_forward.3} parent=43 // pred_check
        %p253 = pneg %p181
      $region46: #{resnet_up_forward.3} parent=43 // pred_check_branch
        %255 = sbr.rel (%p253) target = $region48
      $region47: #{resnet_up_forward.3} parent=43 // pred_region
        %p256 = scmp.lt.s32.totalorder %s14, 1
        %s257 = scalar_select %p256, %s14, 1
        %s258 = smul.addr %s257, 8
        %s259 = smul.addr %s258, 4
        %s260 = scalar_lea.vmem %s7, %s259
      $region48: #{resnet_up_forward.3} parent=43 // pred_fallthru
        _
    $region44: #{resnet_up_forward.3} parent=5 // pred_fallthru
      _
    %p261 = scmp.le.s32.totalorder 1, %s14
    %p262 = scmp.lt.s32.totalorder %s14, 3
    %p263 = pnand %p261, %p262
    %p264 = pneg %p263
    // Predicated region
    $region49: #{resnet_up_forward.3} parent=5 // pred_check
      _
    $region50: #{resnet_up_forward.3} parent=5 // pred_check_branch
      %266 = sbr.rel (%p263) target = $region52
    $region51: #{resnet_up_forward.3} parent=5 // pred_region
      %s267 = ssub.s32 %s14, 1
      %p268 = pneg %p35
      %p269 = pneg %p32
      %p270 = pneg %p56
      %p271 = pneg %p53
      %p272 = pneg %p77
      %p273 = pneg %p74
      %p274 = pneg %p98
      %p275 = pneg %p95
      %p276 = pneg %p119
      %p277 = pneg %p116
      %p278 = pneg %p140
      %p279 = pneg %p137
      %p280 = pneg %p161
      %p281 = pneg %p158
      %p282 = scmp.lt.s32.totalorder %s19, 1
      %s283 = scalar_select %p282, %s19, 1
      %s284 = smul.addr %s283, 8
      %s285 = smul.addr %s284, 4
      %s286 = scalar_lea.vmem %s7, %s285
      %p287 = pneg %p187
      %p288 = pneg %p184
      %p289 = pneg %p213
      %p290 = pneg %p210
      %p291 = scmp.lt.s32.totalorder %s19, 1
      %s292 = scalar_select %p291, %s19, 1
      %s293 = smul.addr %s292, 8
      %s294 = smul.addr %s293, 2
      %s295 = scalar_lea.vmem %s8, %s294
      %p296 = scmp.lt.s32.totalorder %s19, 1
      %s297 = scalar_select %p296, %s19, 1
      %s298 = smul.addr %s297, 8
      %s299 = smul.addr %s298, 4
      %s300 = scalar_lea.vmem %s7, %s299
      %p301 = scmp.lt.s32.totalorder %s19, 1
      %s302 = scalar_select %p301, %s19, 1
      %s303 = smul.addr %s302, 8
      %s304 = smul.addr %s303, 2
      %s305 = scalar_lea.vmem %s8, %s304
      %v306 = vld [vmem:[%s5] sm:$0xff]
      %v307 = vld [vmem:[%s6] sm:$0xff]
      %308 = vst [vmem:[#allocation2] sm:$0xff] 0.0
      %309 = vst [vmem:[#allocation2 + $0x8] sm:$0xff] 0.0
      %310 = vst [vmem:[#allocation2 + $0x10] sm:$0xff] 0.0
      %311 = vst [vmem:[#allocation2 + $0x18] sm:$0xff] 0.0
      %312 = vst [vmem:[#allocation2 + $0x20] sm:$0xff] 0.0
      %v313 = vld [vmem:[%s300] sm:$0xff]
      %v314 = vld [vmem:[%s300 + $0x8] sm:$0xff]
      %v315 = vld [vmem:[%s300 + $0x10] sm:$0xff]
      %v316 = vld [vmem:[%s300 + $0x18] sm:$0xff]
      %317 = vst [vmem:[#allocation2 + $0x4] sm:$0xff] %v313
      %318 = vst [vmem:[#allocation2 + $0xc] sm:$0xff] %v314
      %319 = vst [vmem:[#allocation2 + $0x14] sm:$0xff] %v315
      %320 = vst [vmem:[#allocation2 + $0x1c] sm:$0xff] %v316
      %v321 = vld [vmem:[#allocation2] sm:$0xff]
      %v322 = vld [vmem:[#allocation2 + $0x8] sm:$0xff]
      %v323 = vld [vmem:[#allocation2 + $0x10] sm:$0xff]
      %v324 = vld [vmem:[#allocation2 + $0x18] sm:$0xff]
      %v325 = vld [vmem:[#allocation2 + $0x20] sm:$0xff]
      %v327 = vlaneseq
      %v328 = vshrl.u32 %v327, 7
      %v329 = vsub.s32 0, %v328
      %v330 = vrot.slane %v306, %v329
      %v331 = vlaneseq
      %v332 = vshrl.u32 %v331, 7
      %v333 = vsub.s32 1, %v332
      %v334 = vrot.slane %v306, %v333
      %v335 = vlaneseq
      %v336 = vshrl.u32 %v335, 7
      %v337 = vsub.s32 2, %v336
      %v338 = vrot.slane %v306, %v337
      %v339 = vlaneseq
      %v340 = vshrl.u32 %v339, 7
      %v341 = vsub.s32 3, %v340
      %v342 = vrot.slane %v306, %v341
      %v343 = vlaneseq
      %v344 = vshrl.u32 %v343, 7
      %v345 = vsub.s32 4, %v344
      %v346 = vrot.slane %v306, %v345
      %v347 = vlaneseq
      %v348 = vshrl.u32 %v347, 7
      %v349 = vsub.s32 5, %v348
      %v350 = vrot.slane %v306, %v349
      %v351 = vlaneseq
      %v352 = vshrl.u32 %v351, 7
      %v353 = vsub.s32 6, %v352
      %v354 = vrot.slane %v306, %v353
      %v355 = vlaneseq
      %v356 = vshrl.u32 %v355, 7
      %v357 = vsub.s32 7, %v356
      %v358 = vrot.slane %v306, %v357
      %v359 = vcombine.low %v330, %v334
      %v360 = vcombine.low %v338, %v342
      %v361 = vcombine.low %v346, %v350
      %v362 = vcombine.low %v354, %v358
      %363 = vrot.lane.b32.xlu0 %v359, 95
      %v364 = vpop.permute.xlu0 %363
      %365 = vrot.lane.b32.xlu0 %v360, 95
      %v366 = vpop.permute.xlu0 %365
      %367 = vrot.lane.b32.xlu0 %v361, 95
      %v368 = vpop.permute.xlu0 %367
      %369 = vrot.lane.b32.xlu0 %v362, 95
      %v370 = vpop.permute.xlu0 %369
      %v371 = vrot.slane %v364, 4
      %v372 = vrot.slane %v366, 4
      %v373 = vrot.slane %v368, 4
      %v374 = vrot.slane %v370, 4
      %vm375 = vcmask 777216
      %v376 = vsel %vm375, %v371, %v364
      %vm377 = vcmask 1043456
      %v378 = vsel %vm377, %v371, %v372
      %v379 = vsel %vm375, %v378, %v366
      %v380 = vsel %vm377, %v372, %v373
      %v381 = vsel %vm375, %v380, %v368
      %v382 = vsel %vm377, %v373, %v374
      %v383 = vsel %vm375, %v382, %v370
      %v389 = vmul.f32 %v321, %v376
      %v390 = vmul.f32 %v322, %v379
      %v391 = vmul.f32 %v323, %v381
      %v392 = vmul.f32 %v324, %v383
      %v393 = vmul.f32 %v325, %v374
      %v394 = vld [vmem:[%s0] sm:$0x3]
      %s395 = scalar_lea.vmem %s0, 2
      %v396 = vld [vmem:[%s395] sm:$0x3]
      %v402 = vcombine.high %v321, %v321
      %v403 = vcombine.high %v322, %v322
      %v404 = vcombine.high %v323, %v323
      %v405 = vcombine.high %v324, %v324
      %406 = vrot.lane.b32.xlu0 %v321, 32
      %v407 = vpop.permute.xlu0 %406
      %408 = vrot.lane.b32.xlu0 %v402, 32
      %v409 = vpop.permute.xlu0 %408
      %410 = vrot.lane.b32.xlu0 %v322, 32
      %v411 = vpop.permute.xlu0 %410
      %412 = vrot.lane.b32.xlu0 %v403, 32
      %v413 = vpop.permute.xlu0 %412
      %414 = vrot.lane.b32.xlu0 %v323, 32
      %v415 = vpop.permute.xlu0 %414
      %416 = vrot.lane.b32.xlu0 %v404, 32
      %v417 = vpop.permute.xlu0 %416
      %418 = vrot.lane.b32.xlu0 %v324, 32
      %v419 = vpop.permute.xlu0 %418
      %420 = vrot.lane.b32.xlu0 %v405, 32
      %v421 = vpop.permute.xlu0 %420
      %422 = vrot.lane.b32.xlu0 %v325, 32
      %v423 = vpop.permute.xlu0 %422
      %vm424 = vcmask 261120
      %v425 = vsel %vm424, %v407, %v409
      %v426 = vsel %vm424, %v409, %v411
      %v427 = vsel %vm424, %v411, %v413
      %v428 = vsel %vm424, %v413, %v415
      %v429 = vsel %vm424, %v415, %v417
      %v430 = vsel %vm424, %v417, %v419
      %v431 = vsel %vm424, %v419, %v421
      %v432 = vsel %vm424, %v421, %v423
      %vm433 = vcmask 31744
      %v435 = vsel %vm433, %v396, 0
      %v437 = vsel %vm377, %v425, 0
      %v439 = vsel %vm377, %v426, 0
      %v441 = vsel %vm377, %v427, 0
      %v443 = vsel %vm377, %v428, 0
      %v445 = vsel %vm377, %v429, 0
      %v447 = vsel %vm377, %v430, 0
      %v449 = vsel %vm377, %v431, 0
      %v451 = vsel %vm377, %v432, 0
      %453 = vmatprep.subr.mxu0 %v439
      %454 = vmatpush1.msra.mxu0 %v437
      %455 = vmatprep.subr.mxu0 0.0
      %456 = vmatpush1.msra.mxu0 0.0
      %457 = vmatprep.subr.mxu0 0.0
      %458 = vmatpush1.msra.mxu0 0.0
      %459 = vmatprep.subr.mxu0 0.0
      %460 = vmatpush1.msra.mxu0 0.0
      %461 = vmatprep.subr.mxu0 0.0
      %462 = vmatpush1.msra.mxu0 0.0
      %463 = vmatprep.subr.mxu0 0.0
      %464 = vmatpush1.msra.mxu0 0.0
      %465 = vmatprep.subr.mxu0 0.0
      %466 = vmatpush1.msra.mxu0 0.0
      %467 = vmatprep.subr.mxu0 0.0
      %468 = vmatpush1.msra.mxu0 0.0
      %469 = vmatprep.subr.mxu0 0.0
      %470 = vmatpush1.msra.mxu0 0.0
      %471 = vmatprep.subr.mxu0 0.0
      %472 = vmatpush1.msra.mxu0 0.0
      %473 = vmatprep.subr.mxu0 0.0
      %474 = vmatpush1.msra.mxu0 0.0
      %475 = vmatprep.subr.mxu0 0.0
      %476 = vmatpush1.msra.mxu0 0.0
      %477 = vmatprep.subr.mxu0 0.0
      %478 = vmatpush1.msra.mxu0 0.0
      %479 = vmatprep.subr.mxu0 0.0
      %480 = vmatpush1.msra.mxu0 0.0
      %481 = vmatprep.subr.mxu0 0.0
      %482 = vmatpush1.msra.mxu0 0.0
      %483 = vmatprep.subr.mxu0 0.0
      %484 = vmatpush1.msra.mxu0 0.0
      %485 = vmatprep.subr.mxu0 0.0
      %486 = vmatpush1.msra.mxu0 0.0
      %487 = vmatprep.subr.mxu0 0.0
      %488 = vmatpush1.msra.mxu0 0.0
      %489 = vmatprep.subr.mxu0 0.0
      %490 = vmatpush1.msra.mxu0 0.0
      %491 = vmatprep.subr.mxu0 0.0
      %492 = vmatpush1.msra.mxu0 0.0
      %493 = vmatprep.subr.mxu0 0.0
      %494 = vmatpush1.msra.mxu0 0.0
      %495 = vmatprep.subr.mxu0 0.0
      %496 = vmatpush1.msra.mxu0 0.0
      %497 = vmatprep.subr.mxu0 0.0
      %498 = vmatpush1.msra.mxu0 0.0
      %499 = vmatprep.subr.mxu0 0.0
      %500 = vmatpush1.msra.mxu0 0.0
      %501 = vmatprep.subr.mxu0 0.0
      %502 = vmatpush1.msra.mxu0 0.0
      %503 = vmatprep.subr.mxu0 0.0
      %504 = vmatpush1.msra.mxu0 0.0
      %505 = vmatprep.subr.mxu0 0.0
      %506 = vmatpush1.msra.mxu0 0.0
      %507 = vmatprep.subr.mxu0 0.0
      %508 = vmatpush1.msra.mxu0 0.0
      %509 = vmatprep.subr.mxu0 0.0
      %510 = vmatpush1.msra.mxu0 0.0
      %511 = vmatprep.subr.mxu0 0.0
      %512 = vmatpush1.msra.mxu0 0.0
      %513 = vmatprep.subr.mxu0 0.0
      %514 = vmatpush1.msra.mxu0 0.0
      %515 = vmatprep.subr.mxu0 0.0
      %516 = vmatpush1.msra.mxu0 0.0
      %517 = vmatprep.mubr.f32.mxu0 0.0
      %518 = vmatmul.mubr.f32.gmra.mrb[0].mxu0 %v435
      %v519 = vpop.f32.mrb[0].mxu0
      %v520 = vadd.f32 0.0, %v519
      %v521 = vpop.f32.mrb[0].mxu0
      %v522 = vadd.f32 0.0, %v521
      %523 = vdwg.mxu0
      %524 = vmatprep.subr.mxu0 %v443
      %525 = vmatpush1.msra.mxu0 %v441
      %526 = vmatprep.subr.mxu0 0.0
      %527 = vmatpush1.msra.mxu0 0.0
      %528 = vmatprep.subr.mxu0 0.0
      %529 = vmatpush1.msra.mxu0 0.0
      %530 = vmatprep.subr.mxu0 0.0
      %531 = vmatpush1.msra.mxu0 0.0
      %532 = vmatprep.subr.mxu0 0.0
      %533 = vmatpush1.msra.mxu0 0.0
      %534 = vmatprep.subr.mxu0 0.0
      %535 = vmatpush1.msra.mxu0 0.0
      %536 = vmatprep.subr.mxu0 0.0
      %537 = vmatpush1.msra.mxu0 0.0
      %538 = vmatprep.subr.mxu0 0.0
      %539 = vmatpush1.msra.mxu0 0.0
      %540 = vmatprep.subr.mxu0 0.0
      %541 = vmatpush1.msra.mxu0 0.0
      %542 = vmatprep.subr.mxu0 0.0
      %543 = vmatpush1.msra.mxu0 0.0
      %544 = vmatprep.subr.mxu0 0.0
      %545 = vmatpush1.msra.mxu0 0.0
      %546 = vmatprep.subr.mxu0 0.0
      %547 = vmatpush1.msra.mxu0 0.0
      %548 = vmatprep.subr.mxu0 0.0
      %549 = vmatpush1.msra.mxu0 0.0
      %550 = vmatprep.subr.mxu0 0.0
      %551 = vmatpush1.msra.mxu0 0.0
      %552 = vmatprep.subr.mxu0 0.0
      %553 = vmatpush1.msra.mxu0 0.0
      %554 = vmatprep.subr.mxu0 0.0
      %555 = vmatpush1.msra.mxu0 0.0
      %556 = vmatprep.subr.mxu0 0.0
      %557 = vmatpush1.msra.mxu0 0.0
      %558 = vmatprep.subr.mxu0 0.0
      %559 = vmatpush1.msra.mxu0 0.0
      %560 = vmatprep.subr.mxu0 0.0
      %561 = vmatpush1.msra.mxu0 0.0
      %562 = vmatprep.subr.mxu0 0.0
      %563 = vmatpush1.msra.mxu0 0.0
      %564 = vmatprep.subr.mxu0 0.0
      %565 = vmatpush1.msra.mxu0 0.0
      %566 = vmatprep.subr.mxu0 0.0
      %567 = vmatpush1.msra.mxu0 0.0
      %568 = vmatprep.subr.mxu0 0.0
      %569 = vmatpush1.msra.mxu0 0.0
      %570 = vmatprep.subr.mxu0 0.0
      %571 = vmatpush1.msra.mxu0 0.0
      %572 = vmatprep.subr.mxu0 0.0
      %573 = vmatpush1.msra.mxu0 0.0
      %574 = vmatprep.subr.mxu0 0.0
      %575 = vmatpush1.msra.mxu0 0.0
      %576 = vmatprep.subr.mxu0 0.0
      %577 = vmatpush1.msra.mxu0 0.0
      %578 = vmatprep.subr.mxu0 0.0
      %579 = vmatpush1.msra.mxu0 0.0
      %580 = vmatprep.subr.mxu0 0.0
      %581 = vmatpush1.msra.mxu0 0.0
      %582 = vmatprep.subr.mxu0 0.0
      %583 = vmatpush1.msra.mxu0 0.0
      %584 = vmatprep.subr.mxu0 0.0
      %585 = vmatpush1.msra.mxu0 0.0
      %586 = vmatprep.subr.mxu0 0.0
      %587 = vmatpush1.msra.mxu0 0.0
      %588 = vmatprep.mubr.f32.mxu0 0.0
      %589 = vmatmul.mubr.f32.gmra.mrb[0].mxu0 %v435
      %v590 = vpop.f32.mrb[0].mxu0
      %v591 = vadd.f32 0.0, %v590
      %v592 = vpop.f32.mrb[0].mxu0
      %v593 = vadd.f32 0.0, %v592
      %594 = vdwg.mxu0
      %595 = vmatprep.subr.mxu0 %v447
      %596 = vmatpush1.msra.mxu0 %v445
      %597 = vmatprep.subr.mxu0 0.0
      %598 = vmatpush1.msra.mxu0 0.0
      %599 = vmatprep.subr.mxu0 0.0
      %600 = vmatpush1.msra.mxu0 0.0
      %601 = vmatprep.subr.mxu0 0.0
      %602 = vmatpush1.msra.mxu0 0.0
      %603 = vmatprep.subr.mxu0 0.0
      %604 = vmatpush1.msra.mxu0 0.0
      %605 = vmatprep.subr.mxu0 0.0
      %606 = vmatpush1.msra.mxu0 0.0
      %607 = vmatprep.subr.mxu0 0.0
      %608 = vmatpush1.msra.mxu0 0.0
      %609 = vmatprep.subr.mxu0 0.0
      %610 = vmatpush1.msra.mxu0 0.0
      %611 = vmatprep.subr.mxu0 0.0
      %612 = vmatpush1.msra.mxu0 0.0
      %613 = vmatprep.subr.mxu0 0.0
      %614 = vmatpush1.msra.mxu0 0.0
      %615 = vmatprep.subr.mxu0 0.0
      %616 = vmatpush1.msra.mxu0 0.0
      %617 = vmatprep.subr.mxu0 0.0
      %618 = vmatpush1.msra.mxu0 0.0
      %619 = vmatprep.subr.mxu0 0.0
      %620 = vmatpush1.msra.mxu0 0.0
      %621 = vmatprep.subr.mxu0 0.0
      %622 = vmatpush1.msra.mxu0 0.0
      %623 = vmatprep.subr.mxu0 0.0
      %624 = vmatpush1.msra.mxu0 0.0
      %625 = vmatprep.subr.mxu0 0.0
      %626 = vmatpush1.msra.mxu0 0.0
      %627 = vmatprep.subr.mxu0 0.0
      %628 = vmatpush1.msra.mxu0 0.0
      %629 = vmatprep.subr.mxu0 0.0
      %630 = vmatpush1.msra.mxu0 0.0
      %631 = vmatprep.subr.mxu0 0.0
      %632 = vmatpush1.msra.mxu0 0.0
      %633 = vmatprep.subr.mxu0 0.0
      %634 = vmatpush1.msra.mxu0 0.0
      %635 = vmatprep.subr.mxu0 0.0
      %636 = vmatpush1.msra.mxu0 0.0
      %637 = vmatprep.subr.mxu0 0.0
      %638 = vmatpush1.msra.mxu0 0.0
      %639 = vmatprep.subr.mxu0 0.0
      %640 = vmatpush1.msra.mxu0 0.0
      %641 = vmatprep.subr.mxu0 0.0
      %642 = vmatpush1.msra.mxu0 0.0
      %643 = vmatprep.subr.mxu0 0.0
      %644 = vmatpush1.msra.mxu0 0.0
      %645 = vmatprep.subr.mxu0 0.0
      %646 = vmatpush1.msra.mxu0 0.0
      %647 = vmatprep.subr.mxu0 0.0
      %648 = vmatpush1.msra.mxu0 0.0
      %649 = vmatprep.subr.mxu0 0.0
      %650 = vmatpush1.msra.mxu0 0.0
      %651 = vmatprep.subr.mxu0 0.0
      %652 = vmatpush1.msra.mxu0 0.0
      %653 = vmatprep.subr.mxu0 0.0
      %654 = vmatpush1.msra.mxu0 0.0
      %655 = vmatprep.subr.mxu0 0.0
      %656 = vmatpush1.msra.mxu0 0.0
      %657 = vmatprep.subr.mxu0 0.0
      %658 = vmatpush1.msra.mxu0 0.0
      %659 = vmatprep.mubr.f32.mxu0 0.0
      %660 = vmatmul.mubr.f32.gmra.mrb[0].mxu0 %v435
      %v661 = vpop.f32.mrb[0].mxu0
      %v662 = vadd.f32 0.0, %v661
      %v663 = vpop.f32.mrb[0].mxu0
      %v664 = vadd.f32 0.0, %v663
      %665 = vdwg.mxu0
      %666 = vmatprep.subr.mxu0 %v451
      %667 = vmatpush1.msra.mxu0 %v449
      %668 = vmatprep.subr.mxu0 0.0
      %669 = vmatpush1.msra.mxu0 0.0
      %670 = vmatprep.subr.mxu0 0.0
      %671 = vmatpush1.msra.mxu0 0.0
      %672 = vmatprep.subr.mxu0 0.0
      %673 = vmatpush1.msra.mxu0 0.0
      %674 = vmatprep.subr.mxu0 0.0
      %675 = vmatpush1.msra.mxu0 0.0
      %676 = vmatprep.subr.mxu0 0.0
      %677 = vmatpush1.msra.mxu0 0.0
      %678 = vmatprep.subr.mxu0 0.0
      %679 = vmatpush1.msra.mxu0 0.0
      %680 = vmatprep.subr.mxu0 0.0
      %681 = vmatpush1.msra.mxu0 0.0
      %682 = vmatprep.subr.mxu0 0.0
      %683 = vmatpush1.msra.mxu0 0.0
      %684 = vmatprep.subr.mxu0 0.0
      %685 = vmatpush1.msra.mxu0 0.0
      %686 = vmatprep.subr.mxu0 0.0
      %687 = vmatpush1.msra.mxu0 0.0
      %688 = vmatprep.subr.mxu0 0.0
      %689 = vmatpush1.msra.mxu0 0.0
      %690 = vmatprep.subr.mxu0 0.0
      %691 = vmatpush1.msra.mxu0 0.0
      %692 = vmatprep.subr.mxu0 0.0
      %693 = vmatpush1.msra.mxu0 0.0
      %694 = vmatprep.subr.mxu0 0.0
      %695 = vmatpush1.msra.mxu0 0.0
      %696 = vmatprep.subr.mxu0 0.0
      %697 = vmatpush1.msra.mxu0 0.0
      %698 = vmatprep.subr.mxu0 0.0
      %699 = vmatpush1.msra.mxu0 0.0
      %700 = vmatprep.subr.mxu0 0.0
      %701 = vmatpush1.msra.mxu0 0.0
      %702 = vmatprep.subr.mxu0 0.0
      %703 = vmatpush1.msra.mxu0 0.0
      %704 = vmatprep.subr.mxu0 0.0
      %705 = vmatpush1.msra.mxu0 0.0
      %706 = vmatprep.subr.mxu0 0.0
      %707 = vmatpush1.msra.mxu0 0.0
      %708 = vmatprep.subr.mxu0 0.0
      %709 = vmatpush1.msra.mxu0 0.0
      %710 = vmatprep.subr.mxu0 0.0
      %711 = vmatpush1.msra.mxu0 0.0
      %712 = vmatprep.subr.mxu0 0.0
      %713 = vmatpush1.msra.mxu0 0.0
      %714 = vmatprep.subr.mxu0 0.0
      %715 = vmatpush1.msra.mxu0 0.0
      %716 = vmatprep.subr.mxu0 0.0
      %717 = vmatpush1.msra.mxu0 0.0
      %718 = vmatprep.subr.mxu0 0.0
      %719 = vmatpush1.msra.mxu0 0.0
      %720 = vmatprep.subr.mxu0 0.0
      %721 = vmatpush1.msra.mxu0 0.0
      %722 = vmatprep.subr.mxu0 0.0
      %723 = vmatpush1.msra.mxu0 0.0
      %724 = vmatprep.subr.mxu0 0.0
      %725 = vmatpush1.msra.mxu0 0.0
      %726 = vmatprep.subr.mxu0 0.0
      %727 = vmatpush1.msra.mxu0 0.0
      %728 = vmatprep.subr.mxu0 0.0
      %729 = vmatpush1.msra.mxu0 0.0
      %730 = vmatprep.mubr.f32.mxu0 0.0
      %731 = vmatmul.mubr.f32.gmra.mrb[0].mxu0 %v435
      %v732 = vpop.f32.mrb[0].mxu0
      %v733 = vadd.f32 0.0, %v732
      %v734 = vpop.f32.mrb[0].mxu0
      %v735 = vadd.f32 0.0, %v734
      %736 = vdwg.mxu0
      %v742 = vcombine.high %v389, %v389
      %v743 = vcombine.high %v390, %v390
      %v744 = vcombine.high %v391, %v391
      %v745 = vcombine.high %v392, %v392
      %746 = vrot.lane.b32.xlu0 %v389, 33
      %v747 = vpop.permute.xlu0 %746
      %748 = vrot.lane.b32.xlu0 %v742, 33
      %v749 = vpop.permute.xlu0 %748
      %750 = vrot.lane.b32.xlu0 %v390, 33
      %v751 = vpop.permute.xlu0 %750
      %752 = vrot.lane.b32.xlu0 %v743, 33
      %v753 = vpop.permute.xlu0 %752
      %754 = vrot.lane.b32.xlu0 %v391, 33
      %v755 = vpop.permute.xlu0 %754
      %756 = vrot.lane.b32.xlu0 %v744, 33
      %v757 = vpop.permute.xlu0 %756
      %758 = vrot.lane.b32.xlu0 %v392, 33
      %v759 = vpop.permute.xlu0 %758
      %760 = vrot.lane.b32.xlu0 %v745, 33
      %v761 = vpop.permute.xlu0 %760
      %762 = vrot.lane.b32.xlu0 %v393, 33
      %v763 = vpop.permute.xlu0 %762
      %vm764 = vcmask 269312
      %v765 = vsel %vm764, %v747, %v749
      %v766 = vsel %vm764, %v749, %v751
      %v767 = vsel %vm764, %v751, %v753
      %v768 = vsel %vm764, %v753, %v755
      %v769 = vsel %vm764, %v755, %v757
      %v770 = vsel %vm764, %v757, %v759
      %v771 = vsel %vm764, %v759, %v761
      %v772 = vsel %vm764, %v761, %v763
      %v774 = vsel %vm433, %v394, 0
      %v776 = vsel %vm377, %v765, 0
      %v778 = vsel %vm377, %v766, 0
      %v780 = vsel %vm377, %v767, 0
      %v782 = vsel %vm377, %v768, 0
      %v784 = vsel %vm377, %v769, 0
      %v786 = vsel %vm377, %v770, 0
      %v788 = vsel %vm377, %v771, 0
      %v790 = vsel %vm377, %v772, 0
      %792 = vmatprep.subr.mxu0 %v778
      %793 = vmatpush1.msra.mxu0 %v776
      %794 = vmatprep.subr.mxu0 0.0
      %795 = vmatpush1.msra.mxu0 0.0
      %796 = vmatprep.subr.mxu0 0.0
      %797 = vmatpush1.msra.mxu0 0.0
      %798 = vmatprep.subr.mxu0 0.0
      %799 = vmatpush1.msra.mxu0 0.0
      %800 = vmatprep.subr.mxu0 0.0
      %801 = vmatpush1.msra.mxu0 0.0
      %802 = vmatprep.subr.mxu0 0.0
      %803 = vmatpush1.msra.mxu0 0.0
      %804 = vmatprep.subr.mxu0 0.0
      %805 = vmatpush1.msra.mxu0 0.0
      %806 = vmatprep.subr.mxu0 0.0
      %807 = vmatpush1.msra.mxu0 0.0
      %808 = vmatprep.subr.mxu0 0.0
      %809 = vmatpush1.msra.mxu0 0.0
      %810 = vmatprep.subr.mxu0 0.0
      %811 = vmatpush1.msra.mxu0 0.0
      %812 = vmatprep.subr.mxu0 0.0
      %813 = vmatpush1.msra.mxu0 0.0
      %814 = vmatprep.subr.mxu0 0.0
      %815 = vmatpush1.msra.mxu0 0.0
      %816 = vmatprep.subr.mxu0 0.0
      %817 = vmatpush1.msra.mxu0 0.0
      %818 = vmatprep.subr.mxu0 0.0
      %819 = vmatpush1.msra.mxu0 0.0
      %820 = vmatprep.subr.mxu0 0.0
      %821 = vmatpush1.msra.mxu0 0.0
      %822 = vmatprep.subr.mxu0 0.0
      %823 = vmatpush1.msra.mxu0 0.0
      %824 = vmatprep.subr.mxu0 0.0
      %825 = vmatpush1.msra.mxu0 0.0
      %826 = vmatprep.subr.mxu0 0.0
      %827 = vmatpush1.msra.mxu0 0.0
      %828 = vmatprep.subr.mxu0 0.0
      %829 = vmatpush1.msra.mxu0 0.0
      %830 = vmatprep.subr.mxu0 0.0
      %831 = vmatpush1.msra.mxu0 0.0
      %832 = vmatprep.subr.mxu0 0.0
      %833 = vmatpush1.msra.mxu0 0.0
      %834 = vmatprep.subr.mxu0 0.0
      %835 = vmatpush1.msra.mxu0 0.0
      %836 = vmatprep.subr.mxu0 0.0
      %837 = vmatpush1.msra.mxu0 0.0
      %838 = vmatprep.subr.mxu0 0.0
      %839 = vmatpush1.msra.mxu0 0.0
      %840 = vmatprep.subr.mxu0 0.0
      %841 = vmatpush1.msra.mxu0 0.0
      %842 = vmatprep.subr.mxu0 0.0
      %843 = vmatpush1.msra.mxu0 0.0
      %844 = vmatprep.subr.mxu0 0.0
      %845 = vmatpush1.msra.mxu0 0.0
      %846 = vmatprep.subr.mxu0 0.0
      %847 = vmatpush1.msra.mxu0 0.0
      %848 = vmatprep.subr.mxu0 0.0
      %849 = vmatpush1.msra.mxu0 0.0
      %850 = vmatprep.subr.mxu0 0.0
      %851 = vmatpush1.msra.mxu0 0.0
      %852 = vmatprep.subr.mxu0 0.0
      %853 = vmatpush1.msra.mxu0 0.0
      %854 = vmatprep.subr.mxu0 0.0
      %855 = vmatpush1.msra.mxu0 0.0
      %856 = vmatprep.mubr.f32.mxu0 0.0
      %857 = vmatmul.mubr.f32.gmra.mrb[0].mxu0 %v774
      %v858 = vpop.f32.mrb[0].mxu0
      %v859 = vadd.f32 %v520, %v858
      %v860 = vpop.f32.mrb[0].mxu0
      %v861 = vadd.f32 %v522, %v860
      %862 = vdwg.mxu0
      %863 = vmatprep.subr.mxu0 %v782
      %864 = vmatpush1.msra.mxu0 %v780
      %865 = vmatprep.subr.mxu0 0.0
      %866 = vmatpush1.msra.mxu0 0.0
      %867 = vmatprep.subr.mxu0 0.0
      %868 = vmatpush1.msra.mxu0 0.0
      %869 = vmatprep.subr.mxu0 0.0
      %870 = vmatpush1.msra.mxu0 0.0
      %871 = vmatprep.subr.mxu0 0.0
      %872 = vmatpush1.msra.mxu0 0.0
      %873 = vmatprep.subr.mxu0 0.0
      %874 = vmatpush1.msra.mxu0 0.0
      %875 = vmatprep.subr.mxu0 0.0
      %876 = vmatpush1.msra.mxu0 0.0
      %877 = vmatprep.subr.mxu0 0.0
      %878 = vmatpush1.msra.mxu0 0.0
      %879 = vmatprep.subr.mxu0 0.0
      %880 = vmatpush1.msra.mxu0 0.0
      %881 = vmatprep.subr.mxu0 0.0
      %882 = vmatpush1.msra.mxu0 0.0
      %883 = vmatprep.subr.mxu0 0.0
      %884 = vmatpush1.msra.mxu0 0.0
      %885 = vmatprep.subr.mxu0 0.0
      %886 = vmatpush1.msra.mxu0 0.0
      %887 = vmatprep.subr.mxu0 0.0
      %888 = vmatpush1.msra.mxu0 0.0
      %889 = vmatprep.subr.mxu0 0.0
      %890 = vmatpush1.msra.mxu0 0.0
      %891 = vmatprep.subr.mxu0 0.0
      %892 = vmatpush1.msra.mxu0 0.0
      %893 = vmatprep.subr.mxu0 0.0
      %894 = vmatpush1.msra.mxu0 0.0
      %895 = vmatprep.subr.mxu0 0.0
      %896 = vmatpush1.msra.mxu0 0.0
      %897 = vmatprep.subr.mxu0 0.0
      %898 = vmatpush1.msra.mxu0 0.0
      %899 = vmatprep.subr.mxu0 0.0
      %900 = vmatpush1.msra.mxu0 0.0
      %901 = vmatprep.subr.mxu0 0.0
      %902 = vmatpush1.msra.mxu0 0.0
      %903 = vmatprep.subr.mxu0 0.0
      %904 = vmatpush1.msra.mxu0 0.0
      %905 = vmatprep.subr.mxu0 0.0
      %906 = vmatpush1.msra.mxu0 0.0
      %907 = vmatprep.subr.mxu0 0.0
      %908 = vmatpush1.msra.mxu0 0.0
      %909 = vmatprep.subr.mxu0 0.0
      %910 = vmatpush1.msra.mxu0 0.0
      %911 = vmatprep.subr.mxu0 0.0
      %912 = vmatpush1.msra.mxu0 0.0
      %913 = vmatprep.subr.mxu0 0.0
      %914 = vmatpush1.msra.mxu0 0.0
      %915 = vmatprep.subr.mxu0 0.0
      %916 = vmatpush1.msra.mxu0 0.0
      %917 = vmatprep.subr.mxu0 0.0
      %918 = vmatpush1.msra.mxu0 0.0
      %919 = vmatprep.subr.mxu0 0.0
      %920 = vmatpush1.msra.mxu0 0.0
      %921 = vmatprep.subr.mxu0 0.0
      %922 = vmatpush1.msra.mxu0 0.0
      %923 = vmatprep.subr.mxu0 0.0
      %924 = vmatpush1.msra.mxu0 0.0
      %925 = vmatprep.subr.mxu0 0.0
      %926 = vmatpush1.msra.mxu0 0.0
      %927 = vmatprep.mubr.f32.mxu0 0.0
      %928 = vmatmul.mubr.f32.gmra.mrb[0].mxu0 %v774
      %v929 = vpop.f32.mrb[0].mxu0
      %v930 = vadd.f32 %v591, %v929
      %v931 = vpop.f32.mrb[0].mxu0
      %v932 = vadd.f32 %v593, %v931
      %933 = vdwg.mxu0
      %934 = vmatprep.subr.mxu0 %v786
      %935 = vmatpush1.msra.mxu0 %v784
      %936 = vmatprep.subr.mxu0 0.0
      %937 = vmatpush1.msra.mxu0 0.0
      %938 = vmatprep.subr.mxu0 0.0
      %939 = vmatpush1.msra.mxu0 0.0
      %940 = vmatprep.subr.mxu0 0.0
      %941 = vmatpush1.msra.mxu0 0.0
      %942 = vmatprep.subr.mxu0 0.0
      %943 = vmatpush1.msra.mxu0 0.0
      %944 = vmatprep.subr.mxu0 0.0
      %945 = vmatpush1.msra.mxu0 0.0
      %946 = vmatprep.subr.mxu0 0.0
      %947 = vmatpush1.msra.mxu0 0.0
      %948 = vmatprep.subr.mxu0 0.0
      %949 = vmatpush1.msra.mxu0 0.0
      %950 = vmatprep.subr.mxu0 0.0
      %951 = vmatpush1.msra.mxu0 0.0
      %952 = vmatprep.subr.mxu0 0.0
      %953 = vmatpush1.msra.mxu0 0.0
      %954 = vmatprep.subr.mxu0 0.0
      %955 = vmatpush1.msra.mxu0 0.0
      %956 = vmatprep.subr.mxu0 0.0
      %957 = vmatpush1.msra.mxu0 0.0
      %958 = vmatprep.subr.mxu0 0.0
      %959 = vmatpush1.msra.mxu0 0.0
      %960 = vmatprep.subr.mxu0 0.0
      %961 = vmatpush1.msra.mxu0 0.0
      %962 = vmatprep.subr.mxu0 0.0
      %963 = vmatpush1.msra.mxu0 0.0
      %964 = vmatprep.subr.mxu0 0.0
      %965 = vmatpush1.msra.mxu0 0.0
      %966 = vmatprep.subr.mxu0 0.0
      %967 = vmatpush1.msra.mxu0 0.0
      %968 = vmatprep.subr.mxu0 0.0
      %969 = vmatpush1.msra.mxu0 0.0
      %970 = vmatprep.subr.mxu0 0.0
      %971 = vmatpush1.msra.mxu0 0.0
      %972 = vmatprep.subr.mxu0 0.0
      %973 = vmatpush1.msra.mxu0 0.0
      %974 = vmatprep.subr.mxu0 0.0
      %975 = vmatpush1.msra.mxu0 0.0
      %976 = vmatprep.subr.mxu0 0.0
      %977 = vmatpush1.msra.mxu0 0.0
      %978 = vmatprep.subr.mxu0 0.0
      %979 = vmatpush1.msra.mxu0 0.0
      %980 = vmatprep.subr.mxu0 0.0
      %981 = vmatpush1.msra.mxu0 0.0
      %982 = vmatprep.subr.mxu0 0.0
      %983 = vmatpush1.msra.mxu0 0.0
      %984 = vmatprep.subr.mxu0 0.0
      %985 = vmatpush1.msra.mxu0 0.0
      %986 = vmatprep.subr.mxu0 0.0
      %987 = vmatpush1.msra.mxu0 0.0
      %988 = vmatprep.subr.mxu0 0.0
      %989 = vmatpush1.msra.mxu0 0.0
      %990 = vmatprep.subr.mxu0 0.0
      %991 = vmatpush1.msra.mxu0 0.0
      %992 = vmatprep.subr.mxu0 0.0
      %993 = vmatpush1.msra.mxu0 0.0
      %994 = vmatprep.subr.mxu0 0.0
      %995 = vmatpush1.msra.mxu0 0.0
      %996 = vmatprep.subr.mxu0 0.0
      %997 = vmatpush1.msra.mxu0 0.0
      %998 = vmatprep.mubr.f32.mxu0 0.0
      %999 = vmatmul.mubr.f32.gmra.mrb[0].mxu0 %v774
      %v1000 = vpop.f32.mrb[0].mxu0
      %v1001 = vadd.f32 %v662, %v1000
      %v1002 = vpop.f32.mrb[0].mxu0
      %v1003 = vadd.f32 %v664, %v1002
      %1004 = vdwg.mxu0
      %1005 = vmatprep.subr.mxu0 %v790
      %1006 = vmatpush1.msra.mxu0 %v788
      %1007 = vmatprep.subr.mxu0 0.0
      %1008 = vmatpush1.msra.mxu0 0.0
      %1009 = vmatprep.subr.mxu0 0.0
      %1010 = vmatpush1.msra.mxu0 0.0
      %1011 = vmatprep.subr.mxu0 0.0
      %1012 = vmatpush1.msra.mxu0 0.0
      %1013 = vmatprep.subr.mxu0 0.0
      %1014 = vmatpush1.msra.mxu0 0.0
      %1015 = vmatprep.subr.mxu0 0.0
      %1016 = vmatpush1.msra.mxu0 0.0
      %1017 = vmatprep.subr.mxu0 0.0
      %1018 = vmatpush1.msra.mxu0 0.0
      %1019 = vmatprep.subr.mxu0 0.0
      %1020 = vmatpush1.msra.mxu0 0.0
      %1021 = vmatprep.subr.mxu0 0.0
      %1022 = vmatpush1.msra.mxu0 0.0
      %1023 = vmatprep.subr.mxu0 0.0
      %1024 = vmatpush1.msra.mxu0 0.0
      %1025 = vmatprep.subr.mxu0 0.0
      %1026 = vmatpush1.msra.mxu0 0.0
      %1027 = vmatprep.subr.mxu0 0.0
      %1028 = vmatpush1.msra.mxu0 0.0
      %1029 = vmatprep.subr.mxu0 0.0
      %1030 = vmatpush1.msra.mxu0 0.0
      %1031 = vmatprep.subr.mxu0 0.0
      %1032 = vmatpush1.msra.mxu0 0.0
      %1033 = vmatprep.subr.mxu0 0.0
      %1034 = vmatpush1.msra.mxu0 0.0
      %1035 = vmatprep.subr.mxu0 0.0
      %1036 = vmatpush1.msra.mxu0 0.0
      %1037 = vmatprep.subr.mxu0 0.0
      %1038 = vmatpush1.msra.mxu0 0.0
      %1039 = vmatprep.subr.mxu0 0.0
      %1040 = vmatpush1.msra.mxu0 0.0
      %1041 = vmatprep.subr.mxu0 0.0
      %1042 = vmatpush1.msra.mxu0 0.0
      %1043 = vmatprep.subr.mxu0 0.0
      %1044 = vmatpush1.msra.mxu0 0.0
      %1045 = vmatprep.subr.mxu0 0.0
      %1046 = vmatpush1.msra.mxu0 0.0
      %1047 = vmatprep.subr.mxu0 0.0
      %1048 = vmatpush1.msra.mxu0 0.0
      %1049 = vmatprep.subr.mxu0 0.0
      %1050 = vmatpush1.msra.mxu0 0.0
      %1051 = vmatprep.subr.mxu0 0.0
      %1052 = vmatpush1.msra.mxu0 0.0
      %1053 = vmatprep.subr.mxu0 0.0
      %1054 = vmatpush1.msra.mxu0 0.0
      %1055 = vmatprep.subr.mxu0 0.0
      %1056 = vmatpush1.msra.mxu0 0.0
      %1057 = vmatprep.subr.mxu0 0.0
      %1058 = vmatpush1.msra.mxu0 0.0
      %1059 = vmatprep.subr.mxu0 0.0
      %1060 = vmatpush1.msra.mxu0 0.0
      %1061 = vmatprep.subr.mxu0 0.0
      %1062 = vmatpush1.msra.mxu0 0.0
      %1063 = vmatprep.subr.mxu0 0.0
      %1064 = vmatpush1.msra.mxu0 0.0
      %1065 = vmatprep.subr.mxu0 0.0
      %1066 = vmatpush1.msra.mxu0 0.0
      %1067 = vmatprep.subr.mxu0 0.0
      %1068 = vmatpush1.msra.mxu0 0.0
      %1069 = vmatprep.mubr.f32.mxu0 0.0
      %1070 = vmatmul.mubr.f32.gmra.mrb[0].mxu0 %v774
      %v1071 = vpop.f32.mrb[0].mxu0
      %v1072 = vadd.f32 %v733, %v1071
      %v1073 = vpop.f32.mrb[0].mxu0
      %v1074 = vadd.f32 %v735, %v1073
      %1075 = vdwg.mxu0
      %v1077 = vlaneseq
      %v1078 = vshrl.u32 %v1077, 7
      %v1079 = vsub.s32 0, %v1078
      %v1080 = vrot.slane %v307, %v1079
      %v1081 = vlaneseq
      %v1082 = vshrl.u32 %v1081, 7
      %v1083 = vsub.s32 1, %v1082
      %v1084 = vrot.slane %v307, %v1083
      %v1085 = vlaneseq
      %v1086 = vshrl.u32 %v1085, 7
      %v1087 = vsub.s32 2, %v1086
      %v1088 = vrot.slane %v307, %v1087
      %v1089 = vlaneseq
      %v1090 = vshrl.u32 %v1089, 7
      %v1091 = vsub.s32 3, %v1090
      %v1092 = vrot.slane %v307, %v1091
      %v1093 = vlaneseq
      %v1094 = vshrl.u32 %v1093, 7
      %v1095 = vsub.s32 4, %v1094
      %v1096 = vrot.slane %v307, %v1095
      %v1097 = vlaneseq
      %v1098 = vshrl.u32 %v1097, 7
      %v1099 = vsub.s32 5, %v1098
      %v1100 = vrot.slane %v307, %v1099
      %v1101 = vlaneseq
      %v1102 = vshrl.u32 %v1101, 7
      %v1103 = vsub.s32 6, %v1102
      %v1104 = vrot.slane %v307, %v1103
      %v1105 = vlaneseq
      %v1106 = vshrl.u32 %v1105, 7
      %v1107 = vsub.s32 7, %v1106
      %v1108 = vrot.slane %v307, %v1107
      %v1109 = vcombine.low %v1080, %v1084
      %v1110 = vcombine.low %v1088, %v1092
      %v1111 = vcombine.low %v1096, %v1100
      %v1112 = vcombine.low %v1104, %v1108
      %1113 = vrot.lane.b32.xlu0 %v1109, 97
      %v1114 = vpop.permute.xlu0 %1113
      %1115 = vrot.lane.b32.xlu0 %v1110, 97
      %v1116 = vpop.permute.xlu0 %1115
      %1117 = vrot.lane.b32.xlu0 %v1111, 97
      %v1118 = vpop.permute.xlu0 %1117
      %1119 = vrot.lane.b32.xlu0 %v1112, 97
      %v1120 = vpop.permute.xlu0 %1119
      %v1121 = vrot.slane %v1114, 4
      %v1122 = vrot.slane %v1116, 4
      %v1123 = vrot.slane %v1118, 4
      %v1124 = vrot.slane %v1120, 4
      %vm1125 = vcmask 793600
      %v1126 = vsel %vm1125, %v1121, %v1114
      %v1127 = vsel %vm377, %v1121, %v1122
      %v1128 = vsel %vm1125, %v1127, %v1116
      %v1129 = vsel %vm377, %v1122, %v1123
      %v1130 = vsel %vm1125, %v1129, %v1118
      %v1131 = vsel %vm377, %v1123, %v1124
      %v1132 = vsel %vm1125, %v1131, %v1120
      %v1138 = vmul.f32 %v321, %v1126
      %v1139 = vmul.f32 %v322, %v1128
      %v1140 = vmul.f32 %v323, %v1130
      %v1141 = vmul.f32 %v324, %v1132
      %v1142 = vmul.f32 %v325, %v1124
      %s1143 = scalar_lea.vmem %s0, 4
      %v1144 = vld [vmem:[%s1143] sm:$0x3]
      %v1150 = vcombine.high %v1138, %v1138
      %v1151 = vcombine.high %v1139, %v1139
      %v1152 = vcombine.high %v1140, %v1140
      %v1153 = vcombine.high %v1141, %v1141
      %1154 = vrot.lane.b32.xlu0 %v1138, 31
      %v1155 = vpop.permute.xlu0 %1154
      %1156 = vrot.lane.b32.xlu0 %v1150, 31
      %v1157 = vpop.permute.xlu0 %1156
      %1158 = vrot.lane.b32.xlu0 %v1139, 31
      %v1159 = vpop.permute.xlu0 %1158
      %1160 = vrot.lane.b32.xlu0 %v1151, 31
      %v1161 = vpop.permute.xlu0 %1160
      %1162 = vrot.lane.b32.xlu0 %v1140, 31
      %v1163 = vpop.permute.xlu0 %1162
      %1164 = vrot.lane.b32.xlu0 %v1152, 31
      %v1165 = vpop.permute.xlu0 %1164
      %1166 = vrot.lane.b32.xlu0 %v1141, 31
      %v1167 = vpop.permute.xlu0 %1166
      %1168 = vrot.lane.b32.xlu0 %v1153, 31
      %v1169 = vpop.permute.xlu0 %1168
      %1170 = vrot.lane.b32.xlu0 %v1142, 31
      %v1171 = vpop.permute.xlu0 %1170
      %vm1172 = vcmask 252928
      %v1173 = vsel %vm1172, %v1155, %v1157
      %v1174 = vsel %vm1172, %v1157, %v1159
      %v1175 = vsel %vm1172, %v1159, %v1161
      %v1176 = vsel %vm1172, %v1161, %v1163
      %v1177 = vsel %vm1172, %v1163, %v1165
      %v1178 = vsel %vm1172, %v1165, %v1167
      %v1179 = vsel %vm1172, %v1167, %v1169
      %v1180 = vsel %vm1172, %v1169, %v1171
      %v1182 = vsel %vm433, %v1144, 0
      %v1184 = vsel %vm377, %v1173, 0
      %v1186 = vsel %vm377, %v1174, 0
      %v1188 = vsel %vm377, %v1175, 0
      %v1190 = vsel %vm377, %v1176, 0
      %v1192 = vsel %vm377, %v1177, 0
      %v1194 = vsel %vm377, %v1178, 0
      %v1196 = vsel %vm377, %v1179, 0
      %v1198 = vsel %vm377, %v1180, 0
      %1200 = vmatprep.subr.mxu0 %v1186
      %1201 = vmatpush1.msra.mxu0 %v1184
      %1202 = vmatprep.subr.mxu0 0.0
      %1203 = vmatpush1.msra.mxu0 0.0
      %1204 = vmatprep.subr.mxu0 0.0
      %1205 = vmatpush1.msra.mxu0 0.0
      %1206 = vmatprep.subr.mxu0 0.0
      %1207 = vmatpush1.msra.mxu0 0.0
      %1208 = vmatprep.subr.mxu0 0.0
      %1209 = vmatpush1.msra.mxu0 0.0
      %1210 = vmatprep.subr.mxu0 0.0
      %1211 = vmatpush1.msra.mxu0 0.0
      %1212 = vmatprep.subr.mxu0 0.0
      %1213 = vmatpush1.msra.mxu0 0.0
      %1214 = vmatprep.subr.mxu0 0.0
      %1215 = vmatpush1.msra.mxu0 0.0
      %1216 = vmatprep.subr.mxu0 0.0
      %1217 = vmatpush1.msra.mxu0 0.0
      %1218 = vmatprep.subr.mxu0 0.0
      %1219 = vmatpush1.msra.mxu0 0.0
      %1220 = vmatprep.subr.mxu0 0.0
      %1221 = vmatpush1.msra.mxu0 0.0
      %1222 = vmatprep.subr.mxu0 0.0
      %1223 = vmatpush1.msra.mxu0 0.0
      %1224 = vmatprep.subr.mxu0 0.0
      %1225 = vmatpush1.msra.mxu0 0.0
      %1226 = vmatprep.subr.mxu0 0.0
      %1227 = vmatpush1.msra.mxu0 0.0
      %1228 = vmatprep.subr.mxu0 0.0
      %1229 = vmatpush1.msra.mxu0 0.0
      %1230 = vmatprep.subr.mxu0 0.0
      %1231 = vmatpush1.msra.mxu0 0.0
      %1232 = vmatprep.subr.mxu0 0.0
      %1233 = vmatpush1.msra.mxu0 0.0
      %1234 = vmatprep.subr.mxu0 0.0
      %1235 = vmatpush1.msra.mxu0 0.0
      %1236 = vmatprep.subr.mxu0 0.0
      %1237 = vmatpush1.msra.mxu0 0.0
      %1238 = vmatprep.subr.mxu0 0.0
      %1239 = vmatpush1.msra.mxu0 0.0
      %1240 = vmatprep.subr.mxu0 0.0
      %1241 = vmatpush1.msra.mxu0 0.0
      %1242 = vmatprep.subr.mxu0 0.0
      %1243 = vmatpush1.msra.mxu0 0.0
      %1244 = vmatprep.subr.mxu0 0.0
      %1245 = vmatpush1.msra.mxu0 0.0
      %1246 = vmatprep.subr.mxu0 0.0
      %1247 = vmatpush1.msra.mxu0 0.0
      %1248 = vmatprep.subr.mxu0 0.0
      %1249 = vmatpush1.msra.mxu0 0.0
      %1250 = vmatprep.subr.mxu0 0.0
      %1251 = vmatpush1.msra.mxu0 0.0
      %1252 = vmatprep.subr.mxu0 0.0
      %1253 = vmatpush1.msra.mxu0 0.0
      %1254 = vmatprep.subr.mxu0 0.0
      %1255 = vmatpush1.msra.mxu0 0.0
      %1256 = vmatprep.subr.mxu0 0.0
      %1257 = vmatpush1.msra.mxu0 0.0
      %1258 = vmatprep.subr.mxu0 0.0
      %1259 = vmatpush1.msra.mxu0 0.0
      %1260 = vmatprep.subr.mxu0 0.0
      %1261 = vmatpush1.msra.mxu0 0.0
      %1262 = vmatprep.subr.mxu0 0.0
      %1263 = vmatpush1.msra.mxu0 0.0
      %1264 = vmatprep.mubr.f32.mxu0 0.0
      %1265 = vmatmul.mubr.f32.gmra.mrb[0].mxu0 %v1182
      %v1266 = vpop.f32.mrb[0].mxu0
      %v1267 = vadd.f32 0.0, %v1266
      %v1268 = vpop.f32.mrb[0].mxu0
      %v1269 = vadd.f32 0.0, %v1268
      %1270 = vdwg.mxu0
      %1271 = vmatprep.subr.mxu0 %v1190
      %1272 = vmatpush1.msra.mxu0 %v1188
      %1273 = vmatprep.subr.mxu0 0.0
      %1274 = vmatpush1.msra.mxu0 0.0
      %1275 = vmatprep.subr.mxu0 0.0
      %1276 = vmatpush1.msra.mxu0 0.0
      %1277 = vmatprep.subr.mxu0 0.0
      %1278 = vmatpush1.msra.mxu0 0.0
      %1279 = vmatprep.subr.mxu0 0.0
      %1280 = vmatpush1.msra.mxu0 0.0
      %1281 = vmatprep.subr.mxu0 0.0
      %1282 = vmatpush1.msra.mxu0 0.0
      %1283 = vmatprep.subr.mxu0 0.0
      %1284 = vmatpush1.msra.mxu0 0.0
      %1285 = vmatprep.subr.mxu0 0.0
      %1286 = vmatpush1.msra.mxu0 0.0
      %1287 = vmatprep.subr.mxu0 0.0
      %1288 = vmatpush1.msra.mxu0 0.0
      %1289 = vmatprep.subr.mxu0 0.0
      %1290 = vmatpush1.msra.mxu0 0.0
      %1291 = vmatprep.subr.mxu0 0.0
      %1292 = vmatpush1.msra.mxu0 0.0
      %1293 = vmatprep.subr.mxu0 0.0
      %1294 = vmatpush1.msra.mxu0 0.0
      %1295 = vmatprep.subr.mxu0 0.0
      %1296 = vmatpush1.msra.mxu0 0.0
      %1297 = vmatprep.subr.mxu0 0.0
      %1298 = vmatpush1.msra.mxu0 0.0
      %1299 = vmatprep.subr.mxu0 0.0
      %1300 = vmatpush1.msra.mxu0 0.0
      %1301 = vmatprep.subr.mxu0 0.0
      %1302 = vmatpush1.msra.mxu0 0.0
      %1303 = vmatprep.subr.mxu0 0.0
      %1304 = vmatpush1.msra.mxu0 0.0
      %1305 = vmatprep.subr.mxu0 0.0
      %1306 = vmatpush1.msra.mxu0 0.0
      %1307 = vmatprep.subr.mxu0 0.0
      %1308 = vmatpush1.msra.mxu0 0.0
      %1309 = vmatprep.subr.mxu0 0.0
      %1310 = vmatpush1.msra.mxu0 0.0
      %1311 = vmatprep.subr.mxu0 0.0
      %1312 = vmatpush1.msra.mxu0 0.0
      %1313 = vmatprep.subr.mxu0 0.0
      %1314 = vmatpush1.msra.mxu0 0.0
      %1315 = vmatprep.subr.mxu0 0.0
      %1316 = vmatpush1.msra.mxu0 0.0
      %1317 = vmatprep.subr.mxu0 0.0
      %1318 = vmatpush1.msra.mxu0 0.0
      %1319 = vmatprep.subr.mxu0 0.0
      %1320 = vmatpush1.msra.mxu0 0.0
      %1321 = vmatprep.subr.mxu0 0.0
      %1322 = vmatpush1.msra.mxu0 0.0
      %1323 = vmatprep.subr.mxu0 0.0
      %1324 = vmatpush1.msra.mxu0 0.0
      %1325 = vmatprep.subr.mxu0 0.0
      %1326 = vmatpush1.msra.mxu0 0.0
      %1327 = vmatprep.subr.mxu0 0.0
      %1328 = vmatpush1.msra.mxu0 0.0
      %1329 = vmatprep.subr.mxu0 0.0
      %1330 = vmatpush1.msra.mxu0 0.0
      %1331 = vmatprep.subr.mxu0 0.0
      %1332 = vmatpush1.msra.mxu0 0.0
      %1333 = vmatprep.subr.mxu0 0.0
      %1334 = vmatpush1.msra.mxu0 0.0
      %1335 = vmatprep.mubr.f32.mxu0 0.0
      %1336 = vmatmul.mubr.f32.gmra.mrb[0].mxu0 %v1182
      %v1337 = vpop.f32.mrb[0].mxu0
      %v1338 = vadd.f32 0.0, %v1337
      %v1339 = vpop.f32.mrb[0].mxu0
      %v1340 = vadd.f32 0.0, %v1339
      %1341 = vdwg.mxu0
      %1342 = vmatprep.subr.mxu0 %v1194
      %1343 = vmatpush1.msra.mxu0 %v1192
      %1344 = vmatprep.subr.mxu0 0.0
      %1345 = vmatpush1.msra.mxu0 0.0
      %1346 = vmatprep.subr.mxu0 0.0
      %1347 = vmatpush1.msra.mxu0 0.0
      %1348 = vmatprep.subr.mxu0 0.0
      %1349 = vmatpush1.msra.mxu0 0.0
      %1350 = vmatprep.subr.mxu0 0.0
      %1351 = vmatpush1.msra.mxu0 0.0
      %1352 = vmatprep.subr.mxu0 0.0
      %1353 = vmatpush1.msra.mxu0 0.0
      %1354 = vmatprep.subr.mxu0 0.0
      %1355 = vmatpush1.msra.mxu0 0.0
      %1356 = vmatprep.subr.mxu0 0.0
      %1357 = vmatpush1.msra.mxu0 0.0
      %1358 = vmatprep.subr.mxu0 0.0
      %1359 = vmatpush1.msra.mxu0 0.0
      %1360 = vmatprep.subr.mxu0 0.0
      %1361 = vmatpush1.msra.mxu0 0.0
      %1362 = vmatprep.subr.mxu0 0.0
      %1363 = vmatpush1.msra.mxu0 0.0
      %1364 = vmatprep.subr.mxu0 0.0
      %1365 = vmatpush1.msra.mxu0 0.0
      %1366 = vmatprep.subr.mxu0 0.0
      %1367 = vmatpush1.msra.mxu0 0.0
      %1368 = vmatprep.subr.mxu0 0.0
      %1369 = vmatpush1.msra.mxu0 0.0
      %1370 = vmatprep.subr.mxu0 0.0
      %1371 = vmatpush1.msra.mxu0 0.0
      %1372 = vmatprep.subr.mxu0 0.0
      %1373 = vmatpush1.msra.mxu0 0.0
      %1374 = vmatprep.subr.mxu0 0.0
      %1375 = vmatpush1.msra.mxu0 0.0
      %1376 = vmatprep.subr.mxu0 0.0
      %1377 = vmatpush1.msra.mxu0 0.0
      %1378 = vmatprep.subr.mxu0 0.0
      %1379 = vmatpush1.msra.mxu0 0.0
      %1380 = vmatprep.subr.mxu0 0.0
      %1381 = vmatpush1.msra.mxu0 0.0
      %1382 = vmatprep.subr.mxu0 0.0
      %1383 = vmatpush1.msra.mxu0 0.0
      %1384 = vmatprep.subr.mxu0 0.0
      %1385 = vmatpush1.msra.mxu0 0.0
      %1386 = vmatprep.subr.mxu0 0.0
      %1387 = vmatpush1.msra.mxu0 0.0
      %1388 = vmatprep.subr.mxu0 0.0
      %1389 = vmatpush1.msra.mxu0 0.0
      %1390 = vmatprep.subr.mxu0 0.0
      %1391 = vmatpush1.msra.mxu0 0.0
      %1392 = vmatprep.subr.mxu0 0.0
      %1393 = vmatpush1.msra.mxu0 0.0
      %1394 = vmatprep.subr.mxu0 0.0
      %1395 = vmatpush1.msra.mxu0 0.0
      %1396 = vmatprep.subr.mxu0 0.0
      %1397 = vmatpush1.msra.mxu0 0.0
      %1398 = vmatprep.subr.mxu0 0.0
      %1399 = vmatpush1.msra.mxu0 0.0
      %1400 = vmatprep.subr.mxu0 0.0
      %1401 = vmatpush1.msra.mxu0 0.0
      %1402 = vmatprep.subr.mxu0 0.0
      %1403 = vmatpush1.msra.mxu0 0.0
      %1404 = vmatprep.subr.mxu0 0.0
      %1405 = vmatpush1.msra.mxu0 0.0
      %1406 = vmatprep.mubr.f32.mxu0 0.0
      %1407 = vmatmul.mubr.f32.gmra.mrb[0].mxu0 %v1182
      %v1408 = vpop.f32.mrb[0].mxu0
      %v1409 = vadd.f32 0.0, %v1408
      %v1410 = vpop.f32.mrb[0].mxu0
      %v1411 = vadd.f32 0.0, %v1410
      %1412 = vdwg.mxu0
      %1413 = vmatprep.subr.mxu0 %v1198
      %1414 = vmatpush1.msra.mxu0 %v1196
      %1415 = vmatprep.subr.mxu0 0.0
      %1416 = vmatpush1.msra.mxu0 0.0
      %1417 = vmatprep.subr.mxu0 0.0
      %1418 = vmatpush1.msra.mxu0 0.0
      %1419 = vmatprep.subr.mxu0 0.0
      %1420 = vmatpush1.msra.mxu0 0.0
      %1421 = vmatprep.subr.mxu0 0.0
      %1422 = vmatpush1.msra.mxu0 0.0
      %1423 = vmatprep.subr.mxu0 0.0
      %1424 = vmatpush1.msra.mxu0 0.0
      %1425 = vmatprep.subr.mxu0 0.0
      %1426 = vmatpush1.msra.mxu0 0.0
      %1427 = vmatprep.subr.mxu0 0.0
      %1428 = vmatpush1.msra.mxu0 0.0
      %1429 = vmatprep.subr.mxu0 0.0
      %1430 = vmatpush1.msra.mxu0 0.0
      %1431 = vmatprep.subr.mxu0 0.0
      %1432 = vmatpush1.msra.mxu0 0.0
      %1433 = vmatprep.subr.mxu0 0.0
      %1434 = vmatpush1.msra.mxu0 0.0
      %1435 = vmatprep.subr.mxu0 0.0
      %1436 = vmatpush1.msra.mxu0 0.0
      %1437 = vmatprep.subr.mxu0 0.0
      %1438 = vmatpush1.msra.mxu0 0.0
      %1439 = vmatprep.subr.mxu0 0.0
      %1440 = vmatpush1.msra.mxu0 0.0
      %1441 = vmatprep.subr.mxu0 0.0
      %1442 = vmatpush1.msra.mxu0 0.0
      %1443 = vmatprep.subr.mxu0 0.0
      %1444 = vmatpush1.msra.mxu0 0.0
      %1445 = vmatprep.subr.mxu0 0.0
      %1446 = vmatpush1.msra.mxu0 0.0
      %1447 = vmatprep.subr.mxu0 0.0
      %1448 = vmatpush1.msra.mxu0 0.0
      %1449 = vmatprep.subr.mxu0 0.0
      %1450 = vmatpush1.msra.mxu0 0.0
      %1451 = vmatprep.subr.mxu0 0.0
      %1452 = vmatpush1.msra.mxu0 0.0
      %1453 = vmatprep.subr.mxu0 0.0
      %1454 = vmatpush1.msra.mxu0 0.0
      %1455 = vmatprep.subr.mxu0 0.0
      %1456 = vmatpush1.msra.mxu0 0.0
      %1457 = vmatprep.subr.mxu0 0.0
      %1458 = vmatpush1.msra.mxu0 0.0
      %1459 = vmatprep.subr.mxu0 0.0
      %1460 = vmatpush1.msra.mxu0 0.0
      %1461 = vmatprep.subr.mxu0 0.0
      %1462 = vmatpush1.msra.mxu0 0.0
      %1463 = vmatprep.subr.mxu0 0.0
      %1464 = vmatpush1.msra.mxu0 0.0
      %1465 = vmatprep.subr.mxu0 0.0
      %1466 = vmatpush1.msra.mxu0 0.0
      %1467 = vmatprep.subr.mxu0 0.0
      %1468 = vmatpush1.msra.mxu0 0.0
      %1469 = vmatprep.subr.mxu0 0.0
      %1470 = vmatpush1.msra.mxu0 0.0
      %1471 = vmatprep.subr.mxu0 0.0
      %1472 = vmatpush1.msra.mxu0 0.0
      %1473 = vmatprep.subr.mxu0 0.0
      %1474 = vmatpush1.msra.mxu0 0.0
      %1475 = vmatprep.subr.mxu0 0.0
      %1476 = vmatpush1.msra.mxu0 0.0
      %1477 = vmatprep.mubr.f32.mxu0 0.0
      %1478 = vmatmul.mubr.f32.gmra.mrb[0].mxu0 %v1182
      %v1479 = vpop.f32.mrb[0].mxu0
      %v1480 = vadd.f32 0.0, %v1479
      %v1481 = vpop.f32.mrb[0].mxu0
      %v1482 = vadd.f32 0.0, %v1481
      %1483 = vdwg.mxu0
      %v1484 = vadd.f32 %v859, %v1267
      %v1485 = vadd.f32 %v861, %v1269
      %v1486 = vadd.f32 %v930, %v1338
      %v1487 = vadd.f32 %v932, %v1340
      %v1488 = vadd.f32 %v1001, %v1409
      %v1489 = vadd.f32 %v1003, %v1411
      %v1490 = vadd.f32 %v1072, %v1480
      %v1491 = vadd.f32 %v1074, %v1482
      %1492 = vrot.lane.b32.xlu0 %v359, 127
      %v1493 = vpop.permute.xlu0 %1492
      %1494 = vrot.lane.b32.xlu0 %v360, 127
      %v1495 = vpop.permute.xlu0 %1494
      %1496 = vrot.lane.b32.xlu0 %v361, 127
      %v1497 = vpop.permute.xlu0 %1496
      %1498 = vrot.lane.b32.xlu0 %v362, 127
      %v1499 = vpop.permute.xlu0 %1498
      %v1500 = vrot.slane %v1493, 4
      %v1501 = vrot.slane %v1495, 4
      %v1502 = vrot.slane %v1497, 4
      %v1503 = vrot.slane %v1499, 4
      %vm1504 = vcmask 1039360
      %v1505 = vsel %vm1504, %v1500, %v1493
      %v1506 = vsel %vm377, %v1500, %v1501
      %v1507 = vsel %vm1504, %v1506, %v1495
      %v1508 = vsel %vm377, %v1501, %v1502
      %v1509 = vsel %vm1504, %v1508, %v1497
      %v1510 = vsel %vm377, %v1502, %v1503
      %v1511 = vsel %vm1504, %v1510, %v1499
      %v1517 = vmul.f32 %v321, %v1505
      %v1518 = vmul.f32 %v322, %v1507
      %v1519 = vmul.f32 %v323, %v1509
      %v1520 = vmul.f32 %v324, %v1511
      %v1521 = vmul.f32 %v325, %v1503
      %s1522 = scalar_lea.vmem %s0, 6
      %v1523 = vld [vmem:[%s1522] sm:$0x3]
      %v1529 = vcombine.high %v1517, %v1517
      %v1530 = vcombine.high %v1518, %v1518
      %v1531 = vcombine.high %v1519, %v1519
      %v1532 = vcombine.high %v1520, %v1520
      %1533 = vrot.lane.b32.xlu0 %v1517, 1
      %v1534 = vpop.permute.xlu0 %1533
      %1535 = vrot.lane.b32.xlu0 %v1529, 1
      %v1536 = vpop.permute.xlu0 %1535
      %1537 = vrot.lane.b32.xlu0 %v1518, 1
      %v1538 = vpop.permute.xlu0 %1537
      %1539 = vrot.lane.b32.xlu0 %v1530, 1
      %v1540 = vpop.permute.xlu0 %1539
      %1541 = vrot.lane.b32.xlu0 %v1519, 1
      %v1542 = vpop.permute.xlu0 %1541
      %1543 = vrot.lane.b32.xlu0 %v1531, 1
      %v1544 = vpop.permute.xlu0 %1543
      %1545 = vrot.lane.b32.xlu0 %v1520, 1
      %v1546 = vpop.permute.xlu0 %1545
      %1547 = vrot.lane.b32.xlu0 %v1532, 1
      %v1548 = vpop.permute.xlu0 %1547
      %1549 = vrot.lane.b32.xlu0 %v1521, 1
      %v1550 = vpop.permute.xlu0 %1549
      %vm1551 = vcmask 7168
      %v1552 = vsel %vm1551, %v1534, %v1536
      %v1553 = vsel %vm1551, %v1536, %v1538
      %v1554 = vsel %vm1551, %v1538, %v1540
      %v1555 = vsel %vm1551, %v1540, %v1542
      %v1556 = vsel %vm1551, %v1542, %v1544
      %v1557 = vsel %vm1551, %v1544, %v1546
      %v1558 = vsel %vm1551, %v1546, %v1548
      %v1559 = vsel %vm1551, %v1548, %v1550
      %v1561 = vsel %vm433, %v1523, 0
      %v1563 = vsel %vm377, %v1552, 0
      %v1565 = vsel %vm377, %v1553, 0
      %v1567 = vsel %vm377, %v1554, 0
      %v1569 = vsel %vm377, %v1555, 0
      %v1571 = vsel %vm377, %v1556, 0
      %v1573 = vsel %vm377, %v1557, 0
      %v1575 = vsel %vm377, %v1558, 0
      %v1577 = vsel %vm377, %v1559, 0
      %1579 = vmatprep.subr.mxu0 %v1565
      %1580 = vmatpush1.msra.mxu0 %v1563
      %1581 = vmatprep.subr.mxu0 0.0
      %1582 = vmatpush1.msra.mxu0 0.0
      %1583 = vmatprep.subr.mxu0 0.0
      %1584 = vmatpush1.msra.mxu0 0.0
      %1585 = vmatprep.subr.mxu0 0.0
      %1586 = vmatpush1.msra.mxu0 0.0
      %1587 = vmatprep.subr.mxu0 0.0
      %1588 = vmatpush1.msra.mxu0 0.0
      %1589 = vmatprep.subr.mxu0 0.0
      %1590 = vmatpush1.msra.mxu0 0.0
      %1591 = vmatprep.subr.mxu0 0.0
      %1592 = vmatpush1.msra.mxu0 0.0
      %1593 = vmatprep.subr.mxu0 0.0
      %1594 = vmatpush1.msra.mxu0 0.0
      %1595 = vmatprep.subr.mxu0 0.0
      %1596 = vmatpush1.msra.mxu0 0.0
      %1597 = vmatprep.subr.mxu0 0.0
      %1598 = vmatpush1.msra.mxu0 0.0
      %1599 = vmatprep.subr.mxu0 0.0
      %1600 = vmatpush1.msra.mxu0 0.0
      %1601 = vmatprep.subr.mxu0 0.0
      %1602 = vmatpush1.msra.mxu0 0.0
      %1603 = vmatprep.subr.mxu0 0.0
      %1604 = vmatpush1.msra.mxu0 0.0
      %1605 = vmatprep.subr.mxu0 0.0
      %1606 = vmatpush1.msra.mxu0 0.0
      %1607 = vmatprep.subr.mxu0 0.0
      %1608 = vmatpush1.msra.mxu0 0.0
      %1609 = vmatprep.subr.mxu0 0.0
      %1610 = vmatpush1.msra.mxu0 0.0
      %1611 = vmatprep.subr.mxu0 0.0
      %1612 = vmatpush1.msra.mxu0 0.0
      %1613 = vmatprep.subr.mxu0 0.0
      %1614 = vmatpush1.msra.mxu0 0.0
      %1615 = vmatprep.subr.mxu0 0.0
      %1616 = vmatpush1.msra.mxu0 0.0
      %1617 = vmatprep.subr.mxu0 0.0
      %1618 = vmatpush1.msra.mxu0 0.0
      %1619 = vmatprep.subr.mxu0 0.0
      %1620 = vmatpush1.msra.mxu0 0.0
      %1621 = vmatprep.subr.mxu0 0.0
      %1622 = vmatpush1.msra.mxu0 0.0
      %1623 = vmatprep.subr.mxu0 0.0
      %1624 = vmatpush1.msra.mxu0 0.0
      %1625 = vmatprep.subr.mxu0 0.0
      %1626 = vmatpush1.msra.mxu0 0.0
      %1627 = vmatprep.subr.mxu0 0.0
      %1628 = vmatpush1.msra.mxu0 0.0
      %1629 = vmatprep.subr.mxu0 0.0
      %1630 = vmatpush1.msra.mxu0 0.0
      %1631 = vmatprep.subr.mxu0 0.0
      %1632 = vmatpush1.msra.mxu0 0.0
      %1633 = vmatprep.subr.mxu0 0.0
      %1634 = vmatpush1.msra.mxu0 0.0
      %1635 = vmatprep.subr.mxu0 0.0
      %1636 = vmatpush1.msra.mxu0 0.0
      %1637 = vmatprep.subr.mxu0 0.0
      %1638 = vmatpush1.msra.mxu0 0.0
      %1639 = vmatprep.subr.mxu0 0.0
      %1640 = vmatpush1.msra.mxu0 0.0
      %1641 = vmatprep.subr.mxu0 0.0
      %1642 = vmatpush1.msra.mxu0 0.0
      %1643 = vmatprep.mubr.f32.mxu0 0.0
      %1644 = vmatmul.mubr.f32.gmra.mrb[0].mxu0 %v1561
      %v1645 = vpop.f32.mrb[0].mxu0
      %v1646 = vadd.f32 0.0, %v1645
      %v1647 = vpop.f32.mrb[0].mxu0
      %v1648 = vadd.f32 0.0, %v1647
      %1649 = vdwg.mxu0
      %1650 = vmatprep.subr.mxu0 %v1569
      %1651 = vmatpush1.msra.mxu0 %v1567
      %1652 = vmatprep.subr.mxu0 0.0
      %1653 = vmatpush1.msra.mxu0 0.0
      %1654 = vmatprep.subr.mxu0 0.0
      %1655 = vmatpush1.msra.mxu0 0.0
      %1656 = vmatprep.subr.mxu0 0.0
      %1657 = vmatpush1.msra.mxu0 0.0
      %1658 = vmatprep.subr.mxu0 0.0
      %1659 = vmatpush1.msra.mxu0 0.0
      %1660 = vmatprep.subr.mxu0 0.0
      %1661 = vmatpush1.msra.mxu0 0.0
      %1662 = vmatprep.subr.mxu0 0.0
      %1663 = vmatpush1.msra.mxu0 0.0
      %1664 = vmatprep.subr.mxu0 0.0
      %1665 = vmatpush1.msra.mxu0 0.0
      %1666 = vmatprep.subr.mxu0 0.0
      %1667 = vmatpush1.msra.mxu0 0.0
      %1668 = vmatprep.subr.mxu0 0.0
      %1669 = vmatpush1.msra.mxu0 0.0
      %1670 = vmatprep.subr.mxu0 0.0
      %1671 = vmatpush1.msra.mxu0 0.0
      %1672 = vmatprep.subr.mxu0 0.0
      %1673 = vmatpush1.msra.mxu0 0.0
      %1674 = vmatprep.subr.mxu0 0.0
      %1675 = vmatpush1.msra.mxu0 0.0
      %1676 = vmatprep.subr.mxu0 0.0
      %1677 = vmatpush1.msra.mxu0 0.0
      %1678 = vmatprep.subr.mxu0 0.0
      %1679 = vmatpush1.msra.mxu0 0.0
      %1680 = vmatprep.subr.mxu0 0.0
      %1681 = vmatpush1.msra.mxu0 0.0
      %1682 = vmatprep.subr.mxu0 0.0
      %1683 = vmatpush1.msra.mxu0 0.0
      %1684 = vmatprep.subr.mxu0 0.0
      %1685 = vmatpush1.msra.mxu0 0.0
      %1686 = vmatprep.subr.mxu0 0.0
      %1687 = vmatpush1.msra.mxu0 0.0
      %1688 = vmatprep.subr.mxu0 0.0
      %1689 = vmatpush1.msra.mxu0 0.0
      %1690 = vmatprep.subr.mxu0 0.0
      %1691 = vmatpush1.msra.mxu0 0.0
      %1692 = vmatprep.subr.mxu0 0.0
      %1693 = vmatpush1.msra.mxu0 0.0
      %1694 = vmatprep.subr.mxu0 0.0
      %1695 = vmatpush1.msra.mxu0 0.0
      %1696 = vmatprep.subr.mxu0 0.0
      %1697 = vmatpush1.msra.mxu0 0.0
      %1698 = vmatprep.subr.mxu0 0.0
      %1699 = vmatpush1.msra.mxu0 0.0
      %1700 = vmatprep.subr.mxu0 0.0
      %1701 = vmatpush1.msra.mxu0 0.0
      %1702 = vmatprep.subr.mxu0 0.0
      %1703 = vmatpush1.msra.mxu0 0.0
      %1704 = vmatprep.subr.mxu0 0.0
      %1705 = vmatpush1.msra.mxu0 0.0
      %1706 = vmatprep.subr.mxu0 0.0
      %1707 = vmatpush1.msra.mxu0 0.0
      %1708 = vmatprep.subr.mxu0 0.0
      %1709 = vmatpush1.msra.mxu0 0.0
      %1710 = vmatprep.subr.mxu0 0.0
      %1711 = vmatpush1.msra.mxu0 0.0
      %1712 = vmatprep.subr.mxu0 0.0
      %1713 = vmatpush1.msra.mxu0 0.0
      %1714 = vmatprep.mubr.f32.mxu0 0.0
      %1715 = vmatmul.mubr.f32.gmra.mrb[0].mxu0 %v1561
      %v1716 = vpop.f32.mrb[0].mxu0
      %v1717 = vadd.f32 0.0, %v1716
      %v1718 = vpop.f32.mrb[0].mxu0
      %v1719 = vadd.f32 0.0, %v1718
      %1720 = vdwg.mxu0
      %1721 = vmatprep.subr.mxu0 %v1573
      %1722 = vmatpush1.msra.mxu0 %v1571
      %1723 = vmatprep.subr.mxu0 0.0
      %1724 = vmatpush1.msra.mxu0 0.0
      %1725 = vmatprep.subr.mxu0 0.0
      %1726 = vmatpush1.msra.mxu0 0.0
      %1727 = vmatprep.subr.mxu0 0.0
      %1728 = vmatpush1.msra.mxu0 0.0
      %1729 = vmatprep.subr.mxu0 0.0
      %1730 = vmatpush1.msra.mxu0 0.0
      %1731 = vmatprep.subr.mxu0 0.0
      %1732 = vmatpush1.msra.mxu0 0.0
      %1733 = vmatprep.subr.mxu0 0.0
      %1734 = vmatpush1.msra.mxu0 0.0
      %1735 = vmatprep.subr.mxu0 0.0
      %1736 = vmatpush1.msra.mxu0 0.0
      %1737 = vmatprep.subr.mxu0 0.0
      %1738 = vmatpush1.msra.mxu0 0.0
      %1739 = vmatprep.subr.mxu0 0.0
      %1740 = vmatpush1.msra.mxu0 0.0
      %1741 = vmatprep.subr.mxu0 0.0
      %1742 = vmatpush1.msra.mxu0 0.0
      %1743 = vmatprep.subr.mxu0 0.0
      %1744 = vmatpush1.msra.mxu0 0.0
      %1745 = vmatprep.subr.mxu0 0.0
      %1746 = vmatpush1.msra.mxu0 0.0
      %1747 = vmatprep.subr.mxu0 0.0
      %1748 = vmatpush1.msra.mxu0 0.0
      %1749 = vmatprep.subr.mxu0 0.0
      %1750 = vmatpush1.msra.mxu0 0.0
      %1751 = vmatprep.subr.mxu0 0.0
      %1752 = vmatpush1.msra.mxu0 0.0
      %1753 = vmatprep.subr.mxu0 0.0
      %1754 = vmatpush1.msra.mxu0 0.0
      %1755 = vmatprep.subr.mxu0 0.0
      %1756 = vmatpush1.msra.mxu0 0.0
      %1757 = vmatprep.subr.mxu0 0.0
      %1758 = vmatpush1.msra.mxu0 0.0
      %1759 = vmatprep.subr.mxu0 0.0
      %1760 = vmatpush1.msra.mxu0 0.0
      %1761 = vmatprep.subr.mxu0 0.0
      %1762 = vmatpush1.msra.mxu0 0.0
      %1763 = vmatprep.subr.mxu0 0.0
      %1764 = vmatpush1.msra.mxu0 0.0
      %1765 = vmatprep.subr.mxu0 0.0
      %1766 = vmatpush1.msra.mxu0 0.0
      %1767 = vmatprep.subr.mxu0 0.0
      %1768 = vmatpush1.msra.mxu0 0.0
      %1769 = vmatprep.subr.mxu0 0.0
      %1770 = vmatpush1.msra.mxu0 0.0
      %1771 = vmatprep.subr.mxu0 0.0
      %1772 = vmatpush1.msra.mxu0 0.0
      %1773 = vmatprep.subr.mxu0 0.0
      %1774 = vmatpush1.msra.mxu0 0.0
      %1775 = vmatprep.subr.mxu0 0.0
      %1776 = vmatpush1.msra.mxu0 0.0
      %1777 = vmatprep.subr.mxu0 0.0
      %1778 = vmatpush1.msra.mxu0 0.0
      %1779 = vmatprep.subr.mxu0 0.0
      %1780 = vmatpush1.msra.mxu0 0.0
      %1781 = vmatprep.subr.mxu0 0.0
      %1782 = vmatpush1.msra.mxu0 0.0
      %1783 = vmatprep.subr.mxu0 0.0
      %1784 = vmatpush1.msra.mxu0 0.0
      %1785 = vmatprep.mubr.f32.mxu0 0.0
      %1786 = vmatmul.mubr.f32.gmra.mrb[0].mxu0 %v1561
      %v1787 = vpop.f32.mrb[0].mxu0
      %v1788 = vadd.f32 0.0, %v1787
      %v1789 = vpop.f32.mrb[0].mxu0
      %v1790 = vadd.f32 0.0, %v1789
      %1791 = vdwg.mxu0
      %1792 = vmatprep.subr.mxu0 %v1577
      %1793 = vmatpush1.msra.mxu0 %v1575
      %1794 = vmatprep.subr.mxu0 0.0
      %1795 = vmatpush1.msra.mxu0 0.0
      %1796 = vmatprep.subr.mxu0 0.0
      %1797 = vmatpush1.msra.mxu0 0.0
      %1798 = vmatprep.subr.mxu0 0.0
      %1799 = vmatpush1.msra.mxu0 0.0
      %1800 = vmatprep.subr.mxu0 0.0
      %1801 = vmatpush1.msra.mxu0 0.0
      %1802 = vmatprep.subr.mxu0 0.0
      %1803 = vmatpush1.msra.mxu0 0.0
      %1804 = vmatprep.subr.mxu0 0.0
      %1805 = vmatpush1.msra.mxu0 0.0
      %1806 = vmatprep.subr.mxu0 0.0
      %1807 = vmatpush1.msra.mxu0 0.0
      %1808 = vmatprep.subr.mxu0 0.0
      %1809 = vmatpush1.msra.mxu0 0.0
      %1810 = vmatprep.subr.mxu0 0.0
      %1811 = vmatpush1.msra.mxu0 0.0
      %1812 = vmatprep.subr.mxu0 0.0
      %1813 = vmatpush1.msra.mxu0 0.0
      %1814 = vmatprep.subr.mxu0 0.0
      %1815 = vmatpush1.msra.mxu0 0.0
      %1816 = vmatprep.subr.mxu0 0.0
      %1817 = vmatpush1.msra.mxu0 0.0
      %1818 = vmatprep.subr.mxu0 0.0
      %1819 = vmatpush1.msra.mxu0 0.0
      %1820 = vmatprep.subr.mxu0 0.0
      %1821 = vmatpush1.msra.mxu0 0.0
      %1822 = vmatprep.subr.mxu0 0.0
      %1823 = vmatpush1.msra.mxu0 0.0
      %1824 = vmatprep.subr.mxu0 0.0
      %1825 = vmatpush1.msra.mxu0 0.0
      %1826 = vmatprep.subr.mxu0 0.0
      %1827 = vmatpush1.msra.mxu0 0.0
      %1828 = vmatprep.subr.mxu0 0.0
      %1829 = vmatpush1.msra.mxu0 0.0
      %1830 = vmatprep.subr.mxu0 0.0
      %1831 = vmatpush1.msra.mxu0 0.0
      %1832 = vmatprep.subr.mxu0 0.0
      %1833 = vmatpush1.msra.mxu0 0.0
      %1834 = vmatprep.subr.mxu0 0.0
      %1835 = vmatpush1.msra.mxu0 0.0
      %1836 = vmatprep.subr.mxu0 0.0
      %1837 = vmatpush1.msra.mxu0 0.0
      %1838 = vmatprep.subr.mxu0 0.0
      %1839 = vmatpush1.msra.mxu0 0.0
      %1840 = vmatprep.subr.mxu0 0.0
      %1841 = vmatpush1.msra.mxu0 0.0
      %1842 = vmatprep.subr.mxu0 0.0
      %1843 = vmatpush1.msra.mxu0 0.0
      %1844 = vmatprep.subr.mxu0 0.0
      %1845 = vmatpush1.msra.mxu0 0.0
      %1846 = vmatprep.subr.mxu0 0.0
      %1847 = vmatpush1.msra.mxu0 0.0
      %1848 = vmatprep.subr.mxu0 0.0
      %1849 = vmatpush1.msra.mxu0 0.0
      %1850 = vmatprep.subr.mxu0 0.0
      %1851 = vmatpush1.msra.mxu0 0.0
      %1852 = vmatprep.subr.mxu0 0.0
      %1853 = vmatpush1.msra.mxu0 0.0
      %1854 = vmatprep.subr.mxu0 0.0
      %1855 = vmatpush1.msra.mxu0 0.0
      %1856 = vmatprep.mubr.f32.mxu0 0.0
      %1857 = vmatmul.mubr.f32.gmra.mrb[0].mxu0 %v1561
      %v1858 = vpop.f32.mrb[0].mxu0
      %v1859 = vadd.f32 0.0, %v1858
      %v1860 = vpop.f32.mrb[0].mxu0
      %v1861 = vadd.f32 0.0, %v1860
      %1862 = vdwg.mxu0
      %v1863 = vadd.f32 %v1484, %v1646
      %v1864 = vadd.f32 %v1485, %v1648
      %v1865 = vadd.f32 %v1486, %v1717
      %v1866 = vadd.f32 %v1487, %v1719
      %v1867 = vadd.f32 %v1488, %v1788
      %v1868 = vadd.f32 %v1489, %v1790
      %v1869 = vadd.f32 %v1490, %v1859
      %v1870 = vadd.f32 %v1491, %v1861
      %s1871 = scalar_lea.vmem %s0, 8
      %v1872 = vld [vmem:[%s1871] sm:$0x3]
      %v1874 = vsel %vm433, %v1872, 0
      %v1876 = vsel %vm377, %v402, 0
      %v1878 = vsel %vm377, %v322, 0
      %v1880 = vsel %vm377, %v403, 0
      %v1882 = vsel %vm377, %v323, 0
      %v1884 = vsel %vm377, %v404, 0
      %v1886 = vsel %vm377, %v324, 0
      %v1888 = vsel %vm377, %v405, 0
      %v1890 = vsel %vm377, %v325, 0
      %1892 = vmatprep.subr.mxu0 %v1878
      %1893 = vmatpush1.msra.mxu0 %v1876
      %1894 = vmatprep.subr.mxu0 0.0
      %1895 = vmatpush1.msra.mxu0 0.0
      %1896 = vmatprep.subr.mxu0 0.0
      %1897 = vmatpush1.msra.mxu0 0.0
      %1898 = vmatprep.subr.mxu0 0.0
      %1899 = vmatpush1.msra.mxu0 0.0
      %1900 = vmatprep.subr.mxu0 0.0
      %1901 = vmatpush1.msra.mxu0 0.0
      %1902 = vmatprep.subr.mxu0 0.0
      %1903 = vmatpush1.msra.mxu0 0.0
      %1904 = vmatprep.subr.mxu0 0.0
      %1905 = vmatpush1.msra.mxu0 0.0
      %1906 = vmatprep.subr.mxu0 0.0
      %1907 = vmatpush1.msra.mxu0 0.0
      %1908 = vmatprep.subr.mxu0 0.0
      %1909 = vmatpush1.msra.mxu0 0.0
      %1910 = vmatprep.subr.mxu0 0.0
      %1911 = vmatpush1.msra.mxu0 0.0
      %1912 = vmatprep.subr.mxu0 0.0
      %1913 = vmatpush1.msra.mxu0 0.0
      %1914 = vmatprep.subr.mxu0 0.0
      %1915 = vmatpush1.msra.mxu0 0.0
      %1916 = vmatprep.subr.mxu0 0.0
      %1917 = vmatpush1.msra.mxu0 0.0
      %1918 = vmatprep.subr.mxu0 0.0
      %1919 = vmatpush1.msra.mxu0 0.0
      %1920 = vmatprep.subr.mxu0 0.0
      %1921 = vmatpush1.msra.mxu0 0.0
      %1922 = vmatprep.subr.mxu0 0.0
      %1923 = vmatpush1.msra.mxu0 0.0
      %1924 = vmatprep.subr.mxu0 0.0
      %1925 = vmatpush1.msra.mxu0 0.0
      %1926 = vmatprep.subr.mxu0 0.0
      %1927 = vmatpush1.msra.mxu0 0.0
      %1928 = vmatprep.subr.mxu0 0.0
      %1929 = vmatpush1.msra.mxu0 0.0
      %1930 = vmatprep.subr.mxu0 0.0
      %1931 = vmatpush1.msra.mxu0 0.0
      %1932 = vmatprep.subr.mxu0 0.0
      %1933 = vmatpush1.msra.mxu0 0.0
      %1934 = vmatprep.subr.mxu0 0.0
      %1935 = vmatpush1.msra.mxu0 0.0
      %1936 = vmatprep.subr.mxu0 0.0
      %1937 = vmatpush1.msra.mxu0 0.0
      %1938 = vmatprep.subr.mxu0 0.0
      %1939 = vmatpush1.msra.mxu0 0.0
      %1940 = vmatprep.subr.mxu0 0.0
      %1941 = vmatpush1.msra.mxu0 0.0
      %1942 = vmatprep.subr.mxu0 0.0
      %1943 = vmatpush1.msra.mxu0 0.0
      %1944 = vmatprep.subr.mxu0 0.0
      %1945 = vmatpush1.msra.mxu0 0.0
      %1946 = vmatprep.subr.mxu0 0.0
      %1947 = vmatpush1.msra.mxu0 0.0
      %1948 = vmatprep.subr.mxu0 0.0
      %1949 = vmatpush1.msra.mxu0 0.0
      %1950 = vmatprep.subr.mxu0 0.0
      %1951 = vmatpush1.msra.mxu0 0.0
      %1952 = vmatprep.subr.mxu0 0.0
      %1953 = vmatpush1.msra.mxu0 0.0
      %1954 = vmatprep.subr.mxu0 0.0
      %1955 = vmatpush1.msra.mxu0 0.0
      %1956 = vmatprep.mubr.f32.mxu0 0.0
      %1957 = vmatmul.mubr.f32.gmra.mrb[0].mxu0 %v1874
      %v1958 = vpop.f32.mrb[0].mxu0
      %v1959 = vadd.f32 0.0, %v1958
      %v1960 = vpop.f32.mrb[0].mxu0
      %v1961 = vadd.f32 0.0, %v1960
      %1962 = vdwg.mxu0
      %1963 = vmatprep.subr.mxu0 %v1882
      %1964 = vmatpush1.msra.mxu0 %v1880
      %1965 = vmatprep.subr.mxu0 0.0
      %1966 = vmatpush1.msra.mxu0 0.0
      %1967 = vmatprep.subr.mxu0 0.0
      %1968 = vmatpush1.msra.mxu0 0.0
      %1969 = vmatprep.subr.mxu0 0.0
      %1970 = vmatpush1.msra.mxu0 0.0
      %1971 = vmatprep.subr.mxu0 0.0
      %1972 = vmatpush1.msra.mxu0 0.0
      %1973 = vmatprep.subr.mxu0 0.0
      %1974 = vmatpush1.msra.mxu0 0.0
      %1975 = vmatprep.subr.mxu0 0.0
      %1976 = vmatpush1.msra.mxu0 0.0
      %1977 = vmatprep.subr.mxu0 0.0
      %1978 = vmatpush1.msra.mxu0 0.0
      %1979 = vmatprep.subr.mxu0 0.0
      %1980 = vmatpush1.msra.mxu0 0.0
      %1981 = vmatprep.subr.mxu0 0.0
      %1982 = vmatpush1.msra.mxu0 0.0
      %1983 = vmatprep.subr.mxu0 0.0
      %1984 = vmatpush1.msra.mxu0 0.0
      %1985 = vmatprep.subr.mxu0 0.0
      %1986 = vmatpush1.msra.mxu0 0.0
      %1987 = vmatprep.subr.mxu0 0.0
      %1988 = vmatpush1.msra.mxu0 0.0
      %1989 = vmatprep.subr.mxu0 0.0
      %1990 = vmatpush1.msra.mxu0 0.0
      %1991 = vmatprep.subr.mxu0 0.0
      %1992 = vmatpush1.msra.mxu0 0.0
      %1993 = vmatprep.subr.mxu0 0.0
      %1994 = vmatpush1.msra.mxu0 0.0
      %1995 = vmatprep.subr.mxu0 0.0
      %1996 = vmatpush1.msra.mxu0 0.0
      %1997 = vmatprep.subr.mxu0 0.0
      %1998 = vmatpush1.msra.mxu0 0.0
      %1999 = vmatprep.subr.mxu0 0.0
      %2000 = vmatpush1.msra.mxu0 0.0
      %2001 = vmatprep.subr.mxu0 0.0
      %2002 = vmatpush1.msra.mxu0 0.0
      %2003 = vmatprep.subr.mxu0 0.0
      %2004 = vmatpush1.msra.mxu0 0.0
      %2005 = vmatprep.subr.mxu0 0.0
      %2006 = vmatpush1.msra.mxu0 0.0
      %2007 = vmatprep.subr.mxu0 0.0
      %2008 = vmatpush1.msra.mxu0 0.0
      %2009 = vmatprep.subr.mxu0 0.0
      %2010 = vmatpush1.msra.mxu0 0.0
      %2011 = vmatprep.subr.mxu0 0.0
      %2012 = vmatpush1.msra.mxu0 0.0
      %2013 = vmatprep.subr.mxu0 0.0
      %2014 = vmatpush1.msra.mxu0 0.0
      %2015 = vmatprep.subr.mxu0 0.0
      %2016 = vmatpush1.msra.mxu0 0.0
      %2017 = vmatprep.subr.mxu0 0.0
      %2018 = vmatpush1.msra.mxu0 0.0
      %2019 = vmatprep.subr.mxu0 0.0
      %2020 = vmatpush1.msra.mxu0 0.0
      %2021 = vmatprep.subr.mxu0 0.0
      %2022 = vmatpush1.msra.mxu0 0.0
      %2023 = vmatprep.subr.mxu0 0.0
      %2024 = vmatpush1.msra.mxu0 0.0
      %2025 = vmatprep.subr.mxu0 0.0
      %2026 = vmatpush1.msra.mxu0 0.0
      %2027 = vmatprep.mubr.f32.mxu0 0.0
      %2028 = vmatmul.mubr.f32.gmra.mrb[0].mxu0 %v1874
      %v2029 = vpop.f32.mrb[0].mxu0
      %v2030 = vadd.f32 0.0, %v2029
      %v2031 = vpop.f32.mrb[0].mxu0
      %v2032 = vadd.f32 0.0, %v2031
      %2033 = vdwg.mxu0
      %2034 = vmatprep.subr.mxu0 %v1886
      %2035 = vmatpush1.msra.mxu0 %v1884
      %2036 = vmatprep.subr.mxu0 0.0
      %2037 = vmatpush1.msra.mxu0 0.0
      %2038 = vmatprep.subr.mxu0 0.0
      %2039 = vmatpush1.msra.mxu0 0.0
      %2040 = vmatprep.subr.mxu0 0.0
      %2041 = vmatpush1.msra.mxu0 0.0
      %2042 = vmatprep.subr.mxu0 0.0
      %2043 = vmatpush1.msra.mxu0 0.0
      %2044 = vmatprep.subr.mxu0 0.0
      %2045 = vmatpush1.msra.mxu0 0.0
      %2046 = vmatprep.subr.mxu0 0.0
      %2047 = vmatpush1.msra.mxu0 0.0
      %2048 = vmatprep.subr.mxu0 0.0
      %2049 = vmatpush1.msra.mxu0 0.0
      %2050 = vmatprep.subr.mxu0 0.0
      %2051 = vmatpush1.msra.mxu0 0.0
      %2052 = vmatprep.subr.mxu0 0.0
      %2053 = vmatpush1.msra.mxu0 0.0
      %2054 = vmatprep.subr.mxu0 0.0
      %2055 = vmatpush1.msra.mxu0 0.0
      %2056 = vmatprep.subr.mxu0 0.0
      %2057 = vmatpush1.msra.mxu0 0.0
      %2058 = vmatprep.subr.mxu0 0.0
      %2059 = vmatpush1.msra.mxu0 0.0
      %2060 = vmatprep.subr.mxu0 0.0
      %2061 = vmatpush1.msra.mxu0 0.0
      %2062 = vmatprep.subr.mxu0 0.0
      %2063 = vmatpush1.msra.mxu0 0.0
      %2064 = vmatprep.subr.mxu0 0.0
      %2065 = vmatpush1.msra.mxu0 0.0
      %2066 = vmatprep.subr.mxu0 0.0
      %2067 = vmatpush1.msra.mxu0 0.0
      %2068 = vmatprep.subr.mxu0 0.0
      %2069 = vmatpush1.msra.mxu0 0.0
      %2070 = vmatprep.subr.mxu0 0.0
      %2071 = vmatpush1.msra.mxu0 0.0
      %2072 = vmatprep.subr.mxu0 0.0
      %2073 = vmatpush1.msra.mxu0 0.0
      %2074 = vmatprep.subr.mxu0 0.0
      %2075 = vmatpush1.msra.mxu0 0.0
      %2076 = vmatprep.subr.mxu0 0.0
      %2077 = vmatpush1.msra.mxu0 0.0
      %2078 = vmatprep.subr.mxu0 0.0
      %2079 = vmatpush1.msra.mxu0 0.0
      %2080 = vmatprep.subr.mxu0 0.0
      %2081 = vmatpush1.msra.mxu0 0.0
      %2082 = vmatprep.subr.mxu0 0.0
      %2083 = vmatpush1.msra.mxu0 0.0
      %2084 = vmatprep.subr.mxu0 0.0
      %2085 = vmatpush1.msra.mxu0 0.0
      %2086 = vmatprep.subr.mxu0 0.0
      %2087 = vmatpush1.msra.mxu0 0.0
      %2088 = vmatprep.subr.mxu0 0.0
      %2089 = vmatpush1.msra.mxu0 0.0
      %2090 = vmatprep.subr.mxu0 0.0
      %2091 = vmatpush1.msra.mxu0 0.0
      %2092 = vmatprep.subr.mxu0 0.0
      %2093 = vmatpush1.msra.mxu0 0.0
      %2094 = vmatprep.subr.mxu0 0.0
      %2095 = vmatpush1.msra.mxu0 0.0
      %2096 = vmatprep.subr.mxu0 0.0
      %2097 = vmatpush1.msra.mxu0 0.0
      %2098 = vmatprep.mubr.f32.mxu0 0.0
      %2099 = vmatmul.mubr.f32.gmra.mrb[0].mxu0 %v1874
      %v2100 = vpop.f32.mrb[0].mxu0
      %v2101 = vadd.f32 0.0, %v2100
      %v2102 = vpop.f32.mrb[0].mxu0
      %v2103 = vadd.f32 0.0, %v2102
      %2104 = vdwg.mxu0
      %2105 = vmatprep.subr.mxu0 %v1890
      %2106 = vmatpush1.msra.mxu0 %v1888
      %2107 = vmatprep.subr.mxu0 0.0
      %2108 = vmatpush1.msra.mxu0 0.0
      %2109 = vmatprep.subr.mxu0 0.0
      %2110 = vmatpush1.msra.mxu0 0.0
      %2111 = vmatprep.subr.mxu0 0.0
      %2112 = vmatpush1.msra.mxu0 0.0
      %2113 = vmatprep.subr.mxu0 0.0
      %2114 = vmatpush1.msra.mxu0 0.0
      %2115 = vmatprep.subr.mxu0 0.0
      %2116 = vmatpush1.msra.mxu0 0.0
      %2117 = vmatprep.subr.mxu0 0.0
      %2118 = vmatpush1.msra.mxu0 0.0
      %2119 = vmatprep.subr.mxu0 0.0
      %2120 = vmatpush1.msra.mxu0 0.0
      %2121 = vmatprep.subr.mxu0 0.0
      %2122 = vmatpush1.msra.mxu0 0.0
      %2123 = vmatprep.subr.mxu0 0.0
      %2124 = vmatpush1.msra.mxu0 0.0
      %2125 = vmatprep.subr.mxu0 0.0
      %2126 = vmatpush1.msra.mxu0 0.0
      %2127 = vmatprep.subr.mxu0 0.0
      %2128 = vmatpush1.msra.mxu0 0.0
      %2129 = vmatprep.subr.mxu0 0.0
      %2130 = vmatpush1.msra.mxu0 0.0
      %2131 = vmatprep.subr.mxu0 0.0
      %2132 = vmatpush1.msra.mxu0 0.0
      %2133 = vmatprep.subr.mxu0 0.0
      %2134 = vmatpush1.msra.mxu0 0.0
      %2135 = vmatprep.subr.mxu0 0.0
      %2136 = vmatpush1.msra.mxu0 0.0
      %2137 = vmatprep.subr.mxu0 0.0
      %2138 = vmatpush1.msra.mxu0 0.0
      %2139 = vmatprep.subr.mxu0 0.0
      %2140 = vmatpush1.msra.mxu0 0.0
      %2141 = vmatprep.subr.mxu0 0.0
      %2142 = vmatpush1.msra.mxu0 0.0
      %2143 = vmatprep.subr.mxu0 0.0
      %2144 = vmatpush1.msra.mxu0 0.0
      %2145 = vmatprep.subr.mxu0 0.0
      %2146 = vmatpush1.msra.mxu0 0.0
      %2147 = vmatprep.subr.mxu0 0.0
      %2148 = vmatpush1.msra.mxu0 0.0
      %2149 = vmatprep.subr.mxu0 0.0
      %2150 = vmatpush1.msra.mxu0 0.0
      %2151 = vmatprep.subr.mxu0 0.0
      %2152 = vmatpush1.msra.mxu0 0.0
      %2153 = vmatprep.subr.mxu0 0.0
      %2154 = vmatpush1.msra.mxu0 0.0
      %2155 = vmatprep.subr.mxu0 0.0
      %2156 = vmatpush1.msra.mxu0 0.0
      %2157 = vmatprep.subr.mxu0 0.0
      %2158 = vmatpush1.msra.mxu0 0.0
      %2159 = vmatprep.subr.mxu0 0.0
      %2160 = vmatpush1.msra.mxu0 0.0
      %2161 = vmatprep.subr.mxu0 0.0
      %2162 = vmatpush1.msra.mxu0 0.0
      %2163 = vmatprep.subr.mxu0 0.0
      %2164 = vmatpush1.msra.mxu0 0.0
      %2165 = vmatprep.subr.mxu0 0.0
      %2166 = vmatpush1.msra.mxu0 0.0
      %2167 = vmatprep.subr.mxu0 0.0
      %2168 = vmatpush1.msra.mxu0 0.0
      %2169 = vmatprep.mubr.f32.mxu0 0.0
      %2170 = vmatmul.mubr.f32.gmra.mrb[0].mxu0 %v1874
      %v2171 = vpop.f32.mrb[0].mxu0
      %v2172 = vadd.f32 0.0, %v2171
      %v2173 = vpop.f32.mrb[0].mxu0
      %v2174 = vadd.f32 0.0, %v2173
      %2175 = vdwg.mxu0
      %v2176 = vadd.f32 %v1863, %v1959
      %v2177 = vadd.f32 %v1864, %v1961
      %v2178 = vadd.f32 %v1865, %v2030
      %v2179 = vadd.f32 %v1866, %v2032
      %v2180 = vadd.f32 %v1867, %v2101
      %v2181 = vadd.f32 %v1868, %v2103
      %v2182 = vadd.f32 %v1869, %v2172
      %v2183 = vadd.f32 %v1870, %v2174
      %2184 = vrot.lane.b32.xlu0 %v321, 127
      %v2185 = vpop.permute.xlu0 %2184
      %2186 = vrot.lane.b32.xlu0 %v322, 127
      %v2187 = vpop.permute.xlu0 %2186
      %2188 = vrot.lane.b32.xlu0 %v323, 127
      %v2189 = vpop.permute.xlu0 %2188
      %2190 = vrot.lane.b32.xlu0 %v324, 127
      %v2191 = vpop.permute.xlu0 %2190
      %2192 = vrot.lane.b32.xlu0 %v325, 127
      %v2193 = vpop.permute.xlu0 %2192
      %v2194 = vrot.slane %v2185, 4
      %v2195 = vrot.slane %v2187, 4
      %v2196 = vrot.slane %v2189, 4
      %v2197 = vrot.slane %v2191, 4
      %v2198 = vrot.slane %v2193, 4
      %v2199 = vsel %vm377, %v2194, %v2195
      %v2200 = vsel %vm1504, %v2199, %v2187
      %v2201 = vsel %vm377, %v2195, %v2196
      %v2202 = vsel %vm1504, %v2201, %v2189
      %v2203 = vsel %vm377, %v2196, %v2197
      %v2204 = vsel %vm1504, %v2203, %v2191
      %v2205 = vsel %vm377, %v2197, %v2198
      %v2206 = vsel %vm1504, %v2205, %v2193
      %v2215 = vmul.f32 %v2200, %v1109
      %v2216 = vmul.f32 %v2202, %v1110
      %v2217 = vmul.f32 %v2204, %v1111
      %v2218 = vmul.f32 %v2206, %v1112
      %s2219 = scalar_lea.vmem %s0, 10
      %v2220 = vld [vmem:[%s2219] sm:$0x3]
      %v2225 = vcombine.high %v2215, %v2215
      %v2226 = vcombine.high %v2216, %v2216
      %v2227 = vcombine.high %v2217, %v2217
      %v2228 = vcombine.high %v2218, %v2218
      %v2230 = vsel %vm433, %v2220, 0
      %v2232 = vsel %vm377, %v2215, 0
      %v2234 = vsel %vm377, %v2225, 0
      %v2236 = vsel %vm377, %v2216, 0
      %v2238 = vsel %vm377, %v2226, 0
      %v2240 = vsel %vm377, %v2217, 0
      %v2242 = vsel %vm377, %v2227, 0
      %v2244 = vsel %vm377, %v2218, 0
      %v2246 = vsel %vm377, %v2228, 0
      %2248 = vmatprep.subr.mxu0 %v2234
      %2249 = vmatpush1.msra.mxu0 %v2232
      %2250 = vmatprep.subr.mxu0 0.0
      %2251 = vmatpush1.msra.mxu0 0.0
      %2252 = vmatprep.subr.mxu0 0.0
      %2253 = vmatpush1.msra.mxu0 0.0
      %2254 = vmatprep.subr.mxu0 0.0
      %2255 = vmatpush1.msra.mxu0 0.0
      %2256 = vmatprep.subr.mxu0 0.0
      %2257 = vmatpush1.msra.mxu0 0.0
      %2258 = vmatprep.subr.mxu0 0.0
      %2259 = vmatpush1.msra.mxu0 0.0
      %2260 = vmatprep.subr.mxu0 0.0
      %2261 = vmatpush1.msra.mxu0 0.0
      %2262 = vmatprep.subr.mxu0 0.0
      %2263 = vmatpush1.msra.mxu0 0.0
      %2264 = vmatprep.subr.mxu0 0.0
      %2265 = vmatpush1.msra.mxu0 0.0
      %2266 = vmatprep.subr.mxu0 0.0
      %2267 = vmatpush1.msra.mxu0 0.0
      %2268 = vmatprep.subr.mxu0 0.0
      %2269 = vmatpush1.msra.mxu0 0.0
      %2270 = vmatprep.subr.mxu0 0.0
      %2271 = vmatpush1.msra.mxu0 0.0
      %2272 = vmatprep.subr.mxu0 0.0
      %2273 = vmatpush1.msra.mxu0 0.0
      %2274 = vmatprep.subr.mxu0 0.0
      %2275 = vmatpush1.msra.mxu0 0.0
      %2276 = vmatprep.subr.mxu0 0.0
      %2277 = vmatpush1.msra.mxu0 0.0
      %2278 = vmatprep.subr.mxu0 0.0
      %2279 = vmatpush1.msra.mxu0 0.0
      %2280 = vmatprep.subr.mxu0 0.0
      %2281 = vmatpush1.msra.mxu0 0.0
      %2282 = vmatprep.subr.mxu0 0.0
      %2283 = vmatpush1.msra.mxu0 0.0
      %2284 = vmatprep.subr.mxu0 0.0
      %2285 = vmatpush1.msra.mxu0 0.0
      %2286 = vmatprep.subr.mxu0 0.0
      %2287 = vmatpush1.msra.mxu0 0.0
      %2288 = vmatprep.subr.mxu0 0.0
      %2289 = vmatpush1.msra.mxu0 0.0
      %2290 = vmatprep.subr.mxu0 0.0
      %2291 = vmatpush1.msra.mxu0 0.0
      %2292 = vmatprep.subr.mxu0 0.0
      %2293 = vmatpush1.msra.mxu0 0.0
      %2294 = vmatprep.subr.mxu0 0.0
      %2295 = vmatpush1.msra.mxu0 0.0
      %2296 = vmatprep.subr.mxu0 0.0
      %2297 = vmatpush1.msra.mxu0 0.0
      %2298 = vmatprep.subr.mxu0 0.0
      %2299 = vmatpush1.msra.mxu0 0.0
      %2300 = vmatprep.subr.mxu0 0.0
      %2301 = vmatpush1.msra.mxu0 0.0
      %2302 = vmatprep.subr.mxu0 0.0
      %2303 = vmatpush1.msra.mxu0 0.0
      %2304 = vmatprep.subr.mxu0 0.0
      %2305 = vmatpush1.msra.mxu0 0.0
      %2306 = vmatprep.subr.mxu0 0.0
      %2307 = vmatpush1.msra.mxu0 0.0
      %2308 = vmatprep.subr.mxu0 0.0
      %2309 = vmatpush1.msra.mxu0 0.0
      %2310 = vmatprep.subr.mxu0 0.0
      %2311 = vmatpush1.msra.mxu0 0.0
      %2312 = vmatprep.mubr.f32.mxu0 0.0
      %2313 = vmatmul.mubr.f32.gmra.mrb[0].mxu0 %v2230
      %v2314 = vpop.f32.mrb[0].mxu0
      %v2315 = vadd.f32 0.0, %v2314
      %v2316 = vpop.f32.mrb[0].mxu0
      %v2317 = vadd.f32 0.0, %v2316
      %2318 = vdwg.mxu0
      %2319 = vmatprep.subr.mxu0 %v2238
      %2320 = vmatpush1.msra.mxu0 %v2236
      %2321 = vmatprep.subr.mxu0 0.0
      %2322 = vmatpush1.msra.mxu0 0.0
      %2323 = vmatprep.subr.mxu0 0.0
      %2324 = vmatpush1.msra.mxu0 0.0
      %2325 = vmatprep.subr.mxu0 0.0
      %2326 = vmatpush1.msra.mxu0 0.0
      %2327 = vmatprep.subr.mxu0 0.0
      %2328 = vmatpush1.msra.mxu0 0.0
      %2329 = vmatprep.subr.mxu0 0.0
      %2330 = vmatpush1.msra.mxu0 0.0
      %2331 = vmatprep.subr.mxu0 0.0
      %2332 = vmatpush1.msra.mxu0 0.0
      %2333 = vmatprep.subr.mxu0 0.0
      %2334 = vmatpush1.msra.mxu0 0.0
      %2335 = vmatprep.subr.mxu0 0.0
      %2336 = vmatpush1.msra.mxu0 0.0
      %2337 = vmatprep.subr.mxu0 0.0
      %2338 = vmatpush1.msra.mxu0 0.0
      %2339 = vmatprep.subr.mxu0 0.0
      %2340 = vmatpush1.msra.mxu0 0.0
      %2341 = vmatprep.subr.mxu0 0.0
      %2342 = vmatpush1.msra.mxu0 0.0
      %2343 = vmatprep.subr.mxu0 0.0
      %2344 = vmatpush1.msra.mxu0 0.0
      %2345 = vmatprep.subr.mxu0 0.0
      %2346 = vmatpush1.msra.mxu0 0.0
      %2347 = vmatprep.subr.mxu0 0.0
      %2348 = vmatpush1.msra.mxu0 0.0
      %2349 = vmatprep.subr.mxu0 0.0
      %2350 = vmatpush1.msra.mxu0 0.0
      %2351 = vmatprep.subr.mxu0 0.0
      %2352 = vmatpush1.msra.mxu0 0.0
      %2353 = vmatprep.subr.mxu0 0.0
      %2354 = vmatpush1.msra.mxu0 0.0
      %2355 = vmatprep.subr.mxu0 0.0
      %2356 = vmatpush1.msra.mxu0 0.0
      %2357 = vmatprep.subr.mxu0 0.0
      %2358 = vmatpush1.msra.mxu0 0.0
      %2359 = vmatprep.subr.mxu0 0.0
      %2360 = vmatpush1.msra.mxu0 0.0
      %2361 = vmatprep.subr.mxu0 0.0
      %2362 = vmatpush1.msra.mxu0 0.0
      %2363 = vmatprep.subr.mxu0 0.0
      %2364 = vmatpush1.msra.mxu0 0.0
      %2365 = vmatprep.subr.mxu0 0.0
      %2366 = vmatpush1.msra.mxu0 0.0
      %2367 = vmatprep.subr.mxu0 0.0
      %2368 = vmatpush1.msra.mxu0 0.0
      %2369 = vmatprep.subr.mxu0 0.0
      %2370 = vmatpush1.msra.mxu0 0.0
      %2371 = vmatprep.subr.mxu0 0.0
      %2372 = vmatpush1.msra.mxu0 0.0
      %2373 = vmatprep.subr.mxu0 0.0
      %2374 = vmatpush1.msra.mxu0 0.0
      %2375 = vmatprep.subr.mxu0 0.0
      %2376 = vmatpush1.msra.mxu0 0.0
      %2377 = vmatprep.subr.mxu0 0.0
      %2378 = vmatpush1.msra.mxu0 0.0
      %2379 = vmatprep.subr.mxu0 0.0
      %2380 = vmatpush1.msra.mxu0 0.0
      %2381 = vmatprep.subr.mxu0 0.0
      %2382 = vmatpush1.msra.mxu0 0.0
      %2383 = vmatprep.mubr.f32.mxu0 0.0
      %2384 = vmatmul.mubr.f32.gmra.mrb[0].mxu0 %v2230
      %v2385 = vpop.f32.mrb[0].mxu0
      %v2386 = vadd.f32 0.0, %v2385
      %v2387 = vpop.f32.mrb[0].mxu0
      %v2388 = vadd.f32 0.0, %v2387
      %2389 = vdwg.mxu0
      %2390 = vmatprep.subr.mxu0 %v2242
      %2391 = vmatpush1.msra.mxu0 %v2240
      %2392 = vmatprep.subr.mxu0 0.0
      %2393 = vmatpush1.msra.mxu0 0.0
      %2394 = vmatprep.subr.mxu0 0.0
      %2395 = vmatpush1.msra.mxu0 0.0
      %2396 = vmatprep.subr.mxu0 0.0
      %2397 = vmatpush1.msra.mxu0 0.0
      %2398 = vmatprep.subr.mxu0 0.0
      %2399 = vmatpush1.msra.mxu0 0.0
      %2400 = vmatprep.subr.mxu0 0.0
      %2401 = vmatpush1.msra.mxu0 0.0
      %2402 = vmatprep.subr.mxu0 0.0
      %2403 = vmatpush1.msra.mxu0 0.0
      %2404 = vmatprep.subr.mxu0 0.0
      %2405 = vmatpush1.msra.mxu0 0.0
      %2406 = vmatprep.subr.mxu0 0.0
      %2407 = vmatpush1.msra.mxu0 0.0
      %2408 = vmatprep.subr.mxu0 0.0
      %2409 = vmatpush1.msra.mxu0 0.0
      %2410 = vmatprep.subr.mxu0 0.0
      %2411 = vmatpush1.msra.mxu0 0.0
      %2412 = vmatprep.subr.mxu0 0.0
      %2413 = vmatpush1.msra.mxu0 0.0
      %2414 = vmatprep.subr.mxu0 0.0
      %2415 = vmatpush1.msra.mxu0 0.0
      %2416 = vmatprep.subr.mxu0 0.0
      %2417 = vmatpush1.msra.mxu0 0.0
      %2418 = vmatprep.subr.mxu0 0.0
      %2419 = vmatpush1.msra.mxu0 0.0
      %2420 = vmatprep.subr.mxu0 0.0
      %2421 = vmatpush1.msra.mxu0 0.0
      %2422 = vmatprep.subr.mxu0 0.0
      %2423 = vmatpush1.msra.mxu0 0.0
      %2424 = vmatprep.subr.mxu0 0.0
      %2425 = vmatpush1.msra.mxu0 0.0
      %2426 = vmatprep.subr.mxu0 0.0
      %2427 = vmatpush1.msra.mxu0 0.0
      %2428 = vmatprep.subr.mxu0 0.0
      %2429 = vmatpush1.msra.mxu0 0.0
      %2430 = vmatprep.subr.mxu0 0.0
      %2431 = vmatpush1.msra.mxu0 0.0
      %2432 = vmatprep.subr.mxu0 0.0
      %2433 = vmatpush1.msra.mxu0 0.0
      %2434 = vmatprep.subr.mxu0 0.0
      %2435 = vmatpush1.msra.mxu0 0.0
      %2436 = vmatprep.subr.mxu0 0.0
      %2437 = vmatpush1.msra.mxu0 0.0
      %2438 = vmatprep.subr.mxu0 0.0
      %2439 = vmatpush1.msra.mxu0 0.0
      %2440 = vmatprep.subr.mxu0 0.0
      %2441 = vmatpush1.msra.mxu0 0.0
      %2442 = vmatprep.subr.mxu0 0.0
      %2443 = vmatpush1.msra.mxu0 0.0
      %2444 = vmatprep.subr.mxu0 0.0
      %2445 = vmatpush1.msra.mxu0 0.0
      %2446 = vmatprep.subr.mxu0 0.0
      %2447 = vmatpush1.msra.mxu0 0.0
      %2448 = vmatprep.subr.mxu0 0.0
      %2449 = vmatpush1.msra.mxu0 0.0
      %2450 = vmatprep.subr.mxu0 0.0
      %2451 = vmatpush1.msra.mxu0 0.0
      %2452 = vmatprep.subr.mxu0 0.0
      %2453 = vmatpush1.msra.mxu0 0.0
      %2454 = vmatprep.mubr.f32.mxu0 0.0
      %2455 = vmatmul.mubr.f32.gmra.mrb[0].mxu0 %v2230
      %v2456 = vpop.f32.mrb[0].mxu0
      %v2457 = vadd.f32 0.0, %v2456
      %v2458 = vpop.f32.mrb[0].mxu0
      %v2459 = vadd.f32 0.0, %v2458
      %2460 = vdwg.mxu0
      %2461 = vmatprep.subr.mxu0 %v2246
      %2462 = vmatpush1.msra.mxu0 %v2244
      %2463 = vmatprep.subr.mxu0 0.0
      %2464 = vmatpush1.msra.mxu0 0.0
      %2465 = vmatprep.subr.mxu0 0.0
      %2466 = vmatpush1.msra.mxu0 0.0
      %2467 = vmatprep.subr.mxu0 0.0
      %2468 = vmatpush1.msra.mxu0 0.0
      %2469 = vmatprep.subr.mxu0 0.0
      %2470 = vmatpush1.msra.mxu0 0.0
      %2471 = vmatprep.subr.mxu0 0.0
      %2472 = vmatpush1.msra.mxu0 0.0
      %2473 = vmatprep.subr.mxu0 0.0
      %2474 = vmatpush1.msra.mxu0 0.0
      %2475 = vmatprep.subr.mxu0 0.0
      %2476 = vmatpush1.msra.mxu0 0.0
      %2477 = vmatprep.subr.mxu0 0.0
      %2478 = vmatpush1.msra.mxu0 0.0
      %2479 = vmatprep.subr.mxu0 0.0
      %2480 = vmatpush1.msra.mxu0 0.0
      %2481 = vmatprep.subr.mxu0 0.0
      %2482 = vmatpush1.msra.mxu0 0.0
      %2483 = vmatprep.subr.mxu0 0.0
      %2484 = vmatpush1.msra.mxu0 0.0
      %2485 = vmatprep.subr.mxu0 0.0
      %2486 = vmatpush1.msra.mxu0 0.0
      %2487 = vmatprep.subr.mxu0 0.0
      %2488 = vmatpush1.msra.mxu0 0.0
      %2489 = vmatprep.subr.mxu0 0.0
      %2490 = vmatpush1.msra.mxu0 0.0
      %2491 = vmatprep.subr.mxu0 0.0
      %2492 = vmatpush1.msra.mxu0 0.0
      %2493 = vmatprep.subr.mxu0 0.0
      %2494 = vmatpush1.msra.mxu0 0.0
      %2495 = vmatprep.subr.mxu0 0.0
      %2496 = vmatpush1.msra.mxu0 0.0
      %2497 = vmatprep.subr.mxu0 0.0
      %2498 = vmatpush1.msra.mxu0 0.0
      %2499 = vmatprep.subr.mxu0 0.0
      %2500 = vmatpush1.msra.mxu0 0.0
      %2501 = vmatprep.subr.mxu0 0.0
      %2502 = vmatpush1.msra.mxu0 0.0
      %2503 = vmatprep.subr.mxu0 0.0
      %2504 = vmatpush1.msra.mxu0 0.0
      %2505 = vmatprep.subr.mxu0 0.0
      %2506 = vmatpush1.msra.mxu0 0.0
      %2507 = vmatprep.subr.mxu0 0.0
      %2508 = vmatpush1.msra.mxu0 0.0
      %2509 = vmatprep.subr.mxu0 0.0
      %2510 = vmatpush1.msra.mxu0 0.0
      %2511 = vmatprep.subr.mxu0 0.0
      %2512 = vmatpush1.msra.mxu0 0.0
      %2513 = vmatprep.subr.mxu0 0.0
      %2514 = vmatpush1.msra.mxu0 0.0
      %2515 = vmatprep.subr.mxu0 0.0
      %2516 = vmatpush1.msra.mxu0 0.0
      %2517 = vmatprep.subr.mxu0 0.0
      %2518 = vmatpush1.msra.mxu0 0.0
      %2519 = vmatprep.subr.mxu0 0.0
      %2520 = vmatpush1.msra.mxu0 0.0
      %2521 = vmatprep.subr.mxu0 0.0
      %2522 = vmatpush1.msra.mxu0 0.0
      %2523 = vmatprep.subr.mxu0 0.0
      %2524 = vmatpush1.msra.mxu0 0.0
      %2525 = vmatprep.mubr.f32.mxu0 0.0
      %2526 = vmatmul.mubr.f32.gmra.mrb[0].mxu0 %v2230
      %v2527 = vpop.f32.mrb[0].mxu0
      %v2528 = vadd.f32 0.0, %v2527
      %v2529 = vpop.f32.mrb[0].mxu0
      %v2530 = vadd.f32 0.0, %v2529
      %2531 = vdwg.mxu0
      %v2532 = vadd.f32 %v2176, %v2315
      %v2533 = vadd.f32 %v2177, %v2317
      %v2534 = vadd.f32 %v2178, %v2386
      %v2535 = vadd.f32 %v2179, %v2388
      %v2536 = vadd.f32 %v2180, %v2457
      %v2537 = vadd.f32 %v2181, %v2459
      %v2538 = vadd.f32 %v2182, %v2528
      %v2539 = vadd.f32 %v2183, %v2530
      %2540 = vrot.lane.b32.xlu0 %v321, 97
      %v2541 = vpop.permute.xlu0 %2540
      %2542 = vrot.lane.b32.xlu0 %v322, 97
      %v2543 = vpop.permute.xlu0 %2542
      %2544 = vrot.lane.b32.xlu0 %v323, 97
      %v2545 = vpop.permute.xlu0 %2544
      %2546 = vrot.lane.b32.xlu0 %v324, 97
      %v2547 = vpop.permute.xlu0 %2546
      %2548 = vrot.lane.b32.xlu0 %v325, 97
      %v2549 = vpop.permute.xlu0 %2548
      %v2550 = vrot.slane %v2541, 4
      %v2551 = vrot.slane %v2543, 4
      %v2552 = vrot.slane %v2545, 4
      %v2553 = vrot.slane %v2547, 4
      %v2554 = vrot.slane %v2549, 4
      %v2555 = vsel %vm377, %v2550, %v2551
      %v2556 = vsel %vm1125, %v2555, %v2543
      %v2557 = vsel %vm377, %v2551, %v2552
      %v2558 = vsel %vm1125, %v2557, %v2545
      %v2559 = vsel %vm377, %v2552, %v2553
      %v2560 = vsel %vm1125, %v2559, %v2547
      %v2561 = vsel %vm377, %v2553, %v2554
      %v2562 = vsel %vm1125, %v2561, %v2549
      %v2571 = vmul.f32 %v2556, %v359
      %v2572 = vmul.f32 %v2558, %v360
      %v2573 = vmul.f32 %v2560, %v361
      %v2574 = vmul.f32 %v2562, %v362
      %s2575 = scalar_lea.vmem %s0, 12
      %v2576 = vld [vmem:[%s2575] sm:$0x3]
      %v2581 = vcombine.high %v2571, %v2571
      %v2582 = vcombine.high %v2572, %v2572
      %v2583 = vcombine.high %v2573, %v2573
      %v2584 = vcombine.high %v2574, %v2574
      %v2586 = vsel %vm433, %v2576, 0
      %v2588 = vsel %vm377, %v2571, 0
      %v2590 = vsel %vm377, %v2581, 0
      %v2592 = vsel %vm377, %v2572, 0
      %v2594 = vsel %vm377, %v2582, 0
      %v2596 = vsel %vm377, %v2573, 0
      %v2598 = vsel %vm377, %v2583, 0
      %v2600 = vsel %vm377, %v2574, 0
      %v2602 = vsel %vm377, %v2584, 0
      %2604 = vmatprep.subr.mxu0 %v2590
      %2605 = vmatpush1.msra.mxu0 %v2588
      %2606 = vmatprep.subr.mxu0 0.0
      %2607 = vmatpush1.msra.mxu0 0.0
      %2608 = vmatprep.subr.mxu0 0.0
      %2609 = vmatpush1.msra.mxu0 0.0
      %2610 = vmatprep.subr.mxu0 0.0
      %2611 = vmatpush1.msra.mxu0 0.0
      %2612 = vmatprep.subr.mxu0 0.0
      %2613 = vmatpush1.msra.mxu0 0.0
      %2614 = vmatprep.subr.mxu0 0.0
      %2615 = vmatpush1.msra.mxu0 0.0
      %2616 = vmatprep.subr.mxu0 0.0
      %2617 = vmatpush1.msra.mxu0 0.0
      %2618 = vmatprep.subr.mxu0 0.0
      %2619 = vmatpush1.msra.mxu0 0.0
      %2620 = vmatprep.subr.mxu0 0.0
      %2621 = vmatpush1.msra.mxu0 0.0
      %2622 = vmatprep.subr.mxu0 0.0
      %2623 = vmatpush1.msra.mxu0 0.0
      %2624 = vmatprep.subr.mxu0 0.0
      %2625 = vmatpush1.msra.mxu0 0.0
      %2626 = vmatprep.subr.mxu0 0.0
      %2627 = vmatpush1.msra.mxu0 0.0
      %2628 = vmatprep.subr.mxu0 0.0
      %2629 = vmatpush1.msra.mxu0 0.0
      %2630 = vmatprep.subr.mxu0 0.0
      %2631 = vmatpush1.msra.mxu0 0.0
      %2632 = vmatprep.subr.mxu0 0.0
      %2633 = vmatpush1.msra.mxu0 0.0
      %2634 = vmatprep.subr.mxu0 0.0
      %2635 = vmatpush1.msra.mxu0 0.0
      %2636 = vmatprep.subr.mxu0 0.0
      %2637 = vmatpush1.msra.mxu0 0.0
      %2638 = vmatprep.subr.mxu0 0.0
      %2639 = vmatpush1.msra.mxu0 0.0
      %2640 = vmatprep.subr.mxu0 0.0
      %2641 = vmatpush1.msra.mxu0 0.0
      %2642 = vmatprep.subr.mxu0 0.0
      %2643 = vmatpush1.msra.mxu0 0.0
      %2644 = vmatprep.subr.mxu0 0.0
      %2645 = vmatpush1.msra.mxu0 0.0
      %2646 = vmatprep.subr.mxu0 0.0
      %2647 = vmatpush1.msra.mxu0 0.0
      %2648 = vmatprep.subr.mxu0 0.0
      %2649 = vmatpush1.msra.mxu0 0.0
      %2650 = vmatprep.subr.mxu0 0.0
      %2651 = vmatpush1.msra.mxu0 0.0
      %2652 = vmatprep.subr.mxu0 0.0
      %2653 = vmatpush1.msra.mxu0 0.0
      %2654 = vmatprep.subr.mxu0 0.0
      %2655 = vmatpush1.msra.mxu0 0.0
      %2656 = vmatprep.subr.mxu0 0.0
      %2657 = vmatpush1.msra.mxu0 0.0
      %2658 = vmatprep.subr.mxu0 0.0
      %2659 = vmatpush1.msra.mxu0 0.0
      %2660 = vmatprep.subr.mxu0 0.0
      %2661 = vmatpush1.msra.mxu0 0.0
      %2662 = vmatprep.subr.mxu0 0.0
      %2663 = vmatpush1.msra.mxu0 0.0
      %2664 = vmatprep.subr.mxu0 0.0
      %2665 = vmatpush1.msra.mxu0 0.0
      %2666 = vmatprep.subr.mxu0 0.0
      %2667 = vmatpush1.msra.mxu0 0.0
      %2668 = vmatprep.mubr.f32.mxu0 0.0
      %2669 = vmatmul.mubr.f32.gmra.mrb[0].mxu0 %v2586
      %v2670 = vpop.f32.mrb[0].mxu0
      %v2671 = vadd.f32 0.0, %v2670
      %v2672 = vpop.f32.mrb[0].mxu0
      %v2673 = vadd.f32 0.0, %v2672
      %2674 = vdwg.mxu0
      %2675 = vmatprep.subr.mxu0 %v2594
      %2676 = vmatpush1.msra.mxu0 %v2592
      %2677 = vmatprep.subr.mxu0 0.0
      %2678 = vmatpush1.msra.mxu0 0.0
      %2679 = vmatprep.subr.mxu0 0.0
      %2680 = vmatpush1.msra.mxu0 0.0
      %2681 = vmatprep.subr.mxu0 0.0
      %2682 = vmatpush1.msra.mxu0 0.0
      %2683 = vmatprep.subr.mxu0 0.0
      %2684 = vmatpush1.msra.mxu0 0.0
      %2685 = vmatprep.subr.mxu0 0.0
      %2686 = vmatpush1.msra.mxu0 0.0
      %2687 = vmatprep.subr.mxu0 0.0
      %2688 = vmatpush1.msra.mxu0 0.0
      %2689 = vmatprep.subr.mxu0 0.0
      %2690 = vmatpush1.msra.mxu0 0.0
      %2691 = vmatprep.subr.mxu0 0.0
      %2692 = vmatpush1.msra.mxu0 0.0
      %2693 = vmatprep.subr.mxu0 0.0
      %2694 = vmatpush1.msra.mxu0 0.0
      %2695 = vmatprep.subr.mxu0 0.0
      %2696 = vmatpush1.msra.mxu0 0.0
      %2697 = vmatprep.subr.mxu0 0.0
      %2698 = vmatpush1.msra.mxu0 0.0
      %2699 = vmatprep.subr.mxu0 0.0
      %2700 = vmatpush1.msra.mxu0 0.0
      %2701 = vmatprep.subr.mxu0 0.0
      %2702 = vmatpush1.msra.mxu0 0.0
      %2703 = vmatprep.subr.mxu0 0.0
      %2704 = vmatpush1.msra.mxu0 0.0
      %2705 = vmatprep.subr.mxu0 0.0
      %2706 = vmatpush1.msra.mxu0 0.0
      %2707 = vmatprep.subr.mxu0 0.0
      %2708 = vmatpush1.msra.mxu0 0.0
      %2709 = vmatprep.subr.mxu0 0.0
      %2710 = vmatpush1.msra.mxu0 0.0
      %2711 = vmatprep.subr.mxu0 0.0
      %2712 = vmatpush1.msra.mxu0 0.0
      %2713 = vmatprep.subr.mxu0 0.0
      %2714 = vmatpush1.msra.mxu0 0.0
      %2715 = vmatprep.subr.mxu0 0.0
      %2716 = vmatpush1.msra.mxu0 0.0
      %2717 = vmatprep.subr.mxu0 0.0
      %2718 = vmatpush1.msra.mxu0 0.0
      %2719 = vmatprep.subr.mxu0 0.0
      %2720 = vmatpush1.msra.mxu0 0.0
      %2721 = vmatprep.subr.mxu0 0.0
      %2722 = vmatpush1.msra.mxu0 0.0
      %2723 = vmatprep.subr.mxu0 0.0
      %2724 = vmatpush1.msra.mxu0 0.0
      %2725 = vmatprep.subr.mxu0 0.0
      %2726 = vmatpush1.msra.mxu0 0.0
      %2727 = vmatprep.subr.mxu0 0.0
      %2728 = vmatpush1.msra.mxu0 0.0
      %2729 = vmatprep.subr.mxu0 0.0
      %2730 = vmatpush1.msra.mxu0 0.0
      %2731 = vmatprep.subr.mxu0 0.0
      %2732 = vmatpush1.msra.mxu0 0.0
      %2733 = vmatprep.subr.mxu0 0.0
      %2734 = vmatpush1.msra.mxu0 0.0
      %2735 = vmatprep.subr.mxu0 0.0
      %2736 = vmatpush1.msra.mxu0 0.0
      %2737 = vmatprep.subr.mxu0 0.0
      %2738 = vmatpush1.msra.mxu0 0.0
      %2739 = vmatprep.mubr.f32.mxu0 0.0
      %2740 = vmatmul.mubr.f32.gmra.mrb[0].mxu0 %v2586
      %v2741 = vpop.f32.mrb[0].mxu0
      %v2742 = vadd.f32 0.0, %v2741
      %v2743 = vpop.f32.mrb[0].mxu0
      %v2744 = vadd.f32 0.0, %v2743
      %2745 = vdwg.mxu0
      %2746 = vmatprep.subr.mxu0 %v2598
      %2747 = vmatpush1.msra.mxu0 %v2596
      %2748 = vmatprep.subr.mxu0 0.0
      %2749 = vmatpush1.msra.mxu0 0.0
      %2750 = vmatprep.subr.mxu0 0.0
      %2751 = vmatpush1.msra.mxu0 0.0
      %2752 = vmatprep.subr.mxu0 0.0
      %2753 = vmatpush1.msra.mxu0 0.0
      %2754 = vmatprep.subr.mxu0 0.0
      %2755 = vmatpush1.msra.mxu0 0.0
      %2756 = vmatprep.subr.mxu0 0.0
      %2757 = vmatpush1.msra.mxu0 0.0
      %2758 = vmatprep.subr.mxu0 0.0
      %2759 = vmatpush1.msra.mxu0 0.0
      %2760 = vmatprep.subr.mxu0 0.0
      %2761 = vmatpush1.msra.mxu0 0.0
      %2762 = vmatprep.subr.mxu0 0.0
      %2763 = vmatpush1.msra.mxu0 0.0
      %2764 = vmatprep.subr.mxu0 0.0
      %2765 = vmatpush1.msra.mxu0 0.0
      %2766 = vmatprep.subr.mxu0 0.0
      %2767 = vmatpush1.msra.mxu0 0.0
      %2768 = vmatprep.subr.mxu0 0.0
      %2769 = vmatpush1.msra.mxu0 0.0
      %2770 = vmatprep.subr.mxu0 0.0
      %2771 = vmatpush1.msra.mxu0 0.0
      %2772 = vmatprep.subr.mxu0 0.0
      %2773 = vmatpush1.msra.mxu0 0.0
      %2774 = vmatprep.subr.mxu0 0.0
      %2775 = vmatpush1.msra.mxu0 0.0
      %2776 = vmatprep.subr.mxu0 0.0
      %2777 = vmatpush1.msra.mxu0 0.0
      %2778 = vmatprep.subr.mxu0 0.0
      %2779 = vmatpush1.msra.mxu0 0.0
      %2780 = vmatprep.subr.mxu0 0.0
      %2781 = vmatpush1.msra.mxu0 0.0
      %2782 = vmatprep.subr.mxu0 0.0
      %2783 = vmatpush1.msra.mxu0 0.0
      %2784 = vmatprep.subr.mxu0 0.0
      %2785 = vmatpush1.msra.mxu0 0.0
      %2786 = vmatprep.subr.mxu0 0.0
      %2787 = vmatpush1.msra.mxu0 0.0
      %2788 = vmatprep.subr.mxu0 0.0
      %2789 = vmatpush1.msra.mxu0 0.0
      %2790 = vmatprep.subr.mxu0 0.0
      %2791 = vmatpush1.msra.mxu0 0.0
      %2792 = vmatprep.subr.mxu0 0.0
      %2793 = vmatpush1.msra.mxu0 0.0
      %2794 = vmatprep.subr.mxu0 0.0
      %2795 = vmatpush1.msra.mxu0 0.0
      %2796 = vmatprep.subr.mxu0 0.0
      %2797 = vmatpush1.msra.mxu0 0.0
      %2798 = vmatprep.subr.mxu0 0.0
      %2799 = vmatpush1.msra.mxu0 0.0
      %2800 = vmatprep.subr.mxu0 0.0
      %2801 = vmatpush1.msra.mxu0 0.0
      %2802 = vmatprep.subr.mxu0 0.0
      %2803 = vmatpush1.msra.mxu0 0.0
      %2804 = vmatprep.subr.mxu0 0.0
      %2805 = vmatpush1.msra.mxu0 0.0
      %2806 = vmatprep.subr.mxu0 0.0
      %2807 = vmatpush1.msra.mxu0 0.0
      %2808 = vmatprep.subr.mxu0 0.0
      %2809 = vmatpush1.msra.mxu0 0.0
      %2810 = vmatprep.mubr.f32.mxu0 0.0
      %2811 = vmatmul.mubr.f32.gmra.mrb[0].mxu0 %v2586
      %v2812 = vpop.f32.mrb[0].mxu0
      %v2813 = vadd.f32 0.0, %v2812
      %v2814 = vpop.f32.mrb[0].mxu0
      %v2815 = vadd.f32 0.0, %v2814
      %2816 = vdwg.mxu0
      %2817 = vmatprep.subr.mxu0 %v2602
      %2818 = vmatpush1.msra.mxu0 %v2600
      %2819 = vmatprep.subr.mxu0 0.0
      %2820 = vmatpush1.msra.mxu0 0.0
      %2821 = vmatprep.subr.mxu0 0.0
      %2822 = vmatpush1.msra.mxu0 0.0
      %2823 = vmatprep.subr.mxu0 0.0
      %2824 = vmatpush1.msra.mxu0 0.0
      %2825 = vmatprep.subr.mxu0 0.0
      %2826 = vmatpush1.msra.mxu0 0.0
      %2827 = vmatprep.subr.mxu0 0.0
      %2828 = vmatpush1.msra.mxu0 0.0
      %2829 = vmatprep.subr.mxu0 0.0
      %2830 = vmatpush1.msra.mxu0 0.0
      %2831 = vmatprep.subr.mxu0 0.0
      %2832 = vmatpush1.msra.mxu0 0.0
      %2833 = vmatprep.subr.mxu0 0.0
      %2834 = vmatpush1.msra.mxu0 0.0
      %2835 = vmatprep.subr.mxu0 0.0
      %2836 = vmatpush1.msra.mxu0 0.0
      %2837 = vmatprep.subr.mxu0 0.0
      %2838 = vmatpush1.msra.mxu0 0.0
      %2839 = vmatprep.subr.mxu0 0.0
      %2840 = vmatpush1.msra.mxu0 0.0
      %2841 = vmatprep.subr.mxu0 0.0
      %2842 = vmatpush1.msra.mxu0 0.0
      %2843 = vmatprep.subr.mxu0 0.0
      %2844 = vmatpush1.msra.mxu0 0.0
      %2845 = vmatprep.subr.mxu0 0.0
      %2846 = vmatpush1.msra.mxu0 0.0
      %2847 = vmatprep.subr.mxu0 0.0
      %2848 = vmatpush1.msra.mxu0 0.0
      %2849 = vmatprep.subr.mxu0 0.0
      %2850 = vmatpush1.msra.mxu0 0.0
      %2851 = vmatprep.subr.mxu0 0.0
      %2852 = vmatpush1.msra.mxu0 0.0
      %2853 = vmatprep.subr.mxu0 0.0
      %2854 = vmatpush1.msra.mxu0 0.0
      %2855 = vmatprep.subr.mxu0 0.0
      %2856 = vmatpush1.msra.mxu0 0.0
      %2857 = vmatprep.subr.mxu0 0.0
      %2858 = vmatpush1.msra.mxu0 0.0
      %2859 = vmatprep.subr.mxu0 0.0
      %2860 = vmatpush1.msra.mxu0 0.0
      %2861 = vmatprep.subr.mxu0 0.0
      %2862 = vmatpush1.msra.mxu0 0.0
      %2863 = vmatprep.subr.mxu0 0.0
      %2864 = vmatpush1.msra.mxu0 0.0
      %2865 = vmatprep.subr.mxu0 0.0
      %2866 = vmatpush1.msra.mxu0 0.0
      %2867 = vmatprep.subr.mxu0 0.0
      %2868 = vmatpush1.msra.mxu0 0.0
      %2869 = vmatprep.subr.mxu0 0.0
      %2870 = vmatpush1.msra.mxu0 0.0
      %2871 = vmatprep.subr.mxu0 0.0
      %2872 = vmatpush1.msra.mxu0 0.0
      %2873 = vmatprep.subr.mxu0 0.0
      %2874 = vmatpush1.msra.mxu0 0.0
      %2875 = vmatprep.subr.mxu0 0.0
      %2876 = vmatpush1.msra.mxu0 0.0
      %2877 = vmatprep.subr.mxu0 0.0
      %2878 = vmatpush1.msra.mxu0 0.0
      %2879 = vmatprep.subr.mxu0 0.0
      %2880 = vmatpush1.msra.mxu0 0.0
      %2881 = vmatprep.mubr.f32.mxu0 0.0
      %2882 = vmatmul.mubr.f32.gmra.mrb[0].mxu0 %v2586
      %v2883 = vpop.f32.mrb[0].mxu0
      %v2884 = vadd.f32 0.0, %v2883
      %v2885 = vpop.f32.mrb[0].mxu0
      %v2886 = vadd.f32 0.0, %v2885
      %2887 = vdwg.mxu0
      %v2888 = vadd.f32 %v2532, %v2671
      %v2889 = vadd.f32 %v2533, %v2673
      %v2890 = vadd.f32 %v2534, %v2742
      %v2891 = vadd.f32 %v2535, %v2744
      %v2892 = vadd.f32 %v2536, %v2813
      %v2893 = vadd.f32 %v2537, %v2815
      %v2894 = vadd.f32 %v2538, %v2884
      %v2895 = vadd.f32 %v2539, %v2886
      %s2896 = scalar_lea.vmem %s0, 14
      %v2897 = vld [vmem:[%s2896] sm:$0x3]
      %v2898 = vcombine.high %v325, %v325
      %2899 = vrot.lane.b32.xlu0 %v402, 96
      %v2900 = vpop.permute.xlu0 %2899
      %2901 = vrot.lane.b32.xlu0 %v322, 96
      %v2902 = vpop.permute.xlu0 %2901
      %2903 = vrot.lane.b32.xlu0 %v403, 96
      %v2904 = vpop.permute.xlu0 %2903
      %2905 = vrot.lane.b32.xlu0 %v323, 96
      %v2906 = vpop.permute.xlu0 %2905
      %2907 = vrot.lane.b32.xlu0 %v404, 96
      %v2908 = vpop.permute.xlu0 %2907
      %2909 = vrot.lane.b32.xlu0 %v324, 96
      %v2910 = vpop.permute.xlu0 %2909
      %2911 = vrot.lane.b32.xlu0 %v405, 96
      %v2912 = vpop.permute.xlu0 %2911
      %2913 = vrot.lane.b32.xlu0 %v325, 96
      %v2914 = vpop.permute.xlu0 %2913
      %2915 = vrot.lane.b32.xlu0 %v2898, 96
      %v2916 = vpop.permute.xlu0 %2915
      %vm2917 = vcmask 785408
      %v2918 = vsel %vm2917, %v2900, %v2902
      %v2919 = vsel %vm2917, %v2902, %v2904
      %v2920 = vsel %vm2917, %v2904, %v2906
      %v2921 = vsel %vm2917, %v2906, %v2908
      %v2922 = vsel %vm2917, %v2908, %v2910
      %v2923 = vsel %vm2917, %v2910, %v2912
      %v2924 = vsel %vm2917, %v2912, %v2914
      %v2925 = vsel %vm2917, %v2914, %v2916
      %v2927 = vsel %vm433, %v2897, 0
      %v2929 = vsel %vm377, %v2918, 0
      %v2931 = vsel %vm377, %v2919, 0
      %v2933 = vsel %vm377, %v2920, 0
      %v2935 = vsel %vm377, %v2921, 0
      %v2937 = vsel %vm377, %v2922, 0
      %v2939 = vsel %vm377, %v2923, 0
      %v2941 = vsel %vm377, %v2924, 0
      %v2943 = vsel %vm377, %v2925, 0
      %2945 = vmatprep.subr.mxu0 %v2931
      %2946 = vmatpush1.msra.mxu0 %v2929
      %2947 = vmatprep.subr.mxu0 0.0
      %2948 = vmatpush1.msra.mxu0 0.0
      %2949 = vmatprep.subr.mxu0 0.0
      %2950 = vmatpush1.msra.mxu0 0.0
      %2951 = vmatprep.subr.mxu0 0.0
      %2952 = vmatpush1.msra.mxu0 0.0
      %2953 = vmatprep.subr.mxu0 0.0
      %2954 = vmatpush1.msra.mxu0 0.0
      %2955 = vmatprep.subr.mxu0 0.0
      %2956 = vmatpush1.msra.mxu0 0.0
      %2957 = vmatprep.subr.mxu0 0.0
      %2958 = vmatpush1.msra.mxu0 0.0
      %2959 = vmatprep.subr.mxu0 0.0
      %2960 = vmatpush1.msra.mxu0 0.0
      %2961 = vmatprep.subr.mxu0 0.0
      %2962 = vmatpush1.msra.mxu0 0.0
      %2963 = vmatprep.subr.mxu0 0.0
      %2964 = vmatpush1.msra.mxu0 0.0
      %2965 = vmatprep.subr.mxu0 0.0
      %2966 = vmatpush1.msra.mxu0 0.0
      %2967 = vmatprep.subr.mxu0 0.0
      %2968 = vmatpush1.msra.mxu0 0.0
      %2969 = vmatprep.subr.mxu0 0.0
      %2970 = vmatpush1.msra.mxu0 0.0
      %2971 = vmatprep.subr.mxu0 0.0
      %2972 = vmatpush1.msra.mxu0 0.0
      %2973 = vmatprep.subr.mxu0 0.0
      %2974 = vmatpush1.msra.mxu0 0.0
      %2975 = vmatprep.subr.mxu0 0.0
      %2976 = vmatpush1.msra.mxu0 0.0
      %2977 = vmatprep.subr.mxu0 0.0
      %2978 = vmatpush1.msra.mxu0 0.0
      %2979 = vmatprep.subr.mxu0 0.0
      %2980 = vmatpush1.msra.mxu0 0.0
      %2981 = vmatprep.subr.mxu0 0.0
      %2982 = vmatpush1.msra.mxu0 0.0
      %2983 = vmatprep.subr.mxu0 0.0
      %2984 = vmatpush1.msra.mxu0 0.0
      %2985 = vmatprep.subr.mxu0 0.0
      %2986 = vmatpush1.msra.mxu0 0.0
      %2987 = vmatprep.subr.mxu0 0.0
      %2988 = vmatpush1.msra.mxu0 0.0
      %2989 = vmatprep.subr.mxu0 0.0
      %2990 = vmatpush1.msra.mxu0 0.0
      %2991 = vmatprep.subr.mxu0 0.0
      %2992 = vmatpush1.msra.mxu0 0.0
      %2993 = vmatprep.subr.mxu0 0.0
      %2994 = vmatpush1.msra.mxu0 0.0
      %2995 = vmatprep.subr.mxu0 0.0
      %2996 = vmatpush1.msra.mxu0 0.0
      %2997 = vmatprep.subr.mxu0 0.0
      %2998 = vmatpush1.msra.mxu0 0.0
      %2999 = vmatprep.subr.mxu0 0.0
      %3000 = vmatpush1.msra.mxu0 0.0
      %3001 = vmatprep.subr.mxu0 0.0
      %3002 = vmatpush1.msra.mxu0 0.0
      %3003 = vmatprep.subr.mxu0 0.0
      %3004 = vmatpush1.msra.mxu0 0.0
      %3005 = vmatprep.subr.mxu0 0.0
      %3006 = vmatpush1.msra.mxu0 0.0
      %3007 = vmatprep.subr.mxu0 0.0
      %3008 = vmatpush1.msra.mxu0 0.0
      %3009 = vmatprep.mubr.f32.mxu0 0.0
      %3010 = vmatmul.mubr.f32.gmra.mrb[0].mxu0 %v2927
      %v3011 = vpop.f32.mrb[0].mxu0
      %v3012 = vadd.f32 0.0, %v3011
      %v3013 = vpop.f32.mrb[0].mxu0
      %v3014 = vadd.f32 0.0, %v3013
      %3015 = vdwg.mxu0
      %3016 = vmatprep.subr.mxu0 %v2935
      %3017 = vmatpush1.msra.mxu0 %v2933
      %3018 = vmatprep.subr.mxu0 0.0
      %3019 = vmatpush1.msra.mxu0 0.0
      %3020 = vmatprep.subr.mxu0 0.0
      %3021 = vmatpush1.msra.mxu0 0.0
      %3022 = vmatprep.subr.mxu0 0.0
      %3023 = vmatpush1.msra.mxu0 0.0
      %3024 = vmatprep.subr.mxu0 0.0
      %3025 = vmatpush1.msra.mxu0 0.0
      %3026 = vmatprep.subr.mxu0 0.0
      %3027 = vmatpush1.msra.mxu0 0.0
      %3028 = vmatprep.subr.mxu0 0.0
      %3029 = vmatpush1.msra.mxu0 0.0
      %3030 = vmatprep.subr.mxu0 0.0
      %3031 = vmatpush1.msra.mxu0 0.0
      %3032 = vmatprep.subr.mxu0 0.0
      %3033 = vmatpush1.msra.mxu0 0.0
      %3034 = vmatprep.subr.mxu0 0.0
      %3035 = vmatpush1.msra.mxu0 0.0
      %3036 = vmatprep.subr.mxu0 0.0
      %3037 = vmatpush1.msra.mxu0 0.0
      %3038 = vmatprep.subr.mxu0 0.0
      %3039 = vmatpush1.msra.mxu0 0.0
      %3040 = vmatprep.subr.mxu0 0.0
      %3041 = vmatpush1.msra.mxu0 0.0
      %3042 = vmatprep.subr.mxu0 0.0
      %3043 = vmatpush1.msra.mxu0 0.0
      %3044 = vmatprep.subr.mxu0 0.0
      %3045 = vmatpush1.msra.mxu0 0.0
      %3046 = vmatprep.subr.mxu0 0.0
      %3047 = vmatpush1.msra.mxu0 0.0
      %3048 = vmatprep.subr.mxu0 0.0
      %3049 = vmatpush1.msra.mxu0 0.0
      %3050 = vmatprep.subr.mxu0 0.0
      %3051 = vmatpush1.msra.mxu0 0.0
      %3052 = vmatprep.subr.mxu0 0.0
      %3053 = vmatpush1.msra.mxu0 0.0
      %3054 = vmatprep.subr.mxu0 0.0
      %3055 = vmatpush1.msra.mxu0 0.0
      %3056 = vmatprep.subr.mxu0 0.0
      %3057 = vmatpush1.msra.mxu0 0.0
      %3058 = vmatprep.subr.mxu0 0.0
      %3059 = vmatpush1.msra.mxu0 0.0
      %3060 = vmatprep.subr.mxu0 0.0
      %3061 = vmatpush1.msra.mxu0 0.0
      %3062 = vmatprep.subr.mxu0 0.0
      %3063 = vmatpush1.msra.mxu0 0.0
      %3064 = vmatprep.subr.mxu0 0.0
      %3065 = vmatpush1.msra.mxu0 0.0
      %3066 = vmatprep.subr.mxu0 0.0
      %3067 = vmatpush1.msra.mxu0 0.0
      %3068 = vmatprep.subr.mxu0 0.0
      %3069 = vmatpush1.msra.mxu0 0.0
      %3070 = vmatprep.subr.mxu0 0.0
      %3071 = vmatpush1.msra.mxu0 0.0
      %3072 = vmatprep.subr.mxu0 0.0
      %3073 = vmatpush1.msra.mxu0 0.0
      %3074 = vmatprep.subr.mxu0 0.0
      %3075 = vmatpush1.msra.mxu0 0.0
      %3076 = vmatprep.subr.mxu0 0.0
      %3077 = vmatpush1.msra.mxu0 0.0
      %3078 = vmatprep.subr.mxu0 0.0
      %3079 = vmatpush1.msra.mxu0 0.0
      %3080 = vmatprep.mubr.f32.mxu0 0.0
      %3081 = vmatmul.mubr.f32.gmra.mrb[0].mxu0 %v2927
      %v3082 = vpop.f32.mrb[0].mxu0
      %v3083 = vadd.f32 0.0, %v3082
      %v3084 = vpop.f32.mrb[0].mxu0
      %v3085 = vadd.f32 0.0, %v3084
      %3086 = vdwg.mxu0
      %3087 = vmatprep.subr.mxu0 %v2939
      %3088 = vmatpush1.msra.mxu0 %v2937
      %3089 = vmatprep.subr.mxu0 0.0
      %3090 = vmatpush1.msra.mxu0 0.0
      %3091 = vmatprep.subr.mxu0 0.0
      %3092 = vmatpush1.msra.mxu0 0.0
      %3093 = vmatprep.subr.mxu0 0.0
      %3094 = vmatpush1.msra.mxu0 0.0
      %3095 = vmatprep.subr.mxu0 0.0
      %3096 = vmatpush1.msra.mxu0 0.0
      %3097 = vmatprep.subr.mxu0 0.0
      %3098 = vmatpush1.msra.mxu0 0.0
      %3099 = vmatprep.subr.mxu0 0.0
      %3100 = vmatpush1.msra.mxu0 0.0
      %3101 = vmatprep.subr.mxu0 0.0
      %3102 = vmatpush1.msra.mxu0 0.0
      %3103 = vmatprep.subr.mxu0 0.0
      %3104 = vmatpush1.msra.mxu0 0.0
      %3105 = vmatprep.subr.mxu0 0.0
      %3106 = vmatpush1.msra.mxu0 0.0
      %3107 = vmatprep.subr.mxu0 0.0
      %3108 = vmatpush1.msra.mxu0 0.0
      %3109 = vmatprep.subr.mxu0 0.0
      %3110 = vmatpush1.msra.mxu0 0.0
      %3111 = vmatprep.subr.mxu0 0.0
      %3112 = vmatpush1.msra.mxu0 0.0
      %3113 = vmatprep.subr.mxu0 0.0
      %3114 = vmatpush1.msra.mxu0 0.0
      %3115 = vmatprep.subr.mxu0 0.0
      %3116 = vmatpush1.msra.mxu0 0.0
      %3117 = vmatprep.subr.mxu0 0.0
      %3118 = vmatpush1.msra.mxu0 0.0
      %3119 = vmatprep.subr.mxu0 0.0
      %3120 = vmatpush1.msra.mxu0 0.0
      %3121 = vmatprep.subr.mxu0 0.0
      %3122 = vmatpush1.msra.mxu0 0.0
      %3123 = vmatprep.subr.mxu0 0.0
      %3124 = vmatpush1.msra.mxu0 0.0
      %3125 = vmatprep.subr.mxu0 0.0
      %3126 = vmatpush1.msra.mxu0 0.0
      %3127 = vmatprep.subr.mxu0 0.0
      %3128 = vmatpush1.msra.mxu0 0.0
      %3129 = vmatprep.subr.mxu0 0.0
      %3130 = vmatpush1.msra.mxu0 0.0
      %3131 = vmatprep.subr.mxu0 0.0
      %3132 = vmatpush1.msra.mxu0 0.0
      %3133 = vmatprep.subr.mxu0 0.0
      %3134 = vmatpush1.msra.mxu0 0.0
      %3135 = vmatprep.subr.mxu0 0.0
      %3136 = vmatpush1.msra.mxu0 0.0
      %3137 = vmatprep.subr.mxu0 0.0
      %3138 = vmatpush1.msra.mxu0 0.0
      %3139 = vmatprep.subr.mxu0 0.0
      %3140 = vmatpush1.msra.mxu0 0.0
      %3141 = vmatprep.subr.mxu0 0.0
      %3142 = vmatpush1.msra.mxu0 0.0
      %3143 = vmatprep.subr.mxu0 0.0
      %3144 = vmatpush1.msra.mxu0 0.0
      %3145 = vmatprep.subr.mxu0 0.0
      %3146 = vmatpush1.msra.mxu0 0.0
      %3147 = vmatprep.subr.mxu0 0.0
      %3148 = vmatpush1.msra.mxu0 0.0
      %3149 = vmatprep.subr.mxu0 0.0
      %3150 = vmatpush1.msra.mxu0 0.0
      %3151 = vmatprep.mubr.f32.mxu0 0.0
      %3152 = vmatmul.mubr.f32.gmra.mrb[0].mxu0 %v2927
      %v3153 = vpop.f32.mrb[0].mxu0
      %v3154 = vadd.f32 0.0, %v3153
      %v3155 = vpop.f32.mrb[0].mxu0
      %v3156 = vadd.f32 0.0, %v3155
      %3157 = vdwg.mxu0
      %3158 = vmatprep.subr.mxu0 %v2943
      %3159 = vmatpush1.msra.mxu0 %v2941
      %3160 = vmatprep.subr.mxu0 0.0
      %3161 = vmatpush1.msra.mxu0 0.0
      %3162 = vmatprep.subr.mxu0 0.0
      %3163 = vmatpush1.msra.mxu0 0.0
      %3164 = vmatprep.subr.mxu0 0.0
      %3165 = vmatpush1.msra.mxu0 0.0
      %3166 = vmatprep.subr.mxu0 0.0
      %3167 = vmatpush1.msra.mxu0 0.0
      %3168 = vmatprep.subr.mxu0 0.0
      %3169 = vmatpush1.msra.mxu0 0.0
      %3170 = vmatprep.subr.mxu0 0.0
      %3171 = vmatpush1.msra.mxu0 0.0
      %3172 = vmatprep.subr.mxu0 0.0
      %3173 = vmatpush1.msra.mxu0 0.0
      %3174 = vmatprep.subr.mxu0 0.0
      %3175 = vmatpush1.msra.mxu0 0.0
      %3176 = vmatprep.subr.mxu0 0.0
      %3177 = vmatpush1.msra.mxu0 0.0
      %3178 = vmatprep.subr.mxu0 0.0
      %3179 = vmatpush1.msra.mxu0 0.0
      %3180 = vmatprep.subr.mxu0 0.0
      %3181 = vmatpush1.msra.mxu0 0.0
      %3182 = vmatprep.subr.mxu0 0.0
      %3183 = vmatpush1.msra.mxu0 0.0
      %3184 = vmatprep.subr.mxu0 0.0
      %3185 = vmatpush1.msra.mxu0 0.0
      %3186 = vmatprep.subr.mxu0 0.0
      %3187 = vmatpush1.msra.mxu0 0.0
      %3188 = vmatprep.subr.mxu0 0.0
      %3189 = vmatpush1.msra.mxu0 0.0
      %3190 = vmatprep.subr.mxu0 0.0
      %3191 = vmatpush1.msra.mxu0 0.0
      %3192 = vmatprep.subr.mxu0 0.0
      %3193 = vmatpush1.msra.mxu0 0.0
      %3194 = vmatprep.subr.mxu0 0.0
      %3195 = vmatpush1.msra.mxu0 0.0
      %3196 = vmatprep.subr.mxu0 0.0
      %3197 = vmatpush1.msra.mxu0 0.0
      %3198 = vmatprep.subr.mxu0 0.0
      %3199 = vmatpush1.msra.mxu0 0.0
      %3200 = vmatprep.subr.mxu0 0.0
      %3201 = vmatpush1.msra.mxu0 0.0
      %3202 = vmatprep.subr.mxu0 0.0
      %3203 = vmatpush1.msra.mxu0 0.0
      %3204 = vmatprep.subr.mxu0 0.0
      %3205 = vmatpush1.msra.mxu0 0.0
      %3206 = vmatprep.subr.mxu0 0.0
      %3207 = vmatpush1.msra.mxu0 0.0
      %3208 = vmatprep.subr.mxu0 0.0
      %3209 = vmatpush1.msra.mxu0 0.0
      %3210 = vmatprep.subr.mxu0 0.0
      %3211 = vmatpush1.msra.mxu0 0.0
      %3212 = vmatprep.subr.mxu0 0.0
      %3213 = vmatpush1.msra.mxu0 0.0
      %3214 = vmatprep.subr.mxu0 0.0
      %3215 = vmatpush1.msra.mxu0 0.0
      %3216 = vmatprep.subr.mxu0 0.0
      %3217 = vmatpush1.msra.mxu0 0.0
      %3218 = vmatprep.subr.mxu0 0.0
      %3219 = vmatpush1.msra.mxu0 0.0
      %3220 = vmatprep.subr.mxu0 0.0
      %3221 = vmatpush1.msra.mxu0 0.0
      %3222 = vmatprep.mubr.f32.mxu0 0.0
      %3223 = vmatmul.mubr.f32.gmra.mrb[0].mxu0 %v2927
      %v3224 = vpop.f32.mrb[0].mxu0
      %v3225 = vadd.f32 0.0, %v3224
      %v3226 = vpop.f32.mrb[0].mxu0
      %v3227 = vadd.f32 0.0, %v3226
      %3228 = vdwg.mxu0
      %v3229 = vadd.f32 %v2888, %v3012
      %v3230 = vadd.f32 %v2889, %v3014
      %v3231 = vadd.f32 %v2890, %v3083
      %v3232 = vadd.f32 %v2891, %v3085
      %v3233 = vadd.f32 %v2892, %v3154
      %v3234 = vadd.f32 %v2893, %v3156
      %v3235 = vadd.f32 %v2894, %v3225
      %v3236 = vadd.f32 %v2895, %v3227
      %3237 = vrot.lane.b32.xlu0 %v321, 95
      %v3238 = vpop.permute.xlu0 %3237
      %3239 = vrot.lane.b32.xlu0 %v322, 95
      %v3240 = vpop.permute.xlu0 %3239
      %3241 = vrot.lane.b32.xlu0 %v323, 95
      %v3242 = vpop.permute.xlu0 %3241
      %3243 = vrot.lane.b32.xlu0 %v324, 95
      %v3244 = vpop.permute.xlu0 %3243
      %3245 = vrot.lane.b32.xlu0 %v325, 95
      %v3246 = vpop.permute.xlu0 %3245
      %v3247 = vrot.slane %v3238, 4
      %v3248 = vrot.slane %v3240, 4
      %v3249 = vrot.slane %v3242, 4
      %v3250 = vrot.slane %v3244, 4
      %v3251 = vrot.slane %v3246, 4
      %v3252 = vsel %vm377, %v3247, %v3248
      %v3253 = vsel %vm375, %v3252, %v3240
      %v3254 = vsel %vm377, %v3248, %v3249
      %v3255 = vsel %vm375, %v3254, %v3242
      %v3256 = vsel %vm377, %v3249, %v3250
      %v3257 = vsel %vm375, %v3256, %v3244
      %v3258 = vsel %vm377, %v3250, %v3251
      %v3259 = vsel %vm375, %v3258, %v3246
      %v3264 = vmul.f32 %v3253, %v1109
      %v3265 = vmul.f32 %v3255, %v1110
      %v3266 = vmul.f32 %v3257, %v1111
      %v3267 = vmul.f32 %v3259, %v1112
      %s3268 = scalar_lea.vmem %s0, 16
      %v3269 = vld [vmem:[%s3268] sm:$0x3]
      %v3274 = vcombine.high %v3264, %v3264
      %v3275 = vcombine.high %v3265, %v3265
      %v3276 = vcombine.high %v3266, %v3266
      %v3277 = vcombine.high %v3267, %v3267
      %v3279 = vsel %vm433, %v3269, 0
      %v3281 = vsel %vm377, %v3264, 0
      %v3283 = vsel %vm377, %v3274, 0
      %v3285 = vsel %vm377, %v3265, 0
      %v3287 = vsel %vm377, %v3275, 0
      %v3289 = vsel %vm377, %v3266, 0
      %v3291 = vsel %vm377, %v3276, 0
      %v3293 = vsel %vm377, %v3267, 0
      %v3295 = vsel %vm377, %v3277, 0
      %3297 = vmatprep.subr.mxu0 %v3283
      %3298 = vmatpush1.msra.mxu0 %v3281
      %3299 = vmatprep.subr.mxu0 0.0
      %3300 = vmatpush1.msra.mxu0 0.0
      %3301 = vmatprep.subr.mxu0 0.0
      %3302 = vmatpush1.msra.mxu0 0.0
      %3303 = vmatprep.subr.mxu0 0.0
      %3304 = vmatpush1.msra.mxu0 0.0
      %3305 = vmatprep.subr.mxu0 0.0
      %3306 = vmatpush1.msra.mxu0 0.0
      %3307 = vmatprep.subr.mxu0 0.0
      %3308 = vmatpush1.msra.mxu0 0.0
      %3309 = vmatprep.subr.mxu0 0.0
      %3310 = vmatpush1.msra.mxu0 0.0
      %3311 = vmatprep.subr.mxu0 0.0
      %3312 = vmatpush1.msra.mxu0 0.0
      %3313 = vmatprep.subr.mxu0 0.0
      %3314 = vmatpush1.msra.mxu0 0.0
      %3315 = vmatprep.subr.mxu0 0.0
      %3316 = vmatpush1.msra.mxu0 0.0
      %3317 = vmatprep.subr.mxu0 0.0
      %3318 = vmatpush1.msra.mxu0 0.0
      %3319 = vmatprep.subr.mxu0 0.0
      %3320 = vmatpush1.msra.mxu0 0.0
      %3321 = vmatprep.subr.mxu0 0.0
      %3322 = vmatpush1.msra.mxu0 0.0
      %3323 = vmatprep.subr.mxu0 0.0
      %3324 = vmatpush1.msra.mxu0 0.0
      %3325 = vmatprep.subr.mxu0 0.0
      %3326 = vmatpush1.msra.mxu0 0.0
      %3327 = vmatprep.subr.mxu0 0.0
      %3328 = vmatpush1.msra.mxu0 0.0
      %3329 = vmatprep.subr.mxu0 0.0
      %3330 = vmatpush1.msra.mxu0 0.0
      %3331 = vmatprep.subr.mxu0 0.0
      %3332 = vmatpush1.msra.mxu0 0.0
      %3333 = vmatprep.subr.mxu0 0.0
      %3334 = vmatpush1.msra.mxu0 0.0
      %3335 = vmatprep.subr.mxu0 0.0
      %3336 = vmatpush1.msra.mxu0 0.0
      %3337 = vmatprep.subr.mxu0 0.0
      %3338 = vmatpush1.msra.mxu0 0.0
      %3339 = vmatprep.subr.mxu0 0.0
      %3340 = vmatpush1.msra.mxu0 0.0
      %3341 = vmatprep.subr.mxu0 0.0
      %3342 = vmatpush1.msra.mxu0 0.0
      %3343 = vmatprep.subr.mxu0 0.0
      %3344 = vmatpush1.msra.mxu0 0.0
      %3345 = vmatprep.subr.mxu0 0.0
      %3346 = vmatpush1.msra.mxu0 0.0
      %3347 = vmatprep.subr.mxu0 0.0
      %3348 = vmatpush1.msra.mxu0 0.0
      %3349 = vmatprep.subr.mxu0 0.0
      %3350 = vmatpush1.msra.mxu0 0.0
      %3351 = vmatprep.subr.mxu0 0.0
      %3352 = vmatpush1.msra.mxu0 0.0
      %3353 = vmatprep.subr.mxu0 0.0
      %3354 = vmatpush1.msra.mxu0 0.0
      %3355 = vmatprep.subr.mxu0 0.0
      %3356 = vmatpush1.msra.mxu0 0.0
      %3357 = vmatprep.subr.mxu0 0.0
      %3358 = vmatpush1.msra.mxu0 0.0
      %3359 = vmatprep.subr.mxu0 0.0
      %3360 = vmatpush1.msra.mxu0 0.0
      %3361 = vmatprep.mubr.f32.mxu0 0.0
      %3362 = vmatmul.mubr.f32.gmra.mrb[0].mxu0 %v3279
      %v3363 = vpop.f32.mrb[0].mxu0
      %v3364 = vadd.f32 0.0, %v3363
      %v3365 = vpop.f32.mrb[0].mxu0
      %v3366 = vadd.f32 0.0, %v3365
      %3367 = vdwg.mxu0
      %3368 = vmatprep.subr.mxu0 %v3287
      %3369 = vmatpush1.msra.mxu0 %v3285
      %3370 = vmatprep.subr.mxu0 0.0
      %3371 = vmatpush1.msra.mxu0 0.0
      %3372 = vmatprep.subr.mxu0 0.0
      %3373 = vmatpush1.msra.mxu0 0.0
      %3374 = vmatprep.subr.mxu0 0.0
      %3375 = vmatpush1.msra.mxu0 0.0
      %3376 = vmatprep.subr.mxu0 0.0
      %3377 = vmatpush1.msra.mxu0 0.0
      %3378 = vmatprep.subr.mxu0 0.0
      %3379 = vmatpush1.msra.mxu0 0.0
      %3380 = vmatprep.subr.mxu0 0.0
      %3381 = vmatpush1.msra.mxu0 0.0
      %3382 = vmatprep.subr.mxu0 0.0
      %3383 = vmatpush1.msra.mxu0 0.0
      %3384 = vmatprep.subr.mxu0 0.0
      %3385 = vmatpush1.msra.mxu0 0.0
      %3386 = vmatprep.subr.mxu0 0.0
      %3387 = vmatpush1.msra.mxu0 0.0
      %3388 = vmatprep.subr.mxu0 0.0
      %3389 = vmatpush1.msra.mxu0 0.0
      %3390 = vmatprep.subr.mxu0 0.0
      %3391 = vmatpush1.msra.mxu0 0.0
      %3392 = vmatprep.subr.mxu0 0.0
      %3393 = vmatpush1.msra.mxu0 0.0
      %3394 = vmatprep.subr.mxu0 0.0
      %3395 = vmatpush1.msra.mxu0 0.0
      %3396 = vmatprep.subr.mxu0 0.0
      %3397 = vmatpush1.msra.mxu0 0.0
      %3398 = vmatprep.subr.mxu0 0.0
      %3399 = vmatpush1.msra.mxu0 0.0
      %3400 = vmatprep.subr.mxu0 0.0
      %3401 = vmatpush1.msra.mxu0 0.0
      %3402 = vmatprep.subr.mxu0 0.0
      %3403 = vmatpush1.msra.mxu0 0.0
      %3404 = vmatprep.subr.mxu0 0.0
      %3405 = vmatpush1.msra.mxu0 0.0
      %3406 = vmatprep.subr.mxu0 0.0
      %3407 = vmatpush1.msra.mxu0 0.0
      %3408 = vmatprep.subr.mxu0 0.0
      %3409 = vmatpush1.msra.mxu0 0.0
      %3410 = vmatprep.subr.mxu0 0.0
      %3411 = vmatpush1.msra.mxu0 0.0
      %3412 = vmatprep.subr.mxu0 0.0
      %3413 = vmatpush1.msra.mxu0 0.0
      %3414 = vmatprep.subr.mxu0 0.0
      %3415 = vmatpush1.msra.mxu0 0.0
      %3416 = vmatprep.subr.mxu0 0.0
      %3417 = vmatpush1.msra.mxu0 0.0
      %3418 = vmatprep.subr.mxu0 0.0
      %3419 = vmatpush1.msra.mxu0 0.0
      %3420 = vmatprep.subr.mxu0 0.0
      %3421 = vmatpush1.msra.mxu0 0.0
      %3422 = vmatprep.subr.mxu0 0.0
      %3423 = vmatpush1.msra.mxu0 0.0
      %3424 = vmatprep.subr.mxu0 0.0
      %3425 = vmatpush1.msra.mxu0 0.0
      %3426 = vmatprep.subr.mxu0 0.0
      %3427 = vmatpush1.msra.mxu0 0.0
      %3428 = vmatprep.subr.mxu0 0.0
      %3429 = vmatpush1.msra.mxu0 0.0
      %3430 = vmatprep.subr.mxu0 0.0
      %3431 = vmatpush1.msra.mxu0 0.0
      %3432 = vmatprep.mubr.f32.mxu0 0.0
      %3433 = vmatmul.mubr.f32.gmra.mrb[0].mxu0 %v3279
      %v3434 = vpop.f32.mrb[0].mxu0
      %v3435 = vadd.f32 0.0, %v3434
      %v3436 = vpop.f32.mrb[0].mxu0
      %v3437 = vadd.f32 0.0, %v3436
      %3438 = vdwg.mxu0
      %3439 = vmatprep.subr.mxu0 %v3291
      %3440 = vmatpush1.msra.mxu0 %v3289
      %3441 = vmatprep.subr.mxu0 0.0
      %3442 = vmatpush1.msra.mxu0 0.0
      %3443 = vmatprep.subr.mxu0 0.0
      %3444 = vmatpush1.msra.mxu0 0.0
      %3445 = vmatprep.subr.mxu0 0.0
      %3446 = vmatpush1.msra.mxu0 0.0
      %3447 = vmatprep.subr.mxu0 0.0
      %3448 = vmatpush1.msra.mxu0 0.0
      %3449 = vmatprep.subr.mxu0 0.0
      %3450 = vmatpush1.msra.mxu0 0.0
      %3451 = vmatprep.subr.mxu0 0.0
      %3452 = vmatpush1.msra.mxu0 0.0
      %3453 = vmatprep.subr.mxu0 0.0
      %3454 = vmatpush1.msra.mxu0 0.0
      %3455 = vmatprep.subr.mxu0 0.0
      %3456 = vmatpush1.msra.mxu0 0.0
      %3457 = vmatprep.subr.mxu0 0.0
      %3458 = vmatpush1.msra.mxu0 0.0
      %3459 = vmatprep.subr.mxu0 0.0
      %3460 = vmatpush1.msra.mxu0 0.0
      %3461 = vmatprep.subr.mxu0 0.0
      %3462 = vmatpush1.msra.mxu0 0.0
      %3463 = vmatprep.subr.mxu0 0.0
      %3464 = vmatpush1.msra.mxu0 0.0
      %3465 = vmatprep.subr.mxu0 0.0
      %3466 = vmatpush1.msra.mxu0 0.0
      %3467 = vmatprep.subr.mxu0 0.0
      %3468 = vmatpush1.msra.mxu0 0.0
      %3469 = vmatprep.subr.mxu0 0.0
      %3470 = vmatpush1.msra.mxu0 0.0
      %3471 = vmatprep.subr.mxu0 0.0
      %3472 = vmatpush1.msra.mxu0 0.0
      %3473 = vmatprep.subr.mxu0 0.0
      %3474 = vmatpush1.msra.mxu0 0.0
      %3475 = vmatprep.subr.mxu0 0.0
      %3476 = vmatpush1.msra.mxu0 0.0
      %3477 = vmatprep.subr.mxu0 0.0
      %3478 = vmatpush1.msra.mxu0 0.0
      %3479 = vmatprep.subr.mxu0 0.0
      %3480 = vmatpush1.msra.mxu0 0.0
      %3481 = vmatprep.subr.mxu0 0.0
      %3482 = vmatpush1.msra.mxu0 0.0
      %3483 = vmatprep.subr.mxu0 0.0
      %3484 = vmatpush1.msra.mxu0 0.0
      %3485 = vmatprep.subr.mxu0 0.0
      %3486 = vmatpush1.msra.mxu0 0.0
      %3487 = vmatprep.subr.mxu0 0.0
      %3488 = vmatpush1.msra.mxu0 0.0
      %3489 = vmatprep.subr.mxu0 0.0
      %3490 = vmatpush1.msra.mxu0 0.0
      %3491 = vmatprep.subr.mxu0 0.0
      %3492 = vmatpush1.msra.mxu0 0.0
      %3493 = vmatprep.subr.mxu0 0.0
      %3494 = vmatpush1.msra.mxu0 0.0
      %3495 = vmatprep.subr.mxu0 0.0
      %3496 = vmatpush1.msra.mxu0 0.0
      %3497 = vmatprep.subr.mxu0 0.0
      %3498 = vmatpush1.msra.mxu0 0.0
      %3499 = vmatprep.subr.mxu0 0.0
      %3500 = vmatpush1.msra.mxu0 0.0
      %3501 = vmatprep.subr.mxu0 0.0
      %3502 = vmatpush1.msra.mxu0 0.0
      %3503 = vmatprep.mubr.f32.mxu0 0.0
      %3504 = vmatmul.mubr.f32.gmra.mrb[0].mxu0 %v3279
      %v3505 = vpop.f32.mrb[0].mxu0
      %v3506 = vadd.f32 0.0, %v3505
      %v3507 = vpop.f32.mrb[0].mxu0
      %v3508 = vadd.f32 0.0, %v3507
      %3509 = vdwg.mxu0
      %3510 = vmatprep.subr.mxu0 %v3295
      %3511 = vmatpush1.msra.mxu0 %v3293
      %3512 = vmatprep.subr.mxu0 0.0
      %3513 = vmatpush1.msra.mxu0 0.0
      %3514 = vmatprep.subr.mxu0 0.0
      %3515 = vmatpush1.msra.mxu0 0.0
      %3516 = vmatprep.subr.mxu0 0.0
      %3517 = vmatpush1.msra.mxu0 0.0
      %3518 = vmatprep.subr.mxu0 0.0
      %3519 = vmatpush1.msra.mxu0 0.0
      %3520 = vmatprep.subr.mxu0 0.0
      %3521 = vmatpush1.msra.mxu0 0.0
      %3522 = vmatprep.subr.mxu0 0.0
      %3523 = vmatpush1.msra.mxu0 0.0
      %3524 = vmatprep.subr.mxu0 0.0
      %3525 = vmatpush1.msra.mxu0 0.0
      %3526 = vmatprep.subr.mxu0 0.0
      %3527 = vmatpush1.msra.mxu0 0.0
      %3528 = vmatprep.subr.mxu0 0.0
      %3529 = vmatpush1.msra.mxu0 0.0
      %3530 = vmatprep.subr.mxu0 0.0
      %3531 = vmatpush1.msra.mxu0 0.0
      %3532 = vmatprep.subr.mxu0 0.0
      %3533 = vmatpush1.msra.mxu0 0.0
      %3534 = vmatprep.subr.mxu0 0.0
      %3535 = vmatpush1.msra.mxu0 0.0
      %3536 = vmatprep.subr.mxu0 0.0
      %3537 = vmatpush1.msra.mxu0 0.0
      %3538 = vmatprep.subr.mxu0 0.0
      %3539 = vmatpush1.msra.mxu0 0.0
      %3540 = vmatprep.subr.mxu0 0.0
      %3541 = vmatpush1.msra.mxu0 0.0
      %3542 = vmatprep.subr.mxu0 0.0
      %3543 = vmatpush1.msra.mxu0 0.0
      %3544 = vmatprep.subr.mxu0 0.0
      %3545 = vmatpush1.msra.mxu0 0.0
      %3546 = vmatprep.subr.mxu0 0.0
      %3547 = vmatpush1.msra.mxu0 0.0
      %3548 = vmatprep.subr.mxu0 0.0
      %3549 = vmatpush1.msra.mxu0 0.0
      %3550 = vmatprep.subr.mxu0 0.0
      %3551 = vmatpush1.msra.mxu0 0.0
      %3552 = vmatprep.subr.mxu0 0.0
      %3553 = vmatpush1.msra.mxu0 0.0
      %3554 = vmatprep.subr.mxu0 0.0
      %3555 = vmatpush1.msra.mxu0 0.0
      %3556 = vmatprep.subr.mxu0 0.0
      %3557 = vmatpush1.msra.mxu0 0.0
      %3558 = vmatprep.subr.mxu0 0.0
      %3559 = vmatpush1.msra.mxu0 0.0
      %3560 = vmatprep.subr.mxu0 0.0
      %3561 = vmatpush1.msra.mxu0 0.0
      %3562 = vmatprep.subr.mxu0 0.0
      %3563 = vmatpush1.msra.mxu0 0.0
      %3564 = vmatprep.subr.mxu0 0.0
      %3565 = vmatpush1.msra.mxu0 0.0
      %3566 = vmatprep.subr.mxu0 0.0
      %3567 = vmatpush1.msra.mxu0 0.0
      %3568 = vmatprep.subr.mxu0 0.0
      %3569 = vmatpush1.msra.mxu0 0.0
      %3570 = vmatprep.subr.mxu0 0.0
      %3571 = vmatpush1.msra.mxu0 0.0
      %3572 = vmatprep.subr.mxu0 0.0
      %3573 = vmatpush1.msra.mxu0 0.0
      %3574 = vmatprep.mubr.f32.mxu0 0.0
      %3575 = vmatmul.mubr.f32.gmra.mrb[0].mxu0 %v3279
      %v3576 = vpop.f32.mrb[0].mxu0
      %v3577 = vadd.f32 0.0, %v3576
      %v3578 = vpop.f32.mrb[0].mxu0
      %v3579 = vadd.f32 0.0, %v3578
      %3580 = vdwg.mxu0
      %v3581 = vadd.f32 %v3229, %v3364
      %v3582 = vadd.f32 %v3230, %v3366
      %v3583 = vadd.f32 %v3231, %v3435
      %v3584 = vadd.f32 %v3232, %v3437
      %v3585 = vadd.f32 %v3233, %v3506
      %v3586 = vadd.f32 %v3234, %v3508
      %v3587 = vadd.f32 %v3235, %v3577
      %v3588 = vadd.f32 %v3236, %v3579
      %v3589 = vmax.f32 %v3581, 0.0
      %v3590 = vmax.f32 %v3582, 0.0
      %v3591 = vmax.f32 %v3583, 0.0
      %v3592 = vmax.f32 %v3584, 0.0
      %v3593 = vmax.f32 %v3585, 0.0
      %v3594 = vmax.f32 %v3586, 0.0
      %v3595 = vmax.f32 %v3587, 0.0
      %v3596 = vmax.f32 %v3588, 0.0
      %3597 = vst [vmem:[#allocation3] sm:$0xff] 0.0
      %3598 = vst [vmem:[#allocation3 + $0x8] sm:$0xff] 0.0
      %3599 = vst [vmem:[#allocation3 + $0x10] sm:$0xf] 0.0
      %v3608 = vcombine.low %v3589, %v3590
      %v3609 = vcombine.low %v3591, %v3592
      %v3611 = vunpack.c.l.s4 1983009808
      %v3612 = vunpack.c.0.s8 %v3611
      %v3613 = vlaneseq
      %v3614 = vshrl.u32 %v3613, 7
      %v3615 = vsub.s32 %v3612, %v3614
      %v3616 = vrot.slane %v3608, %v3615
      %v3618 = vunpack.c.l.s4 1983009808
      %v3619 = vunpack.c.0.s8 %v3618
      %v3620 = vlaneseq
      %v3621 = vshrl.u32 %v3620, 7
      %v3622 = vsub.s32 %v3619, %v3621
      %v3623 = vrot.slane %v3609, %v3622
      %v3624 = vcombine.low %v3616, %v3623
      %v3625 = vcombine.low %v3593, %v3594
      %v3626 = vcombine.low %v3595, %v3596
      %v3628 = vunpack.c.l.s4 1983009808
      %v3629 = vunpack.c.0.s8 %v3628
      %v3630 = vlaneseq
      %v3631 = vshrl.u32 %v3630, 7
      %v3632 = vsub.s32 %v3629, %v3631
      %v3633 = vrot.slane %v3625, %v3632
      %v3635 = vunpack.c.l.s4 1983009808
      %v3636 = vunpack.c.0.s8 %v3635
      %v3637 = vlaneseq
      %v3638 = vshrl.u32 %v3637, 7
      %v3639 = vsub.s32 %v3636, %v3638
      %v3640 = vrot.slane %v3626, %v3639
      %v3641 = vcombine.low %v3633, %v3640
      %3644 = vst [vmem:[#allocation3 + $0x2] sm:$0xff] %v3624
      %3645 = vst [vmem:[#allocation3 + $0xa] sm:$0xff] %v3641
      %v3646 = vld [vmem:[#allocation3] sm:$0xff]
      %v3647 = vld [vmem:[#allocation3 + $0x8] sm:$0xff]
      %v3648 = vld [vmem:[#allocation3 + $0x10] sm:$0xf]
      %v3650 = vunpack.c.l.s4 1983009808
      %v3651 = vunpack.c.0.s8 %v3650
      %v3652 = vlaneseq
      %v3653 = vshrl.u32 %v3652, 7
      %v3654 = vsub.s32 %v3651, %v3653
      %v3655 = vrot.slane %v359, %v3654
      %v3657 = vunpack.c.l.s4 1983009808
      %v3658 = vunpack.c.0.s8 %v3657
      %v3659 = vlaneseq
      %v3660 = vshrl.u32 %v3659, 7
      %v3661 = vsub.s32 %v3658, %v3660
      %v3662 = vrot.slane %v360, %v3661
      %v3663 = vcombine.low %v3655, %v3662
      %v3665 = vunpack.c.l.s4 1983009808
      %v3666 = vunpack.c.0.s8 %v3665
      %v3667 = vlaneseq
      %v3668 = vshrl.u32 %v3667, 7
      %v3669 = vsub.s32 %v3666, %v3668
      %v3670 = vrot.slane %v361, %v3669
      %v3672 = vunpack.c.l.s4 1983009808
      %v3673 = vunpack.c.0.s8 %v3672
      %v3674 = vlaneseq
      %v3675 = vshrl.u32 %v3674, 7
      %v3676 = vsub.s32 %v3673, %v3675
      %v3677 = vrot.slane %v362, %v3676
      %v3678 = vcombine.low %v3670, %v3677
      %3679 = vrot.lane.b32.xlu0 %v3663, 95
      %v3680 = vpop.permute.xlu0 %3679
      %3681 = vrot.lane.b32.xlu0 %v3678, 95
      %v3682 = vpop.permute.xlu0 %3681
      %v3683 = vrot.slane %v3680, 6
      %v3684 = vrot.slane %v3682, 6
      %v3685 = vsel %vm375, %v3683, %v3680
      %vm3686 = vcmask 1041408
      %v3687 = vsel %vm3686, %v3683, %v3684
      %v3688 = vsel %vm375, %v3687, %v3682
      %v3692 = vmul.f32 %v3646, %v3685
      %v3693 = vmul.f32 %v3647, %v3688
      %v3694 = vmul.f32 %v3648, %v3684
      %v3695 = vld [vmem:[%s1] sm:$0x3]
      %s3696 = scalar_lea.vmem %s1, 2
      %v3697 = vld [vmem:[%s3696] sm:$0x3]
      %v3701 = vcombine.high %v3646, %v3646
      %v3703 = vunpack.c.l.s4 1983009808
      %v3704 = vunpack.c.0.s8 %v3703
      %v3705 = vlaneseq
      %v3706 = vshrl.u32 %v3705, 7
      %v3707 = vsub.s32 %v3704, %v3706
      %v3708 = vrot.slane %v3646, %v3707
      %v3710 = vunpack.c.l.s4 1983009808
      %v3711 = vunpack.c.0.s8 %v3710
      %v3712 = vlaneseq
      %v3713 = vshrl.u32 %v3712, 7
      %v3714 = vsub.s32 %v3711, %v3713
      %v3715 = vrot.slane %v3701, %v3714
      %v3716 = vcombine.high %v3708, %v3708
      %v3717 = vcombine.high %v3715, %v3715
      %v3718 = vcombine.high %v3647, %v3647
      %v3720 = vunpack.c.l.s4 1983009808
      %v3721 = vunpack.c.0.s8 %v3720
      %v3722 = vlaneseq
      %v3723 = vshrl.u32 %v3722, 7
      %v3724 = vsub.s32 %v3721, %v3723
      %v3725 = vrot.slane %v3647, %v3724
      %v3727 = vunpack.c.l.s4 1983009808
      %v3728 = vunpack.c.0.s8 %v3727
      %v3729 = vlaneseq
      %v3730 = vshrl.u32 %v3729, 7
      %v3731 = vsub.s32 %v3728, %v3730
      %v3732 = vrot.slane %v3718, %v3731
      %v3733 = vcombine.high %v3725, %v3725
      %v3734 = vcombine.high %v3732, %v3732
      %v3736 = vunpack.c.l.s4 1983009808
      %v3737 = vunpack.c.0.s8 %v3736
      %v3738 = vlaneseq
      %v3739 = vshrl.u32 %v3738, 7
      %v3740 = vsub.s32 %v3737, %v3739
      %v3741 = vrot.slane %v3648, %v3740
      %3742 = vrot.lane.b32.xlu0 %v3708, 32
      %v3743 = vpop.permute.xlu0 %3742
      %3744 = vrot.lane.b32.xlu0 %v3716, 32
      %v3745 = vpop.permute.xlu0 %3744
      %3746 = vrot.lane.b32.xlu0 %v3715, 32
      %v3747 = vpop.permute.xlu0 %3746
      %3748 = vrot.lane.b32.xlu0 %v3717, 32
      %v3749 = vpop.permute.xlu0 %3748
      %3750 = vrot.lane.b32.xlu0 %v3725, 32
      %v3751 = vpop.permute.xlu0 %3750
      %3752 = vrot.lane.b32.xlu0 %v3733, 32
      %v3753 = vpop.permute.xlu0 %3752
      %3754 = vrot.lane.b32.xlu0 %v3732, 32
      %v3755 = vpop.permute.xlu0 %3754
      %3756 = vrot.lane.b32.xlu0 %v3734, 32
      %v3757 = vpop.permute.xlu0 %3756
      %3758 = vrot.lane.b32.xlu0 %v3741, 32
      %v3759 = vpop.permute.xlu0 %3758
      %v3760 = vsel %vm424, %v3743, %v3745
      %v3761 = vsel %vm424, %v3745, %v3747
      %v3762 = vsel %vm424, %v3747, %v3749
      %v3763 = vsel %vm424, %v3749, %v3751
      %v3764 = vsel %vm424, %v3751, %v3753
      %v3765 = vsel %vm424, %v3753, %v3755
      %v3766 = vsel %vm424, %v3755, %v3757
      %v3767 = vsel %vm424, %v3757, %v3759
      %vm3768 = vcmask 15360
      %v3770 = vsel %vm3768, %v3697, 0
      %v3772 = vsel %vm3686, %v3760, 0
      %v3774 = vsel %vm3686, %v3761, 0
      %v3776 = vsel %vm3686, %v3762, 0
      %v3778 = vsel %vm3686, %v3763, 0
      %v3780 = vsel %vm3686, %v3764, 0
      %v3782 = vsel %vm3686, %v3765, 0
      %v3784 = vsel %vm3686, %v3766, 0
      %v3786 = vsel %vm3686, %v3767, 0
      %3788 = vmatprep.subr.mxu0 %v3774
      %3789 = vmatpush1.msra.mxu0 %v3772
      %3790 = vmatprep.subr.mxu0 0.0
      %3791 = vmatpush1.msra.mxu0 0.0
      %3792 = vmatprep.subr.mxu0 0.0
      %3793 = vmatpush1.msra.mxu0 0.0
      %3794 = vmatprep.subr.mxu0 0.0
      %3795 = vmatpush1.msra.mxu0 0.0
      %3796 = vmatprep.subr.mxu0 0.0
      %3797 = vmatpush1.msra.mxu0 0.0
      %3798 = vmatprep.subr.mxu0 0.0
      %3799 = vmatpush1.msra.mxu0 0.0
      %3800 = vmatprep.subr.mxu0 0.0
      %3801 = vmatpush1.msra.mxu0 0.0
      %3802 = vmatprep.subr.mxu0 0.0
      %3803 = vmatpush1.msra.mxu0 0.0
      %3804 = vmatprep.subr.mxu0 0.0
      %3805 = vmatpush1.msra.mxu0 0.0
      %3806 = vmatprep.subr.mxu0 0.0
      %3807 = vmatpush1.msra.mxu0 0.0
      %3808 = vmatprep.subr.mxu0 0.0
      %3809 = vmatpush1.msra.mxu0 0.0
      %3810 = vmatprep.subr.mxu0 0.0
      %3811 = vmatpush1.msra.mxu0 0.0
      %3812 = vmatprep.subr.mxu0 0.0
      %3813 = vmatpush1.msra.mxu0 0.0
      %3814 = vmatprep.subr.mxu0 0.0
      %3815 = vmatpush1.msra.mxu0 0.0
      %3816 = vmatprep.subr.mxu0 0.0
      %3817 = vmatpush1.msra.mxu0 0.0
      %3818 = vmatprep.subr.mxu0 0.0
      %3819 = vmatpush1.msra.mxu0 0.0
      %3820 = vmatprep.subr.mxu0 0.0
      %3821 = vmatpush1.msra.mxu0 0.0
      %3822 = vmatprep.subr.mxu0 0.0
      %3823 = vmatpush1.msra.mxu0 0.0
      %3824 = vmatprep.subr.mxu0 0.0
      %3825 = vmatpush1.msra.mxu0 0.0
      %3826 = vmatprep.subr.mxu0 0.0
      %3827 = vmatpush1.msra.mxu0 0.0
      %3828 = vmatprep.subr.mxu0 0.0
      %3829 = vmatpush1.msra.mxu0 0.0
      %3830 = vmatprep.subr.mxu0 0.0
      %3831 = vmatpush1.msra.mxu0 0.0
      %3832 = vmatprep.subr.mxu0 0.0
      %3833 = vmatpush1.msra.mxu0 0.0
      %3834 = vmatprep.subr.mxu0 0.0
      %3835 = vmatpush1.msra.mxu0 0.0
      %3836 = vmatprep.subr.mxu0 0.0
      %3837 = vmatpush1.msra.mxu0 0.0
      %3838 = vmatprep.subr.mxu0 0.0
      %3839 = vmatpush1.msra.mxu0 0.0
      %3840 = vmatprep.subr.mxu0 0.0
      %3841 = vmatpush1.msra.mxu0 0.0
      %3842 = vmatprep.subr.mxu0 0.0
      %3843 = vmatpush1.msra.mxu0 0.0
      %3844 = vmatprep.subr.mxu0 0.0
      %3845 = vmatpush1.msra.mxu0 0.0
      %3846 = vmatprep.subr.mxu0 0.0
      %3847 = vmatpush1.msra.mxu0 0.0
      %3848 = vmatprep.subr.mxu0 0.0
      %3849 = vmatpush1.msra.mxu0 0.0
      %3850 = vmatprep.subr.mxu0 0.0
      %3851 = vmatpush1.msra.mxu0 0.0
      %3852 = vmatprep.mubr.f32.mxu0 0.0
      %3853 = vmatmul.mubr.f32.gmra.mrb[0].mxu0 %v3770
      %v3854 = vpop.f32.mrb[0].mxu0
      %v3855 = vadd.f32 0.0, %v3854
      %v3856 = vpop.f32.mrb[0].mxu0
      %v3857 = vadd.f32 0.0, %v3856
      %3858 = vdwg.mxu0
      %3859 = vmatprep.subr.mxu0 %v3778
      %3860 = vmatpush1.msra.mxu0 %v3776
      %3861 = vmatprep.subr.mxu0 0.0
      %3862 = vmatpush1.msra.mxu0 0.0
      %3863 = vmatprep.subr.mxu0 0.0
      %3864 = vmatpush1.msra.mxu0 0.0
      %3865 = vmatprep.subr.mxu0 0.0
      %3866 = vmatpush1.msra.mxu0 0.0
      %3867 = vmatprep.subr.mxu0 0.0
      %3868 = vmatpush1.msra.mxu0 0.0
      %3869 = vmatprep.subr.mxu0 0.0
      %3870 = vmatpush1.msra.mxu0 0.0
      %3871 = vmatprep.subr.mxu0 0.0
      %3872 = vmatpush1.msra.mxu0 0.0
      %3873 = vmatprep.subr.mxu0 0.0
      %3874 = vmatpush1.msra.mxu0 0.0
      %3875 = vmatprep.subr.mxu0 0.0
      %3876 = vmatpush1.msra.mxu0 0.0
      %3877 = vmatprep.subr.mxu0 0.0
      %3878 = vmatpush1.msra.mxu0 0.0
      %3879 = vmatprep.subr.mxu0 0.0
      %3880 = vmatpush1.msra.mxu0 0.0
      %3881 = vmatprep.subr.mxu0 0.0
      %3882 = vmatpush1.msra.mxu0 0.0
      %3883 = vmatprep.subr.mxu0 0.0
      %3884 = vmatpush1.msra.mxu0 0.0
      %3885 = vmatprep.subr.mxu0 0.0
      %3886 = vmatpush1.msra.mxu0 0.0
      %3887 = vmatprep.subr.mxu0 0.0
      %3888 = vmatpush1.msra.mxu0 0.0
      %3889 = vmatprep.subr.mxu0 0.0
      %3890 = vmatpush1.msra.mxu0 0.0
      %3891 = vmatprep.subr.mxu0 0.0
      %3892 = vmatpush1.msra.mxu0 0.0
      %3893 = vmatprep.subr.mxu0 0.0
      %3894 = vmatpush1.msra.mxu0 0.0
      %3895 = vmatprep.subr.mxu0 0.0
      %3896 = vmatpush1.msra.mxu0 0.0
      %3897 = vmatprep.subr.mxu0 0.0
      %3898 = vmatpush1.msra.mxu0 0.0
      %3899 = vmatprep.subr.mxu0 0.0
      %3900 = vmatpush1.msra.mxu0 0.0
      %3901 = vmatprep.subr.mxu0 0.0
      %3902 = vmatpush1.msra.mxu0 0.0
      %3903 = vmatprep.subr.mxu0 0.0
      %3904 = vmatpush1.msra.mxu0 0.0
      %3905 = vmatprep.subr.mxu0 0.0
      %3906 = vmatpush1.msra.mxu0 0.0
      %3907 = vmatprep.subr.mxu0 0.0
      %3908 = vmatpush1.msra.mxu0 0.0
      %3909 = vmatprep.subr.mxu0 0.0
      %3910 = vmatpush1.msra.mxu0 0.0
      %3911 = vmatprep.subr.mxu0 0.0
      %3912 = vmatpush1.msra.mxu0 0.0
      %3913 = vmatprep.subr.mxu0 0.0
      %3914 = vmatpush1.msra.mxu0 0.0
      %3915 = vmatprep.subr.mxu0 0.0
      %3916 = vmatpush1.msra.mxu0 0.0
      %3917 = vmatprep.subr.mxu0 0.0
      %3918 = vmatpush1.msra.mxu0 0.0
      %3919 = vmatprep.subr.mxu0 0.0
      %3920 = vmatpush1.msra.mxu0 0.0
      %3921 = vmatprep.subr.mxu0 0.0
      %3922 = vmatpush1.msra.mxu0 0.0
      %3923 = vmatprep.mubr.f32.mxu0 0.0
      %3924 = vmatmul.mubr.f32.gmra.mrb[0].mxu0 %v3770
      %v3925 = vpop.f32.mrb[0].mxu0
      %v3926 = vadd.f32 0.0, %v3925
      %v3927 = vpop.f32.mrb[0].mxu0
      %v3928 = vadd.f32 0.0, %v3927
      %3929 = vdwg.mxu0
      %3930 = vmatprep.subr.mxu0 %v3782
      %3931 = vmatpush1.msra.mxu0 %v3780
      %3932 = vmatprep.subr.mxu0 0.0
      %3933 = vmatpush1.msra.mxu0 0.0
      %3934 = vmatprep.subr.mxu0 0.0
      %3935 = vmatpush1.msra.mxu0 0.0
      %3936 = vmatprep.subr.mxu0 0.0
      %3937 = vmatpush1.msra.mxu0 0.0
      %3938 = vmatprep.subr.mxu0 0.0
      %3939 = vmatpush1.msra.mxu0 0.0
      %3940 = vmatprep.subr.mxu0 0.0
      %3941 = vmatpush1.msra.mxu0 0.0
      %3942 = vmatprep.subr.mxu0 0.0
      %3943 = vmatpush1.msra.mxu0 0.0
      %3944 = vmatprep.subr.mxu0 0.0
      %3945 = vmatpush1.msra.mxu0 0.0
      %3946 = vmatprep.subr.mxu0 0.0
      %3947 = vmatpush1.msra.mxu0 0.0
      %3948 = vmatprep.subr.mxu0 0.0
      %3949 = vmatpush1.msra.mxu0 0.0
      %3950 = vmatprep.subr.mxu0 0.0
      %3951 = vmatpush1.msra.mxu0 0.0
      %3952 = vmatprep.subr.mxu0 0.0
      %3953 = vmatpush1.msra.mxu0 0.0
      %3954 = vmatprep.subr.mxu0 0.0
      %3955 = vmatpush1.msra.mxu0 0.0
      %3956 = vmatprep.subr.mxu0 0.0
      %3957 = vmatpush1.msra.mxu0 0.0
      %3958 = vmatprep.subr.mxu0 0.0
      %3959 = vmatpush1.msra.mxu0 0.0
      %3960 = vmatprep.subr.mxu0 0.0
      %3961 = vmatpush1.msra.mxu0 0.0
      %3962 = vmatprep.subr.mxu0 0.0
      %3963 = vmatpush1.msra.mxu0 0.0
      %3964 = vmatprep.subr.mxu0 0.0
      %3965 = vmatpush1.msra.mxu0 0.0
      %3966 = vmatprep.subr.mxu0 0.0
      %3967 = vmatpush1.msra.mxu0 0.0
      %3968 = vmatprep.subr.mxu0 0.0
      %3969 = vmatpush1.msra.mxu0 0.0
      %3970 = vmatprep.subr.mxu0 0.0
      %3971 = vmatpush1.msra.mxu0 0.0
      %3972 = vmatprep.subr.mxu0 0.0
      %3973 = vmatpush1.msra.mxu0 0.0
      %3974 = vmatprep.subr.mxu0 0.0
      %3975 = vmatpush1.msra.mxu0 0.0
      %3976 = vmatprep.subr.mxu0 0.0
      %3977 = vmatpush1.msra.mxu0 0.0
      %3978 = vmatprep.subr.mxu0 0.0
      %3979 = vmatpush1.msra.mxu0 0.0
      %3980 = vmatprep.subr.mxu0 0.0
      %3981 = vmatpush1.msra.mxu0 0.0
      %3982 = vmatprep.subr.mxu0 0.0
      %3983 = vmatpush1.msra.mxu0 0.0
      %3984 = vmatprep.subr.mxu0 0.0
      %3985 = vmatpush1.msra.mxu0 0.0
      %3986 = vmatprep.subr.mxu0 0.0
      %3987 = vmatpush1.msra.mxu0 0.0
      %3988 = vmatprep.subr.mxu0 0.0
      %3989 = vmatpush1.msra.mxu0 0.0
      %3990 = vmatprep.subr.mxu0 0.0
      %3991 = vmatpush1.msra.mxu0 0.0
      %3992 = vmatprep.subr.mxu0 0.0
      %3993 = vmatpush1.msra.mxu0 0.0
      %3994 = vmatprep.mubr.f32.mxu0 0.0
      %3995 = vmatmul.mubr.f32.gmra.mrb[0].mxu0 %v3770
      %v3996 = vpop.f32.mrb[0].mxu0
      %v3997 = vadd.f32 0.0, %v3996
      %v3998 = vpop.f32.mrb[0].mxu0
      %v3999 = vadd.f32 0.0, %v3998
      %4000 = vdwg.mxu0
      %4001 = vmatprep.subr.mxu0 %v3786
      %4002 = vmatpush1.msra.mxu0 %v3784
      %4003 = vmatprep.subr.mxu0 0.0
      %4004 = vmatpush1.msra.mxu0 0.0
      %4005 = vmatprep.subr.mxu0 0.0
      %4006 = vmatpush1.msra.mxu0 0.0
      %4007 = vmatprep.subr.mxu0 0.0
      %4008 = vmatpush1.msra.mxu0 0.0
      %4009 = vmatprep.subr.mxu0 0.0
      %4010 = vmatpush1.msra.mxu0 0.0
      %4011 = vmatprep.subr.mxu0 0.0
      %4012 = vmatpush1.msra.mxu0 0.0
      %4013 = vmatprep.subr.mxu0 0.0
      %4014 = vmatpush1.msra.mxu0 0.0
      %4015 = vmatprep.subr.mxu0 0.0
      %4016 = vmatpush1.msra.mxu0 0.0
      %4017 = vmatprep.subr.mxu0 0.0
      %4018 = vmatpush1.msra.mxu0 0.0
      %4019 = vmatprep.subr.mxu0 0.0
      %4020 = vmatpush1.msra.mxu0 0.0
      %4021 = vmatprep.subr.mxu0 0.0
      %4022 = vmatpush1.msra.mxu0 0.0
      %4023 = vmatprep.subr.mxu0 0.0
      %4024 = vmatpush1.msra.mxu0 0.0
      %4025 = vmatprep.subr.mxu0 0.0
      %4026 = vmatpush1.msra.mxu0 0.0
      %4027 = vmatprep.subr.mxu0 0.0
      %4028 = vmatpush1.msra.mxu0 0.0
      %4029 = vmatprep.subr.mxu0 0.0
      %4030 = vmatpush1.msra.mxu0 0.0
      %4031 = vmatprep.subr.mxu0 0.0
      %4032 = vmatpush1.msra.mxu0 0.0
      %4033 = vmatprep.subr.mxu0 0.0
      %4034 = vmatpush1.msra.mxu0 0.0
      %4035 = vmatprep.subr.mxu0 0.0
      %4036 = vmatpush1.msra.mxu0 0.0
      %4037 = vmatprep.subr.mxu0 0.0
      %4038 = vmatpush1.msra.mxu0 0.0
      %4039 = vmatprep.subr.mxu0 0.0
      %4040 = vmatpush1.msra.mxu0 0.0
      %4041 = vmatprep.subr.mxu0 0.0
      %4042 = vmatpush1.msra.mxu0 0.0
      %4043 = vmatprep.subr.mxu0 0.0
      %4044 = vmatpush1.msra.mxu0 0.0
      %4045 = vmatprep.subr.mxu0 0.0
      %4046 = vmatpush1.msra.mxu0 0.0
      %4047 = vmatprep.subr.mxu0 0.0
      %4048 = vmatpush1.msra.mxu0 0.0
      %4049 = vmatprep.subr.mxu0 0.0
      %4050 = vmatpush1.msra.mxu0 0.0
      %4051 = vmatprep.subr.mxu0 0.0
      %4052 = vmatpush1.msra.mxu0 0.0
      %4053 = vmatprep.subr.mxu0 0.0
      %4054 = vmatpush1.msra.mxu0 0.0
      %4055 = vmatprep.subr.mxu0 0.0
      %4056 = vmatpush1.msra.mxu0 0.0
      %4057 = vmatprep.subr.mxu0 0.0
      %4058 = vmatpush1.msra.mxu0 0.0
      %4059 = vmatprep.subr.mxu0 0.0
      %4060 = vmatpush1.msra.mxu0 0.0
      %4061 = vmatprep.subr.mxu0 0.0
      %4062 = vmatpush1.msra.mxu0 0.0
      %4063 = vmatprep.subr.mxu0 0.0
      %4064 = vmatpush1.msra.mxu0 0.0
      %4065 = vmatprep.mubr.f32.mxu0 0.0
      %4066 = vmatmul.mubr.f32.gmra.mrb[0].mxu0 %v3770
      %v4067 = vpop.f32.mrb[0].mxu0
      %v4068 = vadd.f32 0.0, %v4067
      %v4069 = vpop.f32.mrb[0].mxu0
      %v4070 = vadd.f32 0.0, %v4069
      %4071 = vdwg.mxu0
      %v4075 = vcombine.high %v3692, %v3692
      %v4077 = vunpack.c.l.s4 1983009808
      %v4078 = vunpack.c.0.s8 %v4077
      %v4079 = vlaneseq
      %v4080 = vshrl.u32 %v4079, 7
      %v4081 = vsub.s32 %v4078, %v4080
      %v4082 = vrot.slane %v3692, %v4081
      %v4084 = vunpack.c.l.s4 1983009808
      %v4085 = vunpack.c.0.s8 %v4084
      %v4086 = vlaneseq
      %v4087 = vshrl.u32 %v4086, 7
      %v4088 = vsub.s32 %v4085, %v4087
      %v4089 = vrot.slane %v4075, %v4088
      %v4090 = vcombine.high %v4082, %v4082
      %v4091 = vcombine.high %v4089, %v4089
      %v4092 = vcombine.high %v3693, %v3693
      %v4094 = vunpack.c.l.s4 1983009808
      %v4095 = vunpack.c.0.s8 %v4094
      %v4096 = vlaneseq
      %v4097 = vshrl.u32 %v4096, 7
      %v4098 = vsub.s32 %v4095, %v4097
      %v4099 = vrot.slane %v3693, %v4098
      %v4101 = vunpack.c.l.s4 1983009808
      %v4102 = vunpack.c.0.s8 %v4101
      %v4103 = vlaneseq
      %v4104 = vshrl.u32 %v4103, 7
      %v4105 = vsub.s32 %v4102, %v4104
      %v4106 = vrot.slane %v4092, %v4105
      %v4107 = vcombine.high %v4099, %v4099
      %v4108 = vcombine.high %v4106, %v4106
      %v4110 = vunpack.c.l.s4 1983009808
      %v4111 = vunpack.c.0.s8 %v4110
      %v4112 = vlaneseq
      %v4113 = vshrl.u32 %v4112, 7
      %v4114 = vsub.s32 %v4111, %v4113
      %v4115 = vrot.slane %v3694, %v4114
      %4116 = vrot.lane.b32.xlu0 %v4082, 33
      %v4117 = vpop.permute.xlu0 %4116
      %4118 = vrot.lane.b32.xlu0 %v4090, 33
      %v4119 = vpop.permute.xlu0 %4118
      %4120 = vrot.lane.b32.xlu0 %v4089, 33
      %v4121 = vpop.permute.xlu0 %4120
      %4122 = vrot.lane.b32.xlu0 %v4091, 33
      %v4123 = vpop.permute.xlu0 %4122
      %4124 = vrot.lane.b32.xlu0 %v4099, 33
      %v4125 = vpop.permute.xlu0 %4124
      %4126 = vrot.lane.b32.xlu0 %v4107, 33
      %v4127 = vpop.permute.xlu0 %4126
      %4128 = vrot.lane.b32.xlu0 %v4106, 33
      %v4129 = vpop.permute.xlu0 %4128
      %4130 = vrot.lane.b32.xlu0 %v4108, 33
      %v4131 = vpop.permute.xlu0 %4130
      %4132 = vrot.lane.b32.xlu0 %v4115, 33
      %v4133 = vpop.permute.xlu0 %4132
      %v4134 = vsel %vm764, %v4117, %v4119
      %v4135 = vsel %vm764, %v4119, %v4121
      %v4136 = vsel %vm764, %v4121, %v4123
      %v4137 = vsel %vm764, %v4123, %v4125
      %v4138 = vsel %vm764, %v4125, %v4127
      %v4139 = vsel %vm764, %v4127, %v4129
      %v4140 = vsel %vm764, %v4129, %v4131
      %v4141 = vsel %vm764, %v4131, %v4133
      %v4143 = vsel %vm3768, %v3695, 0
      %v4145 = vsel %vm3686, %v4134, 0
      %v4147 = vsel %vm3686, %v4135, 0
      %v4149 = vsel %vm3686, %v4136, 0
      %v4151 = vsel %vm3686, %v4137, 0
      %v4153 = vsel %vm3686, %v4138, 0
      %v4155 = vsel %vm3686, %v4139, 0
      %v4157 = vsel %vm3686, %v4140, 0
      %v4159 = vsel %vm3686, %v4141, 0
      %4161 = vmatprep.subr.mxu0 %v4147
      %4162 = vmatpush1.msra.mxu0 %v4145
      %4163 = vmatprep.subr.mxu0 0.0
      %4164 = vmatpush1.msra.mxu0 0.0
      %4165 = vmatprep.subr.mxu0 0.0
      %4166 = vmatpush1.msra.mxu0 0.0
      %4167 = vmatprep.subr.mxu0 0.0
      %4168 = vmatpush1.msra.mxu0 0.0
      %4169 = vmatprep.subr.mxu0 0.0
      %4170 = vmatpush1.msra.mxu0 0.0
      %4171 = vmatprep.subr.mxu0 0.0
      %4172 = vmatpush1.msra.mxu0 0.0
      %4173 = vmatprep.subr.mxu0 0.0
      %4174 = vmatpush1.msra.mxu0 0.0
      %4175 = vmatprep.subr.mxu0 0.0
      %4176 = vmatpush1.msra.mxu0 0.0
      %4177 = vmatprep.subr.mxu0 0.0
      %4178 = vmatpush1.msra.mxu0 0.0
      %4179 = vmatprep.subr.mxu0 0.0
      %4180 = vmatpush1.msra.mxu0 0.0
      %4181 = vmatprep.subr.mxu0 0.0
      %4182 = vmatpush1.msra.mxu0 0.0
      %4183 = vmatprep.subr.mxu0 0.0
      %4184 = vmatpush1.msra.mxu0 0.0
      %4185 = vmatprep.subr.mxu0 0.0
      %4186 = vmatpush1.msra.mxu0 0.0
      %4187 = vmatprep.subr.mxu0 0.0
      %4188 = vmatpush1.msra.mxu0 0.0
      %4189 = vmatprep.subr.mxu0 0.0
      %4190 = vmatpush1.msra.mxu0 0.0
      %4191 = vmatprep.subr.mxu0 0.0
      %4192 = vmatpush1.msra.mxu0 0.0
      %4193 = vmatprep.subr.mxu0 0.0
      %4194 = vmatpush1.msra.mxu0 0.0
      %4195 = vmatprep.subr.mxu0 0.0
      %4196 = vmatpush1.msra.mxu0 0.0
      %4197 = vmatprep.subr.mxu0 0.0
      %4198 = vmatpush1.msra.mxu0 0.0
      %4199 = vmatprep.subr.mxu0 0.0
      %4200 = vmatpush1.msra.mxu0 0.0
      %4201 = vmatprep.subr.mxu0 0.0
      %4202 = vmatpush1.msra.mxu0 0.0
      %4203 = vmatprep.subr.mxu0 0.0
      %4204 = vmatpush1.msra.mxu0 0.0
      %4205 = vmatprep.subr.mxu0 0.0
      %4206 = vmatpush1.msra.mxu0 0.0
      %4207 = vmatprep.subr.mxu0 0.0
      %4208 = vmatpush1.msra.mxu0 0.0
      %4209 = vmatprep.subr.mxu0 0.0
      %4210 = vmatpush1.msra.mxu0 0.0
      %4211 = vmatprep.subr.mxu0 0.0
      %4212 = vmatpush1.msra.mxu0 0.0
      %4213 = vmatprep.subr.mxu0 0.0
      %4214 = vmatpush1.msra.mxu0 0.0
      %4215 = vmatprep.subr.mxu0 0.0
      %4216 = vmatpush1.msra.mxu0 0.0
      %4217 = vmatprep.subr.mxu0 0.0
      %4218 = vmatpush1.msra.mxu0 0.0
      %4219 = vmatprep.subr.mxu0 0.0
      %4220 = vmatpush1.msra.mxu0 0.0
      %4221 = vmatprep.subr.mxu0 0.0
      %4222 = vmatpush1.msra.mxu0 0.0
      %4223 = vmatprep.subr.mxu0 0.0
      %4224 = vmatpush1.msra.mxu0 0.0
      %4225 = vmatprep.mubr.f32.mxu0 0.0
      %4226 = vmatmul.mubr.f32.gmra.mrb[0].mxu0 %v4143
      %v4227 = vpop.f32.mrb[0].mxu0
      %v4228 = vadd.f32 %v3855, %v4227
      %v4229 = vpop.f32.mrb[0].mxu0
      %v4230 = vadd.f32 %v3857, %v4229
      %4231 = vdwg.mxu0
      %4232 = vmatprep.subr.mxu0 %v4151
      %4233 = vmatpush1.msra.mxu0 %v4149
      %4234 = vmatprep.subr.mxu0 0.0
      %4235 = vmatpush1.msra.mxu0 0.0
      %4236 = vmatprep.subr.mxu0 0.0
      %4237 = vmatpush1.msra.mxu0 0.0
      %4238 = vmatprep.subr.mxu0 0.0
      %4239 = vmatpush1.msra.mxu0 0.0
      %4240 = vmatprep.subr.mxu0 0.0
      %4241 = vmatpush1.msra.mxu0 0.0
      %4242 = vmatprep.subr.mxu0 0.0
      %4243 = vmatpush1.msra.mxu0 0.0
      %4244 = vmatprep.subr.mxu0 0.0
      %4245 = vmatpush1.msra.mxu0 0.0
      %4246 = vmatprep.subr.mxu0 0.0
      %4247 = vmatpush1.msra.mxu0 0.0
      %4248 = vmatprep.subr.mxu0 0.0
      %4249 = vmatpush1.msra.mxu0 0.0
      %4250 = vmatprep.subr.mxu0 0.0
      %4251 = vmatpush1.msra.mxu0 0.0
      %4252 = vmatprep.subr.mxu0 0.0
      %4253 = vmatpush1.msra.mxu0 0.0
      %4254 = vmatprep.subr.mxu0 0.0
      %4255 = vmatpush1.msra.mxu0 0.0
      %4256 = vmatprep.subr.mxu0 0.0
      %4257 = vmatpush1.msra.mxu0 0.0
      %4258 = vmatprep.subr.mxu0 0.0
      %4259 = vmatpush1.msra.mxu0 0.0
      %4260 = vmatprep.subr.mxu0 0.0
      %4261 = vmatpush1.msra.mxu0 0.0
      %4262 = vmatprep.subr.mxu0 0.0
      %4263 = vmatpush1.msra.mxu0 0.0
      %4264 = vmatprep.subr.mxu0 0.0
      %4265 = vmatpush1.msra.mxu0 0.0
      %4266 = vmatprep.subr.mxu0 0.0
      %4267 = vmatpush1.msra.mxu0 0.0
      %4268 = vmatprep.subr.mxu0 0.0
      %4269 = vmatpush1.msra.mxu0 0.0
      %4270 = vmatprep.subr.mxu0 0.0
      %4271 = vmatpush1.msra.mxu0 0.0
      %4272 = vmatprep.subr.mxu0 0.0
      %4273 = vmatpush1.msra.mxu0 0.0
      %4274 = vmatprep.subr.mxu0 0.0
      %4275 = vmatpush1.msra.mxu0 0.0
      %4276 = vmatprep.subr.mxu0 0.0
      %4277 = vmatpush1.msra.mxu0 0.0
      %4278 = vmatprep.subr.mxu0 0.0
      %4279 = vmatpush1.msra.mxu0 0.0
      %4280 = vmatprep.subr.mxu0 0.0
      %4281 = vmatpush1.msra.mxu0 0.0
      %4282 = vmatprep.subr.mxu0 0.0
      %4283 = vmatpush1.msra.mxu0 0.0
      %4284 = vmatprep.subr.mxu0 0.0
      %4285 = vmatpush1.msra.mxu0 0.0
      %4286 = vmatprep.subr.mxu0 0.0
      %4287 = vmatpush1.msra.mxu0 0.0
      %4288 = vmatprep.subr.mxu0 0.0
      %4289 = vmatpush1.msra.mxu0 0.0
      %4290 = vmatprep.subr.mxu0 0.0
      %4291 = vmatpush1.msra.mxu0 0.0
      %4292 = vmatprep.subr.mxu0 0.0
      %4293 = vmatpush1.msra.mxu0 0.0
      %4294 = vmatprep.subr.mxu0 0.0
      %4295 = vmatpush1.msra.mxu0 0.0
      %4296 = vmatprep.mubr.f32.mxu0 0.0
      %4297 = vmatmul.mubr.f32.gmra.mrb[0].mxu0 %v4143
      %v4298 = vpop.f32.mrb[0].mxu0
      %v4299 = vadd.f32 %v3926, %v4298
      %v4300 = vpop.f32.mrb[0].mxu0
      %v4301 = vadd.f32 %v3928, %v4300
      %4302 = vdwg.mxu0
      %4303 = vmatprep.subr.mxu0 %v4155
      %4304 = vmatpush1.msra.mxu0 %v4153
      %4305 = vmatprep.subr.mxu0 0.0
      %4306 = vmatpush1.msra.mxu0 0.0
      %4307 = vmatprep.subr.mxu0 0.0
      %4308 = vmatpush1.msra.mxu0 0.0
      %4309 = vmatprep.subr.mxu0 0.0
      %4310 = vmatpush1.msra.mxu0 0.0
      %4311 = vmatprep.subr.mxu0 0.0
      %4312 = vmatpush1.msra.mxu0 0.0
      %4313 = vmatprep.subr.mxu0 0.0
      %4314 = vmatpush1.msra.mxu0 0.0
      %4315 = vmatprep.subr.mxu0 0.0
      %4316 = vmatpush1.msra.mxu0 0.0
      %4317 = vmatprep.subr.mxu0 0.0
      %4318 = vmatpush1.msra.mxu0 0.0
      %4319 = vmatprep.subr.mxu0 0.0
      %4320 = vmatpush1.msra.mxu0 0.0
      %4321 = vmatprep.subr.mxu0 0.0
      %4322 = vmatpush1.msra.mxu0 0.0
      %4323 = vmatprep.subr.mxu0 0.0
      %4324 = vmatpush1.msra.mxu0 0.0
      %4325 = vmatprep.subr.mxu0 0.0
      %4326 = vmatpush1.msra.mxu0 0.0
      %4327 = vmatprep.subr.mxu0 0.0
      %4328 = vmatpush1.msra.mxu0 0.0
      %4329 = vmatprep.subr.mxu0 0.0
      %4330 = vmatpush1.msra.mxu0 0.0
      %4331 = vmatprep.subr.mxu0 0.0
      %4332 = vmatpush1.msra.mxu0 0.0
      %4333 = vmatprep.subr.mxu0 0.0
      %4334 = vmatpush1.msra.mxu0 0.0
      %4335 = vmatprep.subr.mxu0 0.0
      %4336 = vmatpush1.msra.mxu0 0.0
      %4337 = vmatprep.subr.mxu0 0.0
      %4338 = vmatpush1.msra.mxu0 0.0
      %4339 = vmatprep.subr.mxu0 0.0
      %4340 = vmatpush1.msra.mxu0 0.0
      %4341 = vmatprep.subr.mxu0 0.0
      %4342 = vmatpush1.msra.mxu0 0.0
      %4343 = vmatprep.subr.mxu0 0.0
      %4344 = vmatpush1.msra.mxu0 0.0
      %4345 = vmatprep.subr.mxu0 0.0
      %4346 = vmatpush1.msra.mxu0 0.0
      %4347 = vmatprep.subr.mxu0 0.0
      %4348 = vmatpush1.msra.mxu0 0.0
      %4349 = vmatprep.subr.mxu0 0.0
      %4350 = vmatpush1.msra.mxu0 0.0
      %4351 = vmatprep.subr.mxu0 0.0
      %4352 = vmatpush1.msra.mxu0 0.0
      %4353 = vmatprep.subr.mxu0 0.0
      %4354 = vmatpush1.msra.mxu0 0.0
      %4355 = vmatprep.subr.mxu0 0.0
      %4356 = vmatpush1.msra.mxu0 0.0
      %4357 = vmatprep.subr.mxu0 0.0
      %4358 = vmatpush1.msra.mxu0 0.0
      %4359 = vmatprep.subr.mxu0 0.0
      %4360 = vmatpush1.msra.mxu0 0.0
      %4361 = vmatprep.subr.mxu0 0.0
      %4362 = vmatpush1.msra.mxu0 0.0
      %4363 = vmatprep.subr.mxu0 0.0
      %4364 = vmatpush1.msra.mxu0 0.0
      %4365 = vmatprep.subr.mxu0 0.0
      %4366 = vmatpush1.msra.mxu0 0.0
      %4367 = vmatprep.mubr.f32.mxu0 0.0
      %4368 = vmatmul.mubr.f32.gmra.mrb[0].mxu0 %v4143
      %v4369 = vpop.f32.mrb[0].mxu0
      %v4370 = vadd.f32 %v3997, %v4369
      %v4371 = vpop.f32.mrb[0].mxu0
      %v4372 = vadd.f32 %v3999, %v4371
      %4373 = vdwg.mxu0
      %4374 = vmatprep.subr.mxu0 %v4159
      %4375 = vmatpush1.msra.mxu0 %v4157
      %4376 = vmatprep.subr.mxu0 0.0
      %4377 = vmatpush1.msra.mxu0 0.0
      %4378 = vmatprep.subr.mxu0 0.0
      %4379 = vmatpush1.msra.mxu0 0.0
      %4380 = vmatprep.subr.mxu0 0.0
      %4381 = vmatpush1.msra.mxu0 0.0
      %4382 = vmatprep.subr.mxu0 0.0
      %4383 = vmatpush1.msra.mxu0 0.0
      %4384 = vmatprep.subr.mxu0 0.0
      %4385 = vmatpush1.msra.mxu0 0.0
      %4386 = vmatprep.subr.mxu0 0.0
      %4387 = vmatpush1.msra.mxu0 0.0
      %4388 = vmatprep.subr.mxu0 0.0
      %4389 = vmatpush1.msra.mxu0 0.0
      %4390 = vmatprep.subr.mxu0 0.0
      %4391 = vmatpush1.msra.mxu0 0.0
      %4392 = vmatprep.subr.mxu0 0.0
      %4393 = vmatpush1.msra.mxu0 0.0
      %4394 = vmatprep.subr.mxu0 0.0
      %4395 = vmatpush1.msra.mxu0 0.0
      %4396 = vmatprep.subr.mxu0 0.0
      %4397 = vmatpush1.msra.mxu0 0.0
      %4398 = vmatprep.subr.mxu0 0.0
      %4399 = vmatpush1.msra.mxu0 0.0
      %4400 = vmatprep.subr.mxu0 0.0
      %4401 = vmatpush1.msra.mxu0 0.0
      %4402 = vmatprep.subr.mxu0 0.0
      %4403 = vmatpush1.msra.mxu0 0.0
      %4404 = vmatprep.subr.mxu0 0.0
      %4405 = vmatpush1.msra.mxu0 0.0
      %4406 = vmatprep.subr.mxu0 0.0
      %4407 = vmatpush1.msra.mxu0 0.0
      %4408 = vmatprep.subr.mxu0 0.0
      %4409 = vmatpush1.msra.mxu0 0.0
      %4410 = vmatprep.subr.mxu0 0.0
      %4411 = vmatpush1.msra.mxu0 0.0
      %4412 = vmatprep.subr.mxu0 0.0
      %4413 = vmatpush1.msra.mxu0 0.0
      %4414 = vmatprep.subr.mxu0 0.0
      %4415 = vmatpush1.msra.mxu0 0.0
      %4416 = vmatprep.subr.mxu0 0.0
      %4417 = vmatpush1.msra.mxu0 0.0
      %4418 = vmatprep.subr.mxu0 0.0
      %4419 = vmatpush1.msra.mxu0 0.0
      %4420 = vmatprep.subr.mxu0 0.0
      %4421 = vmatpush1.msra.mxu0 0.0
      %4422 = vmatprep.subr.mxu0 0.0
      %4423 = vmatpush1.msra.mxu0 0.0
      %4424 = vmatprep.subr.mxu0 0.0
      %4425 = vmatpush1.msra.mxu0 0.0
      %4426 = vmatprep.subr.mxu0 0.0
      %4427 = vmatpush1.msra.mxu0 0.0
      %4428 = vmatprep.subr.mxu0 0.0
      %4429 = vmatpush1.msra.mxu0 0.0
      %4430 = vmatprep.subr.mxu0 0.0
      %4431 = vmatpush1.msra.mxu0 0.0
      %4432 = vmatprep.subr.mxu0 0.0
      %4433 = vmatpush1.msra.mxu0 0.0
      %4434 = vmatprep.subr.mxu0 0.0
      %4435 = vmatpush1.msra.mxu0 0.0
      %4436 = vmatprep.subr.mxu0 0.0
      %4437 = vmatpush1.msra.mxu0 0.0
      %4438 = vmatprep.mubr.f32.mxu0 0.0
      %4439 = vmatmul.mubr.f32.gmra.mrb[0].mxu0 %v4143
      %v4440 = vpop.f32.mrb[0].mxu0
      %v4441 = vadd.f32 %v4068, %v4440
      %v4442 = vpop.f32.mrb[0].mxu0
      %v4443 = vadd.f32 %v4070, %v4442
      %4444 = vdwg.mxu0
      %v4446 = vunpack.c.l.s4 1983009808
      %v4447 = vunpack.c.0.s8 %v4446
      %v4448 = vlaneseq
      %v4449 = vshrl.u32 %v4448, 7
      %v4450 = vsub.s32 %v4447, %v4449
      %v4451 = vrot.slane %v1109, %v4450
      %v4453 = vunpack.c.l.s4 1983009808
      %v4454 = vunpack.c.0.s8 %v4453
      %v4455 = vlaneseq
      %v4456 = vshrl.u32 %v4455, 7
      %v4457 = vsub.s32 %v4454, %v4456
      %v4458 = vrot.slane %v1110, %v4457
      %v4459 = vcombine.low %v4451, %v4458
      %v4461 = vunpack.c.l.s4 1983009808
      %v4462 = vunpack.c.0.s8 %v4461
      %v4463 = vlaneseq
      %v4464 = vshrl.u32 %v4463, 7
      %v4465 = vsub.s32 %v4462, %v4464
      %v4466 = vrot.slane %v1111, %v4465
      %v4468 = vunpack.c.l.s4 1983009808
      %v4469 = vunpack.c.0.s8 %v4468
      %v4470 = vlaneseq
      %v4471 = vshrl.u32 %v4470, 7
      %v4472 = vsub.s32 %v4469, %v4471
      %v4473 = vrot.slane %v1112, %v4472
      %v4474 = vcombine.low %v4466, %v4473
      %4475 = vrot.lane.b32.xlu0 %v4459, 97
      %v4476 = vpop.permute.xlu0 %4475
      %4477 = vrot.lane.b32.xlu0 %v4474, 97
      %v4478 = vpop.permute.xlu0 %4477
      %v4479 = vrot.slane %v4476, 6
      %v4480 = vrot.slane %v4478, 6
      %v4481 = vsel %vm1125, %v4479, %v4476
      %v4482 = vsel %vm3686, %v4479, %v4480
      %v4483 = vsel %vm1125, %v4482, %v4478
      %v4487 = vmul.f32 %v3646, %v4481
      %v4488 = vmul.f32 %v3647, %v4483
      %v4489 = vmul.f32 %v3648, %v4480
      %s4490 = scalar_lea.vmem %s1, 4
      %v4491 = vld [vmem:[%s4490] sm:$0x3]
      %v4495 = vcombine.high %v4487, %v4487
      %v4497 = vunpack.c.l.s4 1983009808
      %v4498 = vunpack.c.0.s8 %v4497
      %v4499 = vlaneseq
      %v4500 = vshrl.u32 %v4499, 7
      %v4501 = vsub.s32 %v4498, %v4500
      %v4502 = vrot.slane %v4487, %v4501
      %v4504 = vunpack.c.l.s4 1983009808
      %v4505 = vunpack.c.0.s8 %v4504
      %v4506 = vlaneseq
      %v4507 = vshrl.u32 %v4506, 7
      %v4508 = vsub.s32 %v4505, %v4507
      %v4509 = vrot.slane %v4495, %v4508
      %v4510 = vcombine.high %v4502, %v4502
      %v4511 = vcombine.high %v4509, %v4509
      %v4512 = vcombine.high %v4488, %v4488
      %v4514 = vunpack.c.l.s4 1983009808
      %v4515 = vunpack.c.0.s8 %v4514
      %v4516 = vlaneseq
      %v4517 = vshrl.u32 %v4516, 7
      %v4518 = vsub.s32 %v4515, %v4517
      %v4519 = vrot.slane %v4488, %v4518
      %v4521 = vunpack.c.l.s4 1983009808
      %v4522 = vunpack.c.0.s8 %v4521
      %v4523 = vlaneseq
      %v4524 = vshrl.u32 %v4523, 7
      %v4525 = vsub.s32 %v4522, %v4524
      %v4526 = vrot.slane %v4512, %v4525
      %v4527 = vcombine.high %v4519, %v4519
      %v4528 = vcombine.high %v4526, %v4526
      %v4530 = vunpack.c.l.s4 1983009808
      %v4531 = vunpack.c.0.s8 %v4530
      %v4532 = vlaneseq
      %v4533 = vshrl.u32 %v4532, 7
      %v4534 = vsub.s32 %v4531, %v4533
      %v4535 = vrot.slane %v4489, %v4534
      %4536 = vrot.lane.b32.xlu0 %v4502, 31
      %v4537 = vpop.permute.xlu0 %4536
      %4538 = vrot.lane.b32.xlu0 %v4510, 31
      %v4539 = vpop.permute.xlu0 %4538
      %4540 = vrot.lane.b32.xlu0 %v4509, 31
      %v4541 = vpop.permute.xlu0 %4540
      %4542 = vrot.lane.b32.xlu0 %v4511, 31
      %v4543 = vpop.permute.xlu0 %4542
      %4544 = vrot.lane.b32.xlu0 %v4519, 31
      %v4545 = vpop.permute.xlu0 %4544
      %4546 = vrot.lane.b32.xlu0 %v4527, 31
      %v4547 = vpop.permute.xlu0 %4546
      %4548 = vrot.lane.b32.xlu0 %v4526, 31
      %v4549 = vpop.permute.xlu0 %4548
      %4550 = vrot.lane.b32.xlu0 %v4528, 31
      %v4551 = vpop.permute.xlu0 %4550
      %4552 = vrot.lane.b32.xlu0 %v4535, 31
      %v4553 = vpop.permute.xlu0 %4552
      %v4554 = vsel %vm1172, %v4537, %v4539
      %v4555 = vsel %vm1172, %v4539, %v4541
      %v4556 = vsel %vm1172, %v4541, %v4543
      %v4557 = vsel %vm1172, %v4543, %v4545
      %v4558 = vsel %vm1172, %v4545, %v4547
      %v4559 = vsel %vm1172, %v4547, %v4549
      %v4560 = vsel %vm1172, %v4549, %v4551
      %v4561 = vsel %vm1172, %v4551, %v4553
      %v4563 = vsel %vm3768, %v4491, 0
      %v4565 = vsel %vm3686, %v4554, 0
      %v4567 = vsel %vm3686, %v4555, 0
      %v4569 = vsel %vm3686, %v4556, 0
      %v4571 = vsel %vm3686, %v4557, 0
      %v4573 = vsel %vm3686, %v4558, 0
      %v4575 = vsel %vm3686, %v4559, 0
      %v4577 = vsel %vm3686, %v4560, 0
      %v4579 = vsel %vm3686, %v4561, 0
      %4581 = vmatprep.subr.mxu0 %v4567
      %4582 = vmatpush1.msra.mxu0 %v4565
      %4583 = vmatprep.subr.mxu0 0.0
      %4584 = vmatpush1.msra.mxu0 0.0
      %4585 = vmatprep.subr.mxu0 0.0
      %4586 = vmatpush1.msra.mxu0 0.0
      %4587 = vmatprep.subr.mxu0 0.0
      %4588 = vmatpush1.msra.mxu0 0.0
      %4589 = vmatprep.subr.mxu0 0.0
      %4590 = vmatpush1.msra.mxu0 0.0
      %4591 = vmatprep.subr.mxu0 0.0
      %4592 = vmatpush1.msra.mxu0 0.0
      %4593 = vmatprep.subr.mxu0 0.0
      %4594 = vmatpush1.msra.mxu0 0.0
      %4595 = vmatprep.subr.mxu0 0.0
      %4596 = vmatpush1.msra.mxu0 0.0
      %4597 = vmatprep.subr.mxu0 0.0
      %4598 = vmatpush1.msra.mxu0 0.0
      %4599 = vmatprep.subr.mxu0 0.0
      %4600 = vmatpush1.msra.mxu0 0.0
      %4601 = vmatprep.subr.mxu0 0.0
      %4602 = vmatpush1.msra.mxu0 0.0
      %4603 = vmatprep.subr.mxu0 0.0
      %4604 = vmatpush1.msra.mxu0 0.0
      %4605 = vmatprep.subr.mxu0 0.0
      %4606 = vmatpush1.msra.mxu0 0.0
      %4607 = vmatprep.subr.mxu0 0.0
      %4608 = vmatpush1.msra.mxu0 0.0
      %4609 = vmatprep.subr.mxu0 0.0
      %4610 = vmatpush1.msra.mxu0 0.0
      %4611 = vmatprep.subr.mxu0 0.0
      %4612 = vmatpush1.msra.mxu0 0.0
      %4613 = vmatprep.subr.mxu0 0.0
      %4614 = vmatpush1.msra.mxu0 0.0
      %4615 = vmatprep.subr.mxu0 0.0
      %4616 = vmatpush1.msra.mxu0 0.0
      %4617 = vmatprep.subr.mxu0 0.0
      %4618 = vmatpush1.msra.mxu0 0.0
      %4619 = vmatprep.subr.mxu0 0.0
      %4620 = vmatpush1.msra.mxu0 0.0
      %4621 = vmatprep.subr.mxu0 0.0
      %4622 = vmatpush1.msra.mxu0 0.0
      %4623 = vmatprep.subr.mxu0 0.0
      %4624 = vmatpush1.msra.mxu0 0.0
      %4625 = vmatprep.subr.mxu0 0.0
      %4626 = vmatpush1.msra.mxu0 0.0
      %4627 = vmatprep.subr.mxu0 0.0
      %4628 = vmatpush1.msra.mxu0 0.0
      %4629 = vmatprep.subr.mxu0 0.0
      %4630 = vmatpush1.msra.mxu0 0.0
      %4631 = vmatprep.subr.mxu0 0.0
      %4632 = vmatpush1.msra.mxu0 0.0
      %4633 = vmatprep.subr.mxu0 0.0
      %4634 = vmatpush1.msra.mxu0 0.0
      %4635 = vmatprep.subr.mxu0 0.0
      %4636 = vmatpush1.msra.mxu0 0.0
      %4637 = vmatprep.subr.mxu0 0.0
      %4638 = vmatpush1.msra.mxu0 0.0
      %4639 = vmatprep.subr.mxu0 0.0
      %4640 = vmatpush1.msra.mxu0 0.0
      %4641 = vmatprep.subr.mxu0 0.0
      %4642 = vmatpush1.msra.mxu0 0.0
      %4643 = vmatprep.subr.mxu0 0.0
      %4644 = vmatpush1.msra.mxu0 0.0
      %4645 = vmatprep.mubr.f32.mxu0 0.0
      %4646 = vmatmul.mubr.f32.gmra.mrb[0].mxu0 %v4563
      %v4647 = vpop.f32.mrb[0].mxu0
      %v4648 = vadd.f32 0.0, %v4647
      %v4649 = vpop.f32.mrb[0].mxu0
      %v4650 = vadd.f32 0.0, %v4649
      %4651 = vdwg.mxu0
      %4652 = vmatprep.subr.mxu0 %v4571
      %4653 = vmatpush1.msra.mxu0 %v4569
      %4654 = vmatprep.subr.mxu0 0.0
      %4655 = vmatpush1.msra.mxu0 0.0
      %4656 = vmatprep.subr.mxu0 0.0
      %4657 = vmatpush1.msra.mxu0 0.0
      %4658 = vmatprep.subr.mxu0 0.0
      %4659 = vmatpush1.msra.mxu0 0.0
      %4660 = vmatprep.subr.mxu0 0.0
      %4661 = vmatpush1.msra.mxu0 0.0
      %4662 = vmatprep.subr.mxu0 0.0
      %4663 = vmatpush1.msra.mxu0 0.0
      %4664 = vmatprep.subr.mxu0 0.0
      %4665 = vmatpush1.msra.mxu0 0.0
      %4666 = vmatprep.subr.mxu0 0.0
      %4667 = vmatpush1.msra.mxu0 0.0
      %4668 = vmatprep.subr.mxu0 0.0
      %4669 = vmatpush1.msra.mxu0 0.0
      %4670 = vmatprep.subr.mxu0 0.0
      %4671 = vmatpush1.msra.mxu0 0.0
      %4672 = vmatprep.subr.mxu0 0.0
      %4673 = vmatpush1.msra.mxu0 0.0
      %4674 = vmatprep.subr.mxu0 0.0
      %4675 = vmatpush1.msra.mxu0 0.0
      %4676 = vmatprep.subr.mxu0 0.0
      %4677 = vmatpush1.msra.mxu0 0.0
      %4678 = vmatprep.subr.mxu0 0.0
      %4679 = vmatpush1.msra.mxu0 0.0
      %4680 = vmatprep.subr.mxu0 0.0
      %4681 = vmatpush1.msra.mxu0 0.0
      %4682 = vmatprep.subr.mxu0 0.0
      %4683 = vmatpush1.msra.mxu0 0.0
      %4684 = vmatprep.subr.mxu0 0.0
      %4685 = vmatpush1.msra.mxu0 0.0
      %4686 = vmatprep.subr.mxu0 0.0
      %4687 = vmatpush1.msra.mxu0 0.0
      %4688 = vmatprep.subr.mxu0 0.0
      %4689 = vmatpush1.msra.mxu0 0.0
      %4690 = vmatprep.subr.mxu0 0.0
      %4691 = vmatpush1.msra.mxu0 0.0
      %4692 = vmatprep.subr.mxu0 0.0
      %4693 = vmatpush1.msra.mxu0 0.0
      %4694 = vmatprep.subr.mxu0 0.0
      %4695 = vmatpush1.msra.mxu0 0.0
      %4696 = vmatprep.subr.mxu0 0.0
      %4697 = vmatpush1.msra.mxu0 0.0
      %4698 = vmatprep.subr.mxu0 0.0
      %4699 = vmatpush1.msra.mxu0 0.0
      %4700 = vmatprep.subr.mxu0 0.0
      %4701 = vmatpush1.msra.mxu0 0.0
      %4702 = vmatprep.subr.mxu0 0.0
      %4703 = vmatpush1.msra.mxu0 0.0
      %4704 = vmatprep.subr.mxu0 0.0
      %4705 = vmatpush1.msra.mxu0 0.0
      %4706 = vmatprep.subr.mxu0 0.0
      %4707 = vmatpush1.msra.mxu0 0.0
      %4708 = vmatprep.subr.mxu0 0.0
      %4709 = vmatpush1.msra.mxu0 0.0
      %4710 = vmatprep.subr.mxu0 0.0
      %4711 = vmatpush1.msra.mxu0 0.0
      %4712 = vmatprep.subr.mxu0 0.0
      %4713 = vmatpush1.msra.mxu0 0.0
      %4714 = vmatprep.subr.mxu0 0.0
      %4715 = vmatpush1.msra.mxu0 0.0
      %4716 = vmatprep.mubr.f32.mxu0 0.0
      %4717 = vmatmul.mubr.f32.gmra.mrb[0].mxu0 %v4563
      %v4718 = vpop.f32.mrb[0].mxu0
      %v4719 = vadd.f32 0.0, %v4718
      %v4720 = vpop.f32.mrb[0].mxu0
      %v4721 = vadd.f32 0.0, %v4720
      %4722 = vdwg.mxu0
      %4723 = vmatprep.subr.mxu0 %v4575
      %4724 = vmatpush1.msra.mxu0 %v4573
      %4725 = vmatprep.subr.mxu0 0.0
      %4726 = vmatpush1.msra.mxu0 0.0
      %4727 = vmatprep.subr.mxu0 0.0
      %4728 = vmatpush1.msra.mxu0 0.0
      %4729 = vmatprep.subr.mxu0 0.0
      %4730 = vmatpush1.msra.mxu0 0.0
      %4731 = vmatprep.subr.mxu0 0.0
      %4732 = vmatpush1.msra.mxu0 0.0
      %4733 = vmatprep.subr.mxu0 0.0
      %4734 = vmatpush1.msra.mxu0 0.0
      %4735 = vmatprep.subr.mxu0 0.0
      %4736 = vmatpush1.msra.mxu0 0.0
      %4737 = vmatprep.subr.mxu0 0.0
      %4738 = vmatpush1.msra.mxu0 0.0
      %4739 = vmatprep.subr.mxu0 0.0
      %4740 = vmatpush1.msra.mxu0 0.0
      %4741 = vmatprep.subr.mxu0 0.0
      %4742 = vmatpush1.msra.mxu0 0.0
      %4743 = vmatprep.subr.mxu0 0.0
      %4744 = vmatpush1.msra.mxu0 0.0
      %4745 = vmatprep.subr.mxu0 0.0
      %4746 = vmatpush1.msra.mxu0 0.0
      %4747 = vmatprep.subr.mxu0 0.0
      %4748 = vmatpush1.msra.mxu0 0.0
      %4749 = vmatprep.subr.mxu0 0.0
      %4750 = vmatpush1.msra.mxu0 0.0
      %4751 = vmatprep.subr.mxu0 0.0
      %4752 = vmatpush1.msra.mxu0 0.0
      %4753 = vmatprep.subr.mxu0 0.0
      %4754 = vmatpush1.msra.mxu0 0.0
      %4755 = vmatprep.subr.mxu0 0.0
      %4756 = vmatpush1.msra.mxu0 0.0
      %4757 = vmatprep.subr.mxu0 0.0
      %4758 = vmatpush1.msra.mxu0 0.0
      %4759 = vmatprep.subr.mxu0 0.0
      %4760 = vmatpush1.msra.mxu0 0.0
      %4761 = vmatprep.subr.mxu0 0.0
      %4762 = vmatpush1.msra.mxu0 0.0
      %4763 = vmatprep.subr.mxu0 0.0
      %4764 = vmatpush1.msra.mxu0 0.0
      %4765 = vmatprep.subr.mxu0 0.0
      %4766 = vmatpush1.msra.mxu0 0.0
      %4767 = vmatprep.subr.mxu0 0.0
      %4768 = vmatpush1.msra.mxu0 0.0
      %4769 = vmatprep.subr.mxu0 0.0
      %4770 = vmatpush1.msra.mxu0 0.0
      %4771 = vmatprep.subr.mxu0 0.0
      %4772 = vmatpush1.msra.mxu0 0.0
      %4773 = vmatprep.subr.mxu0 0.0
      %4774 = vmatpush1.msra.mxu0 0.0
      %4775 = vmatprep.subr.mxu0 0.0
      %4776 = vmatpush1.msra.mxu0 0.0
      %4777 = vmatprep.subr.mxu0 0.0
      %4778 = vmatpush1.msra.mxu0 0.0
      %4779 = vmatprep.subr.mxu0 0.0
      %4780 = vmatpush1.msra.mxu0 0.0
      %4781 = vmatprep.subr.mxu0 0.0
      %4782 = vmatpush1.msra.mxu0 0.0
      %4783 = vmatprep.subr.mxu0 0.0
      %4784 = vmatpush1.msra.mxu0 0.0
      %4785 = vmatprep.subr.mxu0 0.0
      %4786 = vmatpush1.msra.mxu0 0.0
      %4787 = vmatprep.mubr.f32.mxu0 0.0
      %4788 = vmatmul.mubr.f32.gmra.mrb[0].mxu0 %v4563
      %v4789 = vpop.f32.mrb[0].mxu0
      %v4790 = vadd.f32 0.0, %v4789
      %v4791 = vpop.f32.mrb[0].mxu0
      %v4792 = vadd.f32 0.0, %v4791
      %4793 = vdwg.mxu0
      %4794 = vmatprep.subr.mxu0 %v4579
      %4795 = vmatpush1.msra.mxu0 %v4577
      %4796 = vmatprep.subr.mxu0 0.0
      %4797 = vmatpush1.msra.mxu0 0.0
      %4798 = vmatprep.subr.mxu0 0.0
      %4799 = vmatpush1.msra.mxu0 0.0
      %4800 = vmatprep.subr.mxu0 0.0
      %4801 = vmatpush1.msra.mxu0 0.0
      %4802 = vmatprep.subr.mxu0 0.0
      %4803 = vmatpush1.msra.mxu0 0.0
      %4804 = vmatprep.subr.mxu0 0.0
      %4805 = vmatpush1.msra.mxu0 0.0
      %4806 = vmatprep.subr.mxu0 0.0
      %4807 = vmatpush1.msra.mxu0 0.0
      %4808 = vmatprep.subr.mxu0 0.0
      %4809 = vmatpush1.msra.mxu0 0.0
      %4810 = vmatprep.subr.mxu0 0.0
      %4811 = vmatpush1.msra.mxu0 0.0
      %4812 = vmatprep.subr.mxu0 0.0
      %4813 = vmatpush1.msra.mxu0 0.0
      %4814 = vmatprep.subr.mxu0 0.0
      %4815 = vmatpush1.msra.mxu0 0.0
      %4816 = vmatprep.subr.mxu0 0.0
      %4817 = vmatpush1.msra.mxu0 0.0
      %4818 = vmatprep.subr.mxu0 0.0
      %4819 = vmatpush1.msra.mxu0 0.0
      %4820 = vmatprep.subr.mxu0 0.0
      %4821 = vmatpush1.msra.mxu0 0.0
      %4822 = vmatprep.subr.mxu0 0.0
      %4823 = vmatpush1.msra.mxu0 0.0
      %4824 = vmatprep.subr.mxu0 0.0
      %4825 = vmatpush1.msra.mxu0 0.0
      %4826 = vmatprep.subr.mxu0 0.0
      %4827 = vmatpush1.msra.mxu0 0.0
      %4828 = vmatprep.subr.mxu0 0.0
      %4829 = vmatpush1.msra.mxu0 0.0
      %4830 = vmatprep.subr.mxu0 0.0
      %4831 = vmatpush1.msra.mxu0 0.0
      %4832 = vmatprep.subr.mxu0 0.0
      %4833 = vmatpush1.msra.mxu0 0.0
      %4834 = vmatprep.subr.mxu0 0.0
      %4835 = vmatpush1.msra.mxu0 0.0
      %4836 = vmatprep.subr.mxu0 0.0
      %4837 = vmatpush1.msra.mxu0 0.0
      %4838 = vmatprep.subr.mxu0 0.0
      %4839 = vmatpush1.msra.mxu0 0.0
      %4840 = vmatprep.subr.mxu0 0.0
      %4841 = vmatpush1.msra.mxu0 0.0
      %4842 = vmatprep.subr.mxu0 0.0
      %4843 = vmatpush1.msra.mxu0 0.0
      %4844 = vmatprep.subr.mxu0 0.0
      %4845 = vmatpush1.msra.mxu0 0.0
      %4846 = vmatprep.subr.mxu0 0.0
      %4847 = vmatpush1.msra.mxu0 0.0
      %4848 = vmatprep.subr.mxu0 0.0
      %4849 = vmatpush1.msra.mxu0 0.0
      %4850 = vmatprep.subr.mxu0 0.0
      %4851 = vmatpush1.msra.mxu0 0.0
      %4852 = vmatprep.subr.mxu0 0.0
      %4853 = vmatpush1.msra.mxu0 0.0
      %4854 = vmatprep.subr.mxu0 0.0
      %4855 = vmatpush1.msra.mxu0 0.0
      %4856 = vmatprep.subr.mxu0 0.0
      %4857 = vmatpush1.msra.mxu0 0.0
      %4858 = vmatprep.mubr.f32.mxu0 0.0
      %4859 = vmatmul.mubr.f32.gmra.mrb[0].mxu0 %v4563
      %v4860 = vpop.f32.mrb[0].mxu0
      %v4861 = vadd.f32 0.0, %v4860
      %v4862 = vpop.f32.mrb[0].mxu0
      %v4863 = vadd.f32 0.0, %v4862
      %4864 = vdwg.mxu0
      %v4865 = vadd.f32 %v4228, %v4648
      %v4866 = vadd.f32 %v4230, %v4650
      %v4867 = vadd.f32 %v4299, %v4719
      %v4868 = vadd.f32 %v4301, %v4721
      %v4869 = vadd.f32 %v4370, %v4790
      %v4870 = vadd.f32 %v4372, %v4792
      %v4871 = vadd.f32 %v4441, %v4861
      %v4872 = vadd.f32 %v4443, %v4863
      %4873 = vrot.lane.b32.xlu0 %v3663, 127
      %v4874 = vpop.permute.xlu0 %4873
      %4875 = vrot.lane.b32.xlu0 %v3678, 127
      %v4876 = vpop.permute.xlu0 %4875
      %v4877 = vrot.slane %v4874, 6
      %v4878 = vrot.slane %v4876, 6
      %v4879 = vsel %vm1504, %v4877, %v4874
      %v4880 = vsel %vm3686, %v4877, %v4878
      %v4881 = vsel %vm1504, %v4880, %v4876
      %v4885 = vmul.f32 %v3646, %v4879
      %v4886 = vmul.f32 %v3647, %v4881
      %v4887 = vmul.f32 %v3648, %v4878
      %s4888 = scalar_lea.vmem %s1, 6
      %v4889 = vld [vmem:[%s4888] sm:$0x3]
      %v4893 = vcombine.high %v4885, %v4885
      %v4895 = vunpack.c.l.s4 1983009808
      %v4896 = vunpack.c.0.s8 %v4895
      %v4897 = vlaneseq
      %v4898 = vshrl.u32 %v4897, 7
      %v4899 = vsub.s32 %v4896, %v4898
      %v4900 = vrot.slane %v4885, %v4899
      %v4902 = vunpack.c.l.s4 1983009808
      %v4903 = vunpack.c.0.s8 %v4902
      %v4904 = vlaneseq
      %v4905 = vshrl.u32 %v4904, 7
      %v4906 = vsub.s32 %v4903, %v4905
      %v4907 = vrot.slane %v4893, %v4906
      %v4908 = vcombine.high %v4900, %v4900
      %v4909 = vcombine.high %v4907, %v4907
      %v4910 = vcombine.high %v4886, %v4886
      %v4912 = vunpack.c.l.s4 1983009808
      %v4913 = vunpack.c.0.s8 %v4912
      %v4914 = vlaneseq
      %v4915 = vshrl.u32 %v4914, 7
      %v4916 = vsub.s32 %v4913, %v4915
      %v4917 = vrot.slane %v4886, %v4916
      %v4919 = vunpack.c.l.s4 1983009808
      %v4920 = vunpack.c.0.s8 %v4919
      %v4921 = vlaneseq
      %v4922 = vshrl.u32 %v4921, 7
      %v4923 = vsub.s32 %v4920, %v4922
      %v4924 = vrot.slane %v4910, %v4923
      %v4925 = vcombine.high %v4917, %v4917
      %v4926 = vcombine.high %v4924, %v4924
      %v4928 = vunpack.c.l.s4 1983009808
      %v4929 = vunpack.c.0.s8 %v4928
      %v4930 = vlaneseq
      %v4931 = vshrl.u32 %v4930, 7
      %v4932 = vsub.s32 %v4929, %v4931
      %v4933 = vrot.slane %v4887, %v4932
      %4934 = vrot.lane.b32.xlu0 %v4900, 1
      %v4935 = vpop.permute.xlu0 %4934
      %4936 = vrot.lane.b32.xlu0 %v4908, 1
      %v4937 = vpop.permute.xlu0 %4936
      %4938 = vrot.lane.b32.xlu0 %v4907, 1
      %v4939 = vpop.permute.xlu0 %4938
      %4940 = vrot.lane.b32.xlu0 %v4909, 1
      %v4941 = vpop.permute.xlu0 %4940
      %4942 = vrot.lane.b32.xlu0 %v4917, 1
      %v4943 = vpop.permute.xlu0 %4942
      %4944 = vrot.lane.b32.xlu0 %v4925, 1
      %v4945 = vpop.permute.xlu0 %4944
      %4946 = vrot.lane.b32.xlu0 %v4924, 1
      %v4947 = vpop.permute.xlu0 %4946
      %4948 = vrot.lane.b32.xlu0 %v4926, 1
      %v4949 = vpop.permute.xlu0 %4948
      %4950 = vrot.lane.b32.xlu0 %v4933, 1
      %v4951 = vpop.permute.xlu0 %4950
      %v4952 = vsel %vm1551, %v4935, %v4937
      %v4953 = vsel %vm1551, %v4937, %v4939
      %v4954 = vsel %vm1551, %v4939, %v4941
      %v4955 = vsel %vm1551, %v4941, %v4943
      %v4956 = vsel %vm1551, %v4943, %v4945
      %v4957 = vsel %vm1551, %v4945, %v4947
      %v4958 = vsel %vm1551, %v4947, %v4949
      %v4959 = vsel %vm1551, %v4949, %v4951
      %v4961 = vsel %vm3768, %v4889, 0
      %v4963 = vsel %vm3686, %v4952, 0
      %v4965 = vsel %vm3686, %v4953, 0
      %v4967 = vsel %vm3686, %v4954, 0
      %v4969 = vsel %vm3686, %v4955, 0
      %v4971 = vsel %vm3686, %v4956, 0
      %v4973 = vsel %vm3686, %v4957, 0
      %v4975 = vsel %vm3686, %v4958, 0
      %v4977 = vsel %vm3686, %v4959, 0
      %4979 = vmatprep.subr.mxu0 %v4965
      %4980 = vmatpush1.msra.mxu0 %v4963
      %4981 = vmatprep.subr.mxu0 0.0
      %4982 = vmatpush1.msra.mxu0 0.0
      %4983 = vmatprep.subr.mxu0 0.0
      %4984 = vmatpush1.msra.mxu0 0.0
      %4985 = vmatprep.subr.mxu0 0.0
      %4986 = vmatpush1.msra.mxu0 0.0
      %4987 = vmatprep.subr.mxu0 0.0
      %4988 = vmatpush1.msra.mxu0 0.0
      %4989 = vmatprep.subr.mxu0 0.0
      %4990 = vmatpush1.msra.mxu0 0.0
      %4991 = vmatprep.subr.mxu0 0.0
      %4992 = vmatpush1.msra.mxu0 0.0
      %4993 = vmatprep.subr.mxu0 0.0
      %4994 = vmatpush1.msra.mxu0 0.0
      %4995 = vmatprep.subr.mxu0 0.0
      %4996 = vmatpush1.msra.mxu0 0.0
      %4997 = vmatprep.subr.mxu0 0.0
      %4998 = vmatpush1.msra.mxu0 0.0
      %4999 = vmatprep.subr.mxu0 0.0
      %5000 = vmatpush1.msra.mxu0 0.0
      %5001 = vmatprep.subr.mxu0 0.0
      %5002 = vmatpush1.msra.mxu0 0.0
      %5003 = vmatprep.subr.mxu0 0.0
      %5004 = vmatpush1.msra.mxu0 0.0
      %5005 = vmatprep.subr.mxu0 0.0
      %5006 = vmatpush1.msra.mxu0 0.0
      %5007 = vmatprep.subr.mxu0 0.0
      %5008 = vmatpush1.msra.mxu0 0.0
      %5009 = vmatprep.subr.mxu0 0.0
      %5010 = vmatpush1.msra.mxu0 0.0
      %5011 = vmatprep.subr.mxu0 0.0
      %5012 = vmatpush1.msra.mxu0 0.0
      %5013 = vmatprep.subr.mxu0 0.0
      %5014 = vmatpush1.msra.mxu0 0.0
      %5015 = vmatprep.subr.mxu0 0.0
      %5016 = vmatpush1.msra.mxu0 0.0
      %5017 = vmatprep.subr.mxu0 0.0
      %5018 = vmatpush1.msra.mxu0 0.0
      %5019 = vmatprep.subr.mxu0 0.0
      %5020 = vmatpush1.msra.mxu0 0.0
      %5021 = vmatprep.subr.mxu0 0.0
      %5022 = vmatpush1.msra.mxu0 0.0
      %5023 = vmatprep.subr.mxu0 0.0
      %5024 = vmatpush1.msra.mxu0 0.0
      %5025 = vmatprep.subr.mxu0 0.0
      %5026 = vmatpush1.msra.mxu0 0.0
      %5027 = vmatprep.subr.mxu0 0.0
      %5028 = vmatpush1.msra.mxu0 0.0
      %5029 = vmatprep.subr.mxu0 0.0
      %5030 = vmatpush1.msra.mxu0 0.0
      %5031 = vmatprep.subr.mxu0 0.0
      %5032 = vmatpush1.msra.mxu0 0.0
      %5033 = vmatprep.subr.mxu0 0.0
      %5034 = vmatpush1.msra.mxu0 0.0
      %5035 = vmatprep.subr.mxu0 0.0
      %5036 = vmatpush1.msra.mxu0 0.0
      %5037 = vmatprep.subr.mxu0 0.0
      %5038 = vmatpush1.msra.mxu0 0.0
      %5039 = vmatprep.subr.mxu0 0.0
      %5040 = vmatpush1.msra.mxu0 0.0
      %5041 = vmatprep.subr.mxu0 0.0
      %5042 = vmatpush1.msra.mxu0 0.0
      %5043 = vmatprep.mubr.f32.mxu0 0.0
      %5044 = vmatmul.mubr.f32.gmra.mrb[0].mxu0 %v4961
      %v5045 = vpop.f32.mrb[0].mxu0
      %v5046 = vadd.f32 0.0, %v5045
      %v5047 = vpop.f32.mrb[0].mxu0
      %v5048 = vadd.f32 0.0, %v5047
      %5049 = vdwg.mxu0
      %5050 = vmatprep.subr.mxu0 %v4969
      %5051 = vmatpush1.msra.mxu0 %v4967
      %5052 = vmatprep.subr.mxu0 0.0
      %5053 = vmatpush1.msra.mxu0 0.0
      %5054 = vmatprep.subr.mxu0 0.0
      %5055 = vmatpush1.msra.mxu0 0.0
      %5056 = vmatprep.subr.mxu0 0.0
      %5057 = vmatpush1.msra.mxu0 0.0
      %5058 = vmatprep.subr.mxu0 0.0
      %5059 = vmatpush1.msra.mxu0 0.0
      %5060 = vmatprep.subr.mxu0 0.0
      %5061 = vmatpush1.msra.mxu0 0.0
      %5062 = vmatprep.subr.mxu0 0.0
      %5063 = vmatpush1.msra.mxu0 0.0
      %5064 = vmatprep.subr.mxu0 0.0
      %5065 = vmatpush1.msra.mxu0 0.0
      %5066 = vmatprep.subr.mxu0 0.0
      %5067 = vmatpush1.msra.mxu0 0.0
      %5068 = vmatprep.subr.mxu0 0.0
      %5069 = vmatpush1.msra.mxu0 0.0
      %5070 = vmatprep.subr.mxu0 0.0
      %5071 = vmatpush1.msra.mxu0 0.0
      %5072 = vmatprep.subr.mxu0 0.0
      %5073 = vmatpush1.msra.mxu0 0.0
      %5074 = vmatprep.subr.mxu0 0.0
      %5075 = vmatpush1.msra.mxu0 0.0
      %5076 = vmatprep.subr.mxu0 0.0
      %5077 = vmatpush1.msra.mxu0 0.0
      %5078 = vmatprep.subr.mxu0 0.0
      %5079 = vmatpush1.msra.mxu0 0.0
      %5080 = vmatprep.subr.mxu0 0.0
      %5081 = vmatpush1.msra.mxu0 0.0
      %5082 = vmatprep.subr.mxu0 0.0
      %5083 = vmatpush1.msra.mxu0 0.0
      %5084 = vmatprep.subr.mxu0 0.0
      %5085 = vmatpush1.msra.mxu0 0.0
      %5086 = vmatprep.subr.mxu0 0.0
      %5087 = vmatpush1.msra.mxu0 0.0
      %5088 = vmatprep.subr.mxu0 0.0
      %5089 = vmatpush1.msra.mxu0 0.0
      %5090 = vmatprep.subr.mxu0 0.0
      %5091 = vmatpush1.msra.mxu0 0.0
      %5092 = vmatprep.subr.mxu0 0.0
      %5093 = vmatpush1.msra.mxu0 0.0
      %5094 = vmatprep.subr.mxu0 0.0
      %5095 = vmatpush1.msra.mxu0 0.0
      %5096 = vmatprep.subr.mxu0 0.0
      %5097 = vmatpush1.msra.mxu0 0.0
      %5098 = vmatprep.subr.mxu0 0.0
      %5099 = vmatpush1.msra.mxu0 0.0
      %5100 = vmatprep.subr.mxu0 0.0
      %5101 = vmatpush1.msra.mxu0 0.0
      %5102 = vmatprep.subr.mxu0 0.0
      %5103 = vmatpush1.msra.mxu0 0.0
      %5104 = vmatprep.subr.mxu0 0.0
      %5105 = vmatpush1.msra.mxu0 0.0
      %5106 = vmatprep.subr.mxu0 0.0
      %5107 = vmatpush1.msra.mxu0 0.0
      %5108 = vmatprep.subr.mxu0 0.0
      %5109 = vmatpush1.msra.mxu0 0.0
      %5110 = vmatprep.subr.mxu0 0.0
      %5111 = vmatpush1.msra.mxu0 0.0
      %5112 = vmatprep.subr.mxu0 0.0
      %5113 = vmatpush1.msra.mxu0 0.0
      %5114 = vmatprep.mubr.f32.mxu0 0.0
      %5115 = vmatmul.mubr.f32.gmra.mrb[0].mxu0 %v4961
      %v5116 = vpop.f32.mrb[0].mxu0
      %v5117 = vadd.f32 0.0, %v5116
      %v5118 = vpop.f32.mrb[0].mxu0
      %v5119 = vadd.f32 0.0, %v5118
      %5120 = vdwg.mxu0
      %5121 = vmatprep.subr.mxu0 %v4973
      %5122 = vmatpush1.msra.mxu0 %v4971
      %5123 = vmatprep.subr.mxu0 0.0
      %5124 = vmatpush1.msra.mxu0 0.0
      %5125 = vmatprep.subr.mxu0 0.0
      %5126 = vmatpush1.msra.mxu0 0.0
      %5127 = vmatprep.subr.mxu0 0.0
      %5128 = vmatpush1.msra.mxu0 0.0
      %5129 = vmatprep.subr.mxu0 0.0
      %5130 = vmatpush1.msra.mxu0 0.0
      %5131 = vmatprep.subr.mxu0 0.0
      %5132 = vmatpush1.msra.mxu0 0.0
      %5133 = vmatprep.subr.mxu0 0.0
      %5134 = vmatpush1.msra.mxu0 0.0
      %5135 = vmatprep.subr.mxu0 0.0
      %5136 = vmatpush1.msra.mxu0 0.0
      %5137 = vmatprep.subr.mxu0 0.0
      %5138 = vmatpush1.msra.mxu0 0.0
      %5139 = vmatprep.subr.mxu0 0.0
      %5140 = vmatpush1.msra.mxu0 0.0
      %5141 = vmatprep.subr.mxu0 0.0
      %5142 = vmatpush1.msra.mxu0 0.0
      %5143 = vmatprep.subr.mxu0 0.0
      %5144 = vmatpush1.msra.mxu0 0.0
      %5145 = vmatprep.subr.mxu0 0.0
      %5146 = vmatpush1.msra.mxu0 0.0
      %5147 = vmatprep.subr.mxu0 0.0
      %5148 = vmatpush1.msra.mxu0 0.0
      %5149 = vmatprep.subr.mxu0 0.0
      %5150 = vmatpush1.msra.mxu0 0.0
      %5151 = vmatprep.subr.mxu0 0.0
      %5152 = vmatpush1.msra.mxu0 0.0
      %5153 = vmatprep.subr.mxu0 0.0
      %5154 = vmatpush1.msra.mxu0 0.0
      %5155 = vmatprep.subr.mxu0 0.0
      %5156 = vmatpush1.msra.mxu0 0.0
      %5157 = vmatprep.subr.mxu0 0.0
      %5158 = vmatpush1.msra.mxu0 0.0
      %5159 = vmatprep.subr.mxu0 0.0
      %5160 = vmatpush1.msra.mxu0 0.0
      %5161 = vmatprep.subr.mxu0 0.0
      %5162 = vmatpush1.msra.mxu0 0.0
      %5163 = vmatprep.subr.mxu0 0.0
      %5164 = vmatpush1.msra.mxu0 0.0
      %5165 = vmatprep.subr.mxu0 0.0
      %5166 = vmatpush1.msra.mxu0 0.0
      %5167 = vmatprep.subr.mxu0 0.0
      %5168 = vmatpush1.msra.mxu0 0.0
      %5169 = vmatprep.subr.mxu0 0.0
      %5170 = vmatpush1.msra.mxu0 0.0
      %5171 = vmatprep.subr.mxu0 0.0
      %5172 = vmatpush1.msra.mxu0 0.0
      %5173 = vmatprep.subr.mxu0 0.0
      %5174 = vmatpush1.msra.mxu0 0.0
      %5175 = vmatprep.subr.mxu0 0.0
      %5176 = vmatpush1.msra.mxu0 0.0
      %5177 = vmatprep.subr.mxu0 0.0
      %5178 = vmatpush1.msra.mxu0 0.0
      %5179 = vmatprep.subr.mxu0 0.0
      %5180 = vmatpush1.msra.mxu0 0.0
      %5181 = vmatprep.subr.mxu0 0.0
      %5182 = vmatpush1.msra.mxu0 0.0
      %5183 = vmatprep.subr.mxu0 0.0
      %5184 = vmatpush1.msra.mxu0 0.0
      %5185 = vmatprep.mubr.f32.mxu0 0.0
      %5186 = vmatmul.mubr.f32.gmra.mrb[0].mxu0 %v4961
      %v5187 = vpop.f32.mrb[0].mxu0
      %v5188 = vadd.f32 0.0, %v5187
      %v5189 = vpop.f32.mrb[0].mxu0
      %v5190 = vadd.f32 0.0, %v5189
      %5191 = vdwg.mxu0
      %5192 = vmatprep.subr.mxu0 %v4977
      %5193 = vmatpush1.msra.mxu0 %v4975
      %5194 = vmatprep.subr.mxu0 0.0
      %5195 = vmatpush1.msra.mxu0 0.0
      %5196 = vmatprep.subr.mxu0 0.0
      %5197 = vmatpush1.msra.mxu0 0.0
      %5198 = vmatprep.subr.mxu0 0.0
      %5199 = vmatpush1.msra.mxu0 0.0
      %5200 = vmatprep.subr.mxu0 0.0
      %5201 = vmatpush1.msra.mxu0 0.0
      %5202 = vmatprep.subr.mxu0 0.0
      %5203 = vmatpush1.msra.mxu0 0.0
      %5204 = vmatprep.subr.mxu0 0.0
      %5205 = vmatpush1.msra.mxu0 0.0
      %5206 = vmatprep.subr.mxu0 0.0
      %5207 = vmatpush1.msra.mxu0 0.0
      %5208 = vmatprep.subr.mxu0 0.0
      %5209 = vmatpush1.msra.mxu0 0.0
      %5210 = vmatprep.subr.mxu0 0.0
      %5211 = vmatpush1.msra.mxu0 0.0
      %5212 = vmatprep.subr.mxu0 0.0
      %5213 = vmatpush1.msra.mxu0 0.0
      %5214 = vmatprep.subr.mxu0 0.0
      %5215 = vmatpush1.msra.mxu0 0.0
      %5216 = vmatprep.subr.mxu0 0.0
      %5217 = vmatpush1.msra.mxu0 0.0
      %5218 = vmatprep.subr.mxu0 0.0
      %5219 = vmatpush1.msra.mxu0 0.0
      %5220 = vmatprep.subr.mxu0 0.0
      %5221 = vmatpush1.msra.mxu0 0.0
      %5222 = vmatprep.subr.mxu0 0.0
      %5223 = vmatpush1.msra.mxu0 0.0
      %5224 = vmatprep.subr.mxu0 0.0
      %5225 = vmatpush1.msra.mxu0 0.0
      %5226 = vmatprep.subr.mxu0 0.0
      %5227 = vmatpush1.msra.mxu0 0.0
      %5228 = vmatprep.subr.mxu0 0.0
      %5229 = vmatpush1.msra.mxu0 0.0
      %5230 = vmatprep.subr.mxu0 0.0
      %5231 = vmatpush1.msra.mxu0 0.0
      %5232 = vmatprep.subr.mxu0 0.0
      %5233 = vmatpush1.msra.mxu0 0.0
      %5234 = vmatprep.subr.mxu0 0.0
      %5235 = vmatpush1.msra.mxu0 0.0
      %5236 = vmatprep.subr.mxu0 0.0
      %5237 = vmatpush1.msra.mxu0 0.0
      %5238 = vmatprep.subr.mxu0 0.0
      %5239 = vmatpush1.msra.mxu0 0.0
      %5240 = vmatprep.subr.mxu0 0.0
      %5241 = vmatpush1.msra.mxu0 0.0
      %5242 = vmatprep.subr.mxu0 0.0
      %5243 = vmatpush1.msra.mxu0 0.0
      %5244 = vmatprep.subr.mxu0 0.0
      %5245 = vmatpush1.msra.mxu0 0.0
      %5246 = vmatprep.subr.mxu0 0.0
      %5247 = vmatpush1.msra.mxu0 0.0
      %5248 = vmatprep.subr.mxu0 0.0
      %5249 = vmatpush1.msra.mxu0 0.0
      %5250 = vmatprep.subr.mxu0 0.0
      %5251 = vmatpush1.msra.mxu0 0.0
      %5252 = vmatprep.subr.mxu0 0.0
      %5253 = vmatpush1.msra.mxu0 0.0
      %5254 = vmatprep.subr.mxu0 0.0
      %5255 = vmatpush1.msra.mxu0 0.0
      %5256 = vmatprep.mubr.f32.mxu0 0.0
      %5257 = vmatmul.mubr.f32.gmra.mrb[0].mxu0 %v4961
      %v5258 = vpop.f32.mrb[0].mxu0
      %v5259 = vadd.f32 0.0, %v5258
      %v5260 = vpop.f32.mrb[0].mxu0
      %v5261 = vadd.f32 0.0, %v5260
      %5262 = vdwg.mxu0
      %v5263 = vadd.f32 %v4865, %v5046
      %v5264 = vadd.f32 %v4866, %v5048
      %v5265 = vadd.f32 %v4867, %v5117
      %v5266 = vadd.f32 %v4868, %v5119
      %v5267 = vadd.f32 %v4869, %v5188
      %v5268 = vadd.f32 %v4870, %v5190
      %v5269 = vadd.f32 %v4871, %v5259
      %v5270 = vadd.f32 %v4872, %v5261
      %s5271 = scalar_lea.vmem %s1, 8
      %v5272 = vld [vmem:[%s5271] sm:$0x3]
      %v5274 = vsel %vm3768, %v5272, 0
      %v5276 = vsel %vm3686, %v3716, 0
      %v5278 = vsel %vm3686, %v3715, 0
      %v5280 = vsel %vm3686, %v3717, 0
      %v5282 = vsel %vm3686, %v3725, 0
      %v5284 = vsel %vm3686, %v3733, 0
      %v5286 = vsel %vm3686, %v3732, 0
      %v5288 = vsel %vm3686, %v3734, 0
      %v5290 = vsel %vm3686, %v3741, 0
      %5292 = vmatprep.subr.mxu0 %v5278
      %5293 = vmatpush1.msra.mxu0 %v5276
      %5294 = vmatprep.subr.mxu0 0.0
      %5295 = vmatpush1.msra.mxu0 0.0
      %5296 = vmatprep.subr.mxu0 0.0
      %5297 = vmatpush1.msra.mxu0 0.0
      %5298 = vmatprep.subr.mxu0 0.0
      %5299 = vmatpush1.msra.mxu0 0.0
      %5300 = vmatprep.subr.mxu0 0.0
      %5301 = vmatpush1.msra.mxu0 0.0
      %5302 = vmatprep.subr.mxu0 0.0
      %5303 = vmatpush1.msra.mxu0 0.0
      %5304 = vmatprep.subr.mxu0 0.0
      %5305 = vmatpush1.msra.mxu0 0.0
      %5306 = vmatprep.subr.mxu0 0.0
      %5307 = vmatpush1.msra.mxu0 0.0
      %5308 = vmatprep.subr.mxu0 0.0
      %5309 = vmatpush1.msra.mxu0 0.0
      %5310 = vmatprep.subr.mxu0 0.0
      %5311 = vmatpush1.msra.mxu0 0.0
      %5312 = vmatprep.subr.mxu0 0.0
      %5313 = vmatpush1.msra.mxu0 0.0
      %5314 = vmatprep.subr.mxu0 0.0
      %5315 = vmatpush1.msra.mxu0 0.0
      %5316 = vmatprep.subr.mxu0 0.0
      %5317 = vmatpush1.msra.mxu0 0.0
      %5318 = vmatprep.subr.mxu0 0.0
      %5319 = vmatpush1.msra.mxu0 0.0
      %5320 = vmatprep.subr.mxu0 0.0
      %5321 = vmatpush1.msra.mxu0 0.0
      %5322 = vmatprep.subr.mxu0 0.0
      %5323 = vmatpush1.msra.mxu0 0.0
      %5324 = vmatprep.subr.mxu0 0.0
      %5325 = vmatpush1.msra.mxu0 0.0
      %5326 = vmatprep.subr.mxu0 0.0
      %5327 = vmatpush1.msra.mxu0 0.0
      %5328 = vmatprep.subr.mxu0 0.0
      %5329 = vmatpush1.msra.mxu0 0.0
      %5330 = vmatprep.subr.mxu0 0.0
      %5331 = vmatpush1.msra.mxu0 0.0
      %5332 = vmatprep.subr.mxu0 0.0
      %5333 = vmatpush1.msra.mxu0 0.0
      %5334 = vmatprep.subr.mxu0 0.0
      %5335 = vmatpush1.msra.mxu0 0.0
      %5336 = vmatprep.subr.mxu0 0.0
      %5337 = vmatpush1.msra.mxu0 0.0
      %5338 = vmatprep.subr.mxu0 0.0
      %5339 = vmatpush1.msra.mxu0 0.0
      %5340 = vmatprep.subr.mxu0 0.0
      %5341 = vmatpush1.msra.mxu0 0.0
      %5342 = vmatprep.subr.mxu0 0.0
      %5343 = vmatpush1.msra.mxu0 0.0
      %5344 = vmatprep.subr.mxu0 0.0
      %5345 = vmatpush1.msra.mxu0 0.0
      %5346 = vmatprep.subr.mxu0 0.0
      %5347 = vmatpush1.msra.mxu0 0.0
      %5348 = vmatprep.subr.mxu0 0.0
      %5349 = vmatpush1.msra.mxu0 0.0
      %5350 = vmatprep.subr.mxu0 0.0
      %5351 = vmatpush1.msra.mxu0 0.0
      %5352 = vmatprep.subr.mxu0 0.0
      %5353 = vmatpush1.msra.mxu0 0.0
      %5354 = vmatprep.subr.mxu0 0.0
      %5355 = vmatpush1.msra.mxu0 0.0
      %5356 = vmatprep.mubr.f32.mxu0 0.0
      %5357 = vmatmul.mubr.f32.gmra.mrb[0].mxu0 %v5274
      %v5358 = vpop.f32.mrb[0].mxu0
      %v5359 = vadd.f32 0.0, %v5358
      %v5360 = vpop.f32.mrb[0].mxu0
      %v5361 = vadd.f32 0.0, %v5360
      %5362 = vdwg.mxu0
      %5363 = vmatprep.subr.mxu0 %v5282
      %5364 = vmatpush1.msra.mxu0 %v5280
      %5365 = vmatprep.subr.mxu0 0.0
      %5366 = vmatpush1.msra.mxu0 0.0
      %5367 = vmatprep.subr.mxu0 0.0
      %5368 = vmatpush1.msra.mxu0 0.0
      %5369 = vmatprep.subr.mxu0 0.0
      %5370 = vmatpush1.msra.mxu0 0.0
      %5371 = vmatprep.subr.mxu0 0.0
      %5372 = vmatpush1.msra.mxu0 0.0
      %5373 = vmatprep.subr.mxu0 0.0
      %5374 = vmatpush1.msra.mxu0 0.0
      %5375 = vmatprep.subr.mxu0 0.0
      %5376 = vmatpush1.msra.mxu0 0.0
      %5377 = vmatprep.subr.mxu0 0.0
      %5378 = vmatpush1.msra.mxu0 0.0
      %5379 = vmatprep.subr.mxu0 0.0
      %5380 = vmatpush1.msra.mxu0 0.0
      %5381 = vmatprep.subr.mxu0 0.0
      %5382 = vmatpush1.msra.mxu0 0.0
      %5383 = vmatprep.subr.mxu0 0.0
      %5384 = vmatpush1.msra.mxu0 0.0
      %5385 = vmatprep.subr.mxu0 0.0
      %5386 = vmatpush1.msra.mxu0 0.0
      %5387 = vmatprep.subr.mxu0 0.0
      %5388 = vmatpush1.msra.mxu0 0.0
      %5389 = vmatprep.subr.mxu0 0.0
      %5390 = vmatpush1.msra.mxu0 0.0
      %5391 = vmatprep.subr.mxu0 0.0
      %5392 = vmatpush1.msra.mxu0 0.0
      %5393 = vmatprep.subr.mxu0 0.0
      %5394 = vmatpush1.msra.mxu0 0.0
      %5395 = vmatprep.subr.mxu0 0.0
      %5396 = vmatpush1.msra.mxu0 0.0
      %5397 = vmatprep.subr.mxu0 0.0
      %5398 = vmatpush1.msra.mxu0 0.0
      %5399 = vmatprep.subr.mxu0 0.0
      %5400 = vmatpush1.msra.mxu0 0.0
      %5401 = vmatprep.subr.mxu0 0.0
      %5402 = vmatpush1.msra.mxu0 0.0
      %5403 = vmatprep.subr.mxu0 0.0
      %5404 = vmatpush1.msra.mxu0 0.0
      %5405 = vmatprep.subr.mxu0 0.0
      %5406 = vmatpush1.msra.mxu0 0.0
      %5407 = vmatprep.subr.mxu0 0.0
      %5408 = vmatpush1.msra.mxu0 0.0
      %5409 = vmatprep.subr.mxu0 0.0
      %5410 = vmatpush1.msra.mxu0 0.0
      %5411 = vmatprep.subr.mxu0 0.0
      %5412 = vmatpush1.msra.mxu0 0.0
      %5413 = vmatprep.subr.mxu0 0.0
      %5414 = vmatpush1.msra.mxu0 0.0
      %5415 = vmatprep.subr.mxu0 0.0
      %5416 = vmatpush1.msra.mxu0 0.0
      %5417 = vmatprep.subr.mxu0 0.0
      %5418 = vmatpush1.msra.mxu0 0.0
      %5419 = vmatprep.subr.mxu0 0.0
      %5420 = vmatpush1.msra.mxu0 0.0
      %5421 = vmatprep.subr.mxu0 0.0
      %5422 = vmatpush1.msra.mxu0 0.0
      %5423 = vmatprep.subr.mxu0 0.0
      %5424 = vmatpush1.msra.mxu0 0.0
      %5425 = vmatprep.subr.mxu0 0.0
      %5426 = vmatpush1.msra.mxu0 0.0
      %5427 = vmatprep.mubr.f32.mxu0 0.0
      %5428 = vmatmul.mubr.f32.gmra.mrb[0].mxu0 %v5274
      %v5429 = vpop.f32.mrb[0].mxu0
      %v5430 = vadd.f32 0.0, %v5429
      %v5431 = vpop.f32.mrb[0].mxu0
      %v5432 = vadd.f32 0.0, %v5431
      %5433 = vdwg.mxu0
      %5434 = vmatprep.subr.mxu0 %v5286
      %5435 = vmatpush1.msra.mxu0 %v5284
      %5436 = vmatprep.subr.mxu0 0.0
      %5437 = vmatpush1.msra.mxu0 0.0
      %5438 = vmatprep.subr.mxu0 0.0
      %5439 = vmatpush1.msra.mxu0 0.0
      %5440 = vmatprep.subr.mxu0 0.0
      %5441 = vmatpush1.msra.mxu0 0.0
      %5442 = vmatprep.subr.mxu0 0.0
      %5443 = vmatpush1.msra.mxu0 0.0
      %5444 = vmatprep.subr.mxu0 0.0
      %5445 = vmatpush1.msra.mxu0 0.0
      %5446 = vmatprep.subr.mxu0 0.0
      %5447 = vmatpush1.msra.mxu0 0.0
      %5448 = vmatprep.subr.mxu0 0.0
      %5449 = vmatpush1.msra.mxu0 0.0
      %5450 = vmatprep.subr.mxu0 0.0
      %5451 = vmatpush1.msra.mxu0 0.0
      %5452 = vmatprep.subr.mxu0 0.0
      %5453 = vmatpush1.msra.mxu0 0.0
      %5454 = vmatprep.subr.mxu0 0.0
      %5455 = vmatpush1.msra.mxu0 0.0
      %5456 = vmatprep.subr.mxu0 0.0
      %5457 = vmatpush1.msra.mxu0 0.0
      %5458 = vmatprep.subr.mxu0 0.0
      %5459 = vmatpush1.msra.mxu0 0.0
      %5460 = vmatprep.subr.mxu0 0.0
      %5461 = vmatpush1.msra.mxu0 0.0
      %5462 = vmatprep.subr.mxu0 0.0
      %5463 = vmatpush1.msra.mxu0 0.0
      %5464 = vmatprep.subr.mxu0 0.0
      %5465 = vmatpush1.msra.mxu0 0.0
      %5466 = vmatprep.subr.mxu0 0.0
      %5467 = vmatpush1.msra.mxu0 0.0
      %5468 = vmatprep.subr.mxu0 0.0
      %5469 = vmatpush1.msra.mxu0 0.0
      %5470 = vmatprep.subr.mxu0 0.0
      %5471 = vmatpush1.msra.mxu0 0.0
      %5472 = vmatprep.subr.mxu0 0.0
      %5473 = vmatpush1.msra.mxu0 0.0
      %5474 = vmatprep.subr.mxu0 0.0
      %5475 = vmatpush1.msra.mxu0 0.0
      %5476 = vmatprep.subr.mxu0 0.0
      %5477 = vmatpush1.msra.mxu0 0.0
      %5478 = vmatprep.subr.mxu0 0.0
      %5479 = vmatpush1.msra.mxu0 0.0
      %5480 = vmatprep.subr.mxu0 0.0
      %5481 = vmatpush1.msra.mxu0 0.0
      %5482 = vmatprep.subr.mxu0 0.0
      %5483 = vmatpush1.msra.mxu0 0.0
      %5484 = vmatprep.subr.mxu0 0.0
      %5485 = vmatpush1.msra.mxu0 0.0
      %5486 = vmatprep.subr.mxu0 0.0
      %5487 = vmatpush1.msra.mxu0 0.0
      %5488 = vmatprep.subr.mxu0 0.0
      %5489 = vmatpush1.msra.mxu0 0.0
      %5490 = vmatprep.subr.mxu0 0.0
      %5491 = vmatpush1.msra.mxu0 0.0
      %5492 = vmatprep.subr.mxu0 0.0
      %5493 = vmatpush1.msra.mxu0 0.0
      %5494 = vmatprep.subr.mxu0 0.0
      %5495 = vmatpush1.msra.mxu0 0.0
      %5496 = vmatprep.subr.mxu0 0.0
      %5497 = vmatpush1.msra.mxu0 0.0
      %5498 = vmatprep.mubr.f32.mxu0 0.0
      %5499 = vmatmul.mubr.f32.gmra.mrb[0].mxu0 %v5274
      %v5500 = vpop.f32.mrb[0].mxu0
      %v5501 = vadd.f32 0.0, %v5500
      %v5502 = vpop.f32.mrb[0].mxu0
      %v5503 = vadd.f32 0.0, %v5502
      %5504 = vdwg.mxu0
      %5505 = vmatprep.subr.mxu0 %v5290
      %5506 = vmatpush1.msra.mxu0 %v5288
      %5507 = vmatprep.subr.mxu0 0.0
      %5508 = vmatpush1.msra.mxu0 0.0
      %5509 = vmatprep.subr.mxu0 0.0
      %5510 = vmatpush1.msra.mxu0 0.0
      %5511 = vmatprep.subr.mxu0 0.0
      %5512 = vmatpush1.msra.mxu0 0.0
      %5513 = vmatprep.subr.mxu0 0.0
      %5514 = vmatpush1.msra.mxu0 0.0
      %5515 = vmatprep.subr.mxu0 0.0
      %5516 = vmatpush1.msra.mxu0 0.0
      %5517 = vmatprep.subr.mxu0 0.0
      %5518 = vmatpush1.msra.mxu0 0.0
      %5519 = vmatprep.subr.mxu0 0.0
      %5520 = vmatpush1.msra.mxu0 0.0
      %5521 = vmatprep.subr.mxu0 0.0
      %5522 = vmatpush1.msra.mxu0 0.0
      %5523 = vmatprep.subr.mxu0 0.0
      %5524 = vmatpush1.msra.mxu0 0.0
      %5525 = vmatprep.subr.mxu0 0.0
      %5526 = vmatpush1.msra.mxu0 0.0
      %5527 = vmatprep.subr.mxu0 0.0
      %5528 = vmatpush1.msra.mxu0 0.0
      %5529 = vmatprep.subr.mxu0 0.0
      %5530 = vmatpush1.msra.mxu0 0.0
      %5531 = vmatprep.subr.mxu0 0.0
      %5532 = vmatpush1.msra.mxu0 0.0
      %5533 = vmatprep.subr.mxu0 0.0
      %5534 = vmatpush1.msra.mxu0 0.0
      %5535 = vmatprep.subr.mxu0 0.0
      %5536 = vmatpush1.msra.mxu0 0.0
      %5537 = vmatprep.subr.mxu0 0.0
      %5538 = vmatpush1.msra.mxu0 0.0
      %5539 = vmatprep.subr.mxu0 0.0
      %5540 = vmatpush1.msra.mxu0 0.0
      %5541 = vmatprep.subr.mxu0 0.0
      %5542 = vmatpush1.msra.mxu0 0.0
      %5543 = vmatprep.subr.mxu0 0.0
      %5544 = vmatpush1.msra.mxu0 0.0
      %5545 = vmatprep.subr.mxu0 0.0
      %5546 = vmatpush1.msra.mxu0 0.0
      %5547 = vmatprep.subr.mxu0 0.0
      %5548 = vmatpush1.msra.mxu0 0.0
      %5549 = vmatprep.subr.mxu0 0.0
      %5550 = vmatpush1.msra.mxu0 0.0
      %5551 = vmatprep.subr.mxu0 0.0
      %5552 = vmatpush1.msra.mxu0 0.0
      %5553 = vmatprep.subr.mxu0 0.0
      %5554 = vmatpush1.msra.mxu0 0.0
      %5555 = vmatprep.subr.mxu0 0.0
      %5556 = vmatpush1.msra.mxu0 0.0
      %5557 = vmatprep.subr.mxu0 0.0
      %5558 = vmatpush1.msra.mxu0 0.0
      %5559 = vmatprep.subr.mxu0 0.0
      %5560 = vmatpush1.msra.mxu0 0.0
      %5561 = vmatprep.subr.mxu0 0.0
      %5562 = vmatpush1.msra.mxu0 0.0
      %5563 = vmatprep.subr.mxu0 0.0
      %5564 = vmatpush1.msra.mxu0 0.0
      %5565 = vmatprep.subr.mxu0 0.0
      %5566 = vmatpush1.msra.mxu0 0.0
      %5567 = vmatprep.subr.mxu0 0.0
      %5568 = vmatpush1.msra.mxu0 0.0
      %5569 = vmatprep.mubr.f32.mxu0 0.0
      %5570 = vmatmul.mubr.f32.gmra.mrb[0].mxu0 %v5274
      %v5571 = vpop.f32.mrb[0].mxu0
      %v5572 = vadd.f32 0.0, %v5571
      %v5573 = vpop.f32.mrb[0].mxu0
      %v5574 = vadd.f32 0.0, %v5573
      %5575 = vdwg.mxu0
      %v5576 = vadd.f32 %v5263, %v5359
      %v5577 = vadd.f32 %v5264, %v5361
      %v5578 = vadd.f32 %v5265, %v5430
      %v5579 = vadd.f32 %v5266, %v5432
      %v5580 = vadd.f32 %v5267, %v5501
      %v5581 = vadd.f32 %v5268, %v5503
      %v5582 = vadd.f32 %v5269, %v5572
      %v5583 = vadd.f32 %v5270, %v5574
      %5584 = vrot.lane.b32.xlu0 %v3646, 127
      %v5585 = vpop.permute.xlu0 %5584
      %5586 = vrot.lane.b32.xlu0 %v3647, 127
      %v5587 = vpop.permute.xlu0 %5586
      %5588 = vrot.lane.b32.xlu0 %v3648, 127
      %v5589 = vpop.permute.xlu0 %5588
      %v5590 = vrot.slane %v5585, 2
      %v5591 = vrot.slane %v5587, 2
      %v5592 = vrot.slane %v5589, 2
      %v5593 = vrot.slane %v5585, 4
      %v5594 = vrot.slane %v5587, 4
      %v5595 = vrot.slane %v5589, 4
      %vm5596 = vcmask 1045504
      %v5597 = vsel %vm5596, %v5590, %v5591
      %v5598 = vsel %vm377, %v5593, %v5594
      %v5599 = vsel %vm1504, %v5597, %v5598
      %v5600 = vsel %vm5596, %v5591, %v5592
      %v5601 = vsel %vm377, %v5594, %v5595
      %v5602 = vsel %vm1504, %v5600, %v5601
      %v5607 = vmul.f32 %v5599, %v4459
      %v5608 = vmul.f32 %v5602, %v4474
      %s5609 = scalar_lea.vmem %s1, 10
      %v5610 = vld [vmem:[%s5609] sm:$0x3]
      %v5613 = vcombine.high %v5607, %v5607
      %v5615 = vunpack.c.l.s4 1983009808
      %v5616 = vunpack.c.0.s8 %v5615
      %v5617 = vlaneseq
      %v5618 = vshrl.u32 %v5617, 7
      %v5619 = vsub.s32 %v5616, %v5618
      %v5620 = vrot.slane %v5607, %v5619
      %v5622 = vunpack.c.l.s4 1983009808
      %v5623 = vunpack.c.0.s8 %v5622
      %v5624 = vlaneseq
      %v5625 = vshrl.u32 %v5624, 7
      %v5626 = vsub.s32 %v5623, %v5625
      %v5627 = vrot.slane %v5613, %v5626
      %v5628 = vcombine.high %v5620, %v5620
      %v5629 = vcombine.high %v5627, %v5627
      %v5630 = vcombine.high %v5608, %v5608
      %v5632 = vunpack.c.l.s4 1983009808
      %v5633 = vunpack.c.0.s8 %v5632
      %v5634 = vlaneseq
      %v5635 = vshrl.u32 %v5634, 7
      %v5636 = vsub.s32 %v5633, %v5635
      %v5637 = vrot.slane %v5608, %v5636
      %v5639 = vunpack.c.l.s4 1983009808
      %v5640 = vunpack.c.0.s8 %v5639
      %v5641 = vlaneseq
      %v5642 = vshrl.u32 %v5641, 7
      %v5643 = vsub.s32 %v5640, %v5642
      %v5644 = vrot.slane %v5630, %v5643
      %v5645 = vcombine.high %v5637, %v5637
      %v5646 = vcombine.high %v5644, %v5644
      %v5648 = vsel %vm3768, %v5610, 0
      %v5650 = vsel %vm3686, %v5620, 0
      %v5652 = vsel %vm3686, %v5628, 0
      %v5654 = vsel %vm3686, %v5627, 0
      %v5656 = vsel %vm3686, %v5629, 0
      %v5658 = vsel %vm3686, %v5637, 0
      %v5660 = vsel %vm3686, %v5645, 0
      %v5662 = vsel %vm3686, %v5644, 0
      %v5664 = vsel %vm3686, %v5646, 0
      %5666 = vmatprep.subr.mxu0 %v5652
      %5667 = vmatpush1.msra.mxu0 %v5650
      %5668 = vmatprep.subr.mxu0 0.0
      %5669 = vmatpush1.msra.mxu0 0.0
      %5670 = vmatprep.subr.mxu0 0.0
      %5671 = vmatpush1.msra.mxu0 0.0
      %5672 = vmatprep.subr.mxu0 0.0
      %5673 = vmatpush1.msra.mxu0 0.0
      %5674 = vmatprep.subr.mxu0 0.0
      %5675 = vmatpush1.msra.mxu0 0.0
      %5676 = vmatprep.subr.mxu0 0.0
      %5677 = vmatpush1.msra.mxu0 0.0
      %5678 = vmatprep.subr.mxu0 0.0
      %5679 = vmatpush1.msra.mxu0 0.0
      %5680 = vmatprep.subr.mxu0 0.0
      %5681 = vmatpush1.msra.mxu0 0.0
      %5682 = vmatprep.subr.mxu0 0.0
      %5683 = vmatpush1.msra.mxu0 0.0
      %5684 = vmatprep.subr.mxu0 0.0
      %5685 = vmatpush1.msra.mxu0 0.0
      %5686 = vmatprep.subr.mxu0 0.0
      %5687 = vmatpush1.msra.mxu0 0.0
      %5688 = vmatprep.subr.mxu0 0.0
      %5689 = vmatpush1.msra.mxu0 0.0
      %5690 = vmatprep.subr.mxu0 0.0
      %5691 = vmatpush1.msra.mxu0 0.0
      %5692 = vmatprep.subr.mxu0 0.0
      %5693 = vmatpush1.msra.mxu0 0.0
      %5694 = vmatprep.subr.mxu0 0.0
      %5695 = vmatpush1.msra.mxu0 0.0
      %5696 = vmatprep.subr.mxu0 0.0
      %5697 = vmatpush1.msra.mxu0 0.0
      %5698 = vmatprep.subr.mxu0 0.0
      %5699 = vmatpush1.msra.mxu0 0.0
      %5700 = vmatprep.subr.mxu0 0.0
      %5701 = vmatpush1.msra.mxu0 0.0
      %5702 = vmatprep.subr.mxu0 0.0
      %5703 = vmatpush1.msra.mxu0 0.0
      %5704 = vmatprep.subr.mxu0 0.0
      %5705 = vmatpush1.msra.mxu0 0.0
      %5706 = vmatprep.subr.mxu0 0.0
      %5707 = vmatpush1.msra.mxu0 0.0
      %5708 = vmatprep.subr.mxu0 0.0
      %5709 = vmatpush1.msra.mxu0 0.0
      %5710 = vmatprep.subr.mxu0 0.0
      %5711 = vmatpush1.msra.mxu0 0.0
      %5712 = vmatprep.subr.mxu0 0.0
      %5713 = vmatpush1.msra.mxu0 0.0
      %5714 = vmatprep.subr.mxu0 0.0
      %5715 = vmatpush1.msra.mxu0 0.0
      %5716 = vmatprep.subr.mxu0 0.0
      %5717 = vmatpush1.msra.mxu0 0.0
      %5718 = vmatprep.subr.mxu0 0.0
      %5719 = vmatpush1.msra.mxu0 0.0
      %5720 = vmatprep.subr.mxu0 0.0
      %5721 = vmatpush1.msra.mxu0 0.0
      %5722 = vmatprep.subr.mxu0 0.0
      %5723 = vmatpush1.msra.mxu0 0.0
      %5724 = vmatprep.subr.mxu0 0.0
      %5725 = vmatpush1.msra.mxu0 0.0
      %5726 = vmatprep.subr.mxu0 0.0
      %5727 = vmatpush1.msra.mxu0 0.0
      %5728 = vmatprep.subr.mxu0 0.0
      %5729 = vmatpush1.msra.mxu0 0.0
      %5730 = vmatprep.mubr.f32.mxu0 0.0
      %5731 = vmatmul.mubr.f32.gmra.mrb[0].mxu0 %v5648
      %v5732 = vpop.f32.mrb[0].mxu0
      %v5733 = vadd.f32 0.0, %v5732
      %v5734 = vpop.f32.mrb[0].mxu0
      %v5735 = vadd.f32 0.0, %v5734
      %5736 = vdwg.mxu0
      %5737 = vmatprep.subr.mxu0 %v5656
      %5738 = vmatpush1.msra.mxu0 %v5654
      %5739 = vmatprep.subr.mxu0 0.0
      %5740 = vmatpush1.msra.mxu0 0.0
      %5741 = vmatprep.subr.mxu0 0.0
      %5742 = vmatpush1.msra.mxu0 0.0
      %5743 = vmatprep.subr.mxu0 0.0
      %5744 = vmatpush1.msra.mxu0 0.0
      %5745 = vmatprep.subr.mxu0 0.0
      %5746 = vmatpush1.msra.mxu0 0.0
      %5747 = vmatprep.subr.mxu0 0.0
      %5748 = vmatpush1.msra.mxu0 0.0
      %5749 = vmatprep.subr.mxu0 0.0
      %5750 = vmatpush1.msra.mxu0 0.0
      %5751 = vmatprep.subr.mxu0 0.0
      %5752 = vmatpush1.msra.mxu0 0.0
      %5753 = vmatprep.subr.mxu0 0.0
      %5754 = vmatpush1.msra.mxu0 0.0
      %5755 = vmatprep.subr.mxu0 0.0
      %5756 = vmatpush1.msra.mxu0 0.0
      %5757 = vmatprep.subr.mxu0 0.0
      %5758 = vmatpush1.msra.mxu0 0.0
      %5759 = vmatprep.subr.mxu0 0.0
      %5760 = vmatpush1.msra.mxu0 0.0
      %5761 = vmatprep.subr.mxu0 0.0
      %5762 = vmatpush1.msra.mxu0 0.0
      %5763 = vmatprep.subr.mxu0 0.0
      %5764 = vmatpush1.msra.mxu0 0.0
      %5765 = vmatprep.subr.mxu0 0.0
      %5766 = vmatpush1.msra.mxu0 0.0
      %5767 = vmatprep.subr.mxu0 0.0
      %5768 = vmatpush1.msra.mxu0 0.0
      %5769 = vmatprep.subr.mxu0 0.0
      %5770 = vmatpush1.msra.mxu0 0.0
      %5771 = vmatprep.subr.mxu0 0.0
      %5772 = vmatpush1.msra.mxu0 0.0
      %5773 = vmatprep.subr.mxu0 0.0
      %5774 = vmatpush1.msra.mxu0 0.0
      %5775 = vmatprep.subr.mxu0 0.0
      %5776 = vmatpush1.msra.mxu0 0.0
      %5777 = vmatprep.subr.mxu0 0.0
      %5778 = vmatpush1.msra.mxu0 0.0
      %5779 = vmatprep.subr.mxu0 0.0
      %5780 = vmatpush1.msra.mxu0 0.0
      %5781 = vmatprep.subr.mxu0 0.0
      %5782 = vmatpush1.msra.mxu0 0.0
      %5783 = vmatprep.subr.mxu0 0.0
      %5784 = vmatpush1.msra.mxu0 0.0
      %5785 = vmatprep.subr.mxu0 0.0
      %5786 = vmatpush1.msra.mxu0 0.0
      %5787 = vmatprep.subr.mxu0 0.0
      %5788 = vmatpush1.msra.mxu0 0.0
      %5789 = vmatprep.subr.mxu0 0.0
      %5790 = vmatpush1.msra.mxu0 0.0
      %5791 = vmatprep.subr.mxu0 0.0
      %5792 = vmatpush1.msra.mxu0 0.0
      %5793 = vmatprep.subr.mxu0 0.0
      %5794 = vmatpush1.msra.mxu0 0.0
      %5795 = vmatprep.subr.mxu0 0.0
      %5796 = vmatpush1.msra.mxu0 0.0
      %5797 = vmatprep.subr.mxu0 0.0
      %5798 = vmatpush1.msra.mxu0 0.0
      %5799 = vmatprep.subr.mxu0 0.0
      %5800 = vmatpush1.msra.mxu0 0.0
      %5801 = vmatprep.mubr.f32.mxu0 0.0
      %5802 = vmatmul.mubr.f32.gmra.mrb[0].mxu0 %v5648
      %v5803 = vpop.f32.mrb[0].mxu0
      %v5804 = vadd.f32 0.0, %v5803
      %v5805 = vpop.f32.mrb[0].mxu0
      %v5806 = vadd.f32 0.0, %v5805
      %5807 = vdwg.mxu0
      %5808 = vmatprep.subr.mxu0 %v5660
      %5809 = vmatpush1.msra.mxu0 %v5658
      %5810 = vmatprep.subr.mxu0 0.0
      %5811 = vmatpush1.msra.mxu0 0.0
      %5812 = vmatprep.subr.mxu0 0.0
      %5813 = vmatpush1.msra.mxu0 0.0
      %5814 = vmatprep.subr.mxu0 0.0
      %5815 = vmatpush1.msra.mxu0 0.0
      %5816 = vmatprep.subr.mxu0 0.0
      %5817 = vmatpush1.msra.mxu0 0.0
      %5818 = vmatprep.subr.mxu0 0.0
      %5819 = vmatpush1.msra.mxu0 0.0
      %5820 = vmatprep.subr.mxu0 0.0
      %5821 = vmatpush1.msra.mxu0 0.0
      %5822 = vmatprep.subr.mxu0 0.0
      %5823 = vmatpush1.msra.mxu0 0.0
      %5824 = vmatprep.subr.mxu0 0.0
      %5825 = vmatpush1.msra.mxu0 0.0
      %5826 = vmatprep.subr.mxu0 0.0
      %5827 = vmatpush1.msra.mxu0 0.0
      %5828 = vmatprep.subr.mxu0 0.0
      %5829 = vmatpush1.msra.mxu0 0.0
      %5830 = vmatprep.subr.mxu0 0.0
      %5831 = vmatpush1.msra.mxu0 0.0
      %5832 = vmatprep.subr.mxu0 0.0
      %5833 = vmatpush1.msra.mxu0 0.0
      %5834 = vmatprep.subr.mxu0 0.0
      %5835 = vmatpush1.msra.mxu0 0.0
      %5836 = vmatprep.subr.mxu0 0.0
      %5837 = vmatpush1.msra.mxu0 0.0
      %5838 = vmatprep.subr.mxu0 0.0
      %5839 = vmatpush1.msra.mxu0 0.0
      %5840 = vmatprep.subr.mxu0 0.0
      %5841 = vmatpush1.msra.mxu0 0.0
      %5842 = vmatprep.subr.mxu0 0.0
      %5843 = vmatpush1.msra.mxu0 0.0
      %5844 = vmatprep.subr.mxu0 0.0
      %5845 = vmatpush1.msra.mxu0 0.0
      %5846 = vmatprep.subr.mxu0 0.0
      %5847 = vmatpush1.msra.mxu0 0.0
      %5848 = vmatprep.subr.mxu0 0.0
      %5849 = vmatpush1.msra.mxu0 0.0
      %5850 = vmatprep.subr.mxu0 0.0
      %5851 = vmatpush1.msra.mxu0 0.0
      %5852 = vmatprep.subr.mxu0 0.0
      %5853 = vmatpush1.msra.mxu0 0.0
      %5854 = vmatprep.subr.mxu0 0.0
      %5855 = vmatpush1.msra.mxu0 0.0
      %5856 = vmatprep.subr.mxu0 0.0
      %5857 = vmatpush1.msra.mxu0 0.0
      %5858 = vmatprep.subr.mxu0 0.0
      %5859 = vmatpush1.msra.mxu0 0.0
      %5860 = vmatprep.subr.mxu0 0.0
      %5861 = vmatpush1.msra.mxu0 0.0
      %5862 = vmatprep.subr.mxu0 0.0
      %5863 = vmatpush1.msra.mxu0 0.0
      %5864 = vmatprep.subr.mxu0 0.0
      %5865 = vmatpush1.msra.mxu0 0.0
      %5866 = vmatprep.subr.mxu0 0.0
      %5867 = vmatpush1.msra.mxu0 0.0
      %5868 = vmatprep.subr.mxu0 0.0
      %5869 = vmatpush1.msra.mxu0 0.0
      %5870 = vmatprep.subr.mxu0 0.0
      %5871 = vmatpush1.msra.mxu0 0.0
      %5872 = vmatprep.mubr.f32.mxu0 0.0
      %5873 = vmatmul.mubr.f32.gmra.mrb[0].mxu0 %v5648
      %v5874 = vpop.f32.mrb[0].mxu0
      %v5875 = vadd.f32 0.0, %v5874
      %v5876 = vpop.f32.mrb[0].mxu0
      %v5877 = vadd.f32 0.0, %v5876
      %5878 = vdwg.mxu0
      %5879 = vmatprep.subr.mxu0 %v5664
      %5880 = vmatpush1.msra.mxu0 %v5662
      %5881 = vmatprep.subr.mxu0 0.0
      %5882 = vmatpush1.msra.mxu0 0.0
      %5883 = vmatprep.subr.mxu0 0.0
      %5884 = vmatpush1.msra.mxu0 0.0
      %5885 = vmatprep.subr.mxu0 0.0
      %5886 = vmatpush1.msra.mxu0 0.0
      %5887 = vmatprep.subr.mxu0 0.0
      %5888 = vmatpush1.msra.mxu0 0.0
      %5889 = vmatprep.subr.mxu0 0.0
      %5890 = vmatpush1.msra.mxu0 0.0
      %5891 = vmatprep.subr.mxu0 0.0
      %5892 = vmatpush1.msra.mxu0 0.0
      %5893 = vmatprep.subr.mxu0 0.0
      %5894 = vmatpush1.msra.mxu0 0.0
      %5895 = vmatprep.subr.mxu0 0.0
      %5896 = vmatpush1.msra.mxu0 0.0
      %5897 = vmatprep.subr.mxu0 0.0
      %5898 = vmatpush1.msra.mxu0 0.0
      %5899 = vmatprep.subr.mxu0 0.0
      %5900 = vmatpush1.msra.mxu0 0.0
      %5901 = vmatprep.subr.mxu0 0.0
      %5902 = vmatpush1.msra.mxu0 0.0
      %5903 = vmatprep.subr.mxu0 0.0
      %5904 = vmatpush1.msra.mxu0 0.0
      %5905 = vmatprep.subr.mxu0 0.0
      %5906 = vmatpush1.msra.mxu0 0.0
      %5907 = vmatprep.subr.mxu0 0.0
      %5908 = vmatpush1.msra.mxu0 0.0
      %5909 = vmatprep.subr.mxu0 0.0
      %5910 = vmatpush1.msra.mxu0 0.0
      %5911 = vmatprep.subr.mxu0 0.0
      %5912 = vmatpush1.msra.mxu0 0.0
      %5913 = vmatprep.subr.mxu0 0.0
      %5914 = vmatpush1.msra.mxu0 0.0
      %5915 = vmatprep.subr.mxu0 0.0
      %5916 = vmatpush1.msra.mxu0 0.0
      %5917 = vmatprep.subr.mxu0 0.0
      %5918 = vmatpush1.msra.mxu0 0.0
      %5919 = vmatprep.subr.mxu0 0.0
      %5920 = vmatpush1.msra.mxu0 0.0
      %5921 = vmatprep.subr.mxu0 0.0
      %5922 = vmatpush1.msra.mxu0 0.0
      %5923 = vmatprep.subr.mxu0 0.0
      %5924 = vmatpush1.msra.mxu0 0.0
      %5925 = vmatprep.subr.mxu0 0.0
      %5926 = vmatpush1.msra.mxu0 0.0
      %5927 = vmatprep.subr.mxu0 0.0
      %5928 = vmatpush1.msra.mxu0 0.0
      %5929 = vmatprep.subr.mxu0 0.0
      %5930 = vmatpush1.msra.mxu0 0.0
      %5931 = vmatprep.subr.mxu0 0.0
      %5932 = vmatpush1.msra.mxu0 0.0
      %5933 = vmatprep.subr.mxu0 0.0
      %5934 = vmatpush1.msra.mxu0 0.0
      %5935 = vmatprep.subr.mxu0 0.0
      %5936 = vmatpush1.msra.mxu0 0.0
      %5937 = vmatprep.subr.mxu0 0.0
      %5938 = vmatpush1.msra.mxu0 0.0
      %5939 = vmatprep.subr.mxu0 0.0
      %5940 = vmatpush1.msra.mxu0 0.0
      %5941 = vmatprep.subr.mxu0 0.0
      %5942 = vmatpush1.msra.mxu0 0.0
      %5943 = vmatprep.mubr.f32.mxu0 0.0
      %5944 = vmatmul.mubr.f32.gmra.mrb[0].mxu0 %v5648
      %v5945 = vpop.f32.mrb[0].mxu0
      %v5946 = vadd.f32 0.0, %v5945
      %v5947 = vpop.f32.mrb[0].mxu0
      %v5948 = vadd.f32 0.0, %v5947
      %5949 = vdwg.mxu0
      %v5950 = vadd.f32 %v5576, %v5733
      %v5951 = vadd.f32 %v5577, %v5735
      %v5952 = vadd.f32 %v5578, %v5804
      %v5953 = vadd.f32 %v5579, %v5806
      %v5954 = vadd.f32 %v5580, %v5875
      %v5955 = vadd.f32 %v5581, %v5877
      %v5956 = vadd.f32 %v5582, %v5946
      %v5957 = vadd.f32 %v5583, %v5948
      %5958 = vrot.lane.b32.xlu0 %v3646, 97
      %v5959 = vpop.permute.xlu0 %5958
      %5960 = vrot.lane.b32.xlu0 %v3647, 97
      %v5961 = vpop.permute.xlu0 %5960
      %5962 = vrot.lane.b32.xlu0 %v3648, 97
      %v5963 = vpop.permute.xlu0 %5962
      %v5964 = vrot.slane %v5959, 2
      %v5965 = vrot.slane %v5961, 2
      %v5966 = vrot.slane %v5963, 2
      %v5967 = vrot.slane %v5959, 4
      %v5968 = vrot.slane %v5961, 4
      %v5969 = vrot.slane %v5963, 4
      %v5970 = vsel %vm5596, %v5964, %v5965
      %v5971 = vsel %vm377, %v5967, %v5968
      %v5972 = vsel %vm1125, %v5970, %v5971
      %v5973 = vsel %vm5596, %v5965, %v5966
      %v5974 = vsel %vm377, %v5968, %v5969
      %v5975 = vsel %vm1125, %v5973, %v5974
      %v5980 = vmul.f32 %v5972, %v3663
      %v5981 = vmul.f32 %v5975, %v3678
      %s5982 = scalar_lea.vmem %s1, 12
      %v5983 = vld [vmem:[%s5982] sm:$0x3]
      %v5986 = vcombine.high %v5980, %v5980
      %v5988 = vunpack.c.l.s4 1983009808
      %v5989 = vunpack.c.0.s8 %v5988
      %v5990 = vlaneseq
      %v5991 = vshrl.u32 %v5990, 7
      %v5992 = vsub.s32 %v5989, %v5991
      %v5993 = vrot.slane %v5980, %v5992
      %v5995 = vunpack.c.l.s4 1983009808
      %v5996 = vunpack.c.0.s8 %v5995
      %v5997 = vlaneseq
      %v5998 = vshrl.u32 %v5997, 7
      %v5999 = vsub.s32 %v5996, %v5998
      %v6000 = vrot.slane %v5986, %v5999
      %v6001 = vcombine.high %v5993, %v5993
      %v6002 = vcombine.high %v6000, %v6000
      %v6003 = vcombine.high %v5981, %v5981
      %v6005 = vunpack.c.l.s4 1983009808
      %v6006 = vunpack.c.0.s8 %v6005
      %v6007 = vlaneseq
      %v6008 = vshrl.u32 %v6007, 7
      %v6009 = vsub.s32 %v6006, %v6008
      %v6010 = vrot.slane %v5981, %v6009
      %v6012 = vunpack.c.l.s4 1983009808
      %v6013 = vunpack.c.0.s8 %v6012
      %v6014 = vlaneseq
      %v6015 = vshrl.u32 %v6014, 7
      %v6016 = vsub.s32 %v6013, %v6015
      %v6017 = vrot.slane %v6003, %v6016
      %v6018 = vcombine.high %v6010, %v6010
      %v6019 = vcombine.high %v6017, %v6017
      %v6021 = vsel %vm3768, %v5983, 0
      %v6023 = vsel %vm3686, %v5993, 0
      %v6025 = vsel %vm3686, %v6001, 0
      %v6027 = vsel %vm3686, %v6000, 0
      %v6029 = vsel %vm3686, %v6002, 0
      %v6031 = vsel %vm3686, %v6010, 0
      %v6033 = vsel %vm3686, %v6018, 0
      %v6035 = vsel %vm3686, %v6017, 0
      %v6037 = vsel %vm3686, %v6019, 0
      %6039 = vmatprep.subr.mxu0 %v6025
      %6040 = vmatpush1.msra.mxu0 %v6023
      %6041 = vmatprep.subr.mxu0 0.0
      %6042 = vmatpush1.msra.mxu0 0.0
      %6043 = vmatprep.subr.mxu0 0.0
      %6044 = vmatpush1.msra.mxu0 0.0
      %6045 = vmatprep.subr.mxu0 0.0
      %6046 = vmatpush1.msra.mxu0 0.0
      %6047 = vmatprep.subr.mxu0 0.0
      %6048 = vmatpush1.msra.mxu0 0.0
      %6049 = vmatprep.subr.mxu0 0.0
      %6050 = vmatpush1.msra.mxu0 0.0
      %6051 = vmatprep.subr.mxu0 0.0
      %6052 = vmatpush1.msra.mxu0 0.0
      %6053 = vmatprep.subr.mxu0 0.0
      %6054 = vmatpush1.msra.mxu0 0.0
      %6055 = vmatprep.subr.mxu0 0.0
      %6056 = vmatpush1.msra.mxu0 0.0
      %6057 = vmatprep.subr.mxu0 0.0
      %6058 = vmatpush1.msra.mxu0 0.0
      %6059 = vmatprep.subr.mxu0 0.0
      %6060 = vmatpush1.msra.mxu0 0.0
      %6061 = vmatprep.subr.mxu0 0.0
      %6062 = vmatpush1.msra.mxu0 0.0
      %6063 = vmatprep.subr.mxu0 0.0
      %6064 = vmatpush1.msra.mxu0 0.0
      %6065 = vmatprep.subr.mxu0 0.0
      %6066 = vmatpush1.msra.mxu0 0.0
      %6067 = vmatprep.subr.mxu0 0.0
      %6068 = vmatpush1.msra.mxu0 0.0
      %6069 = vmatprep.subr.mxu0 0.0
      %6070 = vmatpush1.msra.mxu0 0.0
      %6071 = vmatprep.subr.mxu0 0.0
      %6072 = vmatpush1.msra.mxu0 0.0
      %6073 = vmatprep.subr.mxu0 0.0
      %6074 = vmatpush1.msra.mxu0 0.0
      %6075 = vmatprep.subr.mxu0 0.0
      %6076 = vmatpush1.msra.mxu0 0.0
      %6077 = vmatprep.subr.mxu0 0.0
      %6078 = vmatpush1.msra.mxu0 0.0
      %6079 = vmatprep.subr.mxu0 0.0
      %6080 = vmatpush1.msra.mxu0 0.0
      %6081 = vmatprep.subr.mxu0 0.0
      %6082 = vmatpush1.msra.mxu0 0.0
      %6083 = vmatprep.subr.mxu0 0.0
      %6084 = vmatpush1.msra.mxu0 0.0
      %6085 = vmatprep.subr.mxu0 0.0
      %6086 = vmatpush1.msra.mxu0 0.0
      %6087 = vmatprep.subr.mxu0 0.0
      %6088 = vmatpush1.msra.mxu0 0.0
      %6089 = vmatprep.subr.mxu0 0.0
      %6090 = vmatpush1.msra.mxu0 0.0
      %6091 = vmatprep.subr.mxu0 0.0
      %6092 = vmatpush1.msra.mxu0 0.0
      %6093 = vmatprep.subr.mxu0 0.0
      %6094 = vmatpush1.msra.mxu0 0.0
      %6095 = vmatprep.subr.mxu0 0.0
      %6096 = vmatpush1.msra.mxu0 0.0
      %6097 = vmatprep.subr.mxu0 0.0
      %6098 = vmatpush1.msra.mxu0 0.0
      %6099 = vmatprep.subr.mxu0 0.0
      %6100 = vmatpush1.msra.mxu0 0.0
      %6101 = vmatprep.subr.mxu0 0.0
      %6102 = vmatpush1.msra.mxu0 0.0
      %6103 = vmatprep.mubr.f32.mxu0 0.0
      %6104 = vmatmul.mubr.f32.gmra.mrb[0].mxu0 %v6021
      %v6105 = vpop.f32.mrb[0].mxu0
      %v6106 = vadd.f32 0.0, %v6105
      %v6107 = vpop.f32.mrb[0].mxu0
      %v6108 = vadd.f32 0.0, %v6107
      %6109 = vdwg.mxu0
      %6110 = vmatprep.subr.mxu0 %v6029
      %6111 = vmatpush1.msra.mxu0 %v6027
      %6112 = vmatprep.subr.mxu0 0.0
      %6113 = vmatpush1.msra.mxu0 0.0
      %6114 = vmatprep.subr.mxu0 0.0
      %6115 = vmatpush1.msra.mxu0 0.0
      %6116 = vmatprep.subr.mxu0 0.0
      %6117 = vmatpush1.msra.mxu0 0.0
      %6118 = vmatprep.subr.mxu0 0.0
      %6119 = vmatpush1.msra.mxu0 0.0
      %6120 = vmatprep.subr.mxu0 0.0
      %6121 = vmatpush1.msra.mxu0 0.0
      %6122 = vmatprep.subr.mxu0 0.0
      %6123 = vmatpush1.msra.mxu0 0.0
      %6124 = vmatprep.subr.mxu0 0.0
      %6125 = vmatpush1.msra.mxu0 0.0
      %6126 = vmatprep.subr.mxu0 0.0
      %6127 = vmatpush1.msra.mxu0 0.0
      %6128 = vmatprep.subr.mxu0 0.0
      %6129 = vmatpush1.msra.mxu0 0.0
      %6130 = vmatprep.subr.mxu0 0.0
      %6131 = vmatpush1.msra.mxu0 0.0
      %6132 = vmatprep.subr.mxu0 0.0
      %6133 = vmatpush1.msra.mxu0 0.0
      %6134 = vmatprep.subr.mxu0 0.0
      %6135 = vmatpush1.msra.mxu0 0.0
      %6136 = vmatprep.subr.mxu0 0.0
      %6137 = vmatpush1.msra.mxu0 0.0
      %6138 = vmatprep.subr.mxu0 0.0
      %6139 = vmatpush1.msra.mxu0 0.0
      %6140 = vmatprep.subr.mxu0 0.0
      %6141 = vmatpush1.msra.mxu0 0.0
      %6142 = vmatprep.subr.mxu0 0.0
      %6143 = vmatpush1.msra.mxu0 0.0
      %6144 = vmatprep.subr.mxu0 0.0
      %6145 = vmatpush1.msra.mxu0 0.0
      %6146 = vmatprep.subr.mxu0 0.0
      %6147 = vmatpush1.msra.mxu0 0.0
      %6148 = vmatprep.subr.mxu0 0.0
      %6149 = vmatpush1.msra.mxu0 0.0
      %6150 = vmatprep.subr.mxu0 0.0
      %6151 = vmatpush1.msra.mxu0 0.0
      %6152 = vmatprep.subr.mxu0 0.0
      %6153 = vmatpush1.msra.mxu0 0.0
      %6154 = vmatprep.subr.mxu0 0.0
      %6155 = vmatpush1.msra.mxu0 0.0
      %6156 = vmatprep.subr.mxu0 0.0
      %6157 = vmatpush1.msra.mxu0 0.0
      %6158 = vmatprep.subr.mxu0 0.0
      %6159 = vmatpush1.msra.mxu0 0.0
      %6160 = vmatprep.subr.mxu0 0.0
      %6161 = vmatpush1.msra.mxu0 0.0
      %6162 = vmatprep.subr.mxu0 0.0
      %6163 = vmatpush1.msra.mxu0 0.0
      %6164 = vmatprep.subr.mxu0 0.0
      %6165 = vmatpush1.msra.mxu0 0.0
      %6166 = vmatprep.subr.mxu0 0.0
      %6167 = vmatpush1.msra.mxu0 0.0
      %6168 = vmatprep.subr.mxu0 0.0
      %6169 = vmatpush1.msra.mxu0 0.0
      %6170 = vmatprep.subr.mxu0 0.0
      %6171 = vmatpush1.msra.mxu0 0.0
      %6172 = vmatprep.subr.mxu0 0.0
      %6173 = vmatpush1.msra.mxu0 0.0
      %6174 = vmatprep.mubr.f32.mxu0 0.0
      %6175 = vmatmul.mubr.f32.gmra.mrb[0].mxu0 %v6021
      %v6176 = vpop.f32.mrb[0].mxu0
      %v6177 = vadd.f32 0.0, %v6176
      %v6178 = vpop.f32.mrb[0].mxu0
      %v6179 = vadd.f32 0.0, %v6178
      %6180 = vdwg.mxu0
      %6181 = vmatprep.subr.mxu0 %v6033
      %6182 = vmatpush1.msra.mxu0 %v6031
      %6183 = vmatprep.subr.mxu0 0.0
      %6184 = vmatpush1.msra.mxu0 0.0
      %6185 = vmatprep.subr.mxu0 0.0
      %6186 = vmatpush1.msra.mxu0 0.0
      %6187 = vmatprep.subr.mxu0 0.0
      %6188 = vmatpush1.msra.mxu0 0.0
      %6189 = vmatprep.subr.mxu0 0.0
      %6190 = vmatpush1.msra.mxu0 0.0
      %6191 = vmatprep.subr.mxu0 0.0
      %6192 = vmatpush1.msra.mxu0 0.0
      %6193 = vmatprep.subr.mxu0 0.0
      %6194 = vmatpush1.msra.mxu0 0.0
      %6195 = vmatprep.subr.mxu0 0.0
      %6196 = vmatpush1.msra.mxu0 0.0
      %6197 = vmatprep.subr.mxu0 0.0
      %6198 = vmatpush1.msra.mxu0 0.0
      %6199 = vmatprep.subr.mxu0 0.0
      %6200 = vmatpush1.msra.mxu0 0.0
      %6201 = vmatprep.subr.mxu0 0.0
      %6202 = vmatpush1.msra.mxu0 0.0
      %6203 = vmatprep.subr.mxu0 0.0
      %6204 = vmatpush1.msra.mxu0 0.0
      %6205 = vmatprep.subr.mxu0 0.0
      %6206 = vmatpush1.msra.mxu0 0.0
      %6207 = vmatprep.subr.mxu0 0.0
      %6208 = vmatpush1.msra.mxu0 0.0
      %6209 = vmatprep.subr.mxu0 0.0
      %6210 = vmatpush1.msra.mxu0 0.0
      %6211 = vmatprep.subr.mxu0 0.0
      %6212 = vmatpush1.msra.mxu0 0.0
      %6213 = vmatprep.subr.mxu0 0.0
      %6214 = vmatpush1.msra.mxu0 0.0
      %6215 = vmatprep.subr.mxu0 0.0
      %6216 = vmatpush1.msra.mxu0 0.0
      %6217 = vmatprep.subr.mxu0 0.0
      %6218 = vmatpush1.msra.mxu0 0.0
      %6219 = vmatprep.subr.mxu0 0.0
      %6220 = vmatpush1.msra.mxu0 0.0
      %6221 = vmatprep.subr.mxu0 0.0
      %6222 = vmatpush1.msra.mxu0 0.0
      %6223 = vmatprep.subr.mxu0 0.0
      %6224 = vmatpush1.msra.mxu0 0.0
      %6225 = vmatprep.subr.mxu0 0.0
      %6226 = vmatpush1.msra.mxu0 0.0
      %6227 = vmatprep.subr.mxu0 0.0
      %6228 = vmatpush1.msra.mxu0 0.0
      %6229 = vmatprep.subr.mxu0 0.0
      %6230 = vmatpush1.msra.mxu0 0.0
      %6231 = vmatprep.subr.mxu0 0.0
      %6232 = vmatpush1.msra.mxu0 0.0
      %6233 = vmatprep.subr.mxu0 0.0
      %6234 = vmatpush1.msra.mxu0 0.0
      %6235 = vmatprep.subr.mxu0 0.0
      %6236 = vmatpush1.msra.mxu0 0.0
      %6237 = vmatprep.subr.mxu0 0.0
      %6238 = vmatpush1.msra.mxu0 0.0
      %6239 = vmatprep.subr.mxu0 0.0
      %6240 = vmatpush1.msra.mxu0 0.0
      %6241 = vmatprep.subr.mxu0 0.0
      %6242 = vmatpush1.msra.mxu0 0.0
      %6243 = vmatprep.subr.mxu0 0.0
      %6244 = vmatpush1.msra.mxu0 0.0
      %6245 = vmatprep.mubr.f32.mxu0 0.0
      %6246 = vmatmul.mubr.f32.gmra.mrb[0].mxu0 %v6021
      %v6247 = vpop.f32.mrb[0].mxu0
      %v6248 = vadd.f32 0.0, %v6247
      %v6249 = vpop.f32.mrb[0].mxu0
      %v6250 = vadd.f32 0.0, %v6249
      %6251 = vdwg.mxu0
      %6252 = vmatprep.subr.mxu0 %v6037
      %6253 = vmatpush1.msra.mxu0 %v6035
      %6254 = vmatprep.subr.mxu0 0.0
      %6255 = vmatpush1.msra.mxu0 0.0
      %6256 = vmatprep.subr.mxu0 0.0
      %6257 = vmatpush1.msra.mxu0 0.0
      %6258 = vmatprep.subr.mxu0 0.0
      %6259 = vmatpush1.msra.mxu0 0.0
      %6260 = vmatprep.subr.mxu0 0.0
      %6261 = vmatpush1.msra.mxu0 0.0
      %6262 = vmatprep.subr.mxu0 0.0
      %6263 = vmatpush1.msra.mxu0 0.0
      %6264 = vmatprep.subr.mxu0 0.0
      %6265 = vmatpush1.msra.mxu0 0.0
      %6266 = vmatprep.subr.mxu0 0.0
      %6267 = vmatpush1.msra.mxu0 0.0
      %6268 = vmatprep.subr.mxu0 0.0
      %6269 = vmatpush1.msra.mxu0 0.0
      %6270 = vmatprep.subr.mxu0 0.0
      %6271 = vmatpush1.msra.mxu0 0.0
      %6272 = vmatprep.subr.mxu0 0.0
      %6273 = vmatpush1.msra.mxu0 0.0
      %6274 = vmatprep.subr.mxu0 0.0
      %6275 = vmatpush1.msra.mxu0 0.0
      %6276 = vmatprep.subr.mxu0 0.0
      %6277 = vmatpush1.msra.mxu0 0.0
      %6278 = vmatprep.subr.mxu0 0.0
      %6279 = vmatpush1.msra.mxu0 0.0
      %6280 = vmatprep.subr.mxu0 0.0
      %6281 = vmatpush1.msra.mxu0 0.0
      %6282 = vmatprep.subr.mxu0 0.0
      %6283 = vmatpush1.msra.mxu0 0.0
      %6284 = vmatprep.subr.mxu0 0.0
      %6285 = vmatpush1.msra.mxu0 0.0
      %6286 = vmatprep.subr.mxu0 0.0
      %6287 = vmatpush1.msra.mxu0 0.0
      %6288 = vmatprep.subr.mxu0 0.0
      %6289 = vmatpush1.msra.mxu0 0.0
      %6290 = vmatprep.subr.mxu0 0.0
      %6291 = vmatpush1.msra.mxu0 0.0
      %6292 = vmatprep.subr.mxu0 0.0
      %6293 = vmatpush1.msra.mxu0 0.0
      %6294 = vmatprep.subr.mxu0 0.0
      %6295 = vmatpush1.msra.mxu0 0.0
      %6296 = vmatprep.subr.mxu0 0.0
      %6297 = vmatpush1.msra.mxu0 0.0
      %6298 = vmatprep.subr.mxu0 0.0
      %6299 = vmatpush1.msra.mxu0 0.0
      %6300 = vmatprep.subr.mxu0 0.0
      %6301 = vmatpush1.msra.mxu0 0.0
      %6302 = vmatprep.subr.mxu0 0.0
      %6303 = vmatpush1.msra.mxu0 0.0
      %6304 = vmatprep.subr.mxu0 0.0
      %6305 = vmatpush1.msra.mxu0 0.0
      %6306 = vmatprep.subr.mxu0 0.0
      %6307 = vmatpush1.msra.mxu0 0.0
      %6308 = vmatprep.subr.mxu0 0.0
      %6309 = vmatpush1.msra.mxu0 0.0
      %6310 = vmatprep.subr.mxu0 0.0
      %6311 = vmatpush1.msra.mxu0 0.0
      %6312 = vmatprep.subr.mxu0 0.0
      %6313 = vmatpush1.msra.mxu0 0.0
      %6314 = vmatprep.subr.mxu0 0.0
      %6315 = vmatpush1.msra.mxu0 0.0
      %6316 = vmatprep.mubr.f32.mxu0 0.0
      %6317 = vmatmul.mubr.f32.gmra.mrb[0].mxu0 %v6021
      %v6318 = vpop.f32.mrb[0].mxu0
      %v6319 = vadd.f32 0.0, %v6318
      %v6320 = vpop.f32.mrb[0].mxu0
      %v6321 = vadd.f32 0.0, %v6320
      %6322 = vdwg.mxu0
      %v6323 = vadd.f32 %v5950, %v6106
      %v6324 = vadd.f32 %v5951, %v6108
      %v6325 = vadd.f32 %v5952, %v6177
      %v6326 = vadd.f32 %v5953, %v6179
      %v6327 = vadd.f32 %v5954, %v6248
      %v6328 = vadd.f32 %v5955, %v6250
      %v6329 = vadd.f32 %v5956, %v6319
      %v6330 = vadd.f32 %v5957, %v6321
      %s6331 = scalar_lea.vmem %s1, 14
      %v6332 = vld [vmem:[%s6331] sm:$0x3]
      %v6333 = vcombine.high %v3741, %v3741
      %6334 = vrot.lane.b32.xlu0 %v3716, 96
      %v6335 = vpop.permute.xlu0 %6334
      %6336 = vrot.lane.b32.xlu0 %v3715, 96
      %v6337 = vpop.permute.xlu0 %6336
      %6338 = vrot.lane.b32.xlu0 %v3717, 96
      %v6339 = vpop.permute.xlu0 %6338
      %6340 = vrot.lane.b32.xlu0 %v3725, 96
      %v6341 = vpop.permute.xlu0 %6340
      %6342 = vrot.lane.b32.xlu0 %v3733, 96
      %v6343 = vpop.permute.xlu0 %6342
      %6344 = vrot.lane.b32.xlu0 %v3732, 96
      %v6345 = vpop.permute.xlu0 %6344
      %6346 = vrot.lane.b32.xlu0 %v3734, 96
      %v6347 = vpop.permute.xlu0 %6346
      %6348 = vrot.lane.b32.xlu0 %v3741, 96
      %v6349 = vpop.permute.xlu0 %6348
      %6350 = vrot.lane.b32.xlu0 %v6333, 96
      %v6351 = vpop.permute.xlu0 %6350
      %v6352 = vsel %vm2917, %v6335, %v6337
      %v6353 = vsel %vm2917, %v6337, %v6339
      %v6354 = vsel %vm2917, %v6339, %v6341
      %v6355 = vsel %vm2917, %v6341, %v6343
      %v6356 = vsel %vm2917, %v6343, %v6345
      %v6357 = vsel %vm2917, %v6345, %v6347
      %v6358 = vsel %vm2917, %v6347, %v6349
      %v6359 = vsel %vm2917, %v6349, %v6351
      %v6361 = vsel %vm3768, %v6332, 0
      %v6363 = vsel %vm3686, %v6352, 0
      %v6365 = vsel %vm3686, %v6353, 0
      %v6367 = vsel %vm3686, %v6354, 0
      %v6369 = vsel %vm3686, %v6355, 0
      %v6371 = vsel %vm3686, %v6356, 0
      %v6373 = vsel %vm3686, %v6357, 0
      %v6375 = vsel %vm3686, %v6358, 0
      %v6377 = vsel %vm3686, %v6359, 0
      %6379 = vmatprep.subr.mxu0 %v6365
      %6380 = vmatpush1.msra.mxu0 %v6363
      %6381 = vmatprep.subr.mxu0 0.0
      %6382 = vmatpush1.msra.mxu0 0.0
      %6383 = vmatprep.subr.mxu0 0.0
      %6384 = vmatpush1.msra.mxu0 0.0
      %6385 = vmatprep.subr.mxu0 0.0
      %6386 = vmatpush1.msra.mxu0 0.0
      %6387 = vmatprep.subr.mxu0 0.0
      %6388 = vmatpush1.msra.mxu0 0.0
      %6389 = vmatprep.subr.mxu0 0.0
      %6390 = vmatpush1.msra.mxu0 0.0
      %6391 = vmatprep.subr.mxu0 0.0
      %6392 = vmatpush1.msra.mxu0 0.0
      %6393 = vmatprep.subr.mxu0 0.0
      %6394 = vmatpush1.msra.mxu0 0.0
      %6395 = vmatprep.subr.mxu0 0.0
      %6396 = vmatpush1.msra.mxu0 0.0
      %6397 = vmatprep.subr.mxu0 0.0
      %6398 = vmatpush1.msra.mxu0 0.0
      %6399 = vmatprep.subr.mxu0 0.0
      %6400 = vmatpush1.msra.mxu0 0.0
      %6401 = vmatprep.subr.mxu0 0.0
      %6402 = vmatpush1.msra.mxu0 0.0
      %6403 = vmatprep.subr.mxu0 0.0
      %6404 = vmatpush1.msra.mxu0 0.0
      %6405 = vmatprep.subr.mxu0 0.0
      %6406 = vmatpush1.msra.mxu0 0.0
      %6407 = vmatprep.subr.mxu0 0.0
      %6408 = vmatpush1.msra.mxu0 0.0
      %6409 = vmatprep.subr.mxu0 0.0
      %6410 = vmatpush1.msra.mxu0 0.0
      %6411 = vmatprep.subr.mxu0 0.0
      %6412 = vmatpush1.msra.mxu0 0.0
      %6413 = vmatprep.subr.mxu0 0.0
      %6414 = vmatpush1.msra.mxu0 0.0
      %6415 = vmatprep.subr.mxu0 0.0
      %6416 = vmatpush1.msra.mxu0 0.0
      %6417 = vmatprep.subr.mxu0 0.0
      %6418 = vmatpush1.msra.mxu0 0.0
      %6419 = vmatprep.subr.mxu0 0.0
      %6420 = vmatpush1.msra.mxu0 0.0
      %6421 = vmatprep.subr.mxu0 0.0
      %6422 = vmatpush1.msra.mxu0 0.0
      %6423 = vmatprep.subr.mxu0 0.0
      %6424 = vmatpush1.msra.mxu0 0.0
      %6425 = vmatprep.subr.mxu0 0.0
      %6426 = vmatpush1.msra.mxu0 0.0
      %6427 = vmatprep.subr.mxu0 0.0
      %6428 = vmatpush1.msra.mxu0 0.0
      %6429 = vmatprep.subr.mxu0 0.0
      %6430 = vmatpush1.msra.mxu0 0.0
      %6431 = vmatprep.subr.mxu0 0.0
      %6432 = vmatpush1.msra.mxu0 0.0
      %6433 = vmatprep.subr.mxu0 0.0
      %6434 = vmatpush1.msra.mxu0 0.0
      %6435 = vmatprep.subr.mxu0 0.0
      %6436 = vmatpush1.msra.mxu0 0.0
      %6437 = vmatprep.subr.mxu0 0.0
      %6438 = vmatpush1.msra.mxu0 0.0
      %6439 = vmatprep.subr.mxu0 0.0
      %6440 = vmatpush1.msra.mxu0 0.0
      %6441 = vmatprep.subr.mxu0 0.0
      %6442 = vmatpush1.msra.mxu0 0.0
      %6443 = vmatprep.mubr.f32.mxu0 0.0
      %6444 = vmatmul.mubr.f32.gmra.mrb[0].mxu0 %v6361
      %v6445 = vpop.f32.mrb[0].mxu0
      %v6446 = vadd.f32 0.0, %v6445
      %v6447 = vpop.f32.mrb[0].mxu0
      %v6448 = vadd.f32 0.0, %v6447
      %6449 = vdwg.mxu0
      %6450 = vmatprep.subr.mxu0 %v6369
      %6451 = vmatpush1.msra.mxu0 %v6367
      %6452 = vmatprep.subr.mxu0 0.0
      %6453 = vmatpush1.msra.mxu0 0.0
      %6454 = vmatprep.subr.mxu0 0.0
      %6455 = vmatpush1.msra.mxu0 0.0
      %6456 = vmatprep.subr.mxu0 0.0
      %6457 = vmatpush1.msra.mxu0 0.0
      %6458 = vmatprep.subr.mxu0 0.0
      %6459 = vmatpush1.msra.mxu0 0.0
      %6460 = vmatprep.subr.mxu0 0.0
      %6461 = vmatpush1.msra.mxu0 0.0
      %6462 = vmatprep.subr.mxu0 0.0
      %6463 = vmatpush1.msra.mxu0 0.0
      %6464 = vmatprep.subr.mxu0 0.0
      %6465 = vmatpush1.msra.mxu0 0.0
      %6466 = vmatprep.subr.mxu0 0.0
      %6467 = vmatpush1.msra.mxu0 0.0
      %6468 = vmatprep.subr.mxu0 0.0
      %6469 = vmatpush1.msra.mxu0 0.0
      %6470 = vmatprep.subr.mxu0 0.0
      %6471 = vmatpush1.msra.mxu0 0.0
      %6472 = vmatprep.subr.mxu0 0.0
      %6473 = vmatpush1.msra.mxu0 0.0
      %6474 = vmatprep.subr.mxu0 0.0
      %6475 = vmatpush1.msra.mxu0 0.0
      %6476 = vmatprep.subr.mxu0 0.0
      %6477 = vmatpush1.msra.mxu0 0.0
      %6478 = vmatprep.subr.mxu0 0.0
      %6479 = vmatpush1.msra.mxu0 0.0
      %6480 = vmatprep.subr.mxu0 0.0
      %6481 = vmatpush1.msra.mxu0 0.0
      %6482 = vmatprep.subr.mxu0 0.0
      %6483 = vmatpush1.msra.mxu0 0.0
      %6484 = vmatprep.subr.mxu0 0.0
      %6485 = vmatpush1.msra.mxu0 0.0
      %6486 = vmatprep.subr.mxu0 0.0
      %6487 = vmatpush1.msra.mxu0 0.0
      %6488 = vmatprep.subr.mxu0 0.0
      %6489 = vmatpush1.msra.mxu0 0.0
      %6490 = vmatprep.subr.mxu0 0.0
      %6491 = vmatpush1.msra.mxu0 0.0
      %6492 = vmatprep.subr.mxu0 0.0
      %6493 = vmatpush1.msra.mxu0 0.0
      %6494 = vmatprep.subr.mxu0 0.0
      %6495 = vmatpush1.msra.mxu0 0.0
      %6496 = vmatprep.subr.mxu0 0.0
      %6497 = vmatpush1.msra.mxu0 0.0
      %6498 = vmatprep.subr.mxu0 0.0
      %6499 = vmatpush1.msra.mxu0 0.0
      %6500 = vmatprep.subr.mxu0 0.0
      %6501 = vmatpush1.msra.mxu0 0.0
      %6502 = vmatprep.subr.mxu0 0.0
      %6503 = vmatpush1.msra.mxu0 0.0
      %6504 = vmatprep.subr.mxu0 0.0
      %6505 = vmatpush1.msra.mxu0 0.0
      %6506 = vmatprep.subr.mxu0 0.0
      %6507 = vmatpush1.msra.mxu0 0.0
      %6508 = vmatprep.subr.mxu0 0.0
      %6509 = vmatpush1.msra.mxu0 0.0
      %6510 = vmatprep.subr.mxu0 0.0
      %6511 = vmatpush1.msra.mxu0 0.0
      %6512 = vmatprep.subr.mxu0 0.0
      %6513 = vmatpush1.msra.mxu0 0.0
      %6514 = vmatprep.mubr.f32.mxu0 0.0
      %6515 = vmatmul.mubr.f32.gmra.mrb[0].mxu0 %v6361
      %v6516 = vpop.f32.mrb[0].mxu0
      %v6517 = vadd.f32 0.0, %v6516
      %v6518 = vpop.f32.mrb[0].mxu0
      %v6519 = vadd.f32 0.0, %v6518
      %6520 = vdwg.mxu0
      %6521 = vmatprep.subr.mxu0 %v6373
      %6522 = vmatpush1.msra.mxu0 %v6371
      %6523 = vmatprep.subr.mxu0 0.0
      %6524 = vmatpush1.msra.mxu0 0.0
      %6525 = vmatprep.subr.mxu0 0.0
      %6526 = vmatpush1.msra.mxu0 0.0
      %6527 = vmatprep.subr.mxu0 0.0
      %6528 = vmatpush1.msra.mxu0 0.0
      %6529 = vmatprep.subr.mxu0 0.0
      %6530 = vmatpush1.msra.mxu0 0.0
      %6531 = vmatprep.subr.mxu0 0.0
      %6532 = vmatpush1.msra.mxu0 0.0
      %6533 = vmatprep.subr.mxu0 0.0
      %6534 = vmatpush1.msra.mxu0 0.0
      %6535 = vmatprep.subr.mxu0 0.0
      %6536 = vmatpush1.msra.mxu0 0.0
      %6537 = vmatprep.subr.mxu0 0.0
      %6538 = vmatpush1.msra.mxu0 0.0
      %6539 = vmatprep.subr.mxu0 0.0
      %6540 = vmatpush1.msra.mxu0 0.0
      %6541 = vmatprep.subr.mxu0 0.0
      %6542 = vmatpush1.msra.mxu0 0.0
      %6543 = vmatprep.subr.mxu0 0.0
      %6544 = vmatpush1.msra.mxu0 0.0
      %6545 = vmatprep.subr.mxu0 0.0
      %6546 = vmatpush1.msra.mxu0 0.0
      %6547 = vmatprep.subr.mxu0 0.0
      %6548 = vmatpush1.msra.mxu0 0.0
      %6549 = vmatprep.subr.mxu0 0.0
      %6550 = vmatpush1.msra.mxu0 0.0
      %6551 = vmatprep.subr.mxu0 0.0
      %6552 = vmatpush1.msra.mxu0 0.0
      %6553 = vmatprep.subr.mxu0 0.0
      %6554 = vmatpush1.msra.mxu0 0.0
      %6555 = vmatprep.subr.mxu0 0.0
      %6556 = vmatpush1.msra.mxu0 0.0
      %6557 = vmatprep.subr.mxu0 0.0
      %6558 = vmatpush1.msra.mxu0 0.0
      %6559 = vmatprep.subr.mxu0 0.0
      %6560 = vmatpush1.msra.mxu0 0.0
      %6561 = vmatprep.subr.mxu0 0.0
      %6562 = vmatpush1.msra.mxu0 0.0
      %6563 = vmatprep.subr.mxu0 0.0
      %6564 = vmatpush1.msra.mxu0 0.0
      %6565 = vmatprep.subr.mxu0 0.0
      %6566 = vmatpush1.msra.mxu0 0.0
      %6567 = vmatprep.subr.mxu0 0.0
      %6568 = vmatpush1.msra.mxu0 0.0
      %6569 = vmatprep.subr.mxu0 0.0
      %6570 = vmatpush1.msra.mxu0 0.0
      %6571 = vmatprep.subr.mxu0 0.0
      %6572 = vmatpush1.msra.mxu0 0.0
      %6573 = vmatprep.subr.mxu0 0.0
      %6574 = vmatpush1.msra.mxu0 0.0
      %6575 = vmatprep.subr.mxu0 0.0
      %6576 = vmatpush1.msra.mxu0 0.0
      %6577 = vmatprep.subr.mxu0 0.0
      %6578 = vmatpush1.msra.mxu0 0.0
      %6579 = vmatprep.subr.mxu0 0.0
      %6580 = vmatpush1.msra.mxu0 0.0
      %6581 = vmatprep.subr.mxu0 0.0
      %6582 = vmatpush1.msra.mxu0 0.0
      %6583 = vmatprep.subr.mxu0 0.0
      %6584 = vmatpush1.msra.mxu0 0.0
      %6585 = vmatprep.mubr.f32.mxu0 0.0
      %6586 = vmatmul.mubr.f32.gmra.mrb[0].mxu0 %v6361
      %v6587 = vpop.f32.mrb[0].mxu0
      %v6588 = vadd.f32 0.0, %v6587
      %v6589 = vpop.f32.mrb[0].mxu0
      %v6590 = vadd.f32 0.0, %v6589
      %6591 = vdwg.mxu0
      %6592 = vmatprep.subr.mxu0 %v6377
      %6593 = vmatpush1.msra.mxu0 %v6375
      %6594 = vmatprep.subr.mxu0 0.0
      %6595 = vmatpush1.msra.mxu0 0.0
      %6596 = vmatprep.subr.mxu0 0.0
      %6597 = vmatpush1.msra.mxu0 0.0
      %6598 = vmatprep.subr.mxu0 0.0
      %6599 = vmatpush1.msra.mxu0 0.0
      %6600 = vmatprep.subr.mxu0 0.0
      %6601 = vmatpush1.msra.mxu0 0.0
      %6602 = vmatprep.subr.mxu0 0.0
      %6603 = vmatpush1.msra.mxu0 0.0
      %6604 = vmatprep.subr.mxu0 0.0
      %6605 = vmatpush1.msra.mxu0 0.0
      %6606 = vmatprep.subr.mxu0 0.0
      %6607 = vmatpush1.msra.mxu0 0.0
      %6608 = vmatprep.subr.mxu0 0.0
      %6609 = vmatpush1.msra.mxu0 0.0
      %6610 = vmatprep.subr.mxu0 0.0
      %6611 = vmatpush1.msra.mxu0 0.0
      %6612 = vmatprep.subr.mxu0 0.0
      %6613 = vmatpush1.msra.mxu0 0.0
      %6614 = vmatprep.subr.mxu0 0.0
      %6615 = vmatpush1.msra.mxu0 0.0
      %6616 = vmatprep.subr.mxu0 0.0
      %6617 = vmatpush1.msra.mxu0 0.0
      %6618 = vmatprep.subr.mxu0 0.0
      %6619 = vmatpush1.msra.mxu0 0.0
      %6620 = vmatprep.subr.mxu0 0.0
      %6621 = vmatpush1.msra.mxu0 0.0
      %6622 = vmatprep.subr.mxu0 0.0
      %6623 = vmatpush1.msra.mxu0 0.0
      %6624 = vmatprep.subr.mxu0 0.0
      %6625 = vmatpush1.msra.mxu0 0.0
      %6626 = vmatprep.subr.mxu0 0.0
      %6627 = vmatpush1.msra.mxu0 0.0
      %6628 = vmatprep.subr.mxu0 0.0
      %6629 = vmatpush1.msra.mxu0 0.0
      %6630 = vmatprep.subr.mxu0 0.0
      %6631 = vmatpush1.msra.mxu0 0.0
      %6632 = vmatprep.subr.mxu0 0.0
      %6633 = vmatpush1.msra.mxu0 0.0
      %6634 = vmatprep.subr.mxu0 0.0
      %6635 = vmatpush1.msra.mxu0 0.0
      %6636 = vmatprep.subr.mxu0 0.0
      %6637 = vmatpush1.msra.mxu0 0.0
      %6638 = vmatprep.subr.mxu0 0.0
      %6639 = vmatpush1.msra.mxu0 0.0
      %6640 = vmatprep.subr.mxu0 0.0
      %6641 = vmatpush1.msra.mxu0 0.0
      %6642 = vmatprep.subr.mxu0 0.0
      %6643 = vmatpush1.msra.mxu0 0.0
      %6644 = vmatprep.subr.mxu0 0.0
      %6645 = vmatpush1.msra.mxu0 0.0
      %6646 = vmatprep.subr.mxu0 0.0
      %6647 = vmatpush1.msra.mxu0 0.0
      %6648 = vmatprep.subr.mxu0 0.0
      %6649 = vmatpush1.msra.mxu0 0.0
      %6650 = vmatprep.subr.mxu0 0.0
      %6651 = vmatpush1.msra.mxu0 0.0
      %6652 = vmatprep.subr.mxu0 0.0
      %6653 = vmatpush1.msra.mxu0 0.0
      %6654 = vmatprep.subr.mxu0 0.0
      %6655 = vmatpush1.msra.mxu0 0.0
      %6656 = vmatprep.mubr.f32.mxu0 0.0
      %6657 = vmatmul.mubr.f32.gmra.mrb[0].mxu0 %v6361
      %v6658 = vpop.f32.mrb[0].mxu0
      %v6659 = vadd.f32 0.0, %v6658
      %v6660 = vpop.f32.mrb[0].mxu0
      %v6661 = vadd.f32 0.0, %v6660
      %6662 = vdwg.mxu0
      %v6663 = vadd.f32 %v6323, %v6446
      %v6664 = vadd.f32 %v6324, %v6448
      %v6665 = vadd.f32 %v6325, %v6517
      %v6666 = vadd.f32 %v6326, %v6519
      %v6667 = vadd.f32 %v6327, %v6588
      %v6668 = vadd.f32 %v6328, %v6590
      %v6669 = vadd.f32 %v6329, %v6659
      %v6670 = vadd.f32 %v6330, %v6661
      %6671 = vrot.lane.b32.xlu0 %v3646, 95
      %v6672 = vpop.permute.xlu0 %6671
      %6673 = vrot.lane.b32.xlu0 %v3647, 95
      %v6674 = vpop.permute.xlu0 %6673
      %6675 = vrot.lane.b32.xlu0 %v3648, 95
      %v6676 = vpop.permute.xlu0 %6675
      %v6677 = vrot.slane %v6672, 2
      %v6678 = vrot.slane %v6674, 2
      %v6679 = vrot.slane %v6676, 2
      %v6680 = vrot.slane %v6672, 4
      %v6681 = vrot.slane %v6674, 4
      %v6682 = vrot.slane %v6676, 4
      %v6683 = vsel %vm5596, %v6677, %v6678
      %v6684 = vsel %vm377, %v6680, %v6681
      %v6685 = vsel %vm375, %v6683, %v6684
      %v6686 = vsel %vm5596, %v6678, %v6679
      %v6687 = vsel %vm377, %v6681, %v6682
      %v6688 = vsel %vm375, %v6686, %v6687
      %v6691 = vmul.f32 %v6685, %v4459
      %v6692 = vmul.f32 %v6688, %v4474
      %s6693 = scalar_lea.vmem %s1, 16
      %v6694 = vld [vmem:[%s6693] sm:$0x3]
      %v6697 = vcombine.high %v6691, %v6691
      %v6699 = vunpack.c.l.s4 1983009808
      %v6700 = vunpack.c.0.s8 %v6699
      %v6701 = vlaneseq
      %v6702 = vshrl.u32 %v6701, 7
      %v6703 = vsub.s32 %v6700, %v6702
      %v6704 = vrot.slane %v6691, %v6703
      %v6706 = vunpack.c.l.s4 1983009808
      %v6707 = vunpack.c.0.s8 %v6706
      %v6708 = vlaneseq
      %v6709 = vshrl.u32 %v6708, 7
      %v6710 = vsub.s32 %v6707, %v6709
      %v6711 = vrot.slane %v6697, %v6710
      %v6712 = vcombine.high %v6704, %v6704
      %v6713 = vcombine.high %v6711, %v6711
      %v6714 = vcombine.high %v6692, %v6692
      %v6716 = vunpack.c.l.s4 1983009808
      %v6717 = vunpack.c.0.s8 %v6716
      %v6718 = vlaneseq
      %v6719 = vshrl.u32 %v6718, 7
      %v6720 = vsub.s32 %v6717, %v6719
      %v6721 = vrot.slane %v6692, %v6720
      %v6723 = vunpack.c.l.s4 1983009808
      %v6724 = vunpack.c.0.s8 %v6723
      %v6725 = vlaneseq
      %v6726 = vshrl.u32 %v6725, 7
      %v6727 = vsub.s32 %v6724, %v6726
      %v6728 = vrot.slane %v6714, %v6727
      %v6729 = vcombine.high %v6721, %v6721
      %v6730 = vcombine.high %v6728, %v6728
      %v6732 = vsel %vm3768, %v6694, 0
      %v6734 = vsel %vm3686, %v6704, 0
      %v6736 = vsel %vm3686, %v6712, 0
      %v6738 = vsel %vm3686, %v6711, 0
      %v6740 = vsel %vm3686, %v6713, 0
      %v6742 = vsel %vm3686, %v6721, 0
      %v6744 = vsel %vm3686, %v6729, 0
      %v6746 = vsel %vm3686, %v6728, 0
      %v6748 = vsel %vm3686, %v6730, 0
      %6750 = vmatprep.subr.mxu0 %v6736
      %6751 = vmatpush1.msra.mxu0 %v6734
      %6752 = vmatprep.subr.mxu0 0.0
      %6753 = vmatpush1.msra.mxu0 0.0
      %6754 = vmatprep.subr.mxu0 0.0
      %6755 = vmatpush1.msra.mxu0 0.0
      %6756 = vmatprep.subr.mxu0 0.0
      %6757 = vmatpush1.msra.mxu0 0.0
      %6758 = vmatprep.subr.mxu0 0.0
      %6759 = vmatpush1.msra.mxu0 0.0
      %6760 = vmatprep.subr.mxu0 0.0
      %6761 = vmatpush1.msra.mxu0 0.0
      %6762 = vmatprep.subr.mxu0 0.0
      %6763 = vmatpush1.msra.mxu0 0.0
      %6764 = vmatprep.subr.mxu0 0.0
      %6765 = vmatpush1.msra.mxu0 0.0
      %6766 = vmatprep.subr.mxu0 0.0
      %6767 = vmatpush1.msra.mxu0 0.0
      %6768 = vmatprep.subr.mxu0 0.0
      %6769 = vmatpush1.msra.mxu0 0.0
      %6770 = vmatprep.subr.mxu0 0.0
      %6771 = vmatpush1.msra.mxu0 0.0
      %6772 = vmatprep.subr.mxu0 0.0
      %6773 = vmatpush1.msra.mxu0 0.0
      %6774 = vmatprep.subr.mxu0 0.0
      %6775 = vmatpush1.msra.mxu0 0.0
      %6776 = vmatprep.subr.mxu0 0.0
      %6777 = vmatpush1.msra.mxu0 0.0
      %6778 = vmatprep.subr.mxu0 0.0
      %6779 = vmatpush1.msra.mxu0 0.0
      %6780 = vmatprep.subr.mxu0 0.0
      %6781 = vmatpush1.msra.mxu0 0.0
      %6782 = vmatprep.subr.mxu0 0.0
      %6783 = vmatpush1.msra.mxu0 0.0
      %6784 = vmatprep.subr.mxu0 0.0
      %6785 = vmatpush1.msra.mxu0 0.0
      %6786 = vmatprep.subr.mxu0 0.0
      %6787 = vmatpush1.msra.mxu0 0.0
      %6788 = vmatprep.subr.mxu0 0.0
      %6789 = vmatpush1.msra.mxu0 0.0
      %6790 = vmatprep.subr.mxu0 0.0
      %6791 = vmatpush1.msra.mxu0 0.0
      %6792 = vmatprep.subr.mxu0 0.0
      %6793 = vmatpush1.msra.mxu0 0.0
      %6794 = vmatprep.subr.mxu0 0.0
      %6795 = vmatpush1.msra.mxu0 0.0
      %6796 = vmatprep.subr.mxu0 0.0
      %6797 = vmatpush1.msra.mxu0 0.0
      %6798 = vmatprep.subr.mxu0 0.0
      %6799 = vmatpush1.msra.mxu0 0.0
      %6800 = vmatprep.subr.mxu0 0.0
      %6801 = vmatpush1.msra.mxu0 0.0
      %6802 = vmatprep.subr.mxu0 0.0
      %6803 = vmatpush1.msra.mxu0 0.0
      %6804 = vmatprep.subr.mxu0 0.0
      %6805 = vmatpush1.msra.mxu0 0.0
      %6806 = vmatprep.subr.mxu0 0.0
      %6807 = vmatpush1.msra.mxu0 0.0
      %6808 = vmatprep.subr.mxu0 0.0
      %6809 = vmatpush1.msra.mxu0 0.0
      %6810 = vmatprep.subr.mxu0 0.0
      %6811 = vmatpush1.msra.mxu0 0.0
      %6812 = vmatprep.subr.mxu0 0.0
      %6813 = vmatpush1.msra.mxu0 0.0
      %6814 = vmatprep.mubr.f32.mxu0 0.0
      %6815 = vmatmul.mubr.f32.gmra.mrb[0].mxu0 %v6732
      %v6816 = vpop.f32.mrb[0].mxu0
      %v6817 = vadd.f32 0.0, %v6816
      %v6818 = vpop.f32.mrb[0].mxu0
      %v6819 = vadd.f32 0.0, %v6818
      %6820 = vdwg.mxu0
      %6821 = vmatprep.subr.mxu0 %v6740
      %6822 = vmatpush1.msra.mxu0 %v6738
      %6823 = vmatprep.subr.mxu0 0.0
      %6824 = vmatpush1.msra.mxu0 0.0
      %6825 = vmatprep.subr.mxu0 0.0
      %6826 = vmatpush1.msra.mxu0 0.0
      %6827 = vmatprep.subr.mxu0 0.0
      %6828 = vmatpush1.msra.mxu0 0.0
      %6829 = vmatprep.subr.mxu0 0.0
      %6830 = vmatpush1.msra.mxu0 0.0
      %6831 = vmatprep.subr.mxu0 0.0
      %6832 = vmatpush1.msra.mxu0 0.0
      %6833 = vmatprep.subr.mxu0 0.0
      %6834 = vmatpush1.msra.mxu0 0.0
      %6835 = vmatprep.subr.mxu0 0.0
      %6836 = vmatpush1.msra.mxu0 0.0
      %6837 = vmatprep.subr.mxu0 0.0
      %6838 = vmatpush1.msra.mxu0 0.0
      %6839 = vmatprep.subr.mxu0 0.0
      %6840 = vmatpush1.msra.mxu0 0.0
      %6841 = vmatprep.subr.mxu0 0.0
      %6842 = vmatpush1.msra.mxu0 0.0
      %6843 = vmatprep.subr.mxu0 0.0
      %6844 = vmatpush1.msra.mxu0 0.0
      %6845 = vmatprep.subr.mxu0 0.0
      %6846 = vmatpush1.msra.mxu0 0.0
      %6847 = vmatprep.subr.mxu0 0.0
      %6848 = vmatpush1.msra.mxu0 0.0
      %6849 = vmatprep.subr.mxu0 0.0
      %6850 = vmatpush1.msra.mxu0 0.0
      %6851 = vmatprep.subr.mxu0 0.0
      %6852 = vmatpush1.msra.mxu0 0.0
      %6853 = vmatprep.subr.mxu0 0.0
      %6854 = vmatpush1.msra.mxu0 0.0
      %6855 = vmatprep.subr.mxu0 0.0
      %6856 = vmatpush1.msra.mxu0 0.0
      %6857 = vmatprep.subr.mxu0 0.0
      %6858 = vmatpush1.msra.mxu0 0.0
      %6859 = vmatprep.subr.mxu0 0.0
      %6860 = vmatpush1.msra.mxu0 0.0
      %6861 = vmatprep.subr.mxu0 0.0
      %6862 = vmatpush1.msra.mxu0 0.0
      %6863 = vmatprep.subr.mxu0 0.0
      %6864 = vmatpush1.msra.mxu0 0.0
      %6865 = vmatprep.subr.mxu0 0.0
      %6866 = vmatpush1.msra.mxu0 0.0
      %6867 = vmatprep.subr.mxu0 0.0
      %6868 = vmatpush1.msra.mxu0 0.0
      %6869 = vmatprep.subr.mxu0 0.0
      %6870 = vmatpush1.msra.mxu0 0.0
      %6871 = vmatprep.subr.mxu0 0.0
      %6872 = vmatpush1.msra.mxu0 0.0
      %6873 = vmatprep.subr.mxu0 0.0
      %6874 = vmatpush1.msra.mxu0 0.0
      %6875 = vmatprep.subr.mxu0 0.0
      %6876 = vmatpush1.msra.mxu0 0.0
      %6877 = vmatprep.subr.mxu0 0.0
      %6878 = vmatpush1.msra.mxu0 0.0
      %6879 = vmatprep.subr.mxu0 0.0
      %6880 = vmatpush1.msra.mxu0 0.0
      %6881 = vmatprep.subr.mxu0 0.0
      %6882 = vmatpush1.msra.mxu0 0.0
      %6883 = vmatprep.subr.mxu0 0.0
      %6884 = vmatpush1.msra.mxu0 0.0
      %6885 = vmatprep.mubr.f32.mxu0 0.0
      %6886 = vmatmul.mubr.f32.gmra.mrb[0].mxu0 %v6732
      %v6887 = vpop.f32.mrb[0].mxu0
      %v6888 = vadd.f32 0.0, %v6887
      %v6889 = vpop.f32.mrb[0].mxu0
      %v6890 = vadd.f32 0.0, %v6889
      %6891 = vdwg.mxu0
      %6892 = vmatprep.subr.mxu0 %v6744
      %6893 = vmatpush1.msra.mxu0 %v6742
      %6894 = vmatprep.subr.mxu0 0.0
      %6895 = vmatpush1.msra.mxu0 0.0
      %6896 = vmatprep.subr.mxu0 0.0
      %6897 = vmatpush1.msra.mxu0 0.0
      %6898 = vmatprep.subr.mxu0 0.0
      %6899 = vmatpush1.msra.mxu0 0.0
      %6900 = vmatprep.subr.mxu0 0.0
      %6901 = vmatpush1.msra.mxu0 0.0
      %6902 = vmatprep.subr.mxu0 0.0
      %6903 = vmatpush1.msra.mxu0 0.0
      %6904 = vmatprep.subr.mxu0 0.0
      %6905 = vmatpush1.msra.mxu0 0.0
      %6906 = vmatprep.subr.mxu0 0.0
      %6907 = vmatpush1.msra.mxu0 0.0
      %6908 = vmatprep.subr.mxu0 0.0
      %6909 = vmatpush1.msra.mxu0 0.0
      %6910 = vmatprep.subr.mxu0 0.0
      %6911 = vmatpush1.msra.mxu0 0.0
      %6912 = vmatprep.subr.mxu0 0.0
      %6913 = vmatpush1.msra.mxu0 0.0
      %6914 = vmatprep.subr.mxu0 0.0
      %6915 = vmatpush1.msra.mxu0 0.0
      %6916 = vmatprep.subr.mxu0 0.0
      %6917 = vmatpush1.msra.mxu0 0.0
      %6918 = vmatprep.subr.mxu0 0.0
      %6919 = vmatpush1.msra.mxu0 0.0
      %6920 = vmatprep.subr.mxu0 0.0
      %6921 = vmatpush1.msra.mxu0 0.0
      %6922 = vmatprep.subr.mxu0 0.0
      %6923 = vmatpush1.msra.mxu0 0.0
      %6924 = vmatprep.subr.mxu0 0.0
      %6925 = vmatpush1.msra.mxu0 0.0
      %6926 = vmatprep.subr.mxu0 0.0
      %6927 = vmatpush1.msra.mxu0 0.0
      %6928 = vmatprep.subr.mxu0 0.0
      %6929 = vmatpush1.msra.mxu0 0.0
      %6930 = vmatprep.subr.mxu0 0.0
      %6931 = vmatpush1.msra.mxu0 0.0
      %6932 = vmatprep.subr.mxu0 0.0
      %6933 = vmatpush1.msra.mxu0 0.0
      %6934 = vmatprep.subr.mxu0 0.0
      %6935 = vmatpush1.msra.mxu0 0.0
      %6936 = vmatprep.subr.mxu0 0.0
      %6937 = vmatpush1.msra.mxu0 0.0
      %6938 = vmatprep.subr.mxu0 0.0
      %6939 = vmatpush1.msra.mxu0 0.0
      %6940 = vmatprep.subr.mxu0 0.0
      %6941 = vmatpush1.msra.mxu0 0.0
      %6942 = vmatprep.subr.mxu0 0.0
      %6943 = vmatpush1.msra.mxu0 0.0
      %6944 = vmatprep.subr.mxu0 0.0
      %6945 = vmatpush1.msra.mxu0 0.0
      %6946 = vmatprep.subr.mxu0 0.0
      %6947 = vmatpush1.msra.mxu0 0.0
      %6948 = vmatprep.subr.mxu0 0.0
      %6949 = vmatpush1.msra.mxu0 0.0
      %6950 = vmatprep.subr.mxu0 0.0
      %6951 = vmatpush1.msra.mxu0 0.0
      %6952 = vmatprep.subr.mxu0 0.0
      %6953 = vmatpush1.msra.mxu0 0.0
      %6954 = vmatprep.subr.mxu0 0.0
      %6955 = vmatpush1.msra.mxu0 0.0
      %6956 = vmatprep.mubr.f32.mxu0 0.0
      %6957 = vmatmul.mubr.f32.gmra.mrb[0].mxu0 %v6732
      %v6958 = vpop.f32.mrb[0].mxu0
      %v6959 = vadd.f32 0.0, %v6958
      %v6960 = vpop.f32.mrb[0].mxu0
      %v6961 = vadd.f32 0.0, %v6960
      %6962 = vdwg.mxu0
      %6963 = vmatprep.subr.mxu0 %v6748
      %6964 = vmatpush1.msra.mxu0 %v6746
      %6965 = vmatprep.subr.mxu0 0.0
      %6966 = vmatpush1.msra.mxu0 0.0
      %6967 = vmatprep.subr.mxu0 0.0
      %6968 = vmatpush1.msra.mxu0 0.0
      %6969 = vmatprep.subr.mxu0 0.0
      %6970 = vmatpush1.msra.mxu0 0.0
      %6971 = vmatprep.subr.mxu0 0.0
      %6972 = vmatpush1.msra.mxu0 0.0
      %6973 = vmatprep.subr.mxu0 0.0
      %6974 = vmatpush1.msra.mxu0 0.0
      %6975 = vmatprep.subr.mxu0 0.0
      %6976 = vmatpush1.msra.mxu0 0.0
      %6977 = vmatprep.subr.mxu0 0.0
      %6978 = vmatpush1.msra.mxu0 0.0
      %6979 = vmatprep.subr.mxu0 0.0
      %6980 = vmatpush1.msra.mxu0 0.0
      %6981 = vmatprep.subr.mxu0 0.0
      %6982 = vmatpush1.msra.mxu0 0.0
      %6983 = vmatprep.subr.mxu0 0.0
      %6984 = vmatpush1.msra.mxu0 0.0
      %6985 = vmatprep.subr.mxu0 0.0
      %6986 = vmatpush1.msra.mxu0 0.0
      %6987 = vmatprep.subr.mxu0 0.0
      %6988 = vmatpush1.msra.mxu0 0.0
      %6989 = vmatprep.subr.mxu0 0.0
      %6990 = vmatpush1.msra.mxu0 0.0
      %6991 = vmatprep.subr.mxu0 0.0
      %6992 = vmatpush1.msra.mxu0 0.0
      %6993 = vmatprep.subr.mxu0 0.0
      %6994 = vmatpush1.msra.mxu0 0.0
      %6995 = vmatprep.subr.mxu0 0.0
      %6996 = vmatpush1.msra.mxu0 0.0
      %6997 = vmatprep.subr.mxu0 0.0
      %6998 = vmatpush1.msra.mxu0 0.0
      %6999 = vmatprep.subr.mxu0 0.0
      %7000 = vmatpush1.msra.mxu0 0.0
      %7001 = vmatprep.subr.mxu0 0.0
      %7002 = vmatpush1.msra.mxu0 0.0
      %7003 = vmatprep.subr.mxu0 0.0
      %7004 = vmatpush1.msra.mxu0 0.0
      %7005 = vmatprep.subr.mxu0 0.0
      %7006 = vmatpush1.msra.mxu0 0.0
      %7007 = vmatprep.subr.mxu0 0.0
      %7008 = vmatpush1.msra.mxu0 0.0
      %7009 = vmatprep.subr.mxu0 0.0
      %7010 = vmatpush1.msra.mxu0 0.0
      %7011 = vmatprep.subr.mxu0 0.0
      %7012 = vmatpush1.msra.mxu0 0.0
      %7013 = vmatprep.subr.mxu0 0.0
      %7014 = vmatpush1.msra.mxu0 0.0
      %7015 = vmatprep.subr.mxu0 0.0
      %7016 = vmatpush1.msra.mxu0 0.0
      %7017 = vmatprep.subr.mxu0 0.0
      %7018 = vmatpush1.msra.mxu0 0.0
      %7019 = vmatprep.subr.mxu0 0.0
      %7020 = vmatpush1.msra.mxu0 0.0
      %7021 = vmatprep.subr.mxu0 0.0
      %7022 = vmatpush1.msra.mxu0 0.0
      %7023 = vmatprep.subr.mxu0 0.0
      %7024 = vmatpush1.msra.mxu0 0.0
      %7025 = vmatprep.subr.mxu0 0.0
      %7026 = vmatpush1.msra.mxu0 0.0
      %7027 = vmatprep.mubr.f32.mxu0 0.0
      %7028 = vmatmul.mubr.f32.gmra.mrb[0].mxu0 %v6732
      %v7029 = vpop.f32.mrb[0].mxu0
      %v7030 = vadd.f32 0.0, %v7029
      %v7031 = vpop.f32.mrb[0].mxu0
      %v7032 = vadd.f32 0.0, %v7031
      %7033 = vdwg.mxu0
      %v7034 = vadd.f32 %v6663, %v6817
      %v7035 = vadd.f32 %v6664, %v6819
      %v7036 = vadd.f32 %v6665, %v6888
      %v7037 = vadd.f32 %v6666, %v6890
      %v7038 = vadd.f32 %v6667, %v6959
      %v7039 = vadd.f32 %v6668, %v6961
      %v7040 = vadd.f32 %v6669, %v7030
      %v7041 = vadd.f32 %v6670, %v7032
      %v7042 = vld [vmem:[%s3] sm:$0x3]
      %7044 = vset.pattern.permute.xlu0 0
      %7045 = vperm.xlu0 %7044, %v7042
      %v7046 = vpop.permute.xlu0 %7045
      %v7048 = vadd.f32 %v7034, %v7046
      %v7049 = vadd.f32 %v7035, %v7046
      %v7050 = vadd.f32 %v7036, %v7046
      %v7051 = vadd.f32 %v7037, %v7046
      %v7052 = vadd.f32 %v7038, %v7046
      %v7053 = vadd.f32 %v7039, %v7046
      %v7054 = vadd.f32 %v7040, %v7046
      %v7055 = vadd.f32 %v7041, %v7046
      %v7056 = vmax.f32 %v7048, 0.0
      %v7057 = vmax.f32 %v7049, 0.0
      %v7058 = vmax.f32 %v7050, 0.0
      %v7059 = vmax.f32 %v7051, 0.0
      %v7060 = vmax.f32 %v7052, 0.0
      %v7061 = vmax.f32 %v7053, 0.0
      %v7062 = vmax.f32 %v7054, 0.0
      %v7063 = vmax.f32 %v7055, 0.0
      %7064 = vst [vmem:[#allocation4] sm:$0xff] 0.0
      %7065 = vst [vmem:[#allocation4 + $0x8] sm:$0xff] 0.0
      %7066 = vst [vmem:[#allocation4 + $0x10] sm:$0xf] 0.0
      %v7075 = vcombine.low %v7056, %v7057
      %v7076 = vcombine.low %v7058, %v7059
      %v7078 = vunpack.c.l.s4 1983009808
      %v7079 = vunpack.c.0.s8 %v7078
      %v7080 = vlaneseq
      %v7081 = vshrl.u32 %v7080, 7
      %v7082 = vsub.s32 %v7079, %v7081
      %v7083 = vrot.slane %v7075, %v7082
      %v7085 = vunpack.c.l.s4 1983009808
      %v7086 = vunpack.c.0.s8 %v7085
      %v7087 = vlaneseq
      %v7088 = vshrl.u32 %v7087, 7
      %v7089 = vsub.s32 %v7086, %v7088
      %v7090 = vrot.slane %v7076, %v7089
      %v7091 = vcombine.low %v7083, %v7090
      %v7092 = vcombine.low %v7060, %v7061
      %v7093 = vcombine.low %v7062, %v7063
      %v7095 = vunpack.c.l.s4 1983009808
      %v7096 = vunpack.c.0.s8 %v7095
      %v7097 = vlaneseq
      %v7098 = vshrl.u32 %v7097, 7
      %v7099 = vsub.s32 %v7096, %v7098
      %v7100 = vrot.slane %v7092, %v7099
      %v7102 = vunpack.c.l.s4 1983009808
      %v7103 = vunpack.c.0.s8 %v7102
      %v7104 = vlaneseq
      %v7105 = vshrl.u32 %v7104, 7
      %v7106 = vsub.s32 %v7103, %v7105
      %v7107 = vrot.slane %v7093, %v7106
      %v7108 = vcombine.low %v7100, %v7107
      %7111 = vst [vmem:[#allocation4 + $0x2] sm:$0xff] %v7091
      %7112 = vst [vmem:[#allocation4 + $0xa] sm:$0xff] %v7108
      %v7113 = vld [vmem:[#allocation4] sm:$0xff]
      %v7114 = vld [vmem:[#allocation4 + $0x8] sm:$0xff]
      %v7115 = vld [vmem:[#allocation4 + $0x10] sm:$0xf]
      %v7116 = vmul.f32 %v7113, %v3685
      %v7117 = vmul.f32 %v7114, %v3688
      %v7118 = vmul.f32 %v7115, %v3684
      %v7119 = vld [vmem:[%s2] sm:$0x3]
      %s7120 = scalar_lea.vmem %s2, 2
      %v7121 = vld [vmem:[%s7120] sm:$0x3]
      %v7125 = vcombine.high %v7113, %v7113
      %v7127 = vunpack.c.l.s4 1983009808
      %v7128 = vunpack.c.0.s8 %v7127
      %v7129 = vlaneseq
      %v7130 = vshrl.u32 %v7129, 7
      %v7131 = vsub.s32 %v7128, %v7130
      %v7132 = vrot.slane %v7113, %v7131
      %v7134 = vunpack.c.l.s4 1983009808
      %v7135 = vunpack.c.0.s8 %v7134
      %v7136 = vlaneseq
      %v7137 = vshrl.u32 %v7136, 7
      %v7138 = vsub.s32 %v7135, %v7137
      %v7139 = vrot.slane %v7125, %v7138
      %v7140 = vcombine.high %v7132, %v7132
      %v7141 = vcombine.high %v7139, %v7139
      %v7142 = vcombine.high %v7114, %v7114
      %v7144 = vunpack.c.l.s4 1983009808
      %v7145 = vunpack.c.0.s8 %v7144
      %v7146 = vlaneseq
      %v7147 = vshrl.u32 %v7146, 7
      %v7148 = vsub.s32 %v7145, %v7147
      %v7149 = vrot.slane %v7114, %v7148
      %v7151 = vunpack.c.l.s4 1983009808
      %v7152 = vunpack.c.0.s8 %v7151
      %v7153 = vlaneseq
      %v7154 = vshrl.u32 %v7153, 7
      %v7155 = vsub.s32 %v7152, %v7154
      %v7156 = vrot.slane %v7142, %v7155
      %v7157 = vcombine.high %v7149, %v7149
      %v7158 = vcombine.high %v7156, %v7156
      %v7160 = vunpack.c.l.s4 1983009808
      %v7161 = vunpack.c.0.s8 %v7160
      %v7162 = vlaneseq
      %v7163 = vshrl.u32 %v7162, 7
      %v7164 = vsub.s32 %v7161, %v7163
      %v7165 = vrot.slane %v7115, %v7164
      %7166 = vrot.lane.b32.xlu0 %v7132, 32
      %v7167 = vpop.permute.xlu0 %7166
      %7168 = vrot.lane.b32.xlu0 %v7140, 32
      %v7169 = vpop.permute.xlu0 %7168
      %7170 = vrot.lane.b32.xlu0 %v7139, 32
      %v7171 = vpop.permute.xlu0 %7170
      %7172 = vrot.lane.b32.xlu0 %v7141, 32
      %v7173 = vpop.permute.xlu0 %7172
      %7174 = vrot.lane.b32.xlu0 %v7149, 32
      %v7175 = vpop.permute.xlu0 %7174
      %7176 = vrot.lane.b32.xlu0 %v7157, 32
      %v7177 = vpop.permute.xlu0 %7176
      %7178 = vrot.lane.b32.xlu0 %v7156, 32
      %v7179 = vpop.permute.xlu0 %7178
      %7180 = vrot.lane.b32.xlu0 %v7158, 32
      %v7181 = vpop.permute.xlu0 %7180
      %7182 = vrot.lane.b32.xlu0 %v7165, 32
      %v7183 = vpop.permute.xlu0 %7182
      %v7184 = vsel %vm424, %v7167, %v7169
      %v7185 = vsel %vm424, %v7169, %v7171
      %v7186 = vsel %vm424, %v7171, %v7173
      %v7187 = vsel %vm424, %v7173, %v7175
      %v7188 = vsel %vm424, %v7175, %v7177
      %v7189 = vsel %vm424, %v7177, %v7179
      %v7190 = vsel %vm424, %v7179, %v7181
      %v7191 = vsel %vm424, %v7181, %v7183
      %v7193 = vsel %vm3768, %v7121, 0
      %v7195 = vsel %vm3686, %v7184, 0
      %v7197 = vsel %vm3686, %v7185, 0
      %v7199 = vsel %vm3686, %v7186, 0
      %v7201 = vsel %vm3686, %v7187, 0
      %v7203 = vsel %vm3686, %v7188, 0
      %v7205 = vsel %vm3686, %v7189, 0
      %v7207 = vsel %vm3686, %v7190, 0
      %v7209 = vsel %vm3686, %v7191, 0
      %7211 = vmatprep.subr.mxu0 %v7197
      %7212 = vmatpush1.msra.mxu0 %v7195
      %7213 = vmatprep.subr.mxu0 0.0
      %7214 = vmatpush1.msra.mxu0 0.0
      %7215 = vmatprep.subr.mxu0 0.0
      %7216 = vmatpush1.msra.mxu0 0.0
      %7217 = vmatprep.subr.mxu0 0.0
      %7218 = vmatpush1.msra.mxu0 0.0
      %7219 = vmatprep.subr.mxu0 0.0
      %7220 = vmatpush1.msra.mxu0 0.0
      %7221 = vmatprep.subr.mxu0 0.0
      %7222 = vmatpush1.msra.mxu0 0.0
      %7223 = vmatprep.subr.mxu0 0.0
      %7224 = vmatpush1.msra.mxu0 0.0
      %7225 = vmatprep.subr.mxu0 0.0
      %7226 = vmatpush1.msra.mxu0 0.0
      %7227 = vmatprep.subr.mxu0 0.0
      %7228 = vmatpush1.msra.mxu0 0.0
      %7229 = vmatprep.subr.mxu0 0.0
      %7230 = vmatpush1.msra.mxu0 0.0
      %7231 = vmatprep.subr.mxu0 0.0
      %7232 = vmatpush1.msra.mxu0 0.0
      %7233 = vmatprep.subr.mxu0 0.0
      %7234 = vmatpush1.msra.mxu0 0.0
      %7235 = vmatprep.subr.mxu0 0.0
      %7236 = vmatpush1.msra.mxu0 0.0
      %7237 = vmatprep.subr.mxu0 0.0
      %7238 = vmatpush1.msra.mxu0 0.0
      %7239 = vmatprep.subr.mxu0 0.0
      %7240 = vmatpush1.msra.mxu0 0.0
      %7241 = vmatprep.subr.mxu0 0.0
      %7242 = vmatpush1.msra.mxu0 0.0
      %7243 = vmatprep.subr.mxu0 0.0
      %7244 = vmatpush1.msra.mxu0 0.0
      %7245 = vmatprep.subr.mxu0 0.0
      %7246 = vmatpush1.msra.mxu0 0.0
      %7247 = vmatprep.subr.mxu0 0.0
      %7248 = vmatpush1.msra.mxu0 0.0
      %7249 = vmatprep.subr.mxu0 0.0
      %7250 = vmatpush1.msra.mxu0 0.0
      %7251 = vmatprep.subr.mxu0 0.0
      %7252 = vmatpush1.msra.mxu0 0.0
      %7253 = vmatprep.subr.mxu0 0.0
      %7254 = vmatpush1.msra.mxu0 0.0
      %7255 = vmatprep.subr.mxu0 0.0
      %7256 = vmatpush1.msra.mxu0 0.0
      %7257 = vmatprep.subr.mxu0 0.0
      %7258 = vmatpush1.msra.mxu0 0.0
      %7259 = vmatprep.subr.mxu0 0.0
      %7260 = vmatpush1.msra.mxu0 0.0
      %7261 = vmatprep.subr.mxu0 0.0
      %7262 = vmatpush1.msra.mxu0 0.0
      %7263 = vmatprep.subr.mxu0 0.0
      %7264 = vmatpush1.msra.mxu0 0.0
      %7265 = vmatprep.subr.mxu0 0.0
      %7266 = vmatpush1.msra.mxu0 0.0
      %7267 = vmatprep.subr.mxu0 0.0
      %7268 = vmatpush1.msra.mxu0 0.0
      %7269 = vmatprep.subr.mxu0 0.0
      %7270 = vmatpush1.msra.mxu0 0.0
      %7271 = vmatprep.subr.mxu0 0.0
      %7272 = vmatpush1.msra.mxu0 0.0
      %7273 = vmatprep.subr.mxu0 0.0
      %7274 = vmatpush1.msra.mxu0 0.0
      %7275 = vmatprep.mubr.f32.mxu0 0.0
      %7276 = vmatmul.mubr.f32.gmra.mrb[0].mxu0 %v7193
      %v7277 = vpop.f32.mrb[0].mxu0
      %v7278 = vadd.f32 0.0, %v7277
      %v7279 = vpop.f32.mrb[0].mxu0
      %v7280 = vadd.f32 0.0, %v7279
      %7281 = vdwg.mxu0
      %7282 = vmatprep.subr.mxu0 %v7201
      %7283 = vmatpush1.msra.mxu0 %v7199
      %7284 = vmatprep.subr.mxu0 0.0
      %7285 = vmatpush1.msra.mxu0 0.0
      %7286 = vmatprep.subr.mxu0 0.0
      %7287 = vmatpush1.msra.mxu0 0.0
      %7288 = vmatprep.subr.mxu0 0.0
      %7289 = vmatpush1.msra.mxu0 0.0
      %7290 = vmatprep.subr.mxu0 0.0
      %7291 = vmatpush1.msra.mxu0 0.0
      %7292 = vmatprep.subr.mxu0 0.0
      %7293 = vmatpush1.msra.mxu0 0.0
      %7294 = vmatprep.subr.mxu0 0.0
      %7295 = vmatpush1.msra.mxu0 0.0
      %7296 = vmatprep.subr.mxu0 0.0
      %7297 = vmatpush1.msra.mxu0 0.0
      %7298 = vmatprep.subr.mxu0 0.0
      %7299 = vmatpush1.msra.mxu0 0.0
      %7300 = vmatprep.subr.mxu0 0.0
      %7301 = vmatpush1.msra.mxu0 0.0
      %7302 = vmatprep.subr.mxu0 0.0
      %7303 = vmatpush1.msra.mxu0 0.0
      %7304 = vmatprep.subr.mxu0 0.0
      %7305 = vmatpush1.msra.mxu0 0.0
      %7306 = vmatprep.subr.mxu0 0.0
      %7307 = vmatpush1.msra.mxu0 0.0
      %7308 = vmatprep.subr.mxu0 0.0
      %7309 = vmatpush1.msra.mxu0 0.0
      %7310 = vmatprep.subr.mxu0 0.0
      %7311 = vmatpush1.msra.mxu0 0.0
      %7312 = vmatprep.subr.mxu0 0.0
      %7313 = vmatpush1.msra.mxu0 0.0
      %7314 = vmatprep.subr.mxu0 0.0
      %7315 = vmatpush1.msra.mxu0 0.0
      %7316 = vmatprep.subr.mxu0 0.0
      %7317 = vmatpush1.msra.mxu0 0.0
      %7318 = vmatprep.subr.mxu0 0.0
      %7319 = vmatpush1.msra.mxu0 0.0
      %7320 = vmatprep.subr.mxu0 0.0
      %7321 = vmatpush1.msra.mxu0 0.0
      %7322 = vmatprep.subr.mxu0 0.0
      %7323 = vmatpush1.msra.mxu0 0.0
      %7324 = vmatprep.subr.mxu0 0.0
      %7325 = vmatpush1.msra.mxu0 0.0
      %7326 = vmatprep.subr.mxu0 0.0
      %7327 = vmatpush1.msra.mxu0 0.0
      %7328 = vmatprep.subr.mxu0 0.0
      %7329 = vmatpush1.msra.mxu0 0.0
      %7330 = vmatprep.subr.mxu0 0.0
      %7331 = vmatpush1.msra.mxu0 0.0
      %7332 = vmatprep.subr.mxu0 0.0
      %7333 = vmatpush1.msra.mxu0 0.0
      %7334 = vmatprep.subr.mxu0 0.0
      %7335 = vmatpush1.msra.mxu0 0.0
      %7336 = vmatprep.subr.mxu0 0.0
      %7337 = vmatpush1.msra.mxu0 0.0
      %7338 = vmatprep.subr.mxu0 0.0
      %7339 = vmatpush1.msra.mxu0 0.0
      %7340 = vmatprep.subr.mxu0 0.0
      %7341 = vmatpush1.msra.mxu0 0.0
      %7342 = vmatprep.subr.mxu0 0.0
      %7343 = vmatpush1.msra.mxu0 0.0
      %7344 = vmatprep.subr.mxu0 0.0
      %7345 = vmatpush1.msra.mxu0 0.0
      %7346 = vmatprep.mubr.f32.mxu0 0.0
      %7347 = vmatmul.mubr.f32.gmra.mrb[0].mxu0 %v7193
      %v7348 = vpop.f32.mrb[0].mxu0
      %v7349 = vadd.f32 0.0, %v7348
      %v7350 = vpop.f32.mrb[0].mxu0
      %v7351 = vadd.f32 0.0, %v7350
      %7352 = vdwg.mxu0
      %7353 = vmatprep.subr.mxu0 %v7205
      %7354 = vmatpush1.msra.mxu0 %v7203
      %7355 = vmatprep.subr.mxu0 0.0
      %7356 = vmatpush1.msra.mxu0 0.0
      %7357 = vmatprep.subr.mxu0 0.0
      %7358 = vmatpush1.msra.mxu0 0.0
      %7359 = vmatprep.subr.mxu0 0.0
      %7360 = vmatpush1.msra.mxu0 0.0
      %7361 = vmatprep.subr.mxu0 0.0
      %7362 = vmatpush1.msra.mxu0 0.0
      %7363 = vmatprep.subr.mxu0 0.0
      %7364 = vmatpush1.msra.mxu0 0.0
      %7365 = vmatprep.subr.mxu0 0.0
      %7366 = vmatpush1.msra.mxu0 0.0
      %7367 = vmatprep.subr.mxu0 0.0
      %7368 = vmatpush1.msra.mxu0 0.0
      %7369 = vmatprep.subr.mxu0 0.0
      %7370 = vmatpush1.msra.mxu0 0.0
      %7371 = vmatprep.subr.mxu0 0.0
      %7372 = vmatpush1.msra.mxu0 0.0
      %7373 = vmatprep.subr.mxu0 0.0
      %7374 = vmatpush1.msra.mxu0 0.0
      %7375 = vmatprep.subr.mxu0 0.0
      %7376 = vmatpush1.msra.mxu0 0.0
      %7377 = vmatprep.subr.mxu0 0.0
      %7378 = vmatpush1.msra.mxu0 0.0
      %7379 = vmatprep.subr.mxu0 0.0
      %7380 = vmatpush1.msra.mxu0 0.0
      %7381 = vmatprep.subr.mxu0 0.0
      %7382 = vmatpush1.msra.mxu0 0.0
      %7383 = vmatprep.subr.mxu0 0.0
      %7384 = vmatpush1.msra.mxu0 0.0
      %7385 = vmatprep.subr.mxu0 0.0
      %7386 = vmatpush1.msra.mxu0 0.0
      %7387 = vmatprep.subr.mxu0 0.0
      %7388 = vmatpush1.msra.mxu0 0.0
      %7389 = vmatprep.subr.mxu0 0.0
      %7390 = vmatpush1.msra.mxu0 0.0
      %7391 = vmatprep.subr.mxu0 0.0
      %7392 = vmatpush1.msra.mxu0 0.0
      %7393 = vmatprep.subr.mxu0 0.0
      %7394 = vmatpush1.msra.mxu0 0.0
      %7395 = vmatprep.subr.mxu0 0.0
      %7396 = vmatpush1.msra.mxu0 0.0
      %7397 = vmatprep.subr.mxu0 0.0
      %7398 = vmatpush1.msra.mxu0 0.0
      %7399 = vmatprep.subr.mxu0 0.0
      %7400 = vmatpush1.msra.mxu0 0.0
      %7401 = vmatprep.subr.mxu0 0.0
      %7402 = vmatpush1.msra.mxu0 0.0
      %7403 = vmatprep.subr.mxu0 0.0
      %7404 = vmatpush1.msra.mxu0 0.0
      %7405 = vmatprep.subr.mxu0 0.0
      %7406 = vmatpush1.msra.mxu0 0.0
      %7407 = vmatprep.subr.mxu0 0.0
      %7408 = vmatpush1.msra.mxu0 0.0
      %7409 = vmatprep.subr.mxu0 0.0
      %7410 = vmatpush1.msra.mxu0 0.0
      %7411 = vmatprep.subr.mxu0 0.0
      %7412 = vmatpush1.msra.mxu0 0.0
      %7413 = vmatprep.subr.mxu0 0.0
      %7414 = vmatpush1.msra.mxu0 0.0
      %7415 = vmatprep.subr.mxu0 0.0
      %7416 = vmatpush1.msra.mxu0 0.0
      %7417 = vmatprep.mubr.f32.mxu0 0.0
      %7418 = vmatmul.mubr.f32.gmra.mrb[0].mxu0 %v7193
      %v7419 = vpop.f32.mrb[0].mxu0
      %v7420 = vadd.f32 0.0, %v7419
      %v7421 = vpop.f32.mrb[0].mxu0
      %v7422 = vadd.f32 0.0, %v7421
      %7423 = vdwg.mxu0
      %7424 = vmatprep.subr.mxu0 %v7209
      %7425 = vmatpush1.msra.mxu0 %v7207
      %7426 = vmatprep.subr.mxu0 0.0
      %7427 = vmatpush1.msra.mxu0 0.0
      %7428 = vmatprep.subr.mxu0 0.0
      %7429 = vmatpush1.msra.mxu0 0.0
      %7430 = vmatprep.subr.mxu0 0.0
      %7431 = vmatpush1.msra.mxu0 0.0
      %7432 = vmatprep.subr.mxu0 0.0
      %7433 = vmatpush1.msra.mxu0 0.0
      %7434 = vmatprep.subr.mxu0 0.0
      %7435 = vmatpush1.msra.mxu0 0.0
      %7436 = vmatprep.subr.mxu0 0.0
      %7437 = vmatpush1.msra.mxu0 0.0
      %7438 = vmatprep.subr.mxu0 0.0
      %7439 = vmatpush1.msra.mxu0 0.0
      %7440 = vmatprep.subr.mxu0 0.0
      %7441 = vmatpush1.msra.mxu0 0.0
      %7442 = vmatprep.subr.mxu0 0.0
      %7443 = vmatpush1.msra.mxu0 0.0
      %7444 = vmatprep.subr.mxu0 0.0
      %7445 = vmatpush1.msra.mxu0 0.0
      %7446 = vmatprep.subr.mxu0 0.0
      %7447 = vmatpush1.msra.mxu0 0.0
      %7448 = vmatprep.subr.mxu0 0.0
      %7449 = vmatpush1.msra.mxu0 0.0
      %7450 = vmatprep.subr.mxu0 0.0
      %7451 = vmatpush1.msra.mxu0 0.0
      %7452 = vmatprep.subr.mxu0 0.0
      %7453 = vmatpush1.msra.mxu0 0.0
      %7454 = vmatprep.subr.mxu0 0.0
      %7455 = vmatpush1.msra.mxu0 0.0
      %7456 = vmatprep.subr.mxu0 0.0
      %7457 = vmatpush1.msra.mxu0 0.0
      %7458 = vmatprep.subr.mxu0 0.0
      %7459 = vmatpush1.msra.mxu0 0.0
      %7460 = vmatprep.subr.mxu0 0.0
      %7461 = vmatpush1.msra.mxu0 0.0
      %7462 = vmatprep.subr.mxu0 0.0
      %7463 = vmatpush1.msra.mxu0 0.0
      %7464 = vmatprep.subr.mxu0 0.0
      %7465 = vmatpush1.msra.mxu0 0.0
      %7466 = vmatprep.subr.mxu0 0.0
      %7467 = vmatpush1.msra.mxu0 0.0
      %7468 = vmatprep.subr.mxu0 0.0
      %7469 = vmatpush1.msra.mxu0 0.0
      %7470 = vmatprep.subr.mxu0 0.0
      %7471 = vmatpush1.msra.mxu0 0.0
      %7472 = vmatprep.subr.mxu0 0.0
      %7473 = vmatpush1.msra.mxu0 0.0
      %7474 = vmatprep.subr.mxu0 0.0
      %7475 = vmatpush1.msra.mxu0 0.0
      %7476 = vmatprep.subr.mxu0 0.0
      %7477 = vmatpush1.msra.mxu0 0.0
      %7478 = vmatprep.subr.mxu0 0.0
      %7479 = vmatpush1.msra.mxu0 0.0
      %7480 = vmatprep.subr.mxu0 0.0
      %7481 = vmatpush1.msra.mxu0 0.0
      %7482 = vmatprep.subr.mxu0 0.0
      %7483 = vmatpush1.msra.mxu0 0.0
      %7484 = vmatprep.subr.mxu0 0.0
      %7485 = vmatpush1.msra.mxu0 0.0
      %7486 = vmatprep.subr.mxu0 0.0
      %7487 = vmatpush1.msra.mxu0 0.0
      %7488 = vmatprep.mubr.f32.mxu0 0.0
      %7489 = vmatmul.mubr.f32.gmra.mrb[0].mxu0 %v7193
      %v7490 = vpop.f32.mrb[0].mxu0
      %v7491 = vadd.f32 0.0, %v7490
      %v7492 = vpop.f32.mrb[0].mxu0
      %v7493 = vadd.f32 0.0, %v7492
      %7494 = vdwg.mxu0
      %v7498 = vcombine.high %v7116, %v7116
      %v7500 = vunpack.c.l.s4 1983009808
      %v7501 = vunpack.c.0.s8 %v7500
      %v7502 = vlaneseq
      %v7503 = vshrl.u32 %v7502, 7
      %v7504 = vsub.s32 %v7501, %v7503
      %v7505 = vrot.slane %v7116, %v7504
      %v7507 = vunpack.c.l.s4 1983009808
      %v7508 = vunpack.c.0.s8 %v7507
      %v7509 = vlaneseq
      %v7510 = vshrl.u32 %v7509, 7
      %v7511 = vsub.s32 %v7508, %v7510
      %v7512 = vrot.slane %v7498, %v7511
      %v7513 = vcombine.high %v7505, %v7505
      %v7514 = vcombine.high %v7512, %v7512
      %v7515 = vcombine.high %v7117, %v7117
      %v7517 = vunpack.c.l.s4 1983009808
      %v7518 = vunpack.c.0.s8 %v7517
      %v7519 = vlaneseq
      %v7520 = vshrl.u32 %v7519, 7
      %v7521 = vsub.s32 %v7518, %v7520
      %v7522 = vrot.slane %v7117, %v7521
      %v7524 = vunpack.c.l.s4 1983009808
      %v7525 = vunpack.c.0.s8 %v7524
      %v7526 = vlaneseq
      %v7527 = vshrl.u32 %v7526, 7
      %v7528 = vsub.s32 %v7525, %v7527
      %v7529 = vrot.slane %v7515, %v7528
      %v7530 = vcombine.high %v7522, %v7522
      %v7531 = vcombine.high %v7529, %v7529
      %v7533 = vunpack.c.l.s4 1983009808
      %v7534 = vunpack.c.0.s8 %v7533
      %v7535 = vlaneseq
      %v7536 = vshrl.u32 %v7535, 7
      %v7537 = vsub.s32 %v7534, %v7536
      %v7538 = vrot.slane %v7118, %v7537
      %7539 = vrot.lane.b32.xlu0 %v7505, 33
      %v7540 = vpop.permute.xlu0 %7539
      %7541 = vrot.lane.b32.xlu0 %v7513, 33
      %v7542 = vpop.permute.xlu0 %7541
      %7543 = vrot.lane.b32.xlu0 %v7512, 33
      %v7544 = vpop.permute.xlu0 %7543
      %7545 = vrot.lane.b32.xlu0 %v7514, 33
      %v7546 = vpop.permute.xlu0 %7545
      %7547 = vrot.lane.b32.xlu0 %v7522, 33
      %v7548 = vpop.permute.xlu0 %7547
      %7549 = vrot.lane.b32.xlu0 %v7530, 33
      %v7550 = vpop.permute.xlu0 %7549
      %7551 = vrot.lane.b32.xlu0 %v7529, 33
      %v7552 = vpop.permute.xlu0 %7551
      %7553 = vrot.lane.b32.xlu0 %v7531, 33
      %v7554 = vpop.permute.xlu0 %7553
      %7555 = vrot.lane.b32.xlu0 %v7538, 33
      %v7556 = vpop.permute.xlu0 %7555
      %v7557 = vsel %vm764, %v7540, %v7542
      %v7558 = vsel %vm764, %v7542, %v7544
      %v7559 = vsel %vm764, %v7544, %v7546
      %v7560 = vsel %vm764, %v7546, %v7548
      %v7561 = vsel %vm764, %v7548, %v7550
      %v7562 = vsel %vm764, %v7550, %v7552
      %v7563 = vsel %vm764, %v7552, %v7554
      %v7564 = vsel %vm764, %v7554, %v7556
      %v7566 = vsel %vm3768, %v7119, 0
      %v7568 = vsel %vm3686, %v7557, 0
      %v7570 = vsel %vm3686, %v7558, 0
      %v7572 = vsel %vm3686, %v7559, 0
      %v7574 = vsel %vm3686, %v7560, 0
      %v7576 = vsel %vm3686, %v7561, 0
      %v7578 = vsel %vm3686, %v7562, 0
      %v7580 = vsel %vm3686, %v7563, 0
      %v7582 = vsel %vm3686, %v7564, 0
      %7584 = vmatprep.subr.mxu0 %v7570
      %7585 = vmatpush1.msra.mxu0 %v7568
      %7586 = vmatprep.subr.mxu0 0.0
      %7587 = vmatpush1.msra.mxu0 0.0
      %7588 = vmatprep.subr.mxu0 0.0
      %7589 = vmatpush1.msra.mxu0 0.0
      %7590 = vmatprep.subr.mxu0 0.0
      %7591 = vmatpush1.msra.mxu0 0.0
      %7592 = vmatprep.subr.mxu0 0.0
      %7593 = vmatpush1.msra.mxu0 0.0
      %7594 = vmatprep.subr.mxu0 0.0
      %7595 = vmatpush1.msra.mxu0 0.0
      %7596 = vmatprep.subr.mxu0 0.0
      %7597 = vmatpush1.msra.mxu0 0.0
      %7598 = vmatprep.subr.mxu0 0.0
      %7599 = vmatpush1.msra.mxu0 0.0
      %7600 = vmatprep.subr.mxu0 0.0
      %7601 = vmatpush1.msra.mxu0 0.0
      %7602 = vmatprep.subr.mxu0 0.0
      %7603 = vmatpush1.msra.mxu0 0.0
      %7604 = vmatprep.subr.mxu0 0.0
      %7605 = vmatpush1.msra.mxu0 0.0
      %7606 = vmatprep.subr.mxu0 0.0
      %7607 = vmatpush1.msra.mxu0 0.0
      %7608 = vmatprep.subr.mxu0 0.0
      %7609 = vmatpush1.msra.mxu0 0.0
      %7610 = vmatprep.subr.mxu0 0.0
      %7611 = vmatpush1.msra.mxu0 0.0
      %7612 = vmatprep.subr.mxu0 0.0
      %7613 = vmatpush1.msra.mxu0 0.0
      %7614 = vmatprep.subr.mxu0 0.0
      %7615 = vmatpush1.msra.mxu0 0.0
      %7616 = vmatprep.subr.mxu0 0.0
      %7617 = vmatpush1.msra.mxu0 0.0
      %7618 = vmatprep.subr.mxu0 0.0
      %7619 = vmatpush1.msra.mxu0 0.0
      %7620 = vmatprep.subr.mxu0 0.0
      %7621 = vmatpush1.msra.mxu0 0.0
      %7622 = vmatprep.subr.mxu0 0.0
      %7623 = vmatpush1.msra.mxu0 0.0
      %7624 = vmatprep.subr.mxu0 0.0
      %7625 = vmatpush1.msra.mxu0 0.0
      %7626 = vmatprep.subr.mxu0 0.0
      %7627 = vmatpush1.msra.mxu0 0.0
      %7628 = vmatprep.subr.mxu0 0.0
      %7629 = vmatpush1.msra.mxu0 0.0
      %7630 = vmatprep.subr.mxu0 0.0
      %7631 = vmatpush1.msra.mxu0 0.0
      %7632 = vmatprep.subr.mxu0 0.0
      %7633 = vmatpush1.msra.mxu0 0.0
      %7634 = vmatprep.subr.mxu0 0.0
      %7635 = vmatpush1.msra.mxu0 0.0
      %7636 = vmatprep.subr.mxu0 0.0
      %7637 = vmatpush1.msra.mxu0 0.0
      %7638 = vmatprep.subr.mxu0 0.0
      %7639 = vmatpush1.msra.mxu0 0.0
      %7640 = vmatprep.subr.mxu0 0.0
      %7641 = vmatpush1.msra.mxu0 0.0
      %7642 = vmatprep.subr.mxu0 0.0
      %7643 = vmatpush1.msra.mxu0 0.0
      %7644 = vmatprep.subr.mxu0 0.0
      %7645 = vmatpush1.msra.mxu0 0.0
      %7646 = vmatprep.subr.mxu0 0.0
      %7647 = vmatpush1.msra.mxu0 0.0
      %7648 = vmatprep.mubr.f32.mxu0 0.0
      %7649 = vmatmul.mubr.f32.gmra.mrb[0].mxu0 %v7566
      %v7650 = vpop.f32.mrb[0].mxu0
      %v7651 = vadd.f32 %v7278, %v7650
      %v7652 = vpop.f32.mrb[0].mxu0
      %v7653 = vadd.f32 %v7280, %v7652
      %7654 = vdwg.mxu0
      %7655 = vmatprep.subr.mxu0 %v7574
      %7656 = vmatpush1.msra.mxu0 %v7572
      %7657 = vmatprep.subr.mxu0 0.0
      %7658 = vmatpush1.msra.mxu0 0.0
      %7659 = vmatprep.subr.mxu0 0.0
      %7660 = vmatpush1.msra.mxu0 0.0
      %7661 = vmatprep.subr.mxu0 0.0
      %7662 = vmatpush1.msra.mxu0 0.0
      %7663 = vmatprep.subr.mxu0 0.0
      %7664 = vmatpush1.msra.mxu0 0.0
      %7665 = vmatprep.subr.mxu0 0.0
      %7666 = vmatpush1.msra.mxu0 0.0
      %7667 = vmatprep.subr.mxu0 0.0
      %7668 = vmatpush1.msra.mxu0 0.0
      %7669 = vmatprep.subr.mxu0 0.0
      %7670 = vmatpush1.msra.mxu0 0.0
      %7671 = vmatprep.subr.mxu0 0.0
      %7672 = vmatpush1.msra.mxu0 0.0
      %7673 = vmatprep.subr.mxu0 0.0
      %7674 = vmatpush1.msra.mxu0 0.0
      %7675 = vmatprep.subr.mxu0 0.0
      %7676 = vmatpush1.msra.mxu0 0.0
      %7677 = vmatprep.subr.mxu0 0.0
      %7678 = vmatpush1.msra.mxu0 0.0
      %7679 = vmatprep.subr.mxu0 0.0
      %7680 = vmatpush1.msra.mxu0 0.0
      %7681 = vmatprep.subr.mxu0 0.0
      %7682 = vmatpush1.msra.mxu0 0.0
      %7683 = vmatprep.subr.mxu0 0.0
      %7684 = vmatpush1.msra.mxu0 0.0
      %7685 = vmatprep.subr.mxu0 0.0
      %7686 = vmatpush1.msra.mxu0 0.0
      %7687 = vmatprep.subr.mxu0 0.0
      %7688 = vmatpush1.msra.mxu0 0.0
      %7689 = vmatprep.subr.mxu0 0.0
      %7690 = vmatpush1.msra.mxu0 0.0
      %7691 = vmatprep.subr.mxu0 0.0
      %7692 = vmatpush1.msra.mxu0 0.0
      %7693 = vmatprep.subr.mxu0 0.0
      %7694 = vmatpush1.msra.mxu0 0.0
      %7695 = vmatprep.subr.mxu0 0.0
      %7696 = vmatpush1.msra.mxu0 0.0
      %7697 = vmatprep.subr.mxu0 0.0
      %7698 = vmatpush1.msra.mxu0 0.0
      %7699 = vmatprep.subr.mxu0 0.0
      %7700 = vmatpush1.msra.mxu0 0.0
      %7701 = vmatprep.subr.mxu0 0.0
      %7702 = vmatpush1.msra.mxu0 0.0
      %7703 = vmatprep.subr.mxu0 0.0
      %7704 = vmatpush1.msra.mxu0 0.0
      %7705 = vmatprep.subr.mxu0 0.0
      %7706 = vmatpush1.msra.mxu0 0.0
      %7707 = vmatprep.subr.mxu0 0.0
      %7708 = vmatpush1.msra.mxu0 0.0
      %7709 = vmatprep.subr.mxu0 0.0
      %7710 = vmatpush1.msra.mxu0 0.0
      %7711 = vmatprep.subr.mxu0 0.0
      %7712 = vmatpush1.msra.mxu0 0.0
      %7713 = vmatprep.subr.mxu0 0.0
      %7714 = vmatpush1.msra.mxu0 0.0
      %7715 = vmatprep.subr.mxu0 0.0
      %7716 = vmatpush1.msra.mxu0 0.0
      %7717 = vmatprep.subr.mxu0 0.0
      %7718 = vmatpush1.msra.mxu0 0.0
      %7719 = vmatprep.mubr.f32.mxu0 0.0
      %7720 = vmatmul.mubr.f32.gmra.mrb[0].mxu0 %v7566
      %v7721 = vpop.f32.mrb[0].mxu0
      %v7722 = vadd.f32 %v7349, %v7721
      %v7723 = vpop.f32.mrb[0].mxu0
      %v7724 = vadd.f32 %v7351, %v7723
      %7725 = vdwg.mxu0
      %7726 = vmatprep.subr.mxu0 %v7578
      %7727 = vmatpush1.msra.mxu0 %v7576
      %7728 = vmatprep.subr.mxu0 0.0
      %7729 = vmatpush1.msra.mxu0 0.0
      %7730 = vmatprep.subr.mxu0 0.0
      %7731 = vmatpush1.msra.mxu0 0.0
      %7732 = vmatprep.subr.mxu0 0.0
      %7733 = vmatpush1.msra.mxu0 0.0
      %7734 = vmatprep.subr.mxu0 0.0
      %7735 = vmatpush1.msra.mxu0 0.0
      %7736 = vmatprep.subr.mxu0 0.0
      %7737 = vmatpush1.msra.mxu0 0.0
      %7738 = vmatprep.subr.mxu0 0.0
      %7739 = vmatpush1.msra.mxu0 0.0
      %7740 = vmatprep.subr.mxu0 0.0
      %7741 = vmatpush1.msra.mxu0 0.0
      %7742 = vmatprep.subr.mxu0 0.0
      %7743 = vmatpush1.msra.mxu0 0.0
      %7744 = vmatprep.subr.mxu0 0.0
      %7745 = vmatpush1.msra.mxu0 0.0
      %7746 = vmatprep.subr.mxu0 0.0
      %7747 = vmatpush1.msra.mxu0 0.0
      %7748 = vmatprep.subr.mxu0 0.0
      %7749 = vmatpush1.msra.mxu0 0.0
      %7750 = vmatprep.subr.mxu0 0.0
      %7751 = vmatpush1.msra.mxu0 0.0
      %7752 = vmatprep.subr.mxu0 0.0
      %7753 = vmatpush1.msra.mxu0 0.0
      %7754 = vmatprep.subr.mxu0 0.0
      %7755 = vmatpush1.msra.mxu0 0.0
      %7756 = vmatprep.subr.mxu0 0.0
      %7757 = vmatpush1.msra.mxu0 0.0
      %7758 = vmatprep.subr.mxu0 0.0
      %7759 = vmatpush1.msra.mxu0 0.0
      %7760 = vmatprep.subr.mxu0 0.0
      %7761 = vmatpush1.msra.mxu0 0.0
      %7762 = vmatprep.subr.mxu0 0.0
      %7763 = vmatpush1.msra.mxu0 0.0
      %7764 = vmatprep.subr.mxu0 0.0
      %7765 = vmatpush1.msra.mxu0 0.0
      %7766 = vmatprep.subr.mxu0 0.0
      %7767 = vmatpush1.msra.mxu0 0.0
      %7768 = vmatprep.subr.mxu0 0.0
      %7769 = vmatpush1.msra.mxu0 0.0
      %7770 = vmatprep.subr.mxu0 0.0
      %7771 = vmatpush1.msra.mxu0 0.0
      %7772 = vmatprep.subr.mxu0 0.0
      %7773 = vmatpush1.msra.mxu0 0.0
      %7774 = vmatprep.subr.mxu0 0.0
      %7775 = vmatpush1.msra.mxu0 0.0
      %7776 = vmatprep.subr.mxu0 0.0
      %7777 = vmatpush1.msra.mxu0 0.0
      %7778 = vmatprep.subr.mxu0 0.0
      %7779 = vmatpush1.msra.mxu0 0.0
      %7780 = vmatprep.subr.mxu0 0.0
      %7781 = vmatpush1.msra.mxu0 0.0
      %7782 = vmatprep.subr.mxu0 0.0
      %7783 = vmatpush1.msra.mxu0 0.0
      %7784 = vmatprep.subr.mxu0 0.0
      %7785 = vmatpush1.msra.mxu0 0.0
      %7786 = vmatprep.subr.mxu0 0.0
      %7787 = vmatpush1.msra.mxu0 0.0
      %7788 = vmatprep.subr.mxu0 0.0
      %7789 = vmatpush1.msra.mxu0 0.0
      %7790 = vmatprep.mubr.f32.mxu0 0.0
      %7791 = vmatmul.mubr.f32.gmra.mrb[0].mxu0 %v7566
      %v7792 = vpop.f32.mrb[0].mxu0
      %v7793 = vadd.f32 %v7420, %v7792
      %v7794 = vpop.f32.mrb[0].mxu0
      %v7795 = vadd.f32 %v7422, %v7794
      %7796 = vdwg.mxu0
      %7797 = vmatprep.subr.mxu0 %v7582
      %7798 = vmatpush1.msra.mxu0 %v7580
      %7799 = vmatprep.subr.mxu0 0.0
      %7800 = vmatpush1.msra.mxu0 0.0
      %7801 = vmatprep.subr.mxu0 0.0
      %7802 = vmatpush1.msra.mxu0 0.0
      %7803 = vmatprep.subr.mxu0 0.0
      %7804 = vmatpush1.msra.mxu0 0.0
      %7805 = vmatprep.subr.mxu0 0.0
      %7806 = vmatpush1.msra.mxu0 0.0
      %7807 = vmatprep.subr.mxu0 0.0
      %7808 = vmatpush1.msra.mxu0 0.0
      %7809 = vmatprep.subr.mxu0 0.0
      %7810 = vmatpush1.msra.mxu0 0.0
      %7811 = vmatprep.subr.mxu0 0.0
      %7812 = vmatpush1.msra.mxu0 0.0
      %7813 = vmatprep.subr.mxu0 0.0
      %7814 = vmatpush1.msra.mxu0 0.0
      %7815 = vmatprep.subr.mxu0 0.0
      %7816 = vmatpush1.msra.mxu0 0.0
      %7817 = vmatprep.subr.mxu0 0.0
      %7818 = vmatpush1.msra.mxu0 0.0
      %7819 = vmatprep.subr.mxu0 0.0
      %7820 = vmatpush1.msra.mxu0 0.0
      %7821 = vmatprep.subr.mxu0 0.0
      %7822 = vmatpush1.msra.mxu0 0.0
      %7823 = vmatprep.subr.mxu0 0.0
      %7824 = vmatpush1.msra.mxu0 0.0
      %7825 = vmatprep.subr.mxu0 0.0
      %7826 = vmatpush1.msra.mxu0 0.0
      %7827 = vmatprep.subr.mxu0 0.0
      %7828 = vmatpush1.msra.mxu0 0.0
      %7829 = vmatprep.subr.mxu0 0.0
      %7830 = vmatpush1.msra.mxu0 0.0
      %7831 = vmatprep.subr.mxu0 0.0
      %7832 = vmatpush1.msra.mxu0 0.0
      %7833 = vmatprep.subr.mxu0 0.0
      %7834 = vmatpush1.msra.mxu0 0.0
      %7835 = vmatprep.subr.mxu0 0.0
      %7836 = vmatpush1.msra.mxu0 0.0
      %7837 = vmatprep.subr.mxu0 0.0
      %7838 = vmatpush1.msra.mxu0 0.0
      %7839 = vmatprep.subr.mxu0 0.0
      %7840 = vmatpush1.msra.mxu0 0.0
      %7841 = vmatprep.subr.mxu0 0.0
      %7842 = vmatpush1.msra.mxu0 0.0
      %7843 = vmatprep.subr.mxu0 0.0
      %7844 = vmatpush1.msra.mxu0 0.0
      %7845 = vmatprep.subr.mxu0 0.0
      %7846 = vmatpush1.msra.mxu0 0.0
      %7847 = vmatprep.subr.mxu0 0.0
      %7848 = vmatpush1.msra.mxu0 0.0
      %7849 = vmatprep.subr.mxu0 0.0
      %7850 = vmatpush1.msra.mxu0 0.0
      %7851 = vmatprep.subr.mxu0 0.0
      %7852 = vmatpush1.msra.mxu0 0.0
      %7853 = vmatprep.subr.mxu0 0.0
      %7854 = vmatpush1.msra.mxu0 0.0
      %7855 = vmatprep.subr.mxu0 0.0
      %7856 = vmatpush1.msra.mxu0 0.0
      %7857 = vmatprep.subr.mxu0 0.0
      %7858 = vmatpush1.msra.mxu0 0.0
      %7859 = vmatprep.subr.mxu0 0.0
      %7860 = vmatpush1.msra.mxu0 0.0
      %7861 = vmatprep.mubr.f32.mxu0 0.0
      %7862 = vmatmul.mubr.f32.gmra.mrb[0].mxu0 %v7566
      %v7863 = vpop.f32.mrb[0].mxu0
      %v7864 = vadd.f32 %v7491, %v7863
      %v7865 = vpop.f32.mrb[0].mxu0
      %v7866 = vadd.f32 %v7493, %v7865
      %7867 = vdwg.mxu0
      %v7868 = vmul.f32 %v7113, %v4481
      %v7869 = vmul.f32 %v7114, %v4483
      %v7870 = vmul.f32 %v7115, %v4480
      %s7871 = scalar_lea.vmem %s2, 4
      %v7872 = vld [vmem:[%s7871] sm:$0x3]
      %v7876 = vcombine.high %v7868, %v7868
      %v7878 = vunpack.c.l.s4 1983009808
      %v7879 = vunpack.c.0.s8 %v7878
      %v7880 = vlaneseq
      %v7881 = vshrl.u32 %v7880, 7
      %v7882 = vsub.s32 %v7879, %v7881
      %v7883 = vrot.slane %v7868, %v7882
      %v7885 = vunpack.c.l.s4 1983009808
      %v7886 = vunpack.c.0.s8 %v7885
      %v7887 = vlaneseq
      %v7888 = vshrl.u32 %v7887, 7
      %v7889 = vsub.s32 %v7886, %v7888
      %v7890 = vrot.slane %v7876, %v7889
      %v7891 = vcombine.high %v7883, %v7883
      %v7892 = vcombine.high %v7890, %v7890
      %v7893 = vcombine.high %v7869, %v7869
      %v7895 = vunpack.c.l.s4 1983009808
      %v7896 = vunpack.c.0.s8 %v7895
      %v7897 = vlaneseq
      %v7898 = vshrl.u32 %v7897, 7
      %v7899 = vsub.s32 %v7896, %v7898
      %v7900 = vrot.slane %v7869, %v7899
      %v7902 = vunpack.c.l.s4 1983009808
      %v7903 = vunpack.c.0.s8 %v7902
      %v7904 = vlaneseq
      %v7905 = vshrl.u32 %v7904, 7
      %v7906 = vsub.s32 %v7903, %v7905
      %v7907 = vrot.slane %v7893, %v7906
      %v7908 = vcombine.high %v7900, %v7900
      %v7909 = vcombine.high %v7907, %v7907
      %v7911 = vunpack.c.l.s4 1983009808
      %v7912 = vunpack.c.0.s8 %v7911
      %v7913 = vlaneseq
      %v7914 = vshrl.u32 %v7913, 7
      %v7915 = vsub.s32 %v7912, %v7914
      %v7916 = vrot.slane %v7870, %v7915
      %7917 = vrot.lane.b32.xlu0 %v7883, 31
      %v7918 = vpop.permute.xlu0 %7917
      %7919 = vrot.lane.b32.xlu0 %v7891, 31
      %v7920 = vpop.permute.xlu0 %7919
      %7921 = vrot.lane.b32.xlu0 %v7890, 31
      %v7922 = vpop.permute.xlu0 %7921
      %7923 = vrot.lane.b32.xlu0 %v7892, 31
      %v7924 = vpop.permute.xlu0 %7923
      %7925 = vrot.lane.b32.xlu0 %v7900, 31
      %v7926 = vpop.permute.xlu0 %7925
      %7927 = vrot.lane.b32.xlu0 %v7908, 31
      %v7928 = vpop.permute.xlu0 %7927
      %7929 = vrot.lane.b32.xlu0 %v7907, 31
      %v7930 = vpop.permute.xlu0 %7929
      %7931 = vrot.lane.b32.xlu0 %v7909, 31
      %v7932 = vpop.permute.xlu0 %7931
      %7933 = vrot.lane.b32.xlu0 %v7916, 31
      %v7934 = vpop.permute.xlu0 %7933
      %v7935 = vsel %vm1172, %v7918, %v7920
      %v7936 = vsel %vm1172, %v7920, %v7922
      %v7937 = vsel %vm1172, %v7922, %v7924
      %v7938 = vsel %vm1172, %v7924, %v7926
      %v7939 = vsel %vm1172, %v7926, %v7928
      %v7940 = vsel %vm1172, %v7928, %v7930
      %v7941 = vsel %vm1172, %v7930, %v7932
      %v7942 = vsel %vm1172, %v7932, %v7934
      %v7944 = vsel %vm3768, %v7872, 0
      %v7946 = vsel %vm3686, %v7935, 0
      %v7948 = vsel %vm3686, %v7936, 0
      %v7950 = vsel %vm3686, %v7937, 0
      %v7952 = vsel %vm3686, %v7938, 0
      %v7954 = vsel %vm3686, %v7939, 0
      %v7956 = vsel %vm3686, %v7940, 0
      %v7958 = vsel %vm3686, %v7941, 0
      %v7960 = vsel %vm3686, %v7942, 0
      %7962 = vmatprep.subr.mxu0 %v7948
      %7963 = vmatpush1.msra.mxu0 %v7946
      %7964 = vmatprep.subr.mxu0 0.0
      %7965 = vmatpush1.msra.mxu0 0.0
      %7966 = vmatprep.subr.mxu0 0.0
      %7967 = vmatpush1.msra.mxu0 0.0
      %7968 = vmatprep.subr.mxu0 0.0
      %7969 = vmatpush1.msra.mxu0 0.0
      %7970 = vmatprep.subr.mxu0 0.0
      %7971 = vmatpush1.msra.mxu0 0.0
      %7972 = vmatprep.subr.mxu0 0.0
      %7973 = vmatpush1.msra.mxu0 0.0
      %7974 = vmatprep.subr.mxu0 0.0
      %7975 = vmatpush1.msra.mxu0 0.0
      %7976 = vmatprep.subr.mxu0 0.0
      %7977 = vmatpush1.msra.mxu0 0.0
      %7978 = vmatprep.subr.mxu0 0.0
      %7979 = vmatpush1.msra.mxu0 0.0
      %7980 = vmatprep.subr.mxu0 0.0
      %7981 = vmatpush1.msra.mxu0 0.0
      %7982 = vmatprep.subr.mxu0 0.0
      %7983 = vmatpush1.msra.mxu0 0.0
      %7984 = vmatprep.subr.mxu0 0.0
      %7985 = vmatpush1.msra.mxu0 0.0
      %7986 = vmatprep.subr.mxu0 0.0
      %7987 = vmatpush1.msra.mxu0 0.0
      %7988 = vmatprep.subr.mxu0 0.0
      %7989 = vmatpush1.msra.mxu0 0.0
      %7990 = vmatprep.subr.mxu0 0.0
      %7991 = vmatpush1.msra.mxu0 0.0
      %7992 = vmatprep.subr.mxu0 0.0
      %7993 = vmatpush1.msra.mxu0 0.0
      %7994 = vmatprep.subr.mxu0 0.0
      %7995 = vmatpush1.msra.mxu0 0.0
      %7996 = vmatprep.subr.mxu0 0.0
      %7997 = vmatpush1.msra.mxu0 0.0
      %7998 = vmatprep.subr.mxu0 0.0
      %7999 = vmatpush1.msra.mxu0 0.0
      %8000 = vmatprep.subr.mxu0 0.0
      %8001 = vmatpush1.msra.mxu0 0.0
      %8002 = vmatprep.subr.mxu0 0.0
      %8003 = vmatpush1.msra.mxu0 0.0
      %8004 = vmatprep.subr.mxu0 0.0
      %8005 = vmatpush1.msra.mxu0 0.0
      %8006 = vmatprep.subr.mxu0 0.0
      %8007 = vmatpush1.msra.mxu0 0.0
      %8008 = vmatprep.subr.mxu0 0.0
      %8009 = vmatpush1.msra.mxu0 0.0
      %8010 = vmatprep.subr.mxu0 0.0
      %8011 = vmatpush1.msra.mxu0 0.0
      %8012 = vmatprep.subr.mxu0 0.0
      %8013 = vmatpush1.msra.mxu0 0.0
      %8014 = vmatprep.subr.mxu0 0.0
      %8015 = vmatpush1.msra.mxu0 0.0
      %8016 = vmatprep.subr.mxu0 0.0
      %8017 = vmatpush1.msra.mxu0 0.0
      %8018 = vmatprep.subr.mxu0 0.0
      %8019 = vmatpush1.msra.mxu0 0.0
      %8020 = vmatprep.subr.mxu0 0.0
      %8021 = vmatpush1.msra.mxu0 0.0
      %8022 = vmatprep.subr.mxu0 0.0
      %8023 = vmatpush1.msra.mxu0 0.0
      %8024 = vmatprep.subr.mxu0 0.0
      %8025 = vmatpush1.msra.mxu0 0.0
      %8026 = vmatprep.mubr.f32.mxu0 0.0
      %8027 = vmatmul.mubr.f32.gmra.mrb[0].mxu0 %v7944
      %v8028 = vpop.f32.mrb[0].mxu0
      %v8029 = vadd.f32 0.0, %v8028
      %v8030 = vpop.f32.mrb[0].mxu0
      %v8031 = vadd.f32 0.0, %v8030
      %8032 = vdwg.mxu0
      %8033 = vmatprep.subr.mxu0 %v7952
      %8034 = vmatpush1.msra.mxu0 %v7950
      %8035 = vmatprep.subr.mxu0 0.0
      %8036 = vmatpush1.msra.mxu0 0.0
      %8037 = vmatprep.subr.mxu0 0.0
      %8038 = vmatpush1.msra.mxu0 0.0
      %8039 = vmatprep.subr.mxu0 0.0
      %8040 = vmatpush1.msra.mxu0 0.0
      %8041 = vmatprep.subr.mxu0 0.0
      %8042 = vmatpush1.msra.mxu0 0.0
      %8043 = vmatprep.subr.mxu0 0.0
      %8044 = vmatpush1.msra.mxu0 0.0
      %8045 = vmatprep.subr.mxu0 0.0
      %8046 = vmatpush1.msra.mxu0 0.0
      %8047 = vmatprep.subr.mxu0 0.0
      %8048 = vmatpush1.msra.mxu0 0.0
      %8049 = vmatprep.subr.mxu0 0.0
      %8050 = vmatpush1.msra.mxu0 0.0
      %8051 = vmatprep.subr.mxu0 0.0
      %8052 = vmatpush1.msra.mxu0 0.0
      %8053 = vmatprep.subr.mxu0 0.0
      %8054 = vmatpush1.msra.mxu0 0.0
      %8055 = vmatprep.subr.mxu0 0.0
      %8056 = vmatpush1.msra.mxu0 0.0
      %8057 = vmatprep.subr.mxu0 0.0
      %8058 = vmatpush1.msra.mxu0 0.0
      %8059 = vmatprep.subr.mxu0 0.0
      %8060 = vmatpush1.msra.mxu0 0.0
      %8061 = vmatprep.subr.mxu0 0.0
      %8062 = vmatpush1.msra.mxu0 0.0
      %8063 = vmatprep.subr.mxu0 0.0
      %8064 = vmatpush1.msra.mxu0 0.0
      %8065 = vmatprep.subr.mxu0 0.0
      %8066 = vmatpush1.msra.mxu0 0.0
      %8067 = vmatprep.subr.mxu0 0.0
      %8068 = vmatpush1.msra.mxu0 0.0
      %8069 = vmatprep.subr.mxu0 0.0
      %8070 = vmatpush1.msra.mxu0 0.0
      %8071 = vmatprep.subr.mxu0 0.0
      %8072 = vmatpush1.msra.mxu0 0.0
      %8073 = vmatprep.subr.mxu0 0.0
      %8074 = vmatpush1.msra.mxu0 0.0
      %8075 = vmatprep.subr.mxu0 0.0
      %8076 = vmatpush1.msra.mxu0 0.0
      %8077 = vmatprep.subr.mxu0 0.0
      %8078 = vmatpush1.msra.mxu0 0.0
      %8079 = vmatprep.subr.mxu0 0.0
      %8080 = vmatpush1.msra.mxu0 0.0
      %8081 = vmatprep.subr.mxu0 0.0
      %8082 = vmatpush1.msra.mxu0 0.0
      %8083 = vmatprep.subr.mxu0 0.0
      %8084 = vmatpush1.msra.mxu0 0.0
      %8085 = vmatprep.subr.mxu0 0.0
      %8086 = vmatpush1.msra.mxu0 0.0
      %8087 = vmatprep.subr.mxu0 0.0
      %8088 = vmatpush1.msra.mxu0 0.0
      %8089 = vmatprep.subr.mxu0 0.0
      %8090 = vmatpush1.msra.mxu0 0.0
      %8091 = vmatprep.subr.mxu0 0.0
      %8092 = vmatpush1.msra.mxu0 0.0
      %8093 = vmatprep.subr.mxu0 0.0
      %8094 = vmatpush1.msra.mxu0 0.0
      %8095 = vmatprep.subr.mxu0 0.0
      %8096 = vmatpush1.msra.mxu0 0.0
      %8097 = vmatprep.mubr.f32.mxu0 0.0
      %8098 = vmatmul.mubr.f32.gmra.mrb[0].mxu0 %v7944
      %v8099 = vpop.f32.mrb[0].mxu0
      %v8100 = vadd.f32 0.0, %v8099
      %v8101 = vpop.f32.mrb[0].mxu0
      %v8102 = vadd.f32 0.0, %v8101
      %8103 = vdwg.mxu0
      %8104 = vmatprep.subr.mxu0 %v7956
      %8105 = vmatpush1.msra.mxu0 %v7954
      %8106 = vmatprep.subr.mxu0 0.0
      %8107 = vmatpush1.msra.mxu0 0.0
      %8108 = vmatprep.subr.mxu0 0.0
      %8109 = vmatpush1.msra.mxu0 0.0
      %8110 = vmatprep.subr.mxu0 0.0
      %8111 = vmatpush1.msra.mxu0 0.0
      %8112 = vmatprep.subr.mxu0 0.0
      %8113 = vmatpush1.msra.mxu0 0.0
      %8114 = vmatprep.subr.mxu0 0.0
      %8115 = vmatpush1.msra.mxu0 0.0
      %8116 = vmatprep.subr.mxu0 0.0
      %8117 = vmatpush1.msra.mxu0 0.0
      %8118 = vmatprep.subr.mxu0 0.0
      %8119 = vmatpush1.msra.mxu0 0.0
      %8120 = vmatprep.subr.mxu0 0.0
      %8121 = vmatpush1.msra.mxu0 0.0
      %8122 = vmatprep.subr.mxu0 0.0
      %8123 = vmatpush1.msra.mxu0 0.0
      %8124 = vmatprep.subr.mxu0 0.0
      %8125 = vmatpush1.msra.mxu0 0.0
      %8126 = vmatprep.subr.mxu0 0.0
      %8127 = vmatpush1.msra.mxu0 0.0
      %8128 = vmatprep.subr.mxu0 0.0
      %8129 = vmatpush1.msra.mxu0 0.0
      %8130 = vmatprep.subr.mxu0 0.0
      %8131 = vmatpush1.msra.mxu0 0.0
      %8132 = vmatprep.subr.mxu0 0.0
      %8133 = vmatpush1.msra.mxu0 0.0
      %8134 = vmatprep.subr.mxu0 0.0
      %8135 = vmatpush1.msra.mxu0 0.0
      %8136 = vmatprep.subr.mxu0 0.0
      %8137 = vmatpush1.msra.mxu0 0.0
      %8138 = vmatprep.subr.mxu0 0.0
      %8139 = vmatpush1.msra.mxu0 0.0
      %8140 = vmatprep.subr.mxu0 0.0
      %8141 = vmatpush1.msra.mxu0 0.0
      %8142 = vmatprep.subr.mxu0 0.0
      %8143 = vmatpush1.msra.mxu0 0.0
      %8144 = vmatprep.subr.mxu0 0.0
      %8145 = vmatpush1.msra.mxu0 0.0
      %8146 = vmatprep.subr.mxu0 0.0
      %8147 = vmatpush1.msra.mxu0 0.0
      %8148 = vmatprep.subr.mxu0 0.0
      %8149 = vmatpush1.msra.mxu0 0.0
      %8150 = vmatprep.subr.mxu0 0.0
      %8151 = vmatpush1.msra.mxu0 0.0
      %8152 = vmatprep.subr.mxu0 0.0
      %8153 = vmatpush1.msra.mxu0 0.0
      %8154 = vmatprep.subr.mxu0 0.0
      %8155 = vmatpush1.msra.mxu0 0.0
      %8156 = vmatprep.subr.mxu0 0.0
      %8157 = vmatpush1.msra.mxu0 0.0
      %8158 = vmatprep.subr.mxu0 0.0
      %8159 = vmatpush1.msra.mxu0 0.0
      %8160 = vmatprep.subr.mxu0 0.0
      %8161 = vmatpush1.msra.mxu0 0.0
      %8162 = vmatprep.subr.mxu0 0.0
      %8163 = vmatpush1.msra.mxu0 0.0
      %8164 = vmatprep.subr.mxu0 0.0
      %8165 = vmatpush1.msra.mxu0 0.0
      %8166 = vmatprep.subr.mxu0 0.0
      %8167 = vmatpush1.msra.mxu0 0.0
      %8168 = vmatprep.mubr.f32.mxu0 0.0
      %8169 = vmatmul.mubr.f32.gmra.mrb[0].mxu0 %v7944
      %v8170 = vpop.f32.mrb[0].mxu0
      %v8171 = vadd.f32 0.0, %v8170
      %v8172 = vpop.f32.mrb[0].mxu0
      %v8173 = vadd.f32 0.0, %v8172
      %8174 = vdwg.mxu0
      %8175 = vmatprep.subr.mxu0 %v7960
      %8176 = vmatpush1.msra.mxu0 %v7958
      %8177 = vmatprep.subr.mxu0 0.0
      %8178 = vmatpush1.msra.mxu0 0.0
      %8179 = vmatprep.subr.mxu0 0.0
      %8180 = vmatpush1.msra.mxu0 0.0
      %8181 = vmatprep.subr.mxu0 0.0
      %8182 = vmatpush1.msra.mxu0 0.0
      %8183 = vmatprep.subr.mxu0 0.0
      %8184 = vmatpush1.msra.mxu0 0.0
      %8185 = vmatprep.subr.mxu0 0.0
      %8186 = vmatpush1.msra.mxu0 0.0
      %8187 = vmatprep.subr.mxu0 0.0
      %8188 = vmatpush1.msra.mxu0 0.0
      %8189 = vmatprep.subr.mxu0 0.0
      %8190 = vmatpush1.msra.mxu0 0.0
      %8191 = vmatprep.subr.mxu0 0.0
      %8192 = vmatpush1.msra.mxu0 0.0
      %8193 = vmatprep.subr.mxu0 0.0
      %8194 = vmatpush1.msra.mxu0 0.0
      %8195 = vmatprep.subr.mxu0 0.0
      %8196 = vmatpush1.msra.mxu0 0.0
      %8197 = vmatprep.subr.mxu0 0.0
      %8198 = vmatpush1.msra.mxu0 0.0
      %8199 = vmatprep.subr.mxu0 0.0
      %8200 = vmatpush1.msra.mxu0 0.0
      %8201 = vmatprep.subr.mxu0 0.0
      %8202 = vmatpush1.msra.mxu0 0.0
      %8203 = vmatprep.subr.mxu0 0.0
      %8204 = vmatpush1.msra.mxu0 0.0
      %8205 = vmatprep.subr.mxu0 0.0
      %8206 = vmatpush1.msra.mxu0 0.0
      %8207 = vmatprep.subr.mxu0 0.0
      %8208 = vmatpush1.msra.mxu0 0.0
      %8209 = vmatprep.subr.mxu0 0.0
      %8210 = vmatpush1.msra.mxu0 0.0
      %8211 = vmatprep.subr.mxu0 0.0
      %8212 = vmatpush1.msra.mxu0 0.0
      %8213 = vmatprep.subr.mxu0 0.0
      %8214 = vmatpush1.msra.mxu0 0.0
      %8215 = vmatprep.subr.mxu0 0.0
      %8216 = vmatpush1.msra.mxu0 0.0
      %8217 = vmatprep.subr.mxu0 0.0
      %8218 = vmatpush1.msra.mxu0 0.0
      %8219 = vmatprep.subr.mxu0 0.0
      %8220 = vmatpush1.msra.mxu0 0.0
      %8221 = vmatprep.subr.mxu0 0.0
      %8222 = vmatpush1.msra.mxu0 0.0
      %8223 = vmatprep.subr.mxu0 0.0
      %8224 = vmatpush1.msra.mxu0 0.0
      %8225 = vmatprep.subr.mxu0 0.0
      %8226 = vmatpush1.msra.mxu0 0.0
      %8227 = vmatprep.subr.mxu0 0.0
      %8228 = vmatpush1.msra.mxu0 0.0
      %8229 = vmatprep.subr.mxu0 0.0
      %8230 = vmatpush1.msra.mxu0 0.0
      %8231 = vmatprep.subr.mxu0 0.0
      %8232 = vmatpush1.msra.mxu0 0.0
      %8233 = vmatprep.subr.mxu0 0.0
      %8234 = vmatpush1.msra.mxu0 0.0
      %8235 = vmatprep.subr.mxu0 0.0
      %8236 = vmatpush1.msra.mxu0 0.0
      %8237 = vmatprep.subr.mxu0 0.0
      %8238 = vmatpush1.msra.mxu0 0.0
      %8239 = vmatprep.mubr.f32.mxu0 0.0
      %8240 = vmatmul.mubr.f32.gmra.mrb[0].mxu0 %v7944
      %v8241 = vpop.f32.mrb[0].mxu0
      %v8242 = vadd.f32 0.0, %v8241
      %v8243 = vpop.f32.mrb[0].mxu0
      %v8244 = vadd.f32 0.0, %v8243
      %8245 = vdwg.mxu0
      %v8246 = vadd.f32 %v7651, %v8029
      %v8247 = vadd.f32 %v7653, %v8031
      %v8248 = vadd.f32 %v7722, %v8100
      %v8249 = vadd.f32 %v7724, %v8102
      %v8250 = vadd.f32 %v7793, %v8171
      %v8251 = vadd.f32 %v7795, %v8173
      %v8252 = vadd.f32 %v7864, %v8242
      %v8253 = vadd.f32 %v7866, %v8244
      %v8254 = vmul.f32 %v7113, %v4879
      %v8255 = vmul.f32 %v7114, %v4881
      %v8256 = vmul.f32 %v7115, %v4878
      %s8257 = scalar_lea.vmem %s2, 6
      %v8258 = vld [vmem:[%s8257] sm:$0x3]
      %v8262 = vcombine.high %v8254, %v8254
      %v8264 = vunpack.c.l.s4 1983009808
      %v8265 = vunpack.c.0.s8 %v8264
      %v8266 = vlaneseq
      %v8267 = vshrl.u32 %v8266, 7
      %v8268 = vsub.s32 %v8265, %v8267
      %v8269 = vrot.slane %v8254, %v8268
      %v8271 = vunpack.c.l.s4 1983009808
      %v8272 = vunpack.c.0.s8 %v8271
      %v8273 = vlaneseq
      %v8274 = vshrl.u32 %v8273, 7
      %v8275 = vsub.s32 %v8272, %v8274
      %v8276 = vrot.slane %v8262, %v8275
      %v8277 = vcombine.high %v8269, %v8269
      %v8278 = vcombine.high %v8276, %v8276
      %v8279 = vcombine.high %v8255, %v8255
      %v8281 = vunpack.c.l.s4 1983009808
      %v8282 = vunpack.c.0.s8 %v8281
      %v8283 = vlaneseq
      %v8284 = vshrl.u32 %v8283, 7
      %v8285 = vsub.s32 %v8282, %v8284
      %v8286 = vrot.slane %v8255, %v8285
      %v8288 = vunpack.c.l.s4 1983009808
      %v8289 = vunpack.c.0.s8 %v8288
      %v8290 = vlaneseq
      %v8291 = vshrl.u32 %v8290, 7
      %v8292 = vsub.s32 %v8289, %v8291
      %v8293 = vrot.slane %v8279, %v8292
      %v8294 = vcombine.high %v8286, %v8286
      %v8295 = vcombine.high %v8293, %v8293
      %v8297 = vunpack.c.l.s4 1983009808
      %v8298 = vunpack.c.0.s8 %v8297
      %v8299 = vlaneseq
      %v8300 = vshrl.u32 %v8299, 7
      %v8301 = vsub.s32 %v8298, %v8300
      %v8302 = vrot.slane %v8256, %v8301
      %8303 = vrot.lane.b32.xlu0 %v8269, 1
      %v8304 = vpop.permute.xlu0 %8303
      %8305 = vrot.lane.b32.xlu0 %v8277, 1
      %v8306 = vpop.permute.xlu0 %8305
      %8307 = vrot.lane.b32.xlu0 %v8276, 1
      %v8308 = vpop.permute.xlu0 %8307
      %8309 = vrot.lane.b32.xlu0 %v8278, 1
      %v8310 = vpop.permute.xlu0 %8309
      %8311 = vrot.lane.b32.xlu0 %v8286, 1
      %v8312 = vpop.permute.xlu0 %8311
      %8313 = vrot.lane.b32.xlu0 %v8294, 1
      %v8314 = vpop.permute.xlu0 %8313
      %8315 = vrot.lane.b32.xlu0 %v8293, 1
      %v8316 = vpop.permute.xlu0 %8315
      %8317 = vrot.lane.b32.xlu0 %v8295, 1
      %v8318 = vpop.permute.xlu0 %8317
      %8319 = vrot.lane.b32.xlu0 %v8302, 1
      %v8320 = vpop.permute.xlu0 %8319
      %v8321 = vsel %vm1551, %v8304, %v8306
      %v8322 = vsel %vm1551, %v8306, %v8308
      %v8323 = vsel %vm1551, %v8308, %v8310
      %v8324 = vsel %vm1551, %v8310, %v8312
      %v8325 = vsel %vm1551, %v8312, %v8314
      %v8326 = vsel %vm1551, %v8314, %v8316
      %v8327 = vsel %vm1551, %v8316, %v8318
      %v8328 = vsel %vm1551, %v8318, %v8320
      %v8330 = vsel %vm3768, %v8258, 0
      %v8332 = vsel %vm3686, %v8321, 0
      %v8334 = vsel %vm3686, %v8322, 0
      %v8336 = vsel %vm3686, %v8323, 0
      %v8338 = vsel %vm3686, %v8324, 0
      %v8340 = vsel %vm3686, %v8325, 0
      %v8342 = vsel %vm3686, %v8326, 0
      %v8344 = vsel %vm3686, %v8327, 0
      %v8346 = vsel %vm3686, %v8328, 0
      %8348 = vmatprep.subr.mxu0 %v8334
      %8349 = vmatpush1.msra.mxu0 %v8332
      %8350 = vmatprep.subr.mxu0 0.0
      %8351 = vmatpush1.msra.mxu0 0.0
      %8352 = vmatprep.subr.mxu0 0.0
      %8353 = vmatpush1.msra.mxu0 0.0
      %8354 = vmatprep.subr.mxu0 0.0
      %8355 = vmatpush1.msra.mxu0 0.0
      %8356 = vmatprep.subr.mxu0 0.0
      %8357 = vmatpush1.msra.mxu0 0.0
      %8358 = vmatprep.subr.mxu0 0.0
      %8359 = vmatpush1.msra.mxu0 0.0
      %8360 = vmatprep.subr.mxu0 0.0
      %8361 = vmatpush1.msra.mxu0 0.0
      %8362 = vmatprep.subr.mxu0 0.0
      %8363 = vmatpush1.msra.mxu0 0.0
      %8364 = vmatprep.subr.mxu0 0.0
      %8365 = vmatpush1.msra.mxu0 0.0
      %8366 = vmatprep.subr.mxu0 0.0
      %8367 = vmatpush1.msra.mxu0 0.0
      %8368 = vmatprep.subr.mxu0 0.0
      %8369 = vmatpush1.msra.mxu0 0.0
      %8370 = vmatprep.subr.mxu0 0.0
      %8371 = vmatpush1.msra.mxu0 0.0
      %8372 = vmatprep.subr.mxu0 0.0
      %8373 = vmatpush1.msra.mxu0 0.0
      %8374 = vmatprep.subr.mxu0 0.0
      %8375 = vmatpush1.msra.mxu0 0.0
      %8376 = vmatprep.subr.mxu0 0.0
      %8377 = vmatpush1.msra.mxu0 0.0
      %8378 = vmatprep.subr.mxu0 0.0
      %8379 = vmatpush1.msra.mxu0 0.0
      %8380 = vmatprep.subr.mxu0 0.0
      %8381 = vmatpush1.msra.mxu0 0.0
      %8382 = vmatprep.subr.mxu0 0.0
      %8383 = vmatpush1.msra.mxu0 0.0
      %8384 = vmatprep.subr.mxu0 0.0
      %8385 = vmatpush1.msra.mxu0 0.0
      %8386 = vmatprep.subr.mxu0 0.0
      %8387 = vmatpush1.msra.mxu0 0.0
      %8388 = vmatprep.subr.mxu0 0.0
      %8389 = vmatpush1.msra.mxu0 0.0
      %8390 = vmatprep.subr.mxu0 0.0
      %8391 = vmatpush1.msra.mxu0 0.0
      %8392 = vmatprep.subr.mxu0 0.0
      %8393 = vmatpush1.msra.mxu0 0.0
      %8394 = vmatprep.subr.mxu0 0.0
      %8395 = vmatpush1.msra.mxu0 0.0
      %8396 = vmatprep.subr.mxu0 0.0
      %8397 = vmatpush1.msra.mxu0 0.0
      %8398 = vmatprep.subr.mxu0 0.0
      %8399 = vmatpush1.msra.mxu0 0.0
      %8400 = vmatprep.subr.mxu0 0.0
      %8401 = vmatpush1.msra.mxu0 0.0
      %8402 = vmatprep.subr.mxu0 0.0
      %8403 = vmatpush1.msra.mxu0 0.0
      %8404 = vmatprep.subr.mxu0 0.0
      %8405 = vmatpush1.msra.mxu0 0.0
      %8406 = vmatprep.subr.mxu0 0.0
      %8407 = vmatpush1.msra.mxu0 0.0
      %8408 = vmatprep.subr.mxu0 0.0
      %8409 = vmatpush1.msra.mxu0 0.0
      %8410 = vmatprep.subr.mxu0 0.0
      %8411 = vmatpush1.msra.mxu0 0.0
      %8412 = vmatprep.mubr.f32.mxu0 0.0
      %8413 = vmatmul.mubr.f32.gmra.mrb[0].mxu0 %v8330
      %v8414 = vpop.f32.mrb[0].mxu0
      %v8415 = vadd.f32 0.0, %v8414
      %v8416 = vpop.f32.mrb[0].mxu0
      %v8417 = vadd.f32 0.0, %v8416
      %8418 = vdwg.mxu0
      %8419 = vmatprep.subr.mxu0 %v8338
      %8420 = vmatpush1.msra.mxu0 %v8336
      %8421 = vmatprep.subr.mxu0 0.0
      %8422 = vmatpush1.msra.mxu0 0.0
      %8423 = vmatprep.subr.mxu0 0.0
      %8424 = vmatpush1.msra.mxu0 0.0
      %8425 = vmatprep.subr.mxu0 0.0
      %8426 = vmatpush1.msra.mxu0 0.0
      %8427 = vmatprep.subr.mxu0 0.0
      %8428 = vmatpush1.msra.mxu0 0.0
      %8429 = vmatprep.subr.mxu0 0.0
      %8430 = vmatpush1.msra.mxu0 0.0
      %8431 = vmatprep.subr.mxu0 0.0
      %8432 = vmatpush1.msra.mxu0 0.0
      %8433 = vmatprep.subr.mxu0 0.0
      %8434 = vmatpush1.msra.mxu0 0.0
      %8435 = vmatprep.subr.mxu0 0.0
      %8436 = vmatpush1.msra.mxu0 0.0
      %8437 = vmatprep.subr.mxu0 0.0
      %8438 = vmatpush1.msra.mxu0 0.0
      %8439 = vmatprep.subr.mxu0 0.0
      %8440 = vmatpush1.msra.mxu0 0.0
      %8441 = vmatprep.subr.mxu0 0.0
      %8442 = vmatpush1.msra.mxu0 0.0
      %8443 = vmatprep.subr.mxu0 0.0
      %8444 = vmatpush1.msra.mxu0 0.0
      %8445 = vmatprep.subr.mxu0 0.0
      %8446 = vmatpush1.msra.mxu0 0.0
      %8447 = vmatprep.subr.mxu0 0.0
      %8448 = vmatpush1.msra.mxu0 0.0
      %8449 = vmatprep.subr.mxu0 0.0
      %8450 = vmatpush1.msra.mxu0 0.0
      %8451 = vmatprep.subr.mxu0 0.0
      %8452 = vmatpush1.msra.mxu0 0.0
      %8453 = vmatprep.subr.mxu0 0.0
      %8454 = vmatpush1.msra.mxu0 0.0
      %8455 = vmatprep.subr.mxu0 0.0
      %8456 = vmatpush1.msra.mxu0 0.0
      %8457 = vmatprep.subr.mxu0 0.0
      %8458 = vmatpush1.msra.mxu0 0.0
      %8459 = vmatprep.subr.mxu0 0.0
      %8460 = vmatpush1.msra.mxu0 0.0
      %8461 = vmatprep.subr.mxu0 0.0
      %8462 = vmatpush1.msra.mxu0 0.0
      %8463 = vmatprep.subr.mxu0 0.0
      %8464 = vmatpush1.msra.mxu0 0.0
      %8465 = vmatprep.subr.mxu0 0.0
      %8466 = vmatpush1.msra.mxu0 0.0
      %8467 = vmatprep.subr.mxu0 0.0
      %8468 = vmatpush1.msra.mxu0 0.0
      %8469 = vmatprep.subr.mxu0 0.0
      %8470 = vmatpush1.msra.mxu0 0.0
      %8471 = vmatprep.subr.mxu0 0.0
      %8472 = vmatpush1.msra.mxu0 0.0
      %8473 = vmatprep.subr.mxu0 0.0
      %8474 = vmatpush1.msra.mxu0 0.0
      %8475 = vmatprep.subr.mxu0 0.0
      %8476 = vmatpush1.msra.mxu0 0.0
      %8477 = vmatprep.subr.mxu0 0.0
      %8478 = vmatpush1.msra.mxu0 0.0
      %8479 = vmatprep.subr.mxu0 0.0
      %8480 = vmatpush1.msra.mxu0 0.0
      %8481 = vmatprep.subr.mxu0 0.0
      %8482 = vmatpush1.msra.mxu0 0.0
      %8483 = vmatprep.mubr.f32.mxu0 0.0
      %8484 = vmatmul.mubr.f32.gmra.mrb[0].mxu0 %v8330
      %v8485 = vpop.f32.mrb[0].mxu0
      %v8486 = vadd.f32 0.0, %v8485
      %v8487 = vpop.f32.mrb[0].mxu0
      %v8488 = vadd.f32 0.0, %v8487
      %8489 = vdwg.mxu0
      %8490 = vmatprep.subr.mxu0 %v8342
      %8491 = vmatpush1.msra.mxu0 %v8340
      %8492 = vmatprep.subr.mxu0 0.0
      %8493 = vmatpush1.msra.mxu0 0.0
      %8494 = vmatprep.subr.mxu0 0.0
      %8495 = vmatpush1.msra.mxu0 0.0
      %8496 = vmatprep.subr.mxu0 0.0
      %8497 = vmatpush1.msra.mxu0 0.0
      %8498 = vmatprep.subr.mxu0 0.0
      %8499 = vmatpush1.msra.mxu0 0.0
      %8500 = vmatprep.subr.mxu0 0.0
      %8501 = vmatpush1.msra.mxu0 0.0
      %8502 = vmatprep.subr.mxu0 0.0
      %8503 = vmatpush1.msra.mxu0 0.0
      %8504 = vmatprep.subr.mxu0 0.0
      %8505 = vmatpush1.msra.mxu0 0.0
      %8506 = vmatprep.subr.mxu0 0.0
      %8507 = vmatpush1.msra.mxu0 0.0
      %8508 = vmatprep.subr.mxu0 0.0
      %8509 = vmatpush1.msra.mxu0 0.0
      %8510 = vmatprep.subr.mxu0 0.0
      %8511 = vmatpush1.msra.mxu0 0.0
      %8512 = vmatprep.subr.mxu0 0.0
      %8513 = vmatpush1.msra.mxu0 0.0
      %8514 = vmatprep.subr.mxu0 0.0
      %8515 = vmatpush1.msra.mxu0 0.0
      %8516 = vmatprep.subr.mxu0 0.0
      %8517 = vmatpush1.msra.mxu0 0.0
      %8518 = vmatprep.subr.mxu0 0.0
      %8519 = vmatpush1.msra.mxu0 0.0
      %8520 = vmatprep.subr.mxu0 0.0
      %8521 = vmatpush1.msra.mxu0 0.0
      %8522 = vmatprep.subr.mxu0 0.0
      %8523 = vmatpush1.msra.mxu0 0.0
      %8524 = vmatprep.subr.mxu0 0.0
      %8525 = vmatpush1.msra.mxu0 0.0
      %8526 = vmatprep.subr.mxu0 0.0
      %8527 = vmatpush1.msra.mxu0 0.0
      %8528 = vmatprep.subr.mxu0 0.0
      %8529 = vmatpush1.msra.mxu0 0.0
      %8530 = vmatprep.subr.mxu0 0.0
      %8531 = vmatpush1.msra.mxu0 0.0
      %8532 = vmatprep.subr.mxu0 0.0
      %8533 = vmatpush1.msra.mxu0 0.0
      %8534 = vmatprep.subr.mxu0 0.0
      %8535 = vmatpush1.msra.mxu0 0.0
      %8536 = vmatprep.subr.mxu0 0.0
      %8537 = vmatpush1.msra.mxu0 0.0
      %8538 = vmatprep.subr.mxu0 0.0
      %8539 = vmatpush1.msra.mxu0 0.0
      %8540 = vmatprep.subr.mxu0 0.0
      %8541 = vmatpush1.msra.mxu0 0.0
      %8542 = vmatprep.subr.mxu0 0.0
      %8543 = vmatpush1.msra.mxu0 0.0
      %8544 = vmatprep.subr.mxu0 0.0
      %8545 = vmatpush1.msra.mxu0 0.0
      %8546 = vmatprep.subr.mxu0 0.0
      %8547 = vmatpush1.msra.mxu0 0.0
      %8548 = vmatprep.subr.mxu0 0.0
      %8549 = vmatpush1.msra.mxu0 0.0
      %8550 = vmatprep.subr.mxu0 0.0
      %8551 = vmatpush1.msra.mxu0 0.0
      %8552 = vmatprep.subr.mxu0 0.0
      %8553 = vmatpush1.msra.mxu0 0.0
      %8554 = vmatprep.mubr.f32.mxu0 0.0
      %8555 = vmatmul.mubr.f32.gmra.mrb[0].mxu0 %v8330
      %v8556 = vpop.f32.mrb[0].mxu0
      %v8557 = vadd.f32 0.0, %v8556
      %v8558 = vpop.f32.mrb[0].mxu0
      %v8559 = vadd.f32 0.0, %v8558
      %8560 = vdwg.mxu0
      %8561 = vmatprep.subr.mxu0 %v8346
      %8562 = vmatpush1.msra.mxu0 %v8344
      %8563 = vmatprep.subr.mxu0 0.0
      %8564 = vmatpush1.msra.mxu0 0.0
      %8565 = vmatprep.subr.mxu0 0.0
      %8566 = vmatpush1.msra.mxu0 0.0
      %8567 = vmatprep.subr.mxu0 0.0
      %8568 = vmatpush1.msra.mxu0 0.0
      %8569 = vmatprep.subr.mxu0 0.0
      %8570 = vmatpush1.msra.mxu0 0.0
      %8571 = vmatprep.subr.mxu0 0.0
      %8572 = vmatpush1.msra.mxu0 0.0
      %8573 = vmatprep.subr.mxu0 0.0
      %8574 = vmatpush1.msra.mxu0 0.0
      %8575 = vmatprep.subr.mxu0 0.0
      %8576 = vmatpush1.msra.mxu0 0.0
      %8577 = vmatprep.subr.mxu0 0.0
      %8578 = vmatpush1.msra.mxu0 0.0
      %8579 = vmatprep.subr.mxu0 0.0
      %8580 = vmatpush1.msra.mxu0 0.0
      %8581 = vmatprep.subr.mxu0 0.0
      %8582 = vmatpush1.msra.mxu0 0.0
      %8583 = vmatprep.subr.mxu0 0.0
      %8584 = vmatpush1.msra.mxu0 0.0
      %8585 = vmatprep.subr.mxu0 0.0
      %8586 = vmatpush1.msra.mxu0 0.0
      %8587 = vmatprep.subr.mxu0 0.0
      %8588 = vmatpush1.msra.mxu0 0.0
      %8589 = vmatprep.subr.mxu0 0.0
      %8590 = vmatpush1.msra.mxu0 0.0
      %8591 = vmatprep.subr.mxu0 0.0
      %8592 = vmatpush1.msra.mxu0 0.0
      %8593 = vmatprep.subr.mxu0 0.0
      %8594 = vmatpush1.msra.mxu0 0.0
      %8595 = vmatprep.subr.mxu0 0.0
      %8596 = vmatpush1.msra.mxu0 0.0
      %8597 = vmatprep.subr.mxu0 0.0
      %8598 = vmatpush1.msra.mxu0 0.0
      %8599 = vmatprep.subr.mxu0 0.0
      %8600 = vmatpush1.msra.mxu0 0.0
      %8601 = vmatprep.subr.mxu0 0.0
      %8602 = vmatpush1.msra.mxu0 0.0
      %8603 = vmatprep.subr.mxu0 0.0
      %8604 = vmatpush1.msra.mxu0 0.0
      %8605 = vmatprep.subr.mxu0 0.0
      %8606 = vmatpush1.msra.mxu0 0.0
      %8607 = vmatprep.subr.mxu0 0.0
      %8608 = vmatpush1.msra.mxu0 0.0
      %8609 = vmatprep.subr.mxu0 0.0
      %8610 = vmatpush1.msra.mxu0 0.0
      %8611 = vmatprep.subr.mxu0 0.0
      %8612 = vmatpush1.msra.mxu0 0.0
      %8613 = vmatprep.subr.mxu0 0.0
      %8614 = vmatpush1.msra.mxu0 0.0
      %8615 = vmatprep.subr.mxu0 0.0
      %8616 = vmatpush1.msra.mxu0 0.0
      %8617 = vmatprep.subr.mxu0 0.0
      %8618 = vmatpush1.msra.mxu0 0.0
      %8619 = vmatprep.subr.mxu0 0.0
      %8620 = vmatpush1.msra.mxu0 0.0
      %8621 = vmatprep.subr.mxu0 0.0
      %8622 = vmatpush1.msra.mxu0 0.0
      %8623 = vmatprep.subr.mxu0 0.0
      %8624 = vmatpush1.msra.mxu0 0.0
      %8625 = vmatprep.mubr.f32.mxu0 0.0
      %8626 = vmatmul.mubr.f32.gmra.mrb[0].mxu0 %v8330
      %v8627 = vpop.f32.mrb[0].mxu0
      %v8628 = vadd.f32 0.0, %v8627
      %v8629 = vpop.f32.mrb[0].mxu0
      %v8630 = vadd.f32 0.0, %v8629
      %8631 = vdwg.mxu0
      %v8632 = vadd.f32 %v8246, %v8415
      %v8633 = vadd.f32 %v8247, %v8417
      %v8634 = vadd.f32 %v8248, %v8486
      %v8635 = vadd.f32 %v8249, %v8488
      %v8636 = vadd.f32 %v8250, %v8557
      %v8637 = vadd.f32 %v8251, %v8559
      %v8638 = vadd.f32 %v8252, %v8628
      %v8639 = vadd.f32 %v8253, %v8630
      %s8640 = scalar_lea.vmem %s2, 8
      %v8641 = vld [vmem:[%s8640] sm:$0x3]
      %v8643 = vsel %vm3768, %v8641, 0
      %v8645 = vsel %vm3686, %v7140, 0
      %v8647 = vsel %vm3686, %v7139, 0
      %v8649 = vsel %vm3686, %v7141, 0
      %v8651 = vsel %vm3686, %v7149, 0
      %v8653 = vsel %vm3686, %v7157, 0
      %v8655 = vsel %vm3686, %v7156, 0
      %v8657 = vsel %vm3686, %v7158, 0
      %v8659 = vsel %vm3686, %v7165, 0
      %8661 = vmatprep.subr.mxu0 %v8647
      %8662 = vmatpush1.msra.mxu0 %v8645
      %8663 = vmatprep.subr.mxu0 0.0
      %8664 = vmatpush1.msra.mxu0 0.0
      %8665 = vmatprep.subr.mxu0 0.0
      %8666 = vmatpush1.msra.mxu0 0.0
      %8667 = vmatprep.subr.mxu0 0.0
      %8668 = vmatpush1.msra.mxu0 0.0
      %8669 = vmatprep.subr.mxu0 0.0
      %8670 = vmatpush1.msra.mxu0 0.0
      %8671 = vmatprep.subr.mxu0 0.0
      %8672 = vmatpush1.msra.mxu0 0.0
      %8673 = vmatprep.subr.mxu0 0.0
      %8674 = vmatpush1.msra.mxu0 0.0
      %8675 = vmatprep.subr.mxu0 0.0
      %8676 = vmatpush1.msra.mxu0 0.0
      %8677 = vmatprep.subr.mxu0 0.0
      %8678 = vmatpush1.msra.mxu0 0.0
      %8679 = vmatprep.subr.mxu0 0.0
      %8680 = vmatpush1.msra.mxu0 0.0
      %8681 = vmatprep.subr.mxu0 0.0
      %8682 = vmatpush1.msra.mxu0 0.0
      %8683 = vmatprep.subr.mxu0 0.0
      %8684 = vmatpush1.msra.mxu0 0.0
      %8685 = vmatprep.subr.mxu0 0.0
      %8686 = vmatpush1.msra.mxu0 0.0
      %8687 = vmatprep.subr.mxu0 0.0
      %8688 = vmatpush1.msra.mxu0 0.0
      %8689 = vmatprep.subr.mxu0 0.0
      %8690 = vmatpush1.msra.mxu0 0.0
      %8691 = vmatprep.subr.mxu0 0.0
      %8692 = vmatpush1.msra.mxu0 0.0
      %8693 = vmatprep.subr.mxu0 0.0
      %8694 = vmatpush1.msra.mxu0 0.0
      %8695 = vmatprep.subr.mxu0 0.0
      %8696 = vmatpush1.msra.mxu0 0.0
      %8697 = vmatprep.subr.mxu0 0.0
      %8698 = vmatpush1.msra.mxu0 0.0
      %8699 = vmatprep.subr.mxu0 0.0
      %8700 = vmatpush1.msra.mxu0 0.0
      %8701 = vmatprep.subr.mxu0 0.0
      %8702 = vmatpush1.msra.mxu0 0.0
      %8703 = vmatprep.subr.mxu0 0.0
      %8704 = vmatpush1.msra.mxu0 0.0
      %8705 = vmatprep.subr.mxu0 0.0
      %8706 = vmatpush1.msra.mxu0 0.0
      %8707 = vmatprep.subr.mxu0 0.0
      %8708 = vmatpush1.msra.mxu0 0.0
      %8709 = vmatprep.subr.mxu0 0.0
      %8710 = vmatpush1.msra.mxu0 0.0
      %8711 = vmatprep.subr.mxu0 0.0
      %8712 = vmatpush1.msra.mxu0 0.0
      %8713 = vmatprep.subr.mxu0 0.0
      %8714 = vmatpush1.msra.mxu0 0.0
      %8715 = vmatprep.subr.mxu0 0.0
      %8716 = vmatpush1.msra.mxu0 0.0
      %8717 = vmatprep.subr.mxu0 0.0
      %8718 = vmatpush1.msra.mxu0 0.0
      %8719 = vmatprep.subr.mxu0 0.0
      %8720 = vmatpush1.msra.mxu0 0.0
      %8721 = vmatprep.subr.mxu0 0.0
      %8722 = vmatpush1.msra.mxu0 0.0
      %8723 = vmatprep.subr.mxu0 0.0
      %8724 = vmatpush1.msra.mxu0 0.0
      %8725 = vmatprep.mubr.f32.mxu0 0.0
      %8726 = vmatmul.mubr.f32.gmra.mrb[0].mxu0 %v8643
      %v8727 = vpop.f32.mrb[0].mxu0
      %v8728 = vadd.f32 0.0, %v8727
      %v8729 = vpop.f32.mrb[0].mxu0
      %v8730 = vadd.f32 0.0, %v8729
      %8731 = vdwg.mxu0
      %8732 = vmatprep.subr.mxu0 %v8651
      %8733 = vmatpush1.msra.mxu0 %v8649
      %8734 = vmatprep.subr.mxu0 0.0
      %8735 = vmatpush1.msra.mxu0 0.0
      %8736 = vmatprep.subr.mxu0 0.0
      %8737 = vmatpush1.msra.mxu0 0.0
      %8738 = vmatprep.subr.mxu0 0.0
      %8739 = vmatpush1.msra.mxu0 0.0
      %8740 = vmatprep.subr.mxu0 0.0
      %8741 = vmatpush1.msra.mxu0 0.0
      %8742 = vmatprep.subr.mxu0 0.0
      %8743 = vmatpush1.msra.mxu0 0.0
      %8744 = vmatprep.subr.mxu0 0.0
      %8745 = vmatpush1.msra.mxu0 0.0
      %8746 = vmatprep.subr.mxu0 0.0
      %8747 = vmatpush1.msra.mxu0 0.0
      %8748 = vmatprep.subr.mxu0 0.0
      %8749 = vmatpush1.msra.mxu0 0.0
      %8750 = vmatprep.subr.mxu0 0.0
      %8751 = vmatpush1.msra.mxu0 0.0
      %8752 = vmatprep.subr.mxu0 0.0
      %8753 = vmatpush1.msra.mxu0 0.0
      %8754 = vmatprep.subr.mxu0 0.0
      %8755 = vmatpush1.msra.mxu0 0.0
      %8756 = vmatprep.subr.mxu0 0.0
      %8757 = vmatpush1.msra.mxu0 0.0
      %8758 = vmatprep.subr.mxu0 0.0
      %8759 = vmatpush1.msra.mxu0 0.0
      %8760 = vmatprep.subr.mxu0 0.0
      %8761 = vmatpush1.msra.mxu0 0.0
      %8762 = vmatprep.subr.mxu0 0.0
      %8763 = vmatpush1.msra.mxu0 0.0
      %8764 = vmatprep.subr.mxu0 0.0
      %8765 = vmatpush1.msra.mxu0 0.0
      %8766 = vmatprep.subr.mxu0 0.0
      %8767 = vmatpush1.msra.mxu0 0.0
      %8768 = vmatprep.subr.mxu0 0.0
      %8769 = vmatpush1.msra.mxu0 0.0
      %8770 = vmatprep.subr.mxu0 0.0
      %8771 = vmatpush1.msra.mxu0 0.0
      %8772 = vmatprep.subr.mxu0 0.0
      %8773 = vmatpush1.msra.mxu0 0.0
      %8774 = vmatprep.subr.mxu0 0.0
      %8775 = vmatpush1.msra.mxu0 0.0
      %8776 = vmatprep.subr.mxu0 0.0
      %8777 = vmatpush1.msra.mxu0 0.0
      %8778 = vmatprep.subr.mxu0 0.0
      %8779 = vmatpush1.msra.mxu0 0.0
      %8780 = vmatprep.subr.mxu0 0.0
      %8781 = vmatpush1.msra.mxu0 0.0
      %8782 = vmatprep.subr.mxu0 0.0
      %8783 = vmatpush1.msra.mxu0 0.0
      %8784 = vmatprep.subr.mxu0 0.0
      %8785 = vmatpush1.msra.mxu0 0.0
      %8786 = vmatprep.subr.mxu0 0.0
      %8787 = vmatpush1.msra.mxu0 0.0
      %8788 = vmatprep.subr.mxu0 0.0
      %8789 = vmatpush1.msra.mxu0 0.0
      %8790 = vmatprep.subr.mxu0 0.0
      %8791 = vmatpush1.msra.mxu0 0.0
      %8792 = vmatprep.subr.mxu0 0.0
      %8793 = vmatpush1.msra.mxu0 0.0
      %8794 = vmatprep.subr.mxu0 0.0
      %8795 = vmatpush1.msra.mxu0 0.0
      %8796 = vmatprep.mubr.f32.mxu0 0.0
      %8797 = vmatmul.mubr.f32.gmra.mrb[0].mxu0 %v8643
      %v8798 = vpop.f32.mrb[0].mxu0
      %v8799 = vadd.f32 0.0, %v8798
      %v8800 = vpop.f32.mrb[0].mxu0
      %v8801 = vadd.f32 0.0, %v8800
      %8802 = vdwg.mxu0
      %8803 = vmatprep.subr.mxu0 %v8655
      %8804 = vmatpush1.msra.mxu0 %v8653
      %8805 = vmatprep.subr.mxu0 0.0
      %8806 = vmatpush1.msra.mxu0 0.0
      %8807 = vmatprep.subr.mxu0 0.0
      %8808 = vmatpush1.msra.mxu0 0.0
      %8809 = vmatprep.subr.mxu0 0.0
      %8810 = vmatpush1.msra.mxu0 0.0
      %8811 = vmatprep.subr.mxu0 0.0
      %8812 = vmatpush1.msra.mxu0 0.0
      %8813 = vmatprep.subr.mxu0 0.0
      %8814 = vmatpush1.msra.mxu0 0.0
      %8815 = vmatprep.subr.mxu0 0.0
      %8816 = vmatpush1.msra.mxu0 0.0
      %8817 = vmatprep.subr.mxu0 0.0
      %8818 = vmatpush1.msra.mxu0 0.0
      %8819 = vmatprep.subr.mxu0 0.0
      %8820 = vmatpush1.msra.mxu0 0.0
      %8821 = vmatprep.subr.mxu0 0.0
      %8822 = vmatpush1.msra.mxu0 0.0
      %8823 = vmatprep.subr.mxu0 0.0
      %8824 = vmatpush1.msra.mxu0 0.0
      %8825 = vmatprep.subr.mxu0 0.0
      %8826 = vmatpush1.msra.mxu0 0.0
      %8827 = vmatprep.subr.mxu0 0.0
      %8828 = vmatpush1.msra.mxu0 0.0
      %8829 = vmatprep.subr.mxu0 0.0
      %8830 = vmatpush1.msra.mxu0 0.0
      %8831 = vmatprep.subr.mxu0 0.0
      %8832 = vmatpush1.msra.mxu0 0.0
      %8833 = vmatprep.subr.mxu0 0.0
      %8834 = vmatpush1.msra.mxu0 0.0
      %8835 = vmatprep.subr.mxu0 0.0
      %8836 = vmatpush1.msra.mxu0 0.0
      %8837 = vmatprep.subr.mxu0 0.0
      %8838 = vmatpush1.msra.mxu0 0.0
      %8839 = vmatprep.subr.mxu0 0.0
      %8840 = vmatpush1.msra.mxu0 0.0
      %8841 = vmatprep.subr.mxu0 0.0
      %8842 = vmatpush1.msra.mxu0 0.0
      %8843 = vmatprep.subr.mxu0 0.0
      %8844 = vmatpush1.msra.mxu0 0.0
      %8845 = vmatprep.subr.mxu0 0.0
      %8846 = vmatpush1.msra.mxu0 0.0
      %8847 = vmatprep.subr.mxu0 0.0
      %8848 = vmatpush1.msra.mxu0 0.0
      %8849 = vmatprep.subr.mxu0 0.0
      %8850 = vmatpush1.msra.mxu0 0.0
      %8851 = vmatprep.subr.mxu0 0.0
      %8852 = vmatpush1.msra.mxu0 0.0
      %8853 = vmatprep.subr.mxu0 0.0
      %8854 = vmatpush1.msra.mxu0 0.0
      %8855 = vmatprep.subr.mxu0 0.0
      %8856 = vmatpush1.msra.mxu0 0.0
      %8857 = vmatprep.subr.mxu0 0.0
      %8858 = vmatpush1.msra.mxu0 0.0
      %8859 = vmatprep.subr.mxu0 0.0
      %8860 = vmatpush1.msra.mxu0 0.0
      %8861 = vmatprep.subr.mxu0 0.0
      %8862 = vmatpush1.msra.mxu0 0.0
      %8863 = vmatprep.subr.mxu0 0.0
      %8864 = vmatpush1.msra.mxu0 0.0
      %8865 = vmatprep.subr.mxu0 0.0
      %8866 = vmatpush1.msra.mxu0 0.0
      %8867 = vmatprep.mubr.f32.mxu0 0.0
      %8868 = vmatmul.mubr.f32.gmra.mrb[0].mxu0 %v8643
      %v8869 = vpop.f32.mrb[0].mxu0
      %v8870 = vadd.f32 0.0, %v8869
      %v8871 = vpop.f32.mrb[0].mxu0
      %v8872 = vadd.f32 0.0, %v8871
      %8873 = vdwg.mxu0
      %8874 = vmatprep.subr.mxu0 %v8659
      %8875 = vmatpush1.msra.mxu0 %v8657
      %8876 = vmatprep.subr.mxu0 0.0
      %8877 = vmatpush1.msra.mxu0 0.0
      %8878 = vmatprep.subr.mxu0 0.0
      %8879 = vmatpush1.msra.mxu0 0.0
      %8880 = vmatprep.subr.mxu0 0.0
      %8881 = vmatpush1.msra.mxu0 0.0
      %8882 = vmatprep.subr.mxu0 0.0
      %8883 = vmatpush1.msra.mxu0 0.0
      %8884 = vmatprep.subr.mxu0 0.0
      %8885 = vmatpush1.msra.mxu0 0.0
      %8886 = vmatprep.subr.mxu0 0.0
      %8887 = vmatpush1.msra.mxu0 0.0
      %8888 = vmatprep.subr.mxu0 0.0
      %8889 = vmatpush1.msra.mxu0 0.0
      %8890 = vmatprep.subr.mxu0 0.0
      %8891 = vmatpush1.msra.mxu0 0.0
      %8892 = vmatprep.subr.mxu0 0.0
      %8893 = vmatpush1.msra.mxu0 0.0
      %8894 = vmatprep.subr.mxu0 0.0
      %8895 = vmatpush1.msra.mxu0 0.0
      %8896 = vmatprep.subr.mxu0 0.0
      %8897 = vmatpush1.msra.mxu0 0.0
      %8898 = vmatprep.subr.mxu0 0.0
      %8899 = vmatpush1.msra.mxu0 0.0
      %8900 = vmatprep.subr.mxu0 0.0
      %8901 = vmatpush1.msra.mxu0 0.0
      %8902 = vmatprep.subr.mxu0 0.0
      %8903 = vmatpush1.msra.mxu0 0.0
      %8904 = vmatprep.subr.mxu0 0.0
      %8905 = vmatpush1.msra.mxu0 0.0
      %8906 = vmatprep.subr.mxu0 0.0
      %8907 = vmatpush1.msra.mxu0 0.0
      %8908 = vmatprep.subr.mxu0 0.0
      %8909 = vmatpush1.msra.mxu0 0.0
      %8910 = vmatprep.subr.mxu0 0.0
      %8911 = vmatpush1.msra.mxu0 0.0
      %8912 = vmatprep.subr.mxu0 0.0
      %8913 = vmatpush1.msra.mxu0 0.0
      %8914 = vmatprep.subr.mxu0 0.0
      %8915 = vmatpush1.msra.mxu0 0.0
      %8916 = vmatprep.subr.mxu0 0.0
      %8917 = vmatpush1.msra.mxu0 0.0
      %8918 = vmatprep.subr.mxu0 0.0
      %8919 = vmatpush1.msra.mxu0 0.0
      %8920 = vmatprep.subr.mxu0 0.0
      %8921 = vmatpush1.msra.mxu0 0.0
      %8922 = vmatprep.subr.mxu0 0.0
      %8923 = vmatpush1.msra.mxu0 0.0
      %8924 = vmatprep.subr.mxu0 0.0
      %8925 = vmatpush1.msra.mxu0 0.0
      %8926 = vmatprep.subr.mxu0 0.0
      %8927 = vmatpush1.msra.mxu0 0.0
      %8928 = vmatprep.subr.mxu0 0.0
      %8929 = vmatpush1.msra.mxu0 0.0
      %8930 = vmatprep.subr.mxu0 0.0
      %8931 = vmatpush1.msra.mxu0 0.0
      %8932 = vmatprep.subr.mxu0 0.0
      %8933 = vmatpush1.msra.mxu0 0.0
      %8934 = vmatprep.subr.mxu0 0.0
      %8935 = vmatpush1.msra.mxu0 0.0
      %8936 = vmatprep.subr.mxu0 0.0
      %8937 = vmatpush1.msra.mxu0 0.0
      %8938 = vmatprep.mubr.f32.mxu0 0.0
      %8939 = vmatmul.mubr.f32.gmra.mrb[0].mxu0 %v8643
      %v8940 = vpop.f32.mrb[0].mxu0
      %v8941 = vadd.f32 0.0, %v8940
      %v8942 = vpop.f32.mrb[0].mxu0
      %v8943 = vadd.f32 0.0, %v8942
      %8944 = vdwg.mxu0
      %v8945 = vadd.f32 %v8632, %v8728
      %v8946 = vadd.f32 %v8633, %v8730
      %v8947 = vadd.f32 %v8634, %v8799
      %v8948 = vadd.f32 %v8635, %v8801
      %v8949 = vadd.f32 %v8636, %v8870
      %v8950 = vadd.f32 %v8637, %v8872
      %v8951 = vadd.f32 %v8638, %v8941
      %v8952 = vadd.f32 %v8639, %v8943
      %8953 = vrot.lane.b32.xlu0 %v7113, 127
      %v8954 = vpop.permute.xlu0 %8953
      %8955 = vrot.lane.b32.xlu0 %v7114, 127
      %v8956 = vpop.permute.xlu0 %8955
      %8957 = vrot.lane.b32.xlu0 %v7115, 127
      %v8958 = vpop.permute.xlu0 %8957
      %v8959 = vrot.slane %v8954, 2
      %v8960 = vrot.slane %v8956, 2
      %v8961 = vrot.slane %v8958, 2
      %v8962 = vrot.slane %v8954, 4
      %v8963 = vrot.slane %v8956, 4
      %v8964 = vrot.slane %v8958, 4
      %v8965 = vsel %vm5596, %v8959, %v8960
      %v8966 = vsel %vm377, %v8962, %v8963
      %v8967 = vsel %vm1504, %v8965, %v8966
      %v8968 = vsel %vm5596, %v8960, %v8961
      %v8969 = vsel %vm377, %v8963, %v8964
      %v8970 = vsel %vm1504, %v8968, %v8969
      %v8973 = vmul.f32 %v8967, %v4459
      %v8974 = vmul.f32 %v8970, %v4474
      %s8975 = scalar_lea.vmem %s2, 10
      %v8976 = vld [vmem:[%s8975] sm:$0x3]
      %v8979 = vcombine.high %v8973, %v8973
      %v8981 = vunpack.c.l.s4 1983009808
      %v8982 = vunpack.c.0.s8 %v8981
      %v8983 = vlaneseq
      %v8984 = vshrl.u32 %v8983, 7
      %v8985 = vsub.s32 %v8982, %v8984
      %v8986 = vrot.slane %v8973, %v8985
      %v8988 = vunpack.c.l.s4 1983009808
      %v8989 = vunpack.c.0.s8 %v8988
      %v8990 = vlaneseq
      %v8991 = vshrl.u32 %v8990, 7
      %v8992 = vsub.s32 %v8989, %v8991
      %v8993 = vrot.slane %v8979, %v8992
      %v8994 = vcombine.high %v8986, %v8986
      %v8995 = vcombine.high %v8993, %v8993
      %v8996 = vcombine.high %v8974, %v8974
      %v8998 = vunpack.c.l.s4 1983009808
      %v8999 = vunpack.c.0.s8 %v8998
      %v9000 = vlaneseq
      %v9001 = vshrl.u32 %v9000, 7
      %v9002 = vsub.s32 %v8999, %v9001
      %v9003 = vrot.slane %v8974, %v9002
      %v9005 = vunpack.c.l.s4 1983009808
      %v9006 = vunpack.c.0.s8 %v9005
      %v9007 = vlaneseq
      %v9008 = vshrl.u32 %v9007, 7
      %v9009 = vsub.s32 %v9006, %v9008
      %v9010 = vrot.slane %v8996, %v9009
      %v9011 = vcombine.high %v9003, %v9003
      %v9012 = vcombine.high %v9010, %v9010
      %v9014 = vsel %vm3768, %v8976, 0
      %v9016 = vsel %vm3686, %v8986, 0
      %v9018 = vsel %vm3686, %v8994, 0
      %v9020 = vsel %vm3686, %v8993, 0
      %v9022 = vsel %vm3686, %v8995, 0
      %v9024 = vsel %vm3686, %v9003, 0
      %v9026 = vsel %vm3686, %v9011, 0
      %v9028 = vsel %vm3686, %v9010, 0
      %v9030 = vsel %vm3686, %v9012, 0
      %9032 = vmatprep.subr.mxu0 %v9018
      %9033 = vmatpush1.msra.mxu0 %v9016
      %9034 = vmatprep.subr.mxu0 0.0
      %9035 = vmatpush1.msra.mxu0 0.0
      %9036 = vmatprep.subr.mxu0 0.0
      %9037 = vmatpush1.msra.mxu0 0.0
      %9038 = vmatprep.subr.mxu0 0.0
      %9039 = vmatpush1.msra.mxu0 0.0
      %9040 = vmatprep.subr.mxu0 0.0
      %9041 = vmatpush1.msra.mxu0 0.0
      %9042 = vmatprep.subr.mxu0 0.0
      %9043 = vmatpush1.msra.mxu0 0.0
      %9044 = vmatprep.subr.mxu0 0.0
      %9045 = vmatpush1.msra.mxu0 0.0
      %9046 = vmatprep.subr.mxu0 0.0
      %9047 = vmatpush1.msra.mxu0 0.0
      %9048 = vmatprep.subr.mxu0 0.0
      %9049 = vmatpush1.msra.mxu0 0.0
      %9050 = vmatprep.subr.mxu0 0.0
      %9051 = vmatpush1.msra.mxu0 0.0
      %9052 = vmatprep.subr.mxu0 0.0
      %9053 = vmatpush1.msra.mxu0 0.0
      %9054 = vmatprep.subr.mxu0 0.0
      %9055 = vmatpush1.msra.mxu0 0.0
      %9056 = vmatprep.subr.mxu0 0.0
      %9057 = vmatpush1.msra.mxu0 0.0
      %9058 = vmatprep.subr.mxu0 0.0
      %9059 = vmatpush1.msra.mxu0 0.0
      %9060 = vmatprep.subr.mxu0 0.0
      %9061 = vmatpush1.msra.mxu0 0.0
      %9062 = vmatprep.subr.mxu0 0.0
      %9063 = vmatpush1.msra.mxu0 0.0
      %9064 = vmatprep.subr.mxu0 0.0
      %9065 = vmatpush1.msra.mxu0 0.0
      %9066 = vmatprep.subr.mxu0 0.0
      %9067 = vmatpush1.msra.mxu0 0.0
      %9068 = vmatprep.subr.mxu0 0.0
      %9069 = vmatpush1.msra.mxu0 0.0
      %9070 = vmatprep.subr.mxu0 0.0
      %9071 = vmatpush1.msra.mxu0 0.0
      %9072 = vmatprep.subr.mxu0 0.0
      %9073 = vmatpush1.msra.mxu0 0.0
      %9074 = vmatprep.subr.mxu0 0.0
      %9075 = vmatpush1.msra.mxu0 0.0
      %9076 = vmatprep.subr.mxu0 0.0
      %9077 = vmatpush1.msra.mxu0 0.0
      %9078 = vmatprep.subr.mxu0 0.0
      %9079 = vmatpush1.msra.mxu0 0.0
      %9080 = vmatprep.subr.mxu0 0.0
      %9081 = vmatpush1.msra.mxu0 0.0
      %9082 = vmatprep.subr.mxu0 0.0
      %9083 = vmatpush1.msra.mxu0 0.0
      %9084 = vmatprep.subr.mxu0 0.0
      %9085 = vmatpush1.msra.mxu0 0.0
      %9086 = vmatprep.subr.mxu0 0.0
      %9087 = vmatpush1.msra.mxu0 0.0
      %9088 = vmatprep.subr.mxu0 0.0
      %9089 = vmatpush1.msra.mxu0 0.0
      %9090 = vmatprep.subr.mxu0 0.0
      %9091 = vmatpush1.msra.mxu0 0.0
      %9092 = vmatprep.subr.mxu0 0.0
      %9093 = vmatpush1.msra.mxu0 0.0
      %9094 = vmatprep.subr.mxu0 0.0
      %9095 = vmatpush1.msra.mxu0 0.0
      %9096 = vmatprep.mubr.f32.mxu0 0.0
      %9097 = vmatmul.mubr.f32.gmra.mrb[0].mxu0 %v9014
      %v9098 = vpop.f32.mrb[0].mxu0
      %v9099 = vadd.f32 0.0, %v9098
      %v9100 = vpop.f32.mrb[0].mxu0
      %v9101 = vadd.f32 0.0, %v9100
      %9102 = vdwg.mxu0
      %9103 = vmatprep.subr.mxu0 %v9022
      %9104 = vmatpush1.msra.mxu0 %v9020
      %9105 = vmatprep.subr.mxu0 0.0
      %9106 = vmatpush1.msra.mxu0 0.0
      %9107 = vmatprep.subr.mxu0 0.0
      %9108 = vmatpush1.msra.mxu0 0.0
      %9109 = vmatprep.subr.mxu0 0.0
      %9110 = vmatpush1.msra.mxu0 0.0
      %9111 = vmatprep.subr.mxu0 0.0
      %9112 = vmatpush1.msra.mxu0 0.0
      %9113 = vmatprep.subr.mxu0 0.0
      %9114 = vmatpush1.msra.mxu0 0.0
      %9115 = vmatprep.subr.mxu0 0.0
      %9116 = vmatpush1.msra.mxu0 0.0
      %9117 = vmatprep.subr.mxu0 0.0
      %9118 = vmatpush1.msra.mxu0 0.0
      %9119 = vmatprep.subr.mxu0 0.0
      %9120 = vmatpush1.msra.mxu0 0.0
      %9121 = vmatprep.subr.mxu0 0.0
      %9122 = vmatpush1.msra.mxu0 0.0
      %9123 = vmatprep.subr.mxu0 0.0
      %9124 = vmatpush1.msra.mxu0 0.0
      %9125 = vmatprep.subr.mxu0 0.0
      %9126 = vmatpush1.msra.mxu0 0.0
      %9127 = vmatprep.subr.mxu0 0.0
      %9128 = vmatpush1.msra.mxu0 0.0
      %9129 = vmatprep.subr.mxu0 0.0
      %9130 = vmatpush1.msra.mxu0 0.0
      %9131 = vmatprep.subr.mxu0 0.0
      %9132 = vmatpush1.msra.mxu0 0.0
      %9133 = vmatprep.subr.mxu0 0.0
      %9134 = vmatpush1.msra.mxu0 0.0
      %9135 = vmatprep.subr.mxu0 0.0
      %9136 = vmatpush1.msra.mxu0 0.0
      %9137 = vmatprep.subr.mxu0 0.0
      %9138 = vmatpush1.msra.mxu0 0.0
      %9139 = vmatprep.subr.mxu0 0.0
      %9140 = vmatpush1.msra.mxu0 0.0
      %9141 = vmatprep.subr.mxu0 0.0
      %9142 = vmatpush1.msra.mxu0 0.0
      %9143 = vmatprep.subr.mxu0 0.0
      %9144 = vmatpush1.msra.mxu0 0.0
      %9145 = vmatprep.subr.mxu0 0.0
      %9146 = vmatpush1.msra.mxu0 0.0
      %9147 = vmatprep.subr.mxu0 0.0
      %9148 = vmatpush1.msra.mxu0 0.0
      %9149 = vmatprep.subr.mxu0 0.0
      %9150 = vmatpush1.msra.mxu0 0.0
      %9151 = vmatprep.subr.mxu0 0.0
      %9152 = vmatpush1.msra.mxu0 0.0
      %9153 = vmatprep.subr.mxu0 0.0
      %9154 = vmatpush1.msra.mxu0 0.0
      %9155 = vmatprep.subr.mxu0 0.0
      %9156 = vmatpush1.msra.mxu0 0.0
      %9157 = vmatprep.subr.mxu0 0.0
      %9158 = vmatpush1.msra.mxu0 0.0
      %9159 = vmatprep.subr.mxu0 0.0
      %9160 = vmatpush1.msra.mxu0 0.0
      %9161 = vmatprep.subr.mxu0 0.0
      %9162 = vmatpush1.msra.mxu0 0.0
      %9163 = vmatprep.subr.mxu0 0.0
      %9164 = vmatpush1.msra.mxu0 0.0
      %9165 = vmatprep.subr.mxu0 0.0
      %9166 = vmatpush1.msra.mxu0 0.0
      %9167 = vmatprep.mubr.f32.mxu0 0.0
      %9168 = vmatmul.mubr.f32.gmra.mrb[0].mxu0 %v9014
      %v9169 = vpop.f32.mrb[0].mxu0
      %v9170 = vadd.f32 0.0, %v9169
      %v9171 = vpop.f32.mrb[0].mxu0
      %v9172 = vadd.f32 0.0, %v9171
      %9173 = vdwg.mxu0
      %9174 = vmatprep.subr.mxu0 %v9026
      %9175 = vmatpush1.msra.mxu0 %v9024
      %9176 = vmatprep.subr.mxu0 0.0
      %9177 = vmatpush1.msra.mxu0 0.0
      %9178 = vmatprep.subr.mxu0 0.0
      %9179 = vmatpush1.msra.mxu0 0.0
      %9180 = vmatprep.subr.mxu0 0.0
      %9181 = vmatpush1.msra.mxu0 0.0
      %9182 = vmatprep.subr.mxu0 0.0
      %9183 = vmatpush1.msra.mxu0 0.0
      %9184 = vmatprep.subr.mxu0 0.0
      %9185 = vmatpush1.msra.mxu0 0.0
      %9186 = vmatprep.subr.mxu0 0.0
      %9187 = vmatpush1.msra.mxu0 0.0
      %9188 = vmatprep.subr.mxu0 0.0
      %9189 = vmatpush1.msra.mxu0 0.0
      %9190 = vmatprep.subr.mxu0 0.0
      %9191 = vmatpush1.msra.mxu0 0.0
      %9192 = vmatprep.subr.mxu0 0.0
      %9193 = vmatpush1.msra.mxu0 0.0
      %9194 = vmatprep.subr.mxu0 0.0
      %9195 = vmatpush1.msra.mxu0 0.0
      %9196 = vmatprep.subr.mxu0 0.0
      %9197 = vmatpush1.msra.mxu0 0.0
      %9198 = vmatprep.subr.mxu0 0.0
      %9199 = vmatpush1.msra.mxu0 0.0
      %9200 = vmatprep.subr.mxu0 0.0
      %9201 = vmatpush1.msra.mxu0 0.0
      %9202 = vmatprep.subr.mxu0 0.0
      %9203 = vmatpush1.msra.mxu0 0.0
      %9204 = vmatprep.subr.mxu0 0.0
      %9205 = vmatpush1.msra.mxu0 0.0
      %9206 = vmatprep.subr.mxu0 0.0
      %9207 = vmatpush1.msra.mxu0 0.0
      %9208 = vmatprep.subr.mxu0 0.0
      %9209 = vmatpush1.msra.mxu0 0.0
      %9210 = vmatprep.subr.mxu0 0.0
      %9211 = vmatpush1.msra.mxu0 0.0
      %9212 = vmatprep.subr.mxu0 0.0
      %9213 = vmatpush1.msra.mxu0 0.0
      %9214 = vmatprep.subr.mxu0 0.0
      %9215 = vmatpush1.msra.mxu0 0.0
      %9216 = vmatprep.subr.mxu0 0.0
      %9217 = vmatpush1.msra.mxu0 0.0
      %9218 = vmatprep.subr.mxu0 0.0
      %9219 = vmatpush1.msra.mxu0 0.0
      %9220 = vmatprep.subr.mxu0 0.0
      %9221 = vmatpush1.msra.mxu0 0.0
      %9222 = vmatprep.subr.mxu0 0.0
      %9223 = vmatpush1.msra.mxu0 0.0
      %9224 = vmatprep.subr.mxu0 0.0
      %9225 = vmatpush1.msra.mxu0 0.0
      %9226 = vmatprep.subr.mxu0 0.0
      %9227 = vmatpush1.msra.mxu0 0.0
      %9228 = vmatprep.subr.mxu0 0.0
      %9229 = vmatpush1.msra.mxu0 0.0
      %9230 = vmatprep.subr.mxu0 0.0
      %9231 = vmatpush1.msra.mxu0 0.0
      %9232 = vmatprep.subr.mxu0 0.0
      %9233 = vmatpush1.msra.mxu0 0.0
      %9234 = vmatprep.subr.mxu0 0.0
      %9235 = vmatpush1.msra.mxu0 0.0
      %9236 = vmatprep.subr.mxu0 0.0
      %9237 = vmatpush1.msra.mxu0 0.0
      %9238 = vmatprep.mubr.f32.mxu0 0.0
      %9239 = vmatmul.mubr.f32.gmra.mrb[0].mxu0 %v9014
      %v9240 = vpop.f32.mrb[0].mxu0
      %v9241 = vadd.f32 0.0, %v9240
      %v9242 = vpop.f32.mrb[0].mxu0
      %v9243 = vadd.f32 0.0, %v9242
      %9244 = vdwg.mxu0
      %9245 = vmatprep.subr.mxu0 %v9030
      %9246 = vmatpush1.msra.mxu0 %v9028
      %9247 = vmatprep.subr.mxu0 0.0
      %9248 = vmatpush1.msra.mxu0 0.0
      %9249 = vmatprep.subr.mxu0 0.0
      %9250 = vmatpush1.msra.mxu0 0.0
      %9251 = vmatprep.subr.mxu0 0.0
      %9252 = vmatpush1.msra.mxu0 0.0
      %9253 = vmatprep.subr.mxu0 0.0
      %9254 = vmatpush1.msra.mxu0 0.0
      %9255 = vmatprep.subr.mxu0 0.0
      %9256 = vmatpush1.msra.mxu0 0.0
      %9257 = vmatprep.subr.mxu0 0.0
      %9258 = vmatpush1.msra.mxu0 0.0
      %9259 = vmatprep.subr.mxu0 0.0
      %9260 = vmatpush1.msra.mxu0 0.0
      %9261 = vmatprep.subr.mxu0 0.0
      %9262 = vmatpush1.msra.mxu0 0.0
      %9263 = vmatprep.subr.mxu0 0.0
      %9264 = vmatpush1.msra.mxu0 0.0
      %9265 = vmatprep.subr.mxu0 0.0
      %9266 = vmatpush1.msra.mxu0 0.0
      %9267 = vmatprep.subr.mxu0 0.0
      %9268 = vmatpush1.msra.mxu0 0.0
      %9269 = vmatprep.subr.mxu0 0.0
      %9270 = vmatpush1.msra.mxu0 0.0
      %9271 = vmatprep.subr.mxu0 0.0
      %9272 = vmatpush1.msra.mxu0 0.0
      %9273 = vmatprep.subr.mxu0 0.0
      %9274 = vmatpush1.msra.mxu0 0.0
      %9275 = vmatprep.subr.mxu0 0.0
      %9276 = vmatpush1.msra.mxu0 0.0
      %9277 = vmatprep.subr.mxu0 0.0
      %9278 = vmatpush1.msra.mxu0 0.0
      %9279 = vmatprep.subr.mxu0 0.0
      %9280 = vmatpush1.msra.mxu0 0.0
      %9281 = vmatprep.subr.mxu0 0.0
      %9282 = vmatpush1.msra.mxu0 0.0
      %9283 = vmatprep.subr.mxu0 0.0
      %9284 = vmatpush1.msra.mxu0 0.0
      %9285 = vmatprep.subr.mxu0 0.0
      %9286 = vmatpush1.msra.mxu0 0.0
      %9287 = vmatprep.subr.mxu0 0.0
      %9288 = vmatpush1.msra.mxu0 0.0
      %9289 = vmatprep.subr.mxu0 0.0
      %9290 = vmatpush1.msra.mxu0 0.0
      %9291 = vmatprep.subr.mxu0 0.0
      %9292 = vmatpush1.msra.mxu0 0.0
      %9293 = vmatprep.subr.mxu0 0.0
      %9294 = vmatpush1.msra.mxu0 0.0
      %9295 = vmatprep.subr.mxu0 0.0
      %9296 = vmatpush1.msra.mxu0 0.0
      %9297 = vmatprep.subr.mxu0 0.0
      %9298 = vmatpush1.msra.mxu0 0.0
      %9299 = vmatprep.subr.mxu0 0.0
      %9300 = vmatpush1.msra.mxu0 0.0
      %9301 = vmatprep.subr.mxu0 0.0
      %9302 = vmatpush1.msra.mxu0 0.0
      %9303 = vmatprep.subr.mxu0 0.0
      %9304 = vmatpush1.msra.mxu0 0.0
      %9305 = vmatprep.subr.mxu0 0.0
      %9306 = vmatpush1.msra.mxu0 0.0
      %9307 = vmatprep.subr.mxu0 0.0
      %9308 = vmatpush1.msra.mxu0 0.0
      %9309 = vmatprep.mubr.f32.mxu0 0.0
      %9310 = vmatmul.mubr.f32.gmra.mrb[0].mxu0 %v9014
      %v9311 = vpop.f32.mrb[0].mxu0
      %v9312 = vadd.f32 0.0, %v9311
      %v9313 = vpop.f32.mrb[0].mxu0
      %v9314 = vadd.f32 0.0, %v9313
      %9315 = vdwg.mxu0
      %v9316 = vadd.f32 %v8945, %v9099
      %v9317 = vadd.f32 %v8946, %v9101
      %v9318 = vadd.f32 %v8947, %v9170
      %v9319 = vadd.f32 %v8948, %v9172
      %v9320 = vadd.f32 %v8949, %v9241
      %v9321 = vadd.f32 %v8950, %v9243
      %v9322 = vadd.f32 %v8951, %v9312
      %v9323 = vadd.f32 %v8952, %v9314
      %9324 = vrot.lane.b32.xlu0 %v7113, 97
      %v9325 = vpop.permute.xlu0 %9324
      %9326 = vrot.lane.b32.xlu0 %v7114, 97
      %v9327 = vpop.permute.xlu0 %9326
      %9328 = vrot.lane.b32.xlu0 %v7115, 97
      %v9329 = vpop.permute.xlu0 %9328
      %v9330 = vrot.slane %v9325, 2
      %v9331 = vrot.slane %v9327, 2
      %v9332 = vrot.slane %v9329, 2
      %v9333 = vrot.slane %v9325, 4
      %v9334 = vrot.slane %v9327, 4
      %v9335 = vrot.slane %v9329, 4
      %v9336 = vsel %vm5596, %v9330, %v9331
      %v9337 = vsel %vm377, %v9333, %v9334
      %v9338 = vsel %vm1125, %v9336, %v9337
      %v9339 = vsel %vm5596, %v9331, %v9332
      %v9340 = vsel %vm377, %v9334, %v9335
      %v9341 = vsel %vm1125, %v9339, %v9340
      %v9344 = vmul.f32 %v9338, %v3663
      %v9345 = vmul.f32 %v9341, %v3678
      %s9346 = scalar_lea.vmem %s2, 12
      %v9347 = vld [vmem:[%s9346] sm:$0x3]
      %v9350 = vcombine.high %v9344, %v9344
      %v9352 = vunpack.c.l.s4 1983009808
      %v9353 = vunpack.c.0.s8 %v9352
      %v9354 = vlaneseq
      %v9355 = vshrl.u32 %v9354, 7
      %v9356 = vsub.s32 %v9353, %v9355
      %v9357 = vrot.slane %v9344, %v9356
      %v9359 = vunpack.c.l.s4 1983009808
      %v9360 = vunpack.c.0.s8 %v9359
      %v9361 = vlaneseq
      %v9362 = vshrl.u32 %v9361, 7
      %v9363 = vsub.s32 %v9360, %v9362
      %v9364 = vrot.slane %v9350, %v9363
      %v9365 = vcombine.high %v9357, %v9357
      %v9366 = vcombine.high %v9364, %v9364
      %v9367 = vcombine.high %v9345, %v9345
      %v9369 = vunpack.c.l.s4 1983009808
      %v9370 = vunpack.c.0.s8 %v9369
      %v9371 = vlaneseq
      %v9372 = vshrl.u32 %v9371, 7
      %v9373 = vsub.s32 %v9370, %v9372
      %v9374 = vrot.slane %v9345, %v9373
      %v9376 = vunpack.c.l.s4 1983009808
      %v9377 = vunpack.c.0.s8 %v9376
      %v9378 = vlaneseq
      %v9379 = vshrl.u32 %v9378, 7
      %v9380 = vsub.s32 %v9377, %v9379
      %v9381 = vrot.slane %v9367, %v9380
      %v9382 = vcombine.high %v9374, %v9374
      %v9383 = vcombine.high %v9381, %v9381
      %v9385 = vsel %vm3768, %v9347, 0
      %v9387 = vsel %vm3686, %v9357, 0
      %v9389 = vsel %vm3686, %v9365, 0
      %v9391 = vsel %vm3686, %v9364, 0
      %v9393 = vsel %vm3686, %v9366, 0
      %v9395 = vsel %vm3686, %v9374, 0
      %v9397 = vsel %vm3686, %v9382, 0
      %v9399 = vsel %vm3686, %v9381, 0
      %v9401 = vsel %vm3686, %v9383, 0
      %9403 = vmatprep.subr.mxu0 %v9389
      %9404 = vmatpush1.msra.mxu0 %v9387
      %9405 = vmatprep.subr.mxu0 0.0
      %9406 = vmatpush1.msra.mxu0 0.0
      %9407 = vmatprep.subr.mxu0 0.0
      %9408 = vmatpush1.msra.mxu0 0.0
      %9409 = vmatprep.subr.mxu0 0.0
      %9410 = vmatpush1.msra.mxu0 0.0
      %9411 = vmatprep.subr.mxu0 0.0
      %9412 = vmatpush1.msra.mxu0 0.0
      %9413 = vmatprep.subr.mxu0 0.0
      %9414 = vmatpush1.msra.mxu0 0.0
      %9415 = vmatprep.subr.mxu0 0.0
      %9416 = vmatpush1.msra.mxu0 0.0
      %9417 = vmatprep.subr.mxu0 0.0
      %9418 = vmatpush1.msra.mxu0 0.0
      %9419 = vmatprep.subr.mxu0 0.0
      %9420 = vmatpush1.msra.mxu0 0.0
      %9421 = vmatprep.subr.mxu0 0.0
      %9422 = vmatpush1.msra.mxu0 0.0
      %9423 = vmatprep.subr.mxu0 0.0
      %9424 = vmatpush1.msra.mxu0 0.0
      %9425 = vmatprep.subr.mxu0 0.0
      %9426 = vmatpush1.msra.mxu0 0.0
      %9427 = vmatprep.subr.mxu0 0.0
      %9428 = vmatpush1.msra.mxu0 0.0
      %9429 = vmatprep.subr.mxu0 0.0
      %9430 = vmatpush1.msra.mxu0 0.0
      %9431 = vmatprep.subr.mxu0 0.0
      %9432 = vmatpush1.msra.mxu0 0.0
      %9433 = vmatprep.subr.mxu0 0.0
      %9434 = vmatpush1.msra.mxu0 0.0
      %9435 = vmatprep.subr.mxu0 0.0
      %9436 = vmatpush1.msra.mxu0 0.0
      %9437 = vmatprep.subr.mxu0 0.0
      %9438 = vmatpush1.msra.mxu0 0.0
      %9439 = vmatprep.subr.mxu0 0.0
      %9440 = vmatpush1.msra.mxu0 0.0
      %9441 = vmatprep.subr.mxu0 0.0
      %9442 = vmatpush1.msra.mxu0 0.0
      %9443 = vmatprep.subr.mxu0 0.0
      %9444 = vmatpush1.msra.mxu0 0.0
      %9445 = vmatprep.subr.mxu0 0.0
      %9446 = vmatpush1.msra.mxu0 0.0
      %9447 = vmatprep.subr.mxu0 0.0
      %9448 = vmatpush1.msra.mxu0 0.0
      %9449 = vmatprep.subr.mxu0 0.0
      %9450 = vmatpush1.msra.mxu0 0.0
      %9451 = vmatprep.subr.mxu0 0.0
      %9452 = vmatpush1.msra.mxu0 0.0
      %9453 = vmatprep.subr.mxu0 0.0
      %9454 = vmatpush1.msra.mxu0 0.0
      %9455 = vmatprep.subr.mxu0 0.0
      %9456 = vmatpush1.msra.mxu0 0.0
      %9457 = vmatprep.subr.mxu0 0.0
      %9458 = vmatpush1.msra.mxu0 0.0
      %9459 = vmatprep.subr.mxu0 0.0
      %9460 = vmatpush1.msra.mxu0 0.0
      %9461 = vmatprep.subr.mxu0 0.0
      %9462 = vmatpush1.msra.mxu0 0.0
      %9463 = vmatprep.subr.mxu0 0.0
      %9464 = vmatpush1.msra.mxu0 0.0
      %9465 = vmatprep.subr.mxu0 0.0
      %9466 = vmatpush1.msra.mxu0 0.0
      %9467 = vmatprep.mubr.f32.mxu0 0.0
      %9468 = vmatmul.mubr.f32.gmra.mrb[0].mxu0 %v9385
      %v9469 = vpop.f32.mrb[0].mxu0
      %v9470 = vadd.f32 0.0, %v9469
      %v9471 = vpop.f32.mrb[0].mxu0
      %v9472 = vadd.f32 0.0, %v9471
      %9473 = vdwg.mxu0
      %9474 = vmatprep.subr.mxu0 %v9393
      %9475 = vmatpush1.msra.mxu0 %v9391
      %9476 = vmatprep.subr.mxu0 0.0
      %9477 = vmatpush1.msra.mxu0 0.0
      %9478 = vmatprep.subr.mxu0 0.0
      %9479 = vmatpush1.msra.mxu0 0.0
      %9480 = vmatprep.subr.mxu0 0.0
      %9481 = vmatpush1.msra.mxu0 0.0
      %9482 = vmatprep.subr.mxu0 0.0
      %9483 = vmatpush1.msra.mxu0 0.0
      %9484 = vmatprep.subr.mxu0 0.0
      %9485 = vmatpush1.msra.mxu0 0.0
      %9486 = vmatprep.subr.mxu0 0.0
      %9487 = vmatpush1.msra.mxu0 0.0
      %9488 = vmatprep.subr.mxu0 0.0
      %9489 = vmatpush1.msra.mxu0 0.0
      %9490 = vmatprep.subr.mxu0 0.0
      %9491 = vmatpush1.msra.mxu0 0.0
      %9492 = vmatprep.subr.mxu0 0.0
      %9493 = vmatpush1.msra.mxu0 0.0
      %9494 = vmatprep.subr.mxu0 0.0
      %9495 = vmatpush1.msra.mxu0 0.0
      %9496 = vmatprep.subr.mxu0 0.0
      %9497 = vmatpush1.msra.mxu0 0.0
      %9498 = vmatprep.subr.mxu0 0.0
      %9499 = vmatpush1.msra.mxu0 0.0
      %9500 = vmatprep.subr.mxu0 0.0
      %9501 = vmatpush1.msra.mxu0 0.0
      %9502 = vmatprep.subr.mxu0 0.0
      %9503 = vmatpush1.msra.mxu0 0.0
      %9504 = vmatprep.subr.mxu0 0.0
      %9505 = vmatpush1.msra.mxu0 0.0
      %9506 = vmatprep.subr.mxu0 0.0
      %9507 = vmatpush1.msra.mxu0 0.0
      %9508 = vmatprep.subr.mxu0 0.0
      %9509 = vmatpush1.msra.mxu0 0.0
      %9510 = vmatprep.subr.mxu0 0.0
      %9511 = vmatpush1.msra.mxu0 0.0
      %9512 = vmatprep.subr.mxu0 0.0
      %9513 = vmatpush1.msra.mxu0 0.0
      %9514 = vmatprep.subr.mxu0 0.0
      %9515 = vmatpush1.msra.mxu0 0.0
      %9516 = vmatprep.subr.mxu0 0.0
      %9517 = vmatpush1.msra.mxu0 0.0
      %9518 = vmatprep.subr.mxu0 0.0
      %9519 = vmatpush1.msra.mxu0 0.0
      %9520 = vmatprep.subr.mxu0 0.0
      %9521 = vmatpush1.msra.mxu0 0.0
      %9522 = vmatprep.subr.mxu0 0.0
      %9523 = vmatpush1.msra.mxu0 0.0
      %9524 = vmatprep.subr.mxu0 0.0
      %9525 = vmatpush1.msra.mxu0 0.0
      %9526 = vmatprep.subr.mxu0 0.0
      %9527 = vmatpush1.msra.mxu0 0.0
      %9528 = vmatprep.subr.mxu0 0.0
      %9529 = vmatpush1.msra.mxu0 0.0
      %9530 = vmatprep.subr.mxu0 0.0
      %9531 = vmatpush1.msra.mxu0 0.0
      %9532 = vmatprep.subr.mxu0 0.0
      %9533 = vmatpush1.msra.mxu0 0.0
      %9534 = vmatprep.subr.mxu0 0.0
      %9535 = vmatpush1.msra.mxu0 0.0
      %9536 = vmatprep.subr.mxu0 0.0
      %9537 = vmatpush1.msra.mxu0 0.0
      %9538 = vmatprep.mubr.f32.mxu0 0.0
      %9539 = vmatmul.mubr.f32.gmra.mrb[0].mxu0 %v9385
      %v9540 = vpop.f32.mrb[0].mxu0
      %v9541 = vadd.f32 0.0, %v9540
      %v9542 = vpop.f32.mrb[0].mxu0
      %v9543 = vadd.f32 0.0, %v9542
      %9544 = vdwg.mxu0
      %9545 = vmatprep.subr.mxu0 %v9397
      %9546 = vmatpush1.msra.mxu0 %v9395
      %9547 = vmatprep.subr.mxu0 0.0
      %9548 = vmatpush1.msra.mxu0 0.0
      %9549 = vmatprep.subr.mxu0 0.0
      %9550 = vmatpush1.msra.mxu0 0.0
      %9551 = vmatprep.subr.mxu0 0.0
      %9552 = vmatpush1.msra.mxu0 0.0
      %9553 = vmatprep.subr.mxu0 0.0
      %9554 = vmatpush1.msra.mxu0 0.0
      %9555 = vmatprep.subr.mxu0 0.0
      %9556 = vmatpush1.msra.mxu0 0.0
      %9557 = vmatprep.subr.mxu0 0.0
      %9558 = vmatpush1.msra.mxu0 0.0
      %9559 = vmatprep.subr.mxu0 0.0
      %9560 = vmatpush1.msra.mxu0 0.0
      %9561 = vmatprep.subr.mxu0 0.0
      %9562 = vmatpush1.msra.mxu0 0.0
      %9563 = vmatprep.subr.mxu0 0.0
      %9564 = vmatpush1.msra.mxu0 0.0
      %9565 = vmatprep.subr.mxu0 0.0
      %9566 = vmatpush1.msra.mxu0 0.0
      %9567 = vmatprep.subr.mxu0 0.0
      %9568 = vmatpush1.msra.mxu0 0.0
      %9569 = vmatprep.subr.mxu0 0.0
      %9570 = vmatpush1.msra.mxu0 0.0
      %9571 = vmatprep.subr.mxu0 0.0
      %9572 = vmatpush1.msra.mxu0 0.0
      %9573 = vmatprep.subr.mxu0 0.0
      %9574 = vmatpush1.msra.mxu0 0.0
      %9575 = vmatprep.subr.mxu0 0.0
      %9576 = vmatpush1.msra.mxu0 0.0
      %9577 = vmatprep.subr.mxu0 0.0
      %9578 = vmatpush1.msra.mxu0 0.0
      %9579 = vmatprep.subr.mxu0 0.0
      %9580 = vmatpush1.msra.mxu0 0.0
      %9581 = vmatprep.subr.mxu0 0.0
      %9582 = vmatpush1.msra.mxu0 0.0
      %9583 = vmatprep.subr.mxu0 0.0
      %9584 = vmatpush1.msra.mxu0 0.0
      %9585 = vmatprep.subr.mxu0 0.0
      %9586 = vmatpush1.msra.mxu0 0.0
      %9587 = vmatprep.subr.mxu0 0.0
      %9588 = vmatpush1.msra.mxu0 0.0
      %9589 = vmatprep.subr.mxu0 0.0
      %9590 = vmatpush1.msra.mxu0 0.0
      %9591 = vmatprep.subr.mxu0 0.0
      %9592 = vmatpush1.msra.mxu0 0.0
      %9593 = vmatprep.subr.mxu0 0.0
      %9594 = vmatpush1.msra.mxu0 0.0
      %9595 = vmatprep.subr.mxu0 0.0
      %9596 = vmatpush1.msra.mxu0 0.0
      %9597 = vmatprep.subr.mxu0 0.0
      %9598 = vmatpush1.msra.mxu0 0.0
      %9599 = vmatprep.subr.mxu0 0.0
      %9600 = vmatpush1.msra.mxu0 0.0
      %9601 = vmatprep.subr.mxu0 0.0
      %9602 = vmatpush1.msra.mxu0 0.0
      %9603 = vmatprep.subr.mxu0 0.0
      %9604 = vmatpush1.msra.mxu0 0.0
      %9605 = vmatprep.subr.mxu0 0.0
      %9606 = vmatpush1.msra.mxu0 0.0
      %9607 = vmatprep.subr.mxu0 0.0
      %9608 = vmatpush1.msra.mxu0 0.0
      %9609 = vmatprep.mubr.f32.mxu0 0.0
      %9610 = vmatmul.mubr.f32.gmra.mrb[0].mxu0 %v9385
      %v9611 = vpop.f32.mrb[0].mxu0
      %v9612 = vadd.f32 0.0, %v9611
      %v9613 = vpop.f32.mrb[0].mxu0
      %v9614 = vadd.f32 0.0, %v9613
      %9615 = vdwg.mxu0
      %9616 = vmatprep.subr.mxu0 %v9401
      %9617 = vmatpush1.msra.mxu0 %v9399
      %9618 = vmatprep.subr.mxu0 0.0
      %9619 = vmatpush1.msra.mxu0 0.0
      %9620 = vmatprep.subr.mxu0 0.0
      %9621 = vmatpush1.msra.mxu0 0.0
      %9622 = vmatprep.subr.mxu0 0.0
      %9623 = vmatpush1.msra.mxu0 0.0
      %9624 = vmatprep.subr.mxu0 0.0
      %9625 = vmatpush1.msra.mxu0 0.0
      %9626 = vmatprep.subr.mxu0 0.0
      %9627 = vmatpush1.msra.mxu0 0.0
      %9628 = vmatprep.subr.mxu0 0.0
      %9629 = vmatpush1.msra.mxu0 0.0
      %9630 = vmatprep.subr.mxu0 0.0
      %9631 = vmatpush1.msra.mxu0 0.0
      %9632 = vmatprep.subr.mxu0 0.0
      %9633 = vmatpush1.msra.mxu0 0.0
      %9634 = vmatprep.subr.mxu0 0.0
      %9635 = vmatpush1.msra.mxu0 0.0
      %9636 = vmatprep.subr.mxu0 0.0
      %9637 = vmatpush1.msra.mxu0 0.0
      %9638 = vmatprep.subr.mxu0 0.0
      %9639 = vmatpush1.msra.mxu0 0.0
      %9640 = vmatprep.subr.mxu0 0.0
      %9641 = vmatpush1.msra.mxu0 0.0
      %9642 = vmatprep.subr.mxu0 0.0
      %9643 = vmatpush1.msra.mxu0 0.0
      %9644 = vmatprep.subr.mxu0 0.0
      %9645 = vmatpush1.msra.mxu0 0.0
      %9646 = vmatprep.subr.mxu0 0.0
      %9647 = vmatpush1.msra.mxu0 0.0
      %9648 = vmatprep.subr.mxu0 0.0
      %9649 = vmatpush1.msra.mxu0 0.0
      %9650 = vmatprep.subr.mxu0 0.0
      %9651 = vmatpush1.msra.mxu0 0.0
      %9652 = vmatprep.subr.mxu0 0.0
      %9653 = vmatpush1.msra.mxu0 0.0
      %9654 = vmatprep.subr.mxu0 0.0
      %9655 = vmatpush1.msra.mxu0 0.0
      %9656 = vmatprep.subr.mxu0 0.0
      %9657 = vmatpush1.msra.mxu0 0.0
      %9658 = vmatprep.subr.mxu0 0.0
      %9659 = vmatpush1.msra.mxu0 0.0
      %9660 = vmatprep.subr.mxu0 0.0
      %9661 = vmatpush1.msra.mxu0 0.0
      %9662 = vmatprep.subr.mxu0 0.0
      %9663 = vmatpush1.msra.mxu0 0.0
      %9664 = vmatprep.subr.mxu0 0.0
      %9665 = vmatpush1.msra.mxu0 0.0
      %9666 = vmatprep.subr.mxu0 0.0
      %9667 = vmatpush1.msra.mxu0 0.0
      %9668 = vmatprep.subr.mxu0 0.0
      %9669 = vmatpush1.msra.mxu0 0.0
      %9670 = vmatprep.subr.mxu0 0.0
      %9671 = vmatpush1.msra.mxu0 0.0
      %9672 = vmatprep.subr.mxu0 0.0
      %9673 = vmatpush1.msra.mxu0 0.0
      %9674 = vmatprep.subr.mxu0 0.0
      %9675 = vmatpush1.msra.mxu0 0.0
      %9676 = vmatprep.subr.mxu0 0.0
      %9677 = vmatpush1.msra.mxu0 0.0
      %9678 = vmatprep.subr.mxu0 0.0
      %9679 = vmatpush1.msra.mxu0 0.0
      %9680 = vmatprep.mubr.f32.mxu0 0.0
      %9681 = vmatmul.mubr.f32.gmra.mrb[0].mxu0 %v9385
      %v9682 = vpop.f32.mrb[0].mxu0
      %v9683 = vadd.f32 0.0, %v9682
      %v9684 = vpop.f32.mrb[0].mxu0
      %v9685 = vadd.f32 0.0, %v9684
      %9686 = vdwg.mxu0
      %v9687 = vadd.f32 %v9316, %v9470
      %v9688 = vadd.f32 %v9317, %v9472
      %v9689 = vadd.f32 %v9318, %v9541
      %v9690 = vadd.f32 %v9319, %v9543
      %v9691 = vadd.f32 %v9320, %v9612
      %v9692 = vadd.f32 %v9321, %v9614
      %v9693 = vadd.f32 %v9322, %v9683
      %v9694 = vadd.f32 %v9323, %v9685
      %s9695 = scalar_lea.vmem %s2, 14
      %v9696 = vld [vmem:[%s9695] sm:$0x3]
      %v9697 = vcombine.high %v7165, %v7165
      %9698 = vrot.lane.b32.xlu0 %v7140, 96
      %v9699 = vpop.permute.xlu0 %9698
      %9700 = vrot.lane.b32.xlu0 %v7139, 96
      %v9701 = vpop.permute.xlu0 %9700
      %9702 = vrot.lane.b32.xlu0 %v7141, 96
      %v9703 = vpop.permute.xlu0 %9702
      %9704 = vrot.lane.b32.xlu0 %v7149, 96
      %v9705 = vpop.permute.xlu0 %9704
      %9706 = vrot.lane.b32.xlu0 %v7157, 96
      %v9707 = vpop.permute.xlu0 %9706
      %9708 = vrot.lane.b32.xlu0 %v7156, 96
      %v9709 = vpop.permute.xlu0 %9708
      %9710 = vrot.lane.b32.xlu0 %v7158, 96
      %v9711 = vpop.permute.xlu0 %9710
      %9712 = vrot.lane.b32.xlu0 %v7165, 96
      %v9713 = vpop.permute.xlu0 %9712
      %9714 = vrot.lane.b32.xlu0 %v9697, 96
      %v9715 = vpop.permute.xlu0 %9714
      %v9716 = vsel %vm2917, %v9699, %v9701
      %v9717 = vsel %vm2917, %v9701, %v9703
      %v9718 = vsel %vm2917, %v9703, %v9705
      %v9719 = vsel %vm2917, %v9705, %v9707
      %v9720 = vsel %vm2917, %v9707, %v9709
      %v9721 = vsel %vm2917, %v9709, %v9711
      %v9722 = vsel %vm2917, %v9711, %v9713
      %v9723 = vsel %vm2917, %v9713, %v9715
      %v9725 = vsel %vm3768, %v9696, 0
      %v9727 = vsel %vm3686, %v9716, 0
      %v9729 = vsel %vm3686, %v9717, 0
      %v9731 = vsel %vm3686, %v9718, 0
      %v9733 = vsel %vm3686, %v9719, 0
      %v9735 = vsel %vm3686, %v9720, 0
      %v9737 = vsel %vm3686, %v9721, 0
      %v9739 = vsel %vm3686, %v9722, 0
      %v9741 = vsel %vm3686, %v9723, 0
      %9743 = vmatprep.subr.mxu0 %v9729
      %9744 = vmatpush1.msra.mxu0 %v9727
      %9745 = vmatprep.subr.mxu0 0.0
      %9746 = vmatpush1.msra.mxu0 0.0
      %9747 = vmatprep.subr.mxu0 0.0
      %9748 = vmatpush1.msra.mxu0 0.0
      %9749 = vmatprep.subr.mxu0 0.0
      %9750 = vmatpush1.msra.mxu0 0.0
      %9751 = vmatprep.subr.mxu0 0.0
      %9752 = vmatpush1.msra.mxu0 0.0
      %9753 = vmatprep.subr.mxu0 0.0
      %9754 = vmatpush1.msra.mxu0 0.0
      %9755 = vmatprep.subr.mxu0 0.0
      %9756 = vmatpush1.msra.mxu0 0.0
      %9757 = vmatprep.subr.mxu0 0.0
      %9758 = vmatpush1.msra.mxu0 0.0
      %9759 = vmatprep.subr.mxu0 0.0
      %9760 = vmatpush1.msra.mxu0 0.0
      %9761 = vmatprep.subr.mxu0 0.0
      %9762 = vmatpush1.msra.mxu0 0.0
      %9763 = vmatprep.subr.mxu0 0.0
      %9764 = vmatpush1.msra.mxu0 0.0
      %9765 = vmatprep.subr.mxu0 0.0
      %9766 = vmatpush1.msra.mxu0 0.0
      %9767 = vmatprep.subr.mxu0 0.0
      %9768 = vmatpush1.msra.mxu0 0.0
      %9769 = vmatprep.subr.mxu0 0.0
      %9770 = vmatpush1.msra.mxu0 0.0
      %9771 = vmatprep.subr.mxu0 0.0
      %9772 = vmatpush1.msra.mxu0 0.0
      %9773 = vmatprep.subr.mxu0 0.0
      %9774 = vmatpush1.msra.mxu0 0.0
      %9775 = vmatprep.subr.mxu0 0.0
      %9776 = vmatpush1.msra.mxu0 0.0
      %9777 = vmatprep.subr.mxu0 0.0
      %9778 = vmatpush1.msra.mxu0 0.0
      %9779 = vmatprep.subr.mxu0 0.0
      %9780 = vmatpush1.msra.mxu0 0.0
      %9781 = vmatprep.subr.mxu0 0.0
      %9782 = vmatpush1.msra.mxu0 0.0
      %9783 = vmatprep.subr.mxu0 0.0
      %9784 = vmatpush1.msra.mxu0 0.0
      %9785 = vmatprep.subr.mxu0 0.0
      %9786 = vmatpush1.msra.mxu0 0.0
      %9787 = vmatprep.subr.mxu0 0.0
      %9788 = vmatpush1.msra.mxu0 0.0
      %9789 = vmatprep.subr.mxu0 0.0
      %9790 = vmatpush1.msra.mxu0 0.0
      %9791 = vmatprep.subr.mxu0 0.0
      %9792 = vmatpush1.msra.mxu0 0.0
      %9793 = vmatprep.subr.mxu0 0.0
      %9794 = vmatpush1.msra.mxu0 0.0
      %9795 = vmatprep.subr.mxu0 0.0
      %9796 = vmatpush1.msra.mxu0 0.0
      %9797 = vmatprep.subr.mxu0 0.0
      %9798 = vmatpush1.msra.mxu0 0.0
      %9799 = vmatprep.subr.mxu0 0.0
      %9800 = vmatpush1.msra.mxu0 0.0
      %9801 = vmatprep.subr.mxu0 0.0
      %9802 = vmatpush1.msra.mxu0 0.0
      %9803 = vmatprep.subr.mxu0 0.0
      %9804 = vmatpush1.msra.mxu0 0.0
      %9805 = vmatprep.subr.mxu0 0.0
      %9806 = vmatpush1.msra.mxu0 0.0
      %9807 = vmatprep.mubr.f32.mxu0 0.0
      %9808 = vmatmul.mubr.f32.gmra.mrb[0].mxu0 %v9725
      %v9809 = vpop.f32.mrb[0].mxu0
      %v9810 = vadd.f32 0.0, %v9809
      %v9811 = vpop.f32.mrb[0].mxu0
      %v9812 = vadd.f32 0.0, %v9811
      %9813 = vdwg.mxu0
      %9814 = vmatprep.subr.mxu0 %v9733
      %9815 = vmatpush1.msra.mxu0 %v9731
      %9816 = vmatprep.subr.mxu0 0.0
      %9817 = vmatpush1.msra.mxu0 0.0
      %9818 = vmatprep.subr.mxu0 0.0
      %9819 = vmatpush1.msra.mxu0 0.0
      %9820 = vmatprep.subr.mxu0 0.0
      %9821 = vmatpush1.msra.mxu0 0.0
      %9822 = vmatprep.subr.mxu0 0.0
      %9823 = vmatpush1.msra.mxu0 0.0
      %9824 = vmatprep.subr.mxu0 0.0
      %9825 = vmatpush1.msra.mxu0 0.0
      %9826 = vmatprep.subr.mxu0 0.0
      %9827 = vmatpush1.msra.mxu0 0.0
      %9828 = vmatprep.subr.mxu0 0.0
      %9829 = vmatpush1.msra.mxu0 0.0
      %9830 = vmatprep.subr.mxu0 0.0
      %9831 = vmatpush1.msra.mxu0 0.0
      %9832 = vmatprep.subr.mxu0 0.0
      %9833 = vmatpush1.msra.mxu0 0.0
      %9834 = vmatprep.subr.mxu0 0.0
      %9835 = vmatpush1.msra.mxu0 0.0
      %9836 = vmatprep.subr.mxu0 0.0
      %9837 = vmatpush1.msra.mxu0 0.0
      %9838 = vmatprep.subr.mxu0 0.0
      %9839 = vmatpush1.msra.mxu0 0.0
      %9840 = vmatprep.subr.mxu0 0.0
      %9841 = vmatpush1.msra.mxu0 0.0
      %9842 = vmatprep.subr.mxu0 0.0
      %9843 = vmatpush1.msra.mxu0 0.0
      %9844 = vmatprep.subr.mxu0 0.0
      %9845 = vmatpush1.msra.mxu0 0.0
      %9846 = vmatprep.subr.mxu0 0.0
      %9847 = vmatpush1.msra.mxu0 0.0
      %9848 = vmatprep.subr.mxu0 0.0
      %9849 = vmatpush1.msra.mxu0 0.0
      %9850 = vmatprep.subr.mxu0 0.0
      %9851 = vmatpush1.msra.mxu0 0.0
      %9852 = vmatprep.subr.mxu0 0.0
      %9853 = vmatpush1.msra.mxu0 0.0
      %9854 = vmatprep.subr.mxu0 0.0
      %9855 = vmatpush1.msra.mxu0 0.0
      %9856 = vmatprep.subr.mxu0 0.0
      %9857 = vmatpush1.msra.mxu0 0.0
      %9858 = vmatprep.subr.mxu0 0.0
      %9859 = vmatpush1.msra.mxu0 0.0
      %9860 = vmatprep.subr.mxu0 0.0
      %9861 = vmatpush1.msra.mxu0 0.0
      %9862 = vmatprep.subr.mxu0 0.0
      %9863 = vmatpush1.msra.mxu0 0.0
      %9864 = vmatprep.subr.mxu0 0.0
      %9865 = vmatpush1.msra.mxu0 0.0
      %9866 = vmatprep.subr.mxu0 0.0
      %9867 = vmatpush1.msra.mxu0 0.0
      %9868 = vmatprep.subr.mxu0 0.0
      %9869 = vmatpush1.msra.mxu0 0.0
      %9870 = vmatprep.subr.mxu0 0.0
      %9871 = vmatpush1.msra.mxu0 0.0
      %9872 = vmatprep.subr.mxu0 0.0
      %9873 = vmatpush1.msra.mxu0 0.0
      %9874 = vmatprep.subr.mxu0 0.0
      %9875 = vmatpush1.msra.mxu0 0.0
      %9876 = vmatprep.subr.mxu0 0.0
      %9877 = vmatpush1.msra.mxu0 0.0
      %9878 = vmatprep.mubr.f32.mxu0 0.0
      %9879 = vmatmul.mubr.f32.gmra.mrb[0].mxu0 %v9725
      %v9880 = vpop.f32.mrb[0].mxu0
      %v9881 = vadd.f32 0.0, %v9880
      %v9882 = vpop.f32.mrb[0].mxu0
      %v9883 = vadd.f32 0.0, %v9882
      %9884 = vdwg.mxu0
      %9885 = vmatprep.subr.mxu0 %v9737
      %9886 = vmatpush1.msra.mxu0 %v9735
      %9887 = vmatprep.subr.mxu0 0.0
      %9888 = vmatpush1.msra.mxu0 0.0
      %9889 = vmatprep.subr.mxu0 0.0
      %9890 = vmatpush1.msra.mxu0 0.0
      %9891 = vmatprep.subr.mxu0 0.0
      %9892 = vmatpush1.msra.mxu0 0.0
      %9893 = vmatprep.subr.mxu0 0.0
      %9894 = vmatpush1.msra.mxu0 0.0
      %9895 = vmatprep.subr.mxu0 0.0
      %9896 = vmatpush1.msra.mxu0 0.0
      %9897 = vmatprep.subr.mxu0 0.0
      %9898 = vmatpush1.msra.mxu0 0.0
      %9899 = vmatprep.subr.mxu0 0.0
      %9900 = vmatpush1.msra.mxu0 0.0
      %9901 = vmatprep.subr.mxu0 0.0
      %9902 = vmatpush1.msra.mxu0 0.0
      %9903 = vmatprep.subr.mxu0 0.0
      %9904 = vmatpush1.msra.mxu0 0.0
      %9905 = vmatprep.subr.mxu0 0.0
      %9906 = vmatpush1.msra.mxu0 0.0
      %9907 = vmatprep.subr.mxu0 0.0
      %9908 = vmatpush1.msra.mxu0 0.0
      %9909 = vmatprep.subr.mxu0 0.0
      %9910 = vmatpush1.msra.mxu0 0.0
      %9911 = vmatprep.subr.mxu0 0.0
      %9912 = vmatpush1.msra.mxu0 0.0
      %9913 = vmatprep.subr.mxu0 0.0
      %9914 = vmatpush1.msra.mxu0 0.0
      %9915 = vmatprep.subr.mxu0 0.0
      %9916 = vmatpush1.msra.mxu0 0.0
      %9917 = vmatprep.subr.mxu0 0.0
      %9918 = vmatpush1.msra.mxu0 0.0
      %9919 = vmatprep.subr.mxu0 0.0
      %9920 = vmatpush1.msra.mxu0 0.0
      %9921 = vmatprep.subr.mxu0 0.0
      %9922 = vmatpush1.msra.mxu0 0.0
      %9923 = vmatprep.subr.mxu0 0.0
      %9924 = vmatpush1.msra.mxu0 0.0
      %9925 = vmatprep.subr.mxu0 0.0
      %9926 = vmatpush1.msra.mxu0 0.0
      %9927 = vmatprep.subr.mxu0 0.0
      %9928 = vmatpush1.msra.mxu0 0.0
      %9929 = vmatprep.subr.mxu0 0.0
      %9930 = vmatpush1.msra.mxu0 0.0
      %9931 = vmatprep.subr.mxu0 0.0
      %9932 = vmatpush1.msra.mxu0 0.0
      %9933 = vmatprep.subr.mxu0 0.0
      %9934 = vmatpush1.msra.mxu0 0.0
      %9935 = vmatprep.subr.mxu0 0.0
      %9936 = vmatpush1.msra.mxu0 0.0
      %9937 = vmatprep.subr.mxu0 0.0
      %9938 = vmatpush1.msra.mxu0 0.0
      %9939 = vmatprep.subr.mxu0 0.0
      %9940 = vmatpush1.msra.mxu0 0.0
      %9941 = vmatprep.subr.mxu0 0.0
      %9942 = vmatpush1.msra.mxu0 0.0
      %9943 = vmatprep.subr.mxu0 0.0
      %9944 = vmatpush1.msra.mxu0 0.0
      %9945 = vmatprep.subr.mxu0 0.0
      %9946 = vmatpush1.msra.mxu0 0.0
      %9947 = vmatprep.subr.mxu0 0.0
      %9948 = vmatpush1.msra.mxu0 0.0
      %9949 = vmatprep.mubr.f32.mxu0 0.0
      %9950 = vmatmul.mubr.f32.gmra.mrb[0].mxu0 %v9725
      %v9951 = vpop.f32.mrb[0].mxu0
      %v9952 = vadd.f32 0.0, %v9951
      %v9953 = vpop.f32.mrb[0].mxu0
      %v9954 = vadd.f32 0.0, %v9953
      %9955 = vdwg.mxu0
      %9956 = vmatprep.subr.mxu0 %v9741
      %9957 = vmatpush1.msra.mxu0 %v9739
      %9958 = vmatprep.subr.mxu0 0.0
      %9959 = vmatpush1.msra.mxu0 0.0
      %9960 = vmatprep.subr.mxu0 0.0
      %9961 = vmatpush1.msra.mxu0 0.0
      %9962 = vmatprep.subr.mxu0 0.0
      %9963 = vmatpush1.msra.mxu0 0.0
      %9964 = vmatprep.subr.mxu0 0.0
      %9965 = vmatpush1.msra.mxu0 0.0
      %9966 = vmatprep.subr.mxu0 0.0
      %9967 = vmatpush1.msra.mxu0 0.0
      %9968 = vmatprep.subr.mxu0 0.0
      %9969 = vmatpush1.msra.mxu0 0.0
      %9970 = vmatprep.subr.mxu0 0.0
      %9971 = vmatpush1.msra.mxu0 0.0
      %9972 = vmatprep.subr.mxu0 0.0
      %9973 = vmatpush1.msra.mxu0 0.0
      %9974 = vmatprep.subr.mxu0 0.0
      %9975 = vmatpush1.msra.mxu0 0.0
      %9976 = vmatprep.subr.mxu0 0.0
      %9977 = vmatpush1.msra.mxu0 0.0
      %9978 = vmatprep.subr.mxu0 0.0
      %9979 = vmatpush1.msra.mxu0 0.0
      %9980 = vmatprep.subr.mxu0 0.0
      %9981 = vmatpush1.msra.mxu0 0.0
      %9982 = vmatprep.subr.mxu0 0.0
      %9983 = vmatpush1.msra.mxu0 0.0
      %9984 = vmatprep.subr.mxu0 0.0
      %9985 = vmatpush1.msra.mxu0 0.0
      %9986 = vmatprep.subr.mxu0 0.0
      %9987 = vmatpush1.msra.mxu0 0.0
      %9988 = vmatprep.subr.mxu0 0.0
      %9989 = vmatpush1.msra.mxu0 0.0
      %9990 = vmatprep.subr.mxu0 0.0
      %9991 = vmatpush1.msra.mxu0 0.0
      %9992 = vmatprep.subr.mxu0 0.0
      %9993 = vmatpush1.msra.mxu0 0.0
      %9994 = vmatprep.subr.mxu0 0.0
      %9995 = vmatpush1.msra.mxu0 0.0
      %9996 = vmatprep.subr.mxu0 0.0
      %9997 = vmatpush1.msra.mxu0 0.0
      %9998 = vmatprep.subr.mxu0 0.0
      %9999 = vmatpush1.msra.mxu0 0.0
      %10000 = vmatprep.subr.mxu0 0.0
      %10001 = vmatpush1.msra.mxu0 0.0
      %10002 = vmatprep.subr.mxu0 0.0
      %10003 = vmatpush1.msra.mxu0 0.0
      %10004 = vmatprep.subr.mxu0 0.0
      %10005 = vmatpush1.msra.mxu0 0.0
      %10006 = vmatprep.subr.mxu0 0.0
      %10007 = vmatpush1.msra.mxu0 0.0
      %10008 = vmatprep.subr.mxu0 0.0
      %10009 = vmatpush1.msra.mxu0 0.0
      %10010 = vmatprep.subr.mxu0 0.0
      %10011 = vmatpush1.msra.mxu0 0.0
      %10012 = vmatprep.subr.mxu0 0.0
      %10013 = vmatpush1.msra.mxu0 0.0
      %10014 = vmatprep.subr.mxu0 0.0
      %10015 = vmatpush1.msra.mxu0 0.0
      %10016 = vmatprep.subr.mxu0 0.0
      %10017 = vmatpush1.msra.mxu0 0.0
      %10018 = vmatprep.subr.mxu0 0.0
      %10019 = vmatpush1.msra.mxu0 0.0
      %10020 = vmatprep.mubr.f32.mxu0 0.0
      %10021 = vmatmul.mubr.f32.gmra.mrb[0].mxu0 %v9725
      %v10022 = vpop.f32.mrb[0].mxu0
      %v10023 = vadd.f32 0.0, %v10022
      %v10024 = vpop.f32.mrb[0].mxu0
      %v10025 = vadd.f32 0.0, %v10024
      %10026 = vdwg.mxu0
      %v10027 = vadd.f32 %v9687, %v9810
      %v10028 = vadd.f32 %v9688, %v9812
      %v10029 = vadd.f32 %v9689, %v9881
      %v10030 = vadd.f32 %v9690, %v9883
      %v10031 = vadd.f32 %v9691, %v9952
      %v10032 = vadd.f32 %v9692, %v9954
      %v10033 = vadd.f32 %v9693, %v10023
      %v10034 = vadd.f32 %v9694, %v10025
      %10035 = vrot.lane.b32.xlu0 %v7113, 95
      %v10036 = vpop.permute.xlu0 %10035
      %10037 = vrot.lane.b32.xlu0 %v7114, 95
      %v10038 = vpop.permute.xlu0 %10037
      %10039 = vrot.lane.b32.xlu0 %v7115, 95
      %v10040 = vpop.permute.xlu0 %10039
      %v10041 = vrot.slane %v10036, 2
      %v10042 = vrot.slane %v10038, 2
      %v10043 = vrot.slane %v10040, 2
      %v10044 = vrot.slane %v10036, 4
      %v10045 = vrot.slane %v10038, 4
      %v10046 = vrot.slane %v10040, 4
      %v10047 = vsel %vm5596, %v10041, %v10042
      %v10048 = vsel %vm377, %v10044, %v10045
      %v10049 = vsel %vm375, %v10047, %v10048
      %v10050 = vsel %vm5596, %v10042, %v10043
      %v10051 = vsel %vm377, %v10045, %v10046
      %v10052 = vsel %vm375, %v10050, %v10051
      %v10055 = vmul.f32 %v10049, %v4459
      %v10056 = vmul.f32 %v10052, %v4474
      %s10057 = scalar_lea.vmem %s2, 16
      %v10058 = vld [vmem:[%s10057] sm:$0x3]
      %v10061 = vcombine.high %v10055, %v10055
      %v10063 = vunpack.c.l.s4 1983009808
      %v10064 = vunpack.c.0.s8 %v10063
      %v10065 = vlaneseq
      %v10066 = vshrl.u32 %v10065, 7
      %v10067 = vsub.s32 %v10064, %v10066
      %v10068 = vrot.slane %v10055, %v10067
      %v10070 = vunpack.c.l.s4 1983009808
      %v10071 = vunpack.c.0.s8 %v10070
      %v10072 = vlaneseq
      %v10073 = vshrl.u32 %v10072, 7
      %v10074 = vsub.s32 %v10071, %v10073
      %v10075 = vrot.slane %v10061, %v10074
      %v10076 = vcombine.high %v10068, %v10068
      %v10077 = vcombine.high %v10075, %v10075
      %v10078 = vcombine.high %v10056, %v10056
      %v10080 = vunpack.c.l.s4 1983009808
      %v10081 = vunpack.c.0.s8 %v10080
      %v10082 = vlaneseq
      %v10083 = vshrl.u32 %v10082, 7
      %v10084 = vsub.s32 %v10081, %v10083
      %v10085 = vrot.slane %v10056, %v10084
      %v10087 = vunpack.c.l.s4 1983009808
      %v10088 = vunpack.c.0.s8 %v10087
      %v10089 = vlaneseq
      %v10090 = vshrl.u32 %v10089, 7
      %v10091 = vsub.s32 %v10088, %v10090
      %v10092 = vrot.slane %v10078, %v10091
      %v10093 = vcombine.high %v10085, %v10085
      %v10094 = vcombine.high %v10092, %v10092
      %v10096 = vsel %vm3768, %v10058, 0
      %v10098 = vsel %vm3686, %v10068, 0
      %v10100 = vsel %vm3686, %v10076, 0
      %v10102 = vsel %vm3686, %v10075, 0
      %v10104 = vsel %vm3686, %v10077, 0
      %v10106 = vsel %vm3686, %v10085, 0
      %v10108 = vsel %vm3686, %v10093, 0
      %v10110 = vsel %vm3686, %v10092, 0
      %v10112 = vsel %vm3686, %v10094, 0
      %10114 = vmatprep.subr.mxu0 %v10100
      %10115 = vmatpush1.msra.mxu0 %v10098
      %10116 = vmatprep.subr.mxu0 0.0
      %10117 = vmatpush1.msra.mxu0 0.0
      %10118 = vmatprep.subr.mxu0 0.0
      %10119 = vmatpush1.msra.mxu0 0.0
      %10120 = vmatprep.subr.mxu0 0.0
      %10121 = vmatpush1.msra.mxu0 0.0
      %10122 = vmatprep.subr.mxu0 0.0
      %10123 = vmatpush1.msra.mxu0 0.0
      %10124 = vmatprep.subr.mxu0 0.0
      %10125 = vmatpush1.msra.mxu0 0.0
      %10126 = vmatprep.subr.mxu0 0.0
      %10127 = vmatpush1.msra.mxu0 0.0
      %10128 = vmatprep.subr.mxu0 0.0
      %10129 = vmatpush1.msra.mxu0 0.0
      %10130 = vmatprep.subr.mxu0 0.0
      %10131 = vmatpush1.msra.mxu0 0.0
      %10132 = vmatprep.subr.mxu0 0.0
      %10133 = vmatpush1.msra.mxu0 0.0
      %10134 = vmatprep.subr.mxu0 0.0
      %10135 = vmatpush1.msra.mxu0 0.0
      %10136 = vmatprep.subr.mxu0 0.0
      %10137 = vmatpush1.msra.mxu0 0.0
      %10138 = vmatprep.subr.mxu0 0.0
      %10139 = vmatpush1.msra.mxu0 0.0
      %10140 = vmatprep.subr.mxu0 0.0
      %10141 = vmatpush1.msra.mxu0 0.0
      %10142 = vmatprep.subr.mxu0 0.0
      %10143 = vmatpush1.msra.mxu0 0.0
      %10144 = vmatprep.subr.mxu0 0.0
      %10145 = vmatpush1.msra.mxu0 0.0
      %10146 = vmatprep.subr.mxu0 0.0
      %10147 = vmatpush1.msra.mxu0 0.0
      %10148 = vmatprep.subr.mxu0 0.0
      %10149 = vmatpush1.msra.mxu0 0.0
      %10150 = vmatprep.subr.mxu0 0.0
      %10151 = vmatpush1.msra.mxu0 0.0
      %10152 = vmatprep.subr.mxu0 0.0
      %10153 = vmatpush1.msra.mxu0 0.0
      %10154 = vmatprep.subr.mxu0 0.0
      %10155 = vmatpush1.msra.mxu0 0.0
      %10156 = vmatprep.subr.mxu0 0.0
      %10157 = vmatpush1.msra.mxu0 0.0
      %10158 = vmatprep.subr.mxu0 0.0
      %10159 = vmatpush1.msra.mxu0 0.0
      %10160 = vmatprep.subr.mxu0 0.0
      %10161 = vmatpush1.msra.mxu0 0.0
      %10162 = vmatprep.subr.mxu0 0.0
      %10163 = vmatpush1.msra.mxu0 0.0
      %10164 = vmatprep.subr.mxu0 0.0
      %10165 = vmatpush1.msra.mxu0 0.0
      %10166 = vmatprep.subr.mxu0 0.0
      %10167 = vmatpush1.msra.mxu0 0.0
      %10168 = vmatprep.subr.mxu0 0.0
      %10169 = vmatpush1.msra.mxu0 0.0
      %10170 = vmatprep.subr.mxu0 0.0
      %10171 = vmatpush1.msra.mxu0 0.0
      %10172 = vmatprep.subr.mxu0 0.0
      %10173 = vmatpush1.msra.mxu0 0.0
      %10174 = vmatprep.subr.mxu0 0.0
      %10175 = vmatpush1.msra.mxu0 0.0
      %10176 = vmatprep.subr.mxu0 0.0
      %10177 = vmatpush1.msra.mxu0 0.0
      %10178 = vmatprep.mubr.f32.mxu0 0.0
      %10179 = vmatmul.mubr.f32.gmra.mrb[0].mxu0 %v10096
      %v10180 = vpop.f32.mrb[0].mxu0
      %v10181 = vadd.f32 0.0, %v10180
      %v10182 = vpop.f32.mrb[0].mxu0
      %v10183 = vadd.f32 0.0, %v10182
      %10184 = vdwg.mxu0
      %10185 = vmatprep.subr.mxu0 %v10104
      %10186 = vmatpush1.msra.mxu0 %v10102
      %10187 = vmatprep.subr.mxu0 0.0
      %10188 = vmatpush1.msra.mxu0 0.0
      %10189 = vmatprep.subr.mxu0 0.0
      %10190 = vmatpush1.msra.mxu0 0.0
      %10191 = vmatprep.subr.mxu0 0.0
      %10192 = vmatpush1.msra.mxu0 0.0
      %10193 = vmatprep.subr.mxu0 0.0
      %10194 = vmatpush1.msra.mxu0 0.0
      %10195 = vmatprep.subr.mxu0 0.0
      %10196 = vmatpush1.msra.mxu0 0.0
      %10197 = vmatprep.subr.mxu0 0.0
      %10198 = vmatpush1.msra.mxu0 0.0
      %10199 = vmatprep.subr.mxu0 0.0
      %10200 = vmatpush1.msra.mxu0 0.0
      %10201 = vmatprep.subr.mxu0 0.0
      %10202 = vmatpush1.msra.mxu0 0.0
      %10203 = vmatprep.subr.mxu0 0.0
      %10204 = vmatpush1.msra.mxu0 0.0
      %10205 = vmatprep.subr.mxu0 0.0
      %10206 = vmatpush1.msra.mxu0 0.0
      %10207 = vmatprep.subr.mxu0 0.0
      %10208 = vmatpush1.msra.mxu0 0.0
      %10209 = vmatprep.subr.mxu0 0.0
      %10210 = vmatpush1.msra.mxu0 0.0
      %10211 = vmatprep.subr.mxu0 0.0
      %10212 = vmatpush1.msra.mxu0 0.0
      %10213 = vmatprep.subr.mxu0 0.0
      %10214 = vmatpush1.msra.mxu0 0.0
      %10215 = vmatprep.subr.mxu0 0.0
      %10216 = vmatpush1.msra.mxu0 0.0
      %10217 = vmatprep.subr.mxu0 0.0
      %10218 = vmatpush1.msra.mxu0 0.0
      %10219 = vmatprep.subr.mxu0 0.0
      %10220 = vmatpush1.msra.mxu0 0.0
      %10221 = vmatprep.subr.mxu0 0.0
      %10222 = vmatpush1.msra.mxu0 0.0
      %10223 = vmatprep.subr.mxu0 0.0
      %10224 = vmatpush1.msra.mxu0 0.0
      %10225 = vmatprep.subr.mxu0 0.0
      %10226 = vmatpush1.msra.mxu0 0.0
      %10227 = vmatprep.subr.mxu0 0.0
      %10228 = vmatpush1.msra.mxu0 0.0
      %10229 = vmatprep.subr.mxu0 0.0
      %10230 = vmatpush1.msra.mxu0 0.0
      %10231 = vmatprep.subr.mxu0 0.0
      %10232 = vmatpush1.msra.mxu0 0.0
      %10233 = vmatprep.subr.mxu0 0.0
      %10234 = vmatpush1.msra.mxu0 0.0
      %10235 = vmatprep.subr.mxu0 0.0
      %10236 = vmatpush1.msra.mxu0 0.0
      %10237 = vmatprep.subr.mxu0 0.0
      %10238 = vmatpush1.msra.mxu0 0.0
      %10239 = vmatprep.subr.mxu0 0.0
      %10240 = vmatpush1.msra.mxu0 0.0
      %10241 = vmatprep.subr.mxu0 0.0
      %10242 = vmatpush1.msra.mxu0 0.0
      %10243 = vmatprep.subr.mxu0 0.0
      %10244 = vmatpush1.msra.mxu0 0.0
      %10245 = vmatprep.subr.mxu0 0.0
      %10246 = vmatpush1.msra.mxu0 0.0
      %10247 = vmatprep.subr.mxu0 0.0
      %10248 = vmatpush1.msra.mxu0 0.0
      %10249 = vmatprep.mubr.f32.mxu0 0.0
      %10250 = vmatmul.mubr.f32.gmra.mrb[0].mxu0 %v10096
      %v10251 = vpop.f32.mrb[0].mxu0
      %v10252 = vadd.f32 0.0, %v10251
      %v10253 = vpop.f32.mrb[0].mxu0
      %v10254 = vadd.f32 0.0, %v10253
      %10255 = vdwg.mxu0
      %10256 = vmatprep.subr.mxu0 %v10108
      %10257 = vmatpush1.msra.mxu0 %v10106
      %10258 = vmatprep.subr.mxu0 0.0
      %10259 = vmatpush1.msra.mxu0 0.0
      %10260 = vmatprep.subr.mxu0 0.0
      %10261 = vmatpush1.msra.mxu0 0.0
      %10262 = vmatprep.subr.mxu0 0.0
      %10263 = vmatpush1.msra.mxu0 0.0
      %10264 = vmatprep.subr.mxu0 0.0
      %10265 = vmatpush1.msra.mxu0 0.0
      %10266 = vmatprep.subr.mxu0 0.0
      %10267 = vmatpush1.msra.mxu0 0.0
      %10268 = vmatprep.subr.mxu0 0.0
      %10269 = vmatpush1.msra.mxu0 0.0
      %10270 = vmatprep.subr.mxu0 0.0
      %10271 = vmatpush1.msra.mxu0 0.0
      %10272 = vmatprep.subr.mxu0 0.0
      %10273 = vmatpush1.msra.mxu0 0.0
      %10274 = vmatprep.subr.mxu0 0.0
      %10275 = vmatpush1.msra.mxu0 0.0
      %10276 = vmatprep.subr.mxu0 0.0
      %10277 = vmatpush1.msra.mxu0 0.0
      %10278 = vmatprep.subr.mxu0 0.0
      %10279 = vmatpush1.msra.mxu0 0.0
      %10280 = vmatprep.subr.mxu0 0.0
      %10281 = vmatpush1.msra.mxu0 0.0
      %10282 = vmatprep.subr.mxu0 0.0
      %10283 = vmatpush1.msra.mxu0 0.0
      %10284 = vmatprep.subr.mxu0 0.0
      %10285 = vmatpush1.msra.mxu0 0.0
      %10286 = vmatprep.subr.mxu0 0.0
      %10287 = vmatpush1.msra.mxu0 0.0
      %10288 = vmatprep.subr.mxu0 0.0
      %10289 = vmatpush1.msra.mxu0 0.0
      %10290 = vmatprep.subr.mxu0 0.0
      %10291 = vmatpush1.msra.mxu0 0.0
      %10292 = vmatprep.subr.mxu0 0.0
      %10293 = vmatpush1.msra.mxu0 0.0
      %10294 = vmatprep.subr.mxu0 0.0
      %10295 = vmatpush1.msra.mxu0 0.0
      %10296 = vmatprep.subr.mxu0 0.0
      %10297 = vmatpush1.msra.mxu0 0.0
      %10298 = vmatprep.subr.mxu0 0.0
      %10299 = vmatpush1.msra.mxu0 0.0
      %10300 = vmatprep.subr.mxu0 0.0
      %10301 = vmatpush1.msra.mxu0 0.0
      %10302 = vmatprep.subr.mxu0 0.0
      %10303 = vmatpush1.msra.mxu0 0.0
      %10304 = vmatprep.subr.mxu0 0.0
      %10305 = vmatpush1.msra.mxu0 0.0
      %10306 = vmatprep.subr.mxu0 0.0
      %10307 = vmatpush1.msra.mxu0 0.0
      %10308 = vmatprep.subr.mxu0 0.0
      %10309 = vmatpush1.msra.mxu0 0.0
      %10310 = vmatprep.subr.mxu0 0.0
      %10311 = vmatpush1.msra.mxu0 0.0
      %10312 = vmatprep.subr.mxu0 0.0
      %10313 = vmatpush1.msra.mxu0 0.0
      %10314 = vmatprep.subr.mxu0 0.0
      %10315 = vmatpush1.msra.mxu0 0.0
      %10316 = vmatprep.subr.mxu0 0.0
      %10317 = vmatpush1.msra.mxu0 0.0
      %10318 = vmatprep.subr.mxu0 0.0
      %10319 = vmatpush1.msra.mxu0 0.0
      %10320 = vmatprep.mubr.f32.mxu0 0.0
      %10321 = vmatmul.mubr.f32.gmra.mrb[0].mxu0 %v10096
      %v10322 = vpop.f32.mrb[0].mxu0
      %v10323 = vadd.f32 0.0, %v10322
      %v10324 = vpop.f32.mrb[0].mxu0
      %v10325 = vadd.f32 0.0, %v10324
      %10326 = vdwg.mxu0
      %10327 = vmatprep.subr.mxu0 %v10112
      %10328 = vmatpush1.msra.mxu0 %v10110
      %10329 = vmatprep.subr.mxu0 0.0
      %10330 = vmatpush1.msra.mxu0 0.0
      %10331 = vmatprep.subr.mxu0 0.0
      %10332 = vmatpush1.msra.mxu0 0.0
      %10333 = vmatprep.subr.mxu0 0.0
      %10334 = vmatpush1.msra.mxu0 0.0
      %10335 = vmatprep.subr.mxu0 0.0
      %10336 = vmatpush1.msra.mxu0 0.0
      %10337 = vmatprep.subr.mxu0 0.0
      %10338 = vmatpush1.msra.mxu0 0.0
      %10339 = vmatprep.subr.mxu0 0.0
      %10340 = vmatpush1.msra.mxu0 0.0
      %10341 = vmatprep.subr.mxu0 0.0
      %10342 = vmatpush1.msra.mxu0 0.0
      %10343 = vmatprep.subr.mxu0 0.0
      %10344 = vmatpush1.msra.mxu0 0.0
      %10345 = vmatprep.subr.mxu0 0.0
      %10346 = vmatpush1.msra.mxu0 0.0
      %10347 = vmatprep.subr.mxu0 0.0
      %10348 = vmatpush1.msra.mxu0 0.0
      %10349 = vmatprep.subr.mxu0 0.0
      %10350 = vmatpush1.msra.mxu0 0.0
      %10351 = vmatprep.subr.mxu0 0.0
      %10352 = vmatpush1.msra.mxu0 0.0
      %10353 = vmatprep.subr.mxu0 0.0
      %10354 = vmatpush1.msra.mxu0 0.0
      %10355 = vmatprep.subr.mxu0 0.0
      %10356 = vmatpush1.msra.mxu0 0.0
      %10357 = vmatprep.subr.mxu0 0.0
      %10358 = vmatpush1.msra.mxu0 0.0
      %10359 = vmatprep.subr.mxu0 0.0
      %10360 = vmatpush1.msra.mxu0 0.0
      %10361 = vmatprep.subr.mxu0 0.0
      %10362 = vmatpush1.msra.mxu0 0.0
      %10363 = vmatprep.subr.mxu0 0.0
      %10364 = vmatpush1.msra.mxu0 0.0
      %10365 = vmatprep.subr.mxu0 0.0
      %10366 = vmatpush1.msra.mxu0 0.0
      %10367 = vmatprep.subr.mxu0 0.0
      %10368 = vmatpush1.msra.mxu0 0.0
      %10369 = vmatprep.subr.mxu0 0.0
      %10370 = vmatpush1.msra.mxu0 0.0
      %10371 = vmatprep.subr.mxu0 0.0
      %10372 = vmatpush1.msra.mxu0 0.0
      %10373 = vmatprep.subr.mxu0 0.0
      %10374 = vmatpush1.msra.mxu0 0.0
      %10375 = vmatprep.subr.mxu0 0.0
      %10376 = vmatpush1.msra.mxu0 0.0
      %10377 = vmatprep.subr.mxu0 0.0
      %10378 = vmatpush1.msra.mxu0 0.0
      %10379 = vmatprep.subr.mxu0 0.0
      %10380 = vmatpush1.msra.mxu0 0.0
      %10381 = vmatprep.subr.mxu0 0.0
      %10382 = vmatpush1.msra.mxu0 0.0
      %10383 = vmatprep.subr.mxu0 0.0
      %10384 = vmatpush1.msra.mxu0 0.0
      %10385 = vmatprep.subr.mxu0 0.0
      %10386 = vmatpush1.msra.mxu0 0.0
      %10387 = vmatprep.subr.mxu0 0.0
      %10388 = vmatpush1.msra.mxu0 0.0
      %10389 = vmatprep.subr.mxu0 0.0
      %10390 = vmatpush1.msra.mxu0 0.0
      %10391 = vmatprep.mubr.f32.mxu0 0.0
      %10392 = vmatmul.mubr.f32.gmra.mrb[0].mxu0 %v10096
      %v10393 = vpop.f32.mrb[0].mxu0
      %v10394 = vadd.f32 0.0, %v10393
      %v10395 = vpop.f32.mrb[0].mxu0
      %v10396 = vadd.f32 0.0, %v10395
      %10397 = vdwg.mxu0
      %v10398 = vadd.f32 %v10027, %v10181
      %v10399 = vadd.f32 %v10028, %v10183
      %v10400 = vadd.f32 %v10029, %v10252
      %v10401 = vadd.f32 %v10030, %v10254
      %v10402 = vadd.f32 %v10031, %v10323
      %v10403 = vadd.f32 %v10032, %v10325
      %v10404 = vadd.f32 %v10033, %v10394
      %v10405 = vadd.f32 %v10034, %v10396
      %v10406 = vld [vmem:[%s4] sm:$0x3]
      %10408 = vset.pattern.permute.xlu0 0
      %10409 = vperm.xlu0 %10408, %v10406
      %v10410 = vpop.permute.xlu0 %10409
      %v10412 = vadd.f32 %v10398, %v10410
      %v10413 = vadd.f32 %v10399, %v10410
      %v10414 = vadd.f32 %v10400, %v10410
      %v10415 = vadd.f32 %v10401, %v10410
      %v10416 = vadd.f32 %v10402, %v10410
      %v10417 = vadd.f32 %v10403, %v10410
      %v10418 = vadd.f32 %v10404, %v10410
      %v10419 = vadd.f32 %v10405, %v10410
      %v10420 = vadd.f32 %v10412, %v3589
      %v10421 = vadd.f32 %v10413, %v3590
      %v10422 = vadd.f32 %v10414, %v3591
      %v10423 = vadd.f32 %v10415, %v3592
      %v10424 = vadd.f32 %v10416, %v3593
      %v10425 = vadd.f32 %v10417, %v3594
      %v10426 = vadd.f32 %v10418, %v3595
      %v10427 = vadd.f32 %v10419, %v3596
      %v10428 = vmax.f32 %v10420, 0.0
      %v10429 = vmax.f32 %v10421, 0.0
      %v10430 = vmax.f32 %v10422, 0.0
      %v10431 = vmax.f32 %v10423, 0.0
      %v10432 = vmax.f32 %v10424, 0.0
      %v10433 = vmax.f32 %v10425, 0.0
      %v10434 = vmax.f32 %v10426, 0.0
      %v10435 = vmax.f32 %v10427, 0.0
      %v10444 = vcombine.low %v10428, %v10429
      %v10445 = vcombine.low %v10430, %v10431
      %v10447 = vunpack.c.l.s4 1983009808
      %v10448 = vunpack.c.0.s8 %v10447
      %v10449 = vlaneseq
      %v10450 = vshrl.u32 %v10449, 7
      %v10451 = vsub.s32 %v10448, %v10450
      %v10452 = vrot.slane %v10444, %v10451
      %v10454 = vunpack.c.l.s4 1983009808
      %v10455 = vunpack.c.0.s8 %v10454
      %v10456 = vlaneseq
      %v10457 = vshrl.u32 %v10456, 7
      %v10458 = vsub.s32 %v10455, %v10457
      %v10459 = vrot.slane %v10445, %v10458
      %v10460 = vcombine.low %v10452, %v10459
      %v10461 = vcombine.low %v10432, %v10433
      %v10462 = vcombine.low %v10434, %v10435
      %v10464 = vunpack.c.l.s4 1983009808
      %v10465 = vunpack.c.0.s8 %v10464
      %v10466 = vlaneseq
      %v10467 = vshrl.u32 %v10466, 7
      %v10468 = vsub.s32 %v10465, %v10467
      %v10469 = vrot.slane %v10461, %v10468
      %v10471 = vunpack.c.l.s4 1983009808
      %v10472 = vunpack.c.0.s8 %v10471
      %v10473 = vlaneseq
      %v10474 = vshrl.u32 %v10473, 7
      %v10475 = vsub.s32 %v10472, %v10474
      %v10476 = vrot.slane %v10462, %v10475
      %v10477 = vcombine.low %v10469, %v10476
      %10480 = vst [vmem:[%s305] sm:$0xff] %v10460
      %10481 = vst [vmem:[%s305 + $0x8] sm:$0xff] %v10477
      %p10482 = scmp.lt.s32.totalorder %s19, 1
      %s10483 = scalar_select %p10482, %s19, 1
      %s10484 = smul.addr %s10483, 8
      %s10485 = smul.addr %s10484, 2
      %s10486 = scalar_lea.vmem %s8, %s10485
      // Predicated region
      $region53: #{resnet_up_forward.3} parent=51 // pred_check
        %p10487 = pneg %p210
      $region54: #{resnet_up_forward.3} parent=51 // pred_check_branch
        %10489 = sbr.rel (%p10487) target = $region56
      $region55: #{resnet_up_forward.3} parent=51 // pred_region
        _
      $region56: #{resnet_up_forward.3} parent=51 // pred_fallthru
        _
    $region52: #{resnet_up_forward.3} parent=5 // pred_fallthru
      _
    %p10490 = scmp.le.s32.totalorder 2, %s14
    // Predicated region
    $region57: #{resnet_up_forward.3} parent=5 // pred_check
      %p10491 = pneg %p10490
    $region58: #{resnet_up_forward.3} parent=5 // pred_check_branch
      %10493 = sbr.rel (%p10491) target = $region60
    $region59: #{resnet_up_forward.3} parent=5 // pred_region
      %s10494 = ssub.s32 %s14, 2
      // Predicated region
      $region61: #{resnet_up_forward.3} parent=59 // pred_check
        %p10495 = pneg %p216
      $region62: #{resnet_up_forward.3} parent=59 // pred_check_branch
        %10497 = sbr.rel (%p10495) target = $region64
      $region63: #{resnet_up_forward.3} parent=59 // pred_region
        %p10498 = scmp.lt.s32.totalorder %s20, 1
        %s10499 = scalar_select %p10498, %s20, 1
        %s10500 = smul.addr %s10499, 8
        %s10501 = smul.addr %s10500, 2
        %s10502 = scalar_lea.vmem %s8, %s10501
      $region64: #{resnet_up_forward.3} parent=59 // pred_fallthru
        _
    $region60: #{resnet_up_forward.3} parent=5 // pred_fallthru
      _
  $region6: #{resnet_up_forward.3} parent=0 // loop_footer
    %s18 = sadd.s32 1, %s14
  $region7: #{resnet_up_forward.3} parent=0 // loop_footer_branch
    %13 = sbr.rel target = $region3
  $region8: #{resnet_up_forward.3} parent=0 // loop_exit
    _

</llo_original>
